<compile_context>
chip_gen: v6e
topology: v6e:2x2x1
jax: 0.10.0
libtpu: 0.0.40
codegen_flags: <defaults>
</compile_context>

<pallas_src>
import math

import jax
import jax.numpy as jnp
from jax import lax
from jax.experimental import pallas as pl
from jax.experimental.pallas import tpu as pltpu

LANE = 128


def _round_up(x, m):
    return ((x + m - 1) // m) * m


# ----------------------------------------------------------------------------
# In-kernel building blocks
# ----------------------------------------------------------------------------
def _depthwise(pad_ref, dw, t_win, t_out, stride, ksize, strided_ds):
    """Depthwise conv reading its taps straight from the padded VMEM scratch.

    pad_ref : (>= t_win, Cp) f32 VMEM ref (zeroed halos / zeroed padded lanes)
    dw      : (ksize, Cp) per-channel taps.  Returns (t_out, Cp) f32.
    """
    if stride == 1:
        acc = pad_ref[pl.ds(0, t_out), :] * dw[0][None, :]
        for k in range(1, ksize):
            acc = acc + pad_ref[pl.ds(k, t_out), :] * dw[k][None, :]
        return acc
    if strided_ds:
        # Strided vld from VMEM: no full-window materialization and no
        # deinterleave shuffles on the downsampling layers.
        acc = pad_ref[pl.ds(0, t_out, stride=stride), :] * dw[0][None, :]
        for k in range(1, ksize):
            acc = acc + pad_ref[pl.ds(k, t_out, stride=stride), :] * dw[k][None, :]
        return acc
    # Fallback (only if strided VMEM loads are unsupported by this Mosaic
    # version): stride-1 depthwise over the full window, then subsample rows
    # with a tiny selection matmul on the MXU (guaranteed to lower).
    t_full = t_win - ksize + 1
    acc = pad_ref[pl.ds(0, t_full), :] * dw[0][None, :]
    for k in range(1, ksize):
        acc = acc + pad_ref[pl.ds(k, t_full), :] * dw[k][None, :]
    rows = lax.broadcasted_iota(jnp.int32, (t_out, t_full), 0)
    cols = lax.broadcasted_iota(jnp.int32, (t_out, t_full), 1)
    sel = (cols == rows * stride).astype(jnp.float32)
    return jnp.dot(sel, acc, preferred_element_type=jnp.float32)


def _pointwise(acc, pw_bf16, shift):
    """1x1 conv as MXU matmul (bf16 operands, f32 accumulate).  BN scale is
    pre-folded into pw; BN shift (+ conv bias) applied here."""
    y = jnp.dot(acc.astype(jnp.bfloat16), pw_bf16,
                preferred_element_type=jnp.float32)
    return y + shift


def _swish(y):
    # TODO(synk): if profiling shows the sigmoid divide on the VALU, switch to
    # exp(-y) on the EUP + pl.reciprocal(1 + e, approx=True).
    return y * jax.nn.sigmoid(y)


# ----------------------------------------------------------------------------
# Fused ContextBlock kernel
# ----------------------------------------------------------------------------
def _make_context_block_kernel(*, t_in, cin, cout, cp, ksize, pad, strides,
                               residual, res_stride, out_dtype, strided_ds):
    n_layers = len(strides)

    def kernel(x_ref, dw_ref, pw_ref, shift_ref,
               w1_ref, b1_ref, w2_ref, b2_ref,
               o_ref, pad_ref, *maybe_res_ref):
        # ---- stage x into the zero-padded VMEM scratch ('same' pad in VMEM) ----
        if cin < cp:
            # Lane padding exists only in VMEM: clear the whole scratch once so
            # padded lanes and both halos are zero, then fill the real lanes.
            pad_ref[...] = jnp.zeros_like(pad_ref)
        elif pad > 0:
            # Lane-dense input: only the halo rows need zeroing (the interior is
            # fully overwritten just below) -> ~half the staging stores.
            pad_ref[0:pad, :] = jnp.zeros((pad, cp), jnp.float32)
            pad_ref[pad + t_in:2 * pad + t_in, :] = jnp.zeros((pad, cp),
                                                              jnp.float32)
        pad_ref[pad:pad + t_in, 0:cin] = x_ref[0].astype(jnp.float32)

        # ---- residual branch first (it consumes the original x) ----
        if residual:
            res_ref = maybe_res_ref[0]
            r_t_out = (t_in + 2 * pad - ksize) // res_stride + 1
            acc = _depthwise(pad_ref, dw_ref[n_layers], t_in + 2 * pad, r_t_out,
                             res_stride, ksize, strided_ds)
            res_ref[...] = _pointwise(acc, pw_ref[n_layers], shift_ref[n_layers])

        # ---- main chain: activation stays resident in the padded scratch ----
        t_cur = t_in
        for l in range(n_layers):
            s = strides[l]
            t_win = t_cur + 2 * pad
            t_nxt = (t_win - ksize) // s + 1
            acc = _depthwise(pad_ref, dw_ref[l], t_win, t_nxt, s, ksize,
                             strided_ds)
            y = _swish(_pointwise(acc, pw_ref[l], shift_ref[l]))
            pad_ref[pad:pad + t_nxt, :] = y
            if pad > 0 and t_nxt < t_cur:
                # T shrank (stride > 1): re-zero the trailing halo rows that the
                # shorter activation no longer overwrites.
                pad_ref[pad + t_nxt:2 * pad + t_nxt, :] = jnp.zeros(
                    (pad, cp), jnp.float32)
            t_cur = t_nxt

        out = pad_ref[pl.ds(pad, t_cur), :]                   # (T_out, Cp)

        # ---- squeeze-excitation gate: mean-pool as a ones-row MXU matmul ----
        ones_row = jnp.full((1, t_cur), 1.0 / t_cur, jnp.float32)
        pooled = jnp.dot(ones_row, out, preferred_element_type=jnp.float32)
        h = jnp.dot(pooled, w1_ref[...], preferred_element_type=jnp.float32)
        h = _swish(h + b1_ref[...])
        gate = jax.nn.sigmoid(
            jnp.dot(h, w2_ref[...], preferred_element_type=jnp.float32)
            + b2_ref[...])

        # ---- fused SE-apply + residual add + final Swish (single HBM store) ----
        y = out * gate
        if residual:
            y = y + maybe_res_ref[0][...]
        y = _swish(y)
        if cout < cp:
            y = y[:, 0:cout]
        o_ref[0] = y.astype(out_dtype)

    return kernel


# ----------------------------------------------------------------------------
# Parameter prep: lane-pad channels (VMEM-side), fold BN scale into pw, stack
# ----------------------------------------------------------------------------
def _prepare_block_params(params, *, kernel_size, residual, cin, cout):
    cp = _round_up(max(cin, cout), LANE)

    def prep_layer(blk):
        dw = jnp.zeros((kernel_size, cp), jnp.float32).at[:, :cin].set(blk["dw"])
        pw_f = blk["pw"] * blk["scale"]            # fold BN scale into 1x1 weights
        pw = jnp.zeros((cp, cp), jnp.float32).at[:cin, :cout].set(pw_f)
        shift = jnp.zeros((1, cp), jnp.float32).at[:, :cout].set(blk["shift"])
        return dw, pw, shift

    layers = [prep_layer(b) for b in params["blocks"]]
    strides = tuple(int(b["stride"]) for b in params["blocks"])
    if residual:
        layers.append(prep_layer(params["res"]))

    dw_stack = jnp.stack([l[0] for l in layers])
    pw_stack = jnp.stack([l[1] for l in layers]).astype(jnp.bfloat16)
    shift_stack = jnp.stack([l[2] for l in layers])

    se = params["se"]
    cr = se["w1"].shape[1]
    crp = _round_up(cr, LANE)
    w1 = jnp.zeros((cp, crp), jnp.float32).at[:cout, :cr].set(se["w1"])
    b1 = jnp.zeros((1, crp), jnp.float32).at[:, :cr].set(se["b1"])
    w2 = jnp.zeros((crp, cp), jnp.float32).at[:cr, :cout].set(se["w2"])
    b2 = jnp.zeros((1, cp), jnp.float32).at[:, :cout].set(se["b2"])

    return dict(cp=cp, crp=crp, strides=strides,
                res_stride=int(params["res"]["stride"]),
                dw=dw_stack, pw=pw_stack, shift=shift_stack,
                w1=w1, b1=b1, w2=w2, b2=b2)


def _vmem_limit_bytes(*, t, t_out, cp, crp, cin, cout, ksize, n_stack, residual,
                      single_buffer_weights):
    """Shape-derived VMEM limit, capped at 3/4 of the detected per-core VMEM."""
    f32, bf16 = 4, 2
    pad_rows = t + 2 * ((ksize - 1) // 2)
    scratch = pad_rows * cp * f32 + (t_out * cp * f32 if residual else 0)
    act_io = 2 * t * cin * f32 + 2 * t_out * cout * f32   # double-buffered blocks
    wbuf = 1 if single_buffer_weights else 2
    weights = wbuf * (
        n_stack * (ksize * cp * f32 + cp * cp * bf16 + cp * f32)
        + cp * crp * f32 + crp * f32 + crp * cp * f32 + cp * f32)
    needed = scratch + act_io + weights
    cap = 64 << 20                       # conservative (v7x-sized) if unknown
    try:
        cap = int(getattr(pltpu.get_tpu_info(), "vmem_capacity_bytes", cap))
    except Exception:
        pass
    # headroom for Mosaic-internal scratch and (8,128) layout padding
    limit = max(int(needed) * 3 // 2 + (8 << 20), 32 << 20)
    return int(min(limit, cap * 3 // 4))


# ----------------------------------------------------------------------------
# ContextBlock forward (single fused pallas_call, grid over batch)
# ----------------------------------------------------------------------------
def _forward_impl(params, x_bct, x_len, *, kernel_size, residual,
                  single_buffer_weights, strided_ds):
    b, cin, t = x_bct.shape
    cout = params["blocks"][0]["pw"].shape[1]
    pad = (kernel_size - 1) // 2

    prep = _prepare_block_params(params, kernel_size=kernel_size,
                                 residual=residual, cin=cin, cout=cout)
    cp, crp = prep["cp"], prep["crp"]
    strides, res_stride = prep["strides"], prep["res_stride"]

    # (B, C, T) -> (B, T, C): channels last.  No HBM lane padding -- the 128-lane
    # zero padding lives only in the VMEM scratch inside the kernel.
    x_btc = jnp.transpose(x_bct, (0, 2, 1))

    # static output lengths
    t_out = t
    for s in strides:
        t_out = (t_out + 2 * pad - kernel_size) // s + 1
    if residual:
        t_res = (t + 2 * pad - kernel_size) // res_stride + 1
        assert t_res == t_out, (t_res, t_out)

    kernel = _make_context_block_kernel(
        t_in=t, cin=cin, cout=cout, cp=cp, ksize=kernel_size, pad=pad,
        strides=strides, residual=residual, res_stride=res_stride,
        out_dtype=x_btc.dtype, strided_ds=strided_ds)

    n_stack = len(strides) + (1 if residual else 0)
    scratch = [pltpu.VMEM((t + 2 * pad, cp), jnp.float32)]
    if residual:
        scratch.append(pltpu.VMEM((t_out, cp), jnp.float32))

    def wspec(shape):
        # Constant-index weight inputs: single-buffer (their block index never
        # changes, so double-buffering only doubles the VMEM footprint).
        zeros = (0,) * len(shape)
        if single_buffer_weights:
            return pl.BlockSpec(shape, lambda i: zeros,
                                pipeline_mode=pl.Buffered(1))
        return pl.BlockSpec(shape, lambda i: zeros)

    vmem_limit = _vmem_limit_bytes(
        t=t, t_out=t_out, cp=cp, crp=crp, cin=cin, cout=cout,
        ksize=kernel_size, n_stack=n_stack, residual=residual,
        single_buffer_weights=single_buffer_weights)

    out = pl.pallas_call(
        kernel,
        out_shape=jax.ShapeDtypeStruct((b, t_out, cout), x_btc.dtype),
        grid=(b,),
        in_specs=[
            pl.BlockSpec((1, t, cin), lambda i: (i, 0, 0)),
            wspec((n_stack, kernel_size, cp)),
            wspec((n_stack, cp, cp)),
            wspec((n_stack, 1, cp)),
            wspec((cp, crp)),
            wspec((1, crp)),
            wspec((crp, cp)),
            wspec((1, cp)),
        ],
        out_specs=pl.BlockSpec((1, t_out, cout), lambda i: (i, 0, 0)),
        scratch_shapes=scratch,
        compiler_params=pltpu.CompilerParams(
            dimension_semantics=("parallel",),
            vmem_limit_bytes=vmem_limit),
    )(x_btc, prep["dw"], prep["pw"], prep["shift"],
      prep["w1"], prep["b1"], prep["w2"], prep["b2"])

    out_len = x_len
    for s in strides:
        out_len = (out_len + 2 * pad - kernel_size) // s + 1

    return jnp.transpose(out, (0, 2, 1)), out_len


def context_block_forward(params, x_bct, x_len, *, kernel_size, residual):
    """Fused ContextBlock forward.  Tries the fully optimized configuration and
    falls back if this jax/Mosaic version rejects pl.Buffered(1) single
    buffering or strided VMEM loads."""
    last_err = None
    for single_buf, strided in ((True, True), (True, False),
                                (False, True), (False, False)):
        try:
            out, out_len = _forward_impl(
                params, x_bct, x_len, kernel_size=kernel_size,
                residual=residual, single_buffer_weights=single_buf,
                strided_ds=strided)
            jax.block_until_ready(out)
            return out, out_len
        except Exception as e:          # pragma: no cover - version fallback
            last_err = e
    raise last_err


# ----------------------------------------------------------------------------
# Parameter init (deterministic, synthetic)
# ----------------------------------------------------------------------------
def init_ds_layer(key, cin, cout, k):
    k1, k2, k3, k4, k5, k6, k7 = jax.random.split(key, 7)
    dw = jax.random.normal(k1, (k, cin), jnp.float32) * (1.0 / math.sqrt(k))
    pw = jax.random.normal(k2, (cin, cout), jnp.float32) * (1.0 / math.sqrt(cin))
    bias = jax.random.normal(k3, (cout,), jnp.float32) * 0.05
    gamma = 1.0 + 0.1 * jax.random.normal(k4, (cout,), jnp.float32)
    beta = 0.1 * jax.random.normal(k5, (cout,), jnp.float32)
    r_mean = 0.1 * jax.random.normal(k6, (cout,), jnp.float32)
    r_var = 1.0 + 0.1 * jnp.abs(jax.random.normal(k7, (cout,), jnp.float32))
    eps = 1e-5
    scale = gamma / jnp.sqrt(r_var + eps)
    shift = (bias - r_mean) * scale + beta
    return dict(dw=dw, pw=pw, scale=scale.reshape(1, cout),
                shift=shift.reshape(1, cout))


def init_se_layer(key, c, reduction):
    cr = max(c // reduction, 1)
    k1, k2, k3, k4 = jax.random.split(key, 4)
    return dict(
        w1=jax.random.normal(k1, (c, cr), jnp.float32) * (1.0 / math.sqrt(c)),
        b1=(0.05 * jax.random.normal(k2, (1, cr), jnp.float32)),
        w2=jax.random.normal(k3, (cr, c), jnp.float32) * (1.0 / math.sqrt(cr)),
        b2=(0.05 * jax.random.normal(k4, (1, c), jnp.float32)),
    )


def init_context_block(key, cin, cout, num_layers, kernel_size, stride, reduction=4):
    keys = jax.random.split(key, num_layers + 2)
    blocks = []
    for block_id in range(num_layers):
        s = 1 if (stride == 1 or block_id < 4) else 2
        p = init_ds_layer(keys[block_id], cin, cout, kernel_size)
        p["stride"] = s
        blocks.append(p)
    res = init_ds_layer(keys[num_layers], cin, cout, kernel_size)
    res["stride"] = stride
    se = init_se_layer(keys[num_layers + 1], cout, reduction)
    return dict(blocks=blocks, res=res, se=se)


# ----------------------------------------------------------------------------
# Pure-JAX reference (lax conv, f32), used only for a correctness assert
# ----------------------------------------------------------------------------
def _ref_ds_layer(blk, x_bct, kernel_size, activation):
    cin = x_bct.shape[1]
    pad = (kernel_size - 1) // 2
    s = blk["stride"]
    dw = jnp.transpose(blk["dw"], (1, 0))[:, None, :]          # (Cin, 1, K)
    pw = jnp.transpose(blk["pw"], (1, 0))[:, :, None]          # (Cout, Cin, 1)
    y = lax.conv_general_dilated(x_bct, dw, window_strides=(s,),
                                 padding=[(pad, pad)],
                                 dimension_numbers=("NCH", "OIH", "NCH"),
                                 feature_group_count=cin)
    y = lax.conv_general_dilated(y, pw, window_strides=(1,), padding=[(0, 0)],
                                 dimension_numbers=("NCH", "OIH", "NCH"))
    y = y * blk["scale"][0][None, :, None] + blk["shift"][0][None, :, None]
    if activation:
        y = y * jax.nn.sigmoid(y)
    return y


def reference_forward(params, x_bct, x_len, *, kernel_size, residual):
    pad = (kernel_size - 1) // 2
    out = x_bct
    out_len = x_len
    for blk in params["blocks"]:
        out = _ref_ds_layer(blk, out, kernel_size, activation=True)
        out_len = (out_len + 2 * pad - kernel_size) // blk["stride"] + 1
    se = params["se"]
    pooled = jnp.mean(out, axis=2)                              # (B, C)
    h = pooled @ se["w1"] + se["b1"]
    h = h * jax.nn.sigmoid(h)
    sgate = jax.nn.sigmoid(h @ se["w2"] + se["b2"])             # (B, C)
    out = out * sgate[:, :, None]
    if residual:
        res = _ref_ds_layer(params["res"], x_bct, kernel_size, activation=False)
        out = out + res
    out = out * jax.nn.sigmoid(out)
    return out, out_len


# ----------------------------------------------------------------------------
def _run_case(key, *, B, Cin, Cout, T, num_layers, kernel_size, stride,
              residual, atol, rtol):
    kx, kp = jax.random.split(key)
    x = jax.random.normal(kx, (B, Cin, T), jnp.float32)   # PyTorch layout (B, C, T)
    x_len = jnp.array([T, max(T - 4, 1)], jnp.int32)[:B]

    params = init_context_block(kp, Cin, Cout, num_layers, kernel_size, stride,
                                reduction=4)

    out, out_len = context_block_forward(params, x, x_len,
                                         kernel_size=kernel_size,
                                         residual=residual)
    out = jax.block_until_ready(out)
    out_len = jax.block_until_ready(out_len)

    ref, ref_len = reference_forward(params, x, x_len,
                                     kernel_size=kernel_size, residual=residual)
    assert out.shape == ref.shape, (out.shape, ref.shape)
    # tolerance accounts for bf16 MXU pointwise matmuls vs. the f32 reference
    max_err = float(jnp.max(jnp.abs(out - ref)))
    assert jnp.allclose(out, ref, atol=atol, rtol=rtol), max_err
    assert jnp.array_equal(out_len, ref_len)


if __name__ == "__main__":
    key = jax.random.PRNGKey(0)
    k1, k2 = jax.random.split(key)

    # stride=1 block (C1-style)
    _run_case(k1, B=2, Cin=8, Cout=8, T=16, num_layers=3, kernel_size=5,
              stride=1, residual=True, atol=5e-2, rtol=5e-2)
    # stride=2 block (C3/C7-style): exercises the strided depthwise path and the
    # stride-2 residual conv.
    _run_case(k2, B=2, Cin=8, Cout=8, T=16, num_layers=5, kernel_size=5,
              stride=2, residual=True, atol=8e-2, rtol=8e-2)

    print("KERNEL_OK")
</pallas_src>

<mosaic_0001>
module attributes {stable_mosaic.version = 11 : i64} {
  func.func @kernel(%arg0: i32, %arg1: memref<1x16x8xf32, #tpu.memory_space<vmem>>, %arg2: memref<4x5x128xf32, #tpu.memory_space<vmem>>, %arg3: memref<4x128x128xbf16, #tpu.memory_space<vmem>>, %arg4: memref<4x1x128xf32, #tpu.memory_space<vmem>>, %arg5: memref<128x128xf32, #tpu.memory_space<vmem>>, %arg6: memref<1x128xf32, #tpu.memory_space<vmem>>, %arg7: memref<128x128xf32, #tpu.memory_space<vmem>>, %arg8: memref<1x128xf32, #tpu.memory_space<vmem>>, %arg9: memref<1x16x8xf32, #tpu.memory_space<vmem>>, %arg10: memref<20x128xf32, #tpu.memory_space<vmem>>, %arg11: memref<16x128xf32, #tpu.memory_space<vmem>>) attributes {dimension_semantics = [#tpu.dimension_semantics<parallel>], iteration_bounds = array<i64: 2>, scalar_prefetch = 0 : i64, scratch_operands = 2 : i64, tpu.core_type = #tpu.core_type<tc>, window_params = [{transform_indices = @transform_0, window_bounds = array<i64: 1, 16, 8>}, {pipeline_mode = #tpu.pipeline_mode<synchronous>, transform_indices = @transform_1, window_bounds = array<i64: 4, 5, 128>}, {pipeline_mode = #tpu.pipeline_mode<synchronous>, transform_indices = @transform_2, window_bounds = array<i64: 4, 128, 128>}, {pipeline_mode = #tpu.pipeline_mode<synchronous>, transform_indices = @transform_3, window_bounds = array<i64: 4, 1, 128>}, {pipeline_mode = #tpu.pipeline_mode<synchronous>, transform_indices = @transform_4, window_bounds = array<i64: 128, 128>}, {pipeline_mode = #tpu.pipeline_mode<synchronous>, transform_indices = @transform_5, window_bounds = array<i64: 1, 128>}, {pipeline_mode = #tpu.pipeline_mode<synchronous>, transform_indices = @transform_6, window_bounds = array<i64: 128, 128>}, {pipeline_mode = #tpu.pipeline_mode<synchronous>, transform_indices = @transform_7, window_bounds = array<i64: 1, 128>}, {transform_indices = @transform_8, window_bounds = array<i64: 1, 16, 8>}]} {
    %cst = arith.constant 0.000000e+00 : f32
    %0 = vector.broadcast %cst : f32 to vector<20x128xf32>
    %c0 = arith.constant 0 : index
    %c0_0 = arith.constant 0 : index
    %1 = vector.load %arg10[%c0, %c0_0] : memref<20x128xf32, #tpu.memory_space<vmem>>, vector<20x128xf32>
    tpu.vector_store %arg10[%c0, %c0_0], %0 {strides = array<i32>} : memref<20x128xf32, #tpu.memory_space<vmem>>, vector<20x128xf32>,
    %c0_1 = arith.constant 0 : index
    %c0_2 = arith.constant 0 : index
    %c0_3 = arith.constant 0 : index
    %2 = vector.load %arg1[%c0_1, %c0_2, %c0_3] : memref<1x16x8xf32, #tpu.memory_space<vmem>>, vector<1x16x8xf32>
    %3 = vector.shape_cast %2 : vector<1x16x8xf32> to vector<16x8xf32>
    %c2 = arith.constant 2 : index
    %c0_4 = arith.constant 0 : index
    %4 = vector.load %arg10[%c2, %c0_4] : memref<20x128xf32, #tpu.memory_space<vmem>>, vector<16x8xf32>
    tpu.vector_store %arg10[%c2, %c0_4], %3 {strides = array<i32>} : memref<20x128xf32, #tpu.memory_space<vmem>>, vector<16x8xf32>,
    %c3 = arith.constant 3 : index
    %c0_5 = arith.constant 0 : index
    %c0_6 = arith.constant 0 : index
    %5 = vector.load %arg2[%c3, %c0_5, %c0_6] : memref<4x5x128xf32, #tpu.memory_space<vmem>>, vector<1x5x128xf32>
    %6 = vector.shape_cast %5 : vector<1x5x128xf32> to vector<5x128xf32>
    %c0_7 = arith.constant 0 : index
    %c0_8 = arith.constant 0 : index
    %7 = vector.load %arg10[%c0_7, %c0_8] : memref<20x128xf32, #tpu.memory_space<vmem>>, vector<16x128xf32>
    %8 = vector.extract_strided_slice %6 {offsets = [0, 0], sizes = [1, 128], strides = [1, 1]} : vector<5x128xf32> to vector<1x128xf32>
    %9 = vector.shape_cast %8 : vector<1x128xf32> to vector<128xf32>
    %10 = vector.shape_cast %9 : vector<128xf32> to vector<1x128xf32>
    %11 = vector.broadcast %10 : vector<1x128xf32> to vector<16x128xf32>
    %12 = arith.mulf %7, %11 : vector<16x128xf32>
    %c1 = arith.constant 1 : index
    %c0_9 = arith.constant 0 : index
    %13 = vector.load %arg10[%c1, %c0_9] : memref<20x128xf32, #tpu.memory_space<vmem>>, vector<16x128xf32>
    %14 = vector.extract_strided_slice %6 {offsets = [1, 0], sizes = [1, 128], strides = [1, 1]} : vector<5x128xf32> to vector<1x128xf32>
    %15 = vector.shape_cast %14 : vector<1x128xf32> to vector<128xf32>
    %16 = vector.shape_cast %15 : vector<128xf32> to vector<1x128xf32>
    %17 = vector.broadcast %16 : vector<1x128xf32> to vector<16x128xf32>
    %18 = arith.mulf %13, %17 : vector<16x128xf32>
    %19 = arith.addf %12, %18 : vector<16x128xf32>
    %c2_10 = arith.constant 2 : index
    %c0_11 = arith.constant 0 : index
    %20 = vector.load %arg10[%c2_10, %c0_11] : memref<20x128xf32, #tpu.memory_space<vmem>>, vector<16x128xf32>
    %21 = vector.extract_strided_slice %6 {offsets = [2, 0], sizes = [1, 128], strides = [1, 1]} : vector<5x128xf32> to vector<1x128xf32>
    %22 = vector.shape_cast %21 : vector<1x128xf32> to vector<128xf32>
    %23 = vector.shape_cast %22 : vector<128xf32> to vector<1x128xf32>
    %24 = vector.broadcast %23 : vector<1x128xf32> to vector<16x128xf32>
    %25 = arith.mulf %20, %24 : vector<16x128xf32>
    %26 = arith.addf %19, %25 : vector<16x128xf32>
    %c3_12 = arith.constant 3 : index
    %c0_13 = arith.constant 0 : index
    %27 = vector.load %arg10[%c3_12, %c0_13] : memref<20x128xf32, #tpu.memory_space<vmem>>, vector<16x128xf32>
    %28 = vector.extract_strided_slice %6 {offsets = [3, 0], sizes = [1, 128], strides = [1, 1]} : vector<5x128xf32> to vector<1x128xf32>
    %29 = vector.shape_cast %28 : vector<1x128xf32> to vector<128xf32>
    %30 = vector.shape_cast %29 : vector<128xf32> to vector<1x128xf32>
    %31 = vector.broadcast %30 : vector<1x128xf32> to vector<16x128xf32>
    %32 = arith.mulf %27, %31 : vector<16x128xf32>
    %33 = arith.addf %26, %32 : vector<16x128xf32>
    %c4 = arith.constant 4 : index
    %c0_14 = arith.constant 0 : index
    %34 = vector.load %arg10[%c4, %c0_14] : memref<20x128xf32, #tpu.memory_space<vmem>>, vector<16x128xf32>
    %35 = vector.extract_strided_slice %6 {offsets = [4, 0], sizes = [1, 128], strides = [1, 1]} : vector<5x128xf32> to vector<1x128xf32>
    %36 = vector.shape_cast %35 : vector<1x128xf32> to vector<128xf32>
    %37 = vector.shape_cast %36 : vector<128xf32> to vector<1x128xf32>
    %38 = vector.broadcast %37 : vector<1x128xf32> to vector<16x128xf32>
    %39 = arith.mulf %34, %38 : vector<16x128xf32>
    %40 = arith.addf %33, %39 : vector<16x128xf32>
    %c3_15 = arith.constant 3 : index
    %c0_16 = arith.constant 0 : index
    %c0_17 = arith.constant 0 : index
    %41 = vector.load %arg3[%c3_15, %c0_16, %c0_17] : memref<4x128x128xbf16, #tpu.memory_space<vmem>>, vector<1x128x128xbf16>
    %42 = vector.shape_cast %41 : vector<1x128x128xbf16> to vector<128x128xbf16>
    %c3_18 = arith.constant 3 : index
    %c0_19 = arith.constant 0 : index
    %c0_20 = arith.constant 0 : index
    %43 = vector.load %arg4[%c3_18, %c0_19, %c0_20] : memref<4x1x128xf32, #tpu.memory_space<vmem>>, vector<1x1x128xf32>
    %44 = vector.shape_cast %43 : vector<1x1x128xf32> to vector<1x128xf32>
    %45 = arith.truncf %40 : vector<16x128xf32> to vector<16x128xbf16>
    %cst_21 = arith.constant dense<0.000000e+00> : vector<16x128xf32>
    %46 = tpu.matmul %45, %42, %cst_21 {dimension_numbers = #tpu.dot_dimension_numbers<[1], [0], [0], [1], [0, 0, 1, 1], [], []>} : vector<16x128xbf16>, vector<128x128xbf16>, vector<16x128xf32> -> vector<16x128xf32>
    %47 = vector.broadcast %44 : vector<1x128xf32> to vector<16x128xf32>
    %48 = arith.addf %46, %47 : vector<16x128xf32>
    %c0_22 = arith.constant 0 : index
    %c0_23 = arith.constant 0 : index
    %49 = vector.load %arg11[%c0_22, %c0_23] : memref<16x128xf32, #tpu.memory_space<vmem>>, vector<16x128xf32>
    tpu.vector_store %arg11[%c0_22, %c0_23], %48 {strides = array<i32>} : memref<16x128xf32, #tpu.memory_space<vmem>>, vector<16x128xf32>,
    %c0_24 = arith.constant 0 : index
    %c0_25 = arith.constant 0 : index
    %c0_26 = arith.constant 0 : index
    %50 = vector.load %arg2[%c0_24, %c0_25, %c0_26] : memref<4x5x128xf32, #tpu.memory_space<vmem>>, vector<1x5x128xf32>
    %51 = vector.shape_cast %50 : vector<1x5x128xf32> to vector<5x128xf32>
    %c0_27 = arith.constant 0 : index
    %c0_28 = arith.constant 0 : index
    %52 = vector.load %arg10[%c0_27, %c0_28] : memref<20x128xf32, #tpu.memory_space<vmem>>, vector<16x128xf32>
    %53 = vector.extract_strided_slice %51 {offsets = [0, 0], sizes = [1, 128], strides = [1, 1]} : vector<5x128xf32> to vector<1x128xf32>
    %54 = vector.shape_cast %53 : vector<1x128xf32> to vector<128xf32>
    %55 = vector.shape_cast %54 : vector<128xf32> to vector<1x128xf32>
    %56 = vector.broadcast %55 : vector<1x128xf32> to vector<16x128xf32>
    %57 = arith.mulf %52, %56 : vector<16x128xf32>
    %c1_29 = arith.constant 1 : index
    %c0_30 = arith.constant 0 : index
    %58 = vector.load %arg10[%c1_29, %c0_30] : memref<20x128xf32, #tpu.memory_space<vmem>>, vector<16x128xf32>
    %59 = vector.extract_strided_slice %51 {offsets = [1, 0], sizes = [1, 128], strides = [1, 1]} : vector<5x128xf32> to vector<1x128xf32>
    %60 = vector.shape_cast %59 : vector<1x128xf32> to vector<128xf32>
    %61 = vector.shape_cast %60 : vector<128xf32> to vector<1x128xf32>
    %62 = vector.broadcast %61 : vector<1x128xf32> to vector<16x128xf32>
    %63 = arith.mulf %58, %62 : vector<16x128xf32>
    %64 = arith.addf %57, %63 : vector<16x128xf32>
    %c2_31 = arith.constant 2 : index
    %c0_32 = arith.constant 0 : index
    %65 = vector.load %arg10[%c2_31, %c0_32] : memref<20x128xf32, #tpu.memory_space<vmem>>, vector<16x128xf32>
    %66 = vector.extract_strided_slice %51 {offsets = [2, 0], sizes = [1, 128], strides = [1, 1]} : vector<5x128xf32> to vector<1x128xf32>
    %67 = vector.shape_cast %66 : vector<1x128xf32> to vector<128xf32>
    %68 = vector.shape_cast %67 : vector<128xf32> to vector<1x128xf32>
    %69 = vector.broadcast %68 : vector<1x128xf32> to vector<16x128xf32>
    %70 = arith.mulf %65, %69 : vector<16x128xf32>
    %71 = arith.addf %64, %70 : vector<16x128xf32>
    %c3_33 = arith.constant 3 : index
    %c0_34 = arith.constant 0 : index
    %72 = vector.load %arg10[%c3_33, %c0_34] : memref<20x128xf32, #tpu.memory_space<vmem>>, vector<16x128xf32>
    %73 = vector.extract_strided_slice %51 {offsets = [3, 0], sizes = [1, 128], strides = [1, 1]} : vector<5x128xf32> to vector<1x128xf32>
    %74 = vector.shape_cast %73 : vector<1x128xf32> to vector<128xf32>
    %75 = vector.shape_cast %74 : vector<128xf32> to vector<1x128xf32>
    %76 = vector.broadcast %75 : vector<1x128xf32> to vector<16x128xf32>
    %77 = arith.mulf %72, %76 : vector<16x128xf32>
    %78 = arith.addf %71, %77 : vector<16x128xf32>
    %c4_35 = arith.constant 4 : index
    %c0_36 = arith.constant 0 : index
    %79 = vector.load %arg10[%c4_35, %c0_36] : memref<20x128xf32, #tpu.memory_space<vmem>>, vector<16x128xf32>
    %80 = vector.extract_strided_slice %51 {offsets = [4, 0], sizes = [1, 128], strides = [1, 1]} : vector<5x128xf32> to vector<1x128xf32>
    %81 = vector.shape_cast %80 : vector<1x128xf32> to vector<128xf32>
    %82 = vector.shape_cast %81 : vector<128xf32> to vector<1x128xf32>
    %83 = vector.broadcast %82 : vector<1x128xf32> to vector<16x128xf32>
    %84 = arith.mulf %79, %83 : vector<16x128xf32>
    %85 = arith.addf %78, %84 : vector<16x128xf32>
    %c0_37 = arith.constant 0 : index
    %c0_38 = arith.constant 0 : index
    %c0_39 = arith.constant 0 : index
    %86 = vector.load %arg3[%c0_37, %c0_38, %c0_39] : memref<4x128x128xbf16, #tpu.memory_space<vmem>>, vector<1x128x128xbf16>
    %87 = vector.shape_cast %86 : vector<1x128x128xbf16> to vector<128x128xbf16>
    %c0_40 = arith.constant 0 : index
    %c0_41 = arith.constant 0 : index
    %c0_42 = arith.constant 0 : index
    %88 = vector.load %arg4[%c0_40, %c0_41, %c0_42] : memref<4x1x128xf32, #tpu.memory_space<vmem>>, vector<1x1x128xf32>
    %89 = vector.shape_cast %88 : vector<1x1x128xf32> to vector<1x128xf32>
    %90 = arith.truncf %85 : vector<16x128xf32> to vector<16x128xbf16>
    %cst_43 = arith.constant dense<0.000000e+00> : vector<16x128xf32>
    %91 = tpu.matmul %90, %87, %cst_43 {dimension_numbers = #tpu.dot_dimension_numbers<[1], [0], [0], [1], [0, 0, 1, 1], [], []>} : vector<16x128xbf16>, vector<128x128xbf16>, vector<16x128xf32> -> vector<16x128xf32>
    %92 = vector.broadcast %89 : vector<1x128xf32> to vector<16x128xf32>
    %93 = arith.addf %91, %92 : vector<16x128xf32>
    %94 = arith.negf %93 : vector<16x128xf32>
    %95 = math.exp %94 : vector<16x128xf32>
    %cst_44 = arith.constant 1.000000e+00 : f32
    %96 = vector.broadcast %cst_44 : f32 to vector<16x128xf32>
    %97 = arith.addf %96, %95 : vector<16x128xf32>
    %98 = arith.divf %96, %97 : vector<16x128xf32>
    %99 = arith.mulf %93, %98 : vector<16x128xf32>
    %c2_45 = arith.constant 2 : index
    %c0_46 = arith.constant 0 : index
    %100 = vector.load %arg10[%c2_45, %c0_46] : memref<20x128xf32, #tpu.memory_space<vmem>>, vector<16x128xf32>
    tpu.vector_store %arg10[%c2_45, %c0_46], %99 {strides = array<i32>} : memref<20x128xf32, #tpu.memory_space<vmem>>, vector<16x128xf32>,
    %c1_47 = arith.constant 1 : index
    %c0_48 = arith.constant 0 : index
    %c0_49 = arith.constant 0 : index
    %101 = vector.load %arg2[%c1_47, %c0_48, %c0_49] : memref<4x5x128xf32, #tpu.memory_space<vmem>>, vector<1x5x128xf32>
    %102 = vector.shape_cast %101 : vector<1x5x128xf32> to vector<5x128xf32>
    %c0_50 = arith.constant 0 : index
    %c0_51 = arith.constant 0 : index
    %103 = vector.load %arg10[%c0_50, %c0_51] : memref<20x128xf32, #tpu.memory_space<vmem>>, vector<16x128xf32>
    %104 = vector.extract_strided_slice %102 {offsets = [0, 0], sizes = [1, 128], strides = [1, 1]} : vector<5x128xf32> to vector<1x128xf32>
    %105 = vector.shape_cast %104 : vector<1x128xf32> to vector<128xf32>
    %106 = vector.shape_cast %105 : vector<128xf32> to vector<1x128xf32>
    %107 = vector.broadcast %106 : vector<1x128xf32> to vector<16x128xf32>
    %108 = arith.mulf %103, %107 : vector<16x128xf32>
    %c1_52 = arith.constant 1 : index
    %c0_53 = arith.constant 0 : index
    %109 = vector.load %arg10[%c1_52, %c0_53] : memref<20x128xf32, #tpu.memory_space<vmem>>, vector<16x128xf32>
    %110 = vector.extract_strided_slice %102 {offsets = [1, 0], sizes = [1, 128], strides = [1, 1]} : vector<5x128xf32> to vector<1x128xf32>
    %111 = vector.shape_cast %110 : vector<1x128xf32> to vector<128xf32>
    %112 = vector.shape_cast %111 : vector<128xf32> to vector<1x128xf32>
    %113 = vector.broadcast %112 : vector<1x128xf32> to vector<16x128xf32>
    %114 = arith.mulf %109, %113 : vector<16x128xf32>
    %115 = arith.addf %108, %114 : vector<16x128xf32>
    %c2_54 = arith.constant 2 : index
    %c0_55 = arith.constant 0 : index
    %116 = vector.load %arg10[%c2_54, %c0_55] : memref<20x128xf32, #tpu.memory_space<vmem>>, vector<16x128xf32>
    %117 = vector.extract_strided_slice %102 {offsets = [2, 0], sizes = [1, 128], strides = [1, 1]} : vector<5x128xf32> to vector<1x128xf32>
    %118 = vector.shape_cast %117 : vector<1x128xf32> to vector<128xf32>
    %119 = vector.shape_cast %118 : vector<128xf32> to vector<1x128xf32>
    %120 = vector.broadcast %119 : vector<1x128xf32> to vector<16x128xf32>
    %121 = arith.mulf %116, %120 : vector<16x128xf32>
    %122 = arith.addf %115, %121 : vector<16x128xf32>
    %c3_56 = arith.constant 3 : index
    %c0_57 = arith.constant 0 : index
    %123 = vector.load %arg10[%c3_56, %c0_57] : memref<20x128xf32, #tpu.memory_space<vmem>>, vector<16x128xf32>
    %124 = vector.extract_strided_slice %102 {offsets = [3, 0], sizes = [1, 128], strides = [1, 1]} : vector<5x128xf32> to vector<1x128xf32>
    %125 = vector.shape_cast %124 : vector<1x128xf32> to vector<128xf32>
    %126 = vector.shape_cast %125 : vector<128xf32> to vector<1x128xf32>
    %127 = vector.broadcast %126 : vector<1x128xf32> to vector<16x128xf32>
    %128 = arith.mulf %123, %127 : vector<16x128xf32>
    %129 = arith.addf %122, %128 : vector<16x128xf32>
    %c4_58 = arith.constant 4 : index
    %c0_59 = arith.constant 0 : index
    %130 = vector.load %arg10[%c4_58, %c0_59] : memref<20x128xf32, #tpu.memory_space<vmem>>, vector<16x128xf32>
    %131 = vector.extract_strided_slice %102 {offsets = [4, 0], sizes = [1, 128], strides = [1, 1]} : vector<5x128xf32> to vector<1x128xf32>
    %132 = vector.shape_cast %131 : vector<1x128xf32> to vector<128xf32>
    %133 = vector.shape_cast %132 : vector<128xf32> to vector<1x128xf32>
    %134 = vector.broadcast %133 : vector<1x128xf32> to vector<16x128xf32>
    %135 = arith.mulf %130, %134 : vector<16x128xf32>
    %136 = arith.addf %129, %135 : vector<16x128xf32>
    %c1_60 = arith.constant 1 : index
    %c0_61 = arith.constant 0 : index
    %c0_62 = arith.constant 0 : index
    %137 = vector.load %arg3[%c1_60, %c0_61, %c0_62] : memref<4x128x128xbf16, #tpu.memory_space<vmem>>, vector<1x128x128xbf16>
    %138 = vector.shape_cast %137 : vector<1x128x128xbf16> to vector<128x128xbf16>
    %c1_63 = arith.constant 1 : index
    %c0_64 = arith.constant 0 : index
    %c0_65 = arith.constant 0 : index
    %139 = vector.load %arg4[%c1_63, %c0_64, %c0_65] : memref<4x1x128xf32, #tpu.memory_space<vmem>>, vector<1x1x128xf32>
    %140 = vector.shape_cast %139 : vector<1x1x128xf32> to vector<1x128xf32>
    %141 = arith.truncf %136 : vector<16x128xf32> to vector<16x128xbf16>
    %cst_66 = arith.constant dense<0.000000e+00> : vector<16x128xf32>
    %142 = tpu.matmul %141, %138, %cst_66 {dimension_numbers = #tpu.dot_dimension_numbers<[1], [0], [0], [1], [0, 0, 1, 1], [], []>} : vector<16x128xbf16>, vector<128x128xbf16>, vector<16x128xf32> -> vector<16x128xf32>
    %143 = vector.broadcast %140 : vector<1x128xf32> to vector<16x128xf32>
    %144 = arith.addf %142, %143 : vector<16x128xf32>
    %145 = arith.negf %144 : vector<16x128xf32>
    %146 = math.exp %145 : vector<16x128xf32>
    %cst_67 = arith.constant 1.000000e+00 : f32
    %147 = vector.broadcast %cst_67 : f32 to vector<16x128xf32>
    %148 = arith.addf %147, %146 : vector<16x128xf32>
    %149 = arith.divf %147, %148 : vector<16x128xf32>
    %150 = arith.mulf %144, %149 : vector<16x128xf32>
    %c2_68 = arith.constant 2 : index
    %c0_69 = arith.constant 0 : index
    %151 = vector.load %arg10[%c2_68, %c0_69] : memref<20x128xf32, #tpu.memory_space<vmem>>, vector<16x128xf32>
    tpu.vector_store %arg10[%c2_68, %c0_69], %150 {strides = array<i32>} : memref<20x128xf32, #tpu.memory_space<vmem>>, vector<16x128xf32>,
    %c2_70 = arith.constant 2 : index
    %c0_71 = arith.constant 0 : index
    %c0_72 = arith.constant 0 : index
    %152 = vector.load %arg2[%c2_70, %c0_71, %c0_72] : memref<4x5x128xf32, #tpu.memory_space<vmem>>, vector<1x5x128xf32>
    %153 = vector.shape_cast %152 : vector<1x5x128xf32> to vector<5x128xf32>
    %c0_73 = arith.constant 0 : index
    %c0_74 = arith.constant 0 : index
    %154 = vector.load %arg10[%c0_73, %c0_74] : memref<20x128xf32, #tpu.memory_space<vmem>>, vector<16x128xf32>
    %155 = vector.extract_strided_slice %153 {offsets = [0, 0], sizes = [1, 128], strides = [1, 1]} : vector<5x128xf32> to vector<1x128xf32>
    %156 = vector.shape_cast %155 : vector<1x128xf32> to vector<128xf32>
    %157 = vector.shape_cast %156 : vector<128xf32> to vector<1x128xf32>
    %158 = vector.broadcast %157 : vector<1x128xf32> to vector<16x128xf32>
    %159 = arith.mulf %154, %158 : vector<16x128xf32>
    %c1_75 = arith.constant 1 : index
    %c0_76 = arith.constant 0 : index
    %160 = vector.load %arg10[%c1_75, %c0_76] : memref<20x128xf32, #tpu.memory_space<vmem>>, vector<16x128xf32>
    %161 = vector.extract_strided_slice %153 {offsets = [1, 0], sizes = [1, 128], strides = [1, 1]} : vector<5x128xf32> to vector<1x128xf32>
    %162 = vector.shape_cast %161 : vector<1x128xf32> to vector<128xf32>
    %163 = vector.shape_cast %162 : vector<128xf32> to vector<1x128xf32>
    %164 = vector.broadcast %163 : vector<1x128xf32> to vector<16x128xf32>
    %165 = arith.mulf %160, %164 : vector<16x128xf32>
    %166 = arith.addf %159, %165 : vector<16x128xf32>
    %c2_77 = arith.constant 2 : index
    %c0_78 = arith.constant 0 : index
    %167 = vector.load %arg10[%c2_77, %c0_78] : memref<20x128xf32, #tpu.memory_space<vmem>>, vector<16x128xf32>
    %168 = vector.extract_strided_slice %153 {offsets = [2, 0], sizes = [1, 128], strides = [1, 1]} : vector<5x128xf32> to vector<1x128xf32>
    %169 = vector.shape_cast %168 : vector<1x128xf32> to vector<128xf32>
    %170 = vector.shape_cast %169 : vector<128xf32> to vector<1x128xf32>
    %171 = vector.broadcast %170 : vector<1x128xf32> to vector<16x128xf32>
    %172 = arith.mulf %167, %171 : vector<16x128xf32>
    %173 = arith.addf %166, %172 : vector<16x128xf32>
    %c3_79 = arith.constant 3 : index
    %c0_80 = arith.constant 0 : index
    %174 = vector.load %arg10[%c3_79, %c0_80] : memref<20x128xf32, #tpu.memory_space<vmem>>, vector<16x128xf32>
    %175 = vector.extract_strided_slice %153 {offsets = [3, 0], sizes = [1, 128], strides = [1, 1]} : vector<5x128xf32> to vector<1x128xf32>
    %176 = vector.shape_cast %175 : vector<1x128xf32> to vector<128xf32>
    %177 = vector.shape_cast %176 : vector<128xf32> to vector<1x128xf32>
    %178 = vector.broadcast %177 : vector<1x128xf32> to vector<16x128xf32>
    %179 = arith.mulf %174, %178 : vector<16x128xf32>
    %180 = arith.addf %173, %179 : vector<16x128xf32>
    %c4_81 = arith.constant 4 : index
    %c0_82 = arith.constant 0 : index
    %181 = vector.load %arg10[%c4_81, %c0_82] : memref<20x128xf32, #tpu.memory_space<vmem>>, vector<16x128xf32>
    %182 = vector.extract_strided_slice %153 {offsets = [4, 0], sizes = [1, 128], strides = [1, 1]} : vector<5x128xf32> to vector<1x128xf32>
    %183 = vector.shape_cast %182 : vector<1x128xf32> to vector<128xf32>
    %184 = vector.shape_cast %183 : vector<128xf32> to vector<1x128xf32>
    %185 = vector.broadcast %184 : vector<1x128xf32> to vector<16x128xf32>
    %186 = arith.mulf %181, %185 : vector<16x128xf32>
    %187 = arith.addf %180, %186 : vector<16x128xf32>
    %c2_83 = arith.constant 2 : index
    %c0_84 = arith.constant 0 : index
    %c0_85 = arith.constant 0 : index
    %188 = vector.load %arg3[%c2_83, %c0_84, %c0_85] : memref<4x128x128xbf16, #tpu.memory_space<vmem>>, vector<1x128x128xbf16>
    %189 = vector.shape_cast %188 : vector<1x128x128xbf16> to vector<128x128xbf16>
    %c2_86 = arith.constant 2 : index
    %c0_87 = arith.constant 0 : index
    %c0_88 = arith.constant 0 : index
    %190 = vector.load %arg4[%c2_86, %c0_87, %c0_88] : memref<4x1x128xf32, #tpu.memory_space<vmem>>, vector<1x1x128xf32>
    %191 = vector.shape_cast %190 : vector<1x1x128xf32> to vector<1x128xf32>
    %192 = arith.truncf %187 : vector<16x128xf32> to vector<16x128xbf16>
    %cst_89 = arith.constant dense<0.000000e+00> : vector<16x128xf32>
    %193 = tpu.matmul %192, %189, %cst_89 {dimension_numbers = #tpu.dot_dimension_numbers<[1], [0], [0], [1], [0, 0, 1, 1], [], []>} : vector<16x128xbf16>, vector<128x128xbf16>, vector<16x128xf32> -> vector<16x128xf32>
    %194 = vector.broadcast %191 : vector<1x128xf32> to vector<16x128xf32>
    %195 = arith.addf %193, %194 : vector<16x128xf32>
    %196 = arith.negf %195 : vector<16x128xf32>
    %197 = math.exp %196 : vector<16x128xf32>
    %cst_90 = arith.constant 1.000000e+00 : f32
    %198 = vector.broadcast %cst_90 : f32 to vector<16x128xf32>
    %199 = arith.addf %198, %197 : vector<16x128xf32>
    %200 = arith.divf %198, %199 : vector<16x128xf32>
    %201 = arith.mulf %195, %200 : vector<16x128xf32>
    %c2_91 = arith.constant 2 : index
    %c0_92 = arith.constant 0 : index
    %202 = vector.load %arg10[%c2_91, %c0_92] : memref<20x128xf32, #tpu.memory_space<vmem>>, vector<16x128xf32>
    tpu.vector_store %arg10[%c2_91, %c0_92], %201 {strides = array<i32>} : memref<20x128xf32, #tpu.memory_space<vmem>>, vector<16x128xf32>,
    %c2_93 = arith.constant 2 : index
    %c0_94 = arith.constant 0 : index
    %203 = vector.load %arg10[%c2_93, %c0_94] : memref<20x128xf32, #tpu.memory_space<vmem>>, vector<16x128xf32>
    %cst_95 = arith.constant 6.250000e-02 : f32
    %204 = vector.broadcast %cst_95 : f32 to vector<1x16xf32>
    %cst_96 = arith.constant dense<0.000000e+00> : vector<1x128xf32>
    %205 = tpu.matmul %204, %203, %cst_96 {dimension_numbers = #tpu.dot_dimension_numbers<[1], [0], [0], [1], [0, 0, 1, 1], [], []>} : vector<1x16xf32>, vector<16x128xf32>, vector<1x128xf32> -> vector<1x128xf32>
    %c0_97 = arith.constant 0 : index
    %c0_98 = arith.constant 0 : index
    %206 = vector.load %arg5[%c0_97, %c0_98] : memref<128x128xf32, #tpu.memory_space<vmem>>, vector<128x128xf32>
    %cst_99 = arith.constant dense<0.000000e+00> : vector<1x128xf32>
    %207 = tpu.matmul %205, %206, %cst_99 {dimension_numbers = #tpu.dot_dimension_numbers<[1], [0], [0], [1], [0, 0, 1, 1], [], []>} : vector<1x128xf32>, vector<128x128xf32>, vector<1x128xf32> -> vector<1x128xf32>
    %c0_100 = arith.constant 0 : index
    %c0_101 = arith.constant 0 : index
    %208 = vector.load %arg6[%c0_100, %c0_101] : memref<1x128xf32, #tpu.memory_space<vmem>>, vector<1x128xf32>
    %209 = arith.addf %207, %208 : vector<1x128xf32>
    %210 = arith.negf %209 : vector<1x128xf32>
    %211 = math.exp %210 : vector<1x128xf32>
    %cst_102 = arith.constant 1.000000e+00 : f32
    %212 = vector.broadcast %cst_102 : f32 to vector<1x128xf32>
    %213 = arith.addf %212, %211 : vector<1x128xf32>
    %214 = arith.divf %212, %213 : vector<1x128xf32>
    %215 = arith.mulf %209, %214 : vector<1x128xf32>
    %c0_103 = arith.constant 0 : index
    %c0_104 = arith.constant 0 : index
    %216 = vector.load %arg7[%c0_103, %c0_104] : memref<128x128xf32, #tpu.memory_space<vmem>>, vector<128x128xf32>
    %cst_105 = arith.constant dense<0.000000e+00> : vector<1x128xf32>
    %217 = tpu.matmul %215, %216, %cst_105 {dimension_numbers = #tpu.dot_dimension_numbers<[1], [0], [0], [1], [0, 0, 1, 1], [], []>} : vector<1x128xf32>, vector<128x128xf32>, vector<1x128xf32> -> vector<1x128xf32>
    %c0_106 = arith.constant 0 : index
    %c0_107 = arith.constant 0 : index
    %218 = vector.load %arg8[%c0_106, %c0_107] : memref<1x128xf32, #tpu.memory_space<vmem>>, vector<1x128xf32>
    %219 = arith.addf %217, %218 : vector<1x128xf32>
    %220 = arith.negf %219 : vector<1x128xf32>
    %221 = math.exp %220 : vector<1x128xf32>
    %cst_108 = arith.constant 1.000000e+00 : f32
    %222 = vector.broadcast %cst_108 : f32 to vector<1x128xf32>
    %223 = arith.addf %222, %221 : vector<1x128xf32>
    %224 = arith.divf %222, %223 : vector<1x128xf32>
    %225 = vector.broadcast %224 : vector<1x128xf32> to vector<16x128xf32>
    %226 = arith.mulf %203, %225 : vector<16x128xf32>
    %c0_109 = arith.constant 0 : index
    %c0_110 = arith.constant 0 : index
    %227 = vector.load %arg11[%c0_109, %c0_110] : memref<16x128xf32, #tpu.memory_space<vmem>>, vector<16x128xf32>
    %228 = arith.addf %226, %227 : vector<16x128xf32>
    %229 = arith.negf %228 : vector<16x128xf32>
    %230 = math.exp %229 : vector<16x128xf32>
    %cst_111 = arith.constant 1.000000e+00 : f32
    %231 = vector.broadcast %cst_111 : f32 to vector<16x128xf32>
    %232 = arith.addf %231, %230 : vector<16x128xf32>
    %233 = arith.divf %231, %232 : vector<16x128xf32>
    %234 = arith.mulf %228, %233 : vector<16x128xf32>
    %235 = vector.extract_strided_slice %234 {offsets = [0, 0], sizes = [16, 8], strides = [1, 1]} : vector<16x128xf32> to vector<16x8xf32>
    %c0_112 = arith.constant 0 : index
    %c0_113 = arith.constant 0 : index
    %c0_114 = arith.constant 0 : index
    %236 = vector.load %arg9[%c0_112, %c0_113, %c0_114] : memref<1x16x8xf32, #tpu.memory_space<vmem>>, vector<1x16x8xf32>
    %237 = vector.shape_cast %236 : vector<1x16x8xf32> to vector<16x8xf32>
    %238 = vector.shape_cast %235 : vector<16x8xf32> to vector<1x16x8xf32>
    tpu.vector_store %arg9[%c0_112, %c0_113, %c0_114], %238 {strides = array<i32>} : memref<1x16x8xf32, #tpu.memory_space<vmem>>, vector<1x16x8xf32>,
    return
  }
  func.func @transform_0(%arg0: i32) -> (i32, i32, i32) {
    %c0_i32 = arith.constant 0 : i32
    %c0_i32_0 = arith.constant 0 : i32
    %c0_i32_1 = arith.constant 0 : i32
    return %arg0, %c0_i32, %c0_i32_0 : i32, i32, i32
  }
  func.func @transform_1(%arg0: i32) -> (i32, i32, i32) {
    %c0_i32 = arith.constant 0 : i32
    %c0_i32_0 = arith.constant 0 : i32
    %c0_i32_1 = arith.constant 0 : i32
    %c0_i32_2 = arith.constant 0 : i32
    return %c0_i32, %c0_i32_0, %c0_i32_1 : i32, i32, i32
  }
  func.func @transform_2(%arg0: i32) -> (i32, i32, i32) {
    %c0_i32 = arith.constant 0 : i32
    %c0_i32_0 = arith.constant 0 : i32
    %c0_i32_1 = arith.constant 0 : i32
    %c0_i32_2 = arith.constant 0 : i32
    return %c0_i32, %c0_i32_0, %c0_i32_1 : i32, i32, i32
  }
  func.func @transform_3(%arg0: i32) -> (i32, i32, i32) {
    %c0_i32 = arith.constant 0 : i32
    %c0_i32_0 = arith.constant 0 : i32
    %c0_i32_1 = arith.constant 0 : i32
    %c0_i32_2 = arith.constant 0 : i32
    return %c0_i32, %c0_i32_0, %c0_i32_1 : i32, i32, i32
  }
  func.func @transform_4(%arg0: i32) -> (i32, i32) {
    %c0_i32 = arith.constant 0 : i32
    %c0_i32_0 = arith.constant 0 : i32
    %c0_i32_1 = arith.constant 0 : i32
    return %c0_i32, %c0_i32_0 : i32, i32
  }
  func.func @transform_5(%arg0: i32) -> (i32, i32) {
    %c0_i32 = arith.constant 0 : i32
    %c0_i32_0 = arith.constant 0 : i32
    %c0_i32_1 = arith.constant 0 : i32
    return %c0_i32, %c0_i32_0 : i32, i32
  }
  func.func @transform_6(%arg0: i32) -> (i32, i32) {
    %c0_i32 = arith.constant 0 : i32
    %c0_i32_0 = arith.constant 0 : i32
    %c0_i32_1 = arith.constant 0 : i32
    return %c0_i32, %c0_i32_0 : i32, i32
  }
  func.func @transform_7(%arg0: i32) -> (i32, i32) {
    %c0_i32 = arith.constant 0 : i32
    %c0_i32_0 = arith.constant 0 : i32
    %c0_i32_1 = arith.constant 0 : i32
    return %c0_i32, %c0_i32_0 : i32, i32
  }
  func.func @transform_8(%arg0: i32) -> (i32, i32, i32) {
    %c0_i32 = arith.constant 0 : i32
    %c0_i32_0 = arith.constant 0 : i32
    %c0_i32_1 = arith.constant 0 : i32
    return %arg0, %c0_i32, %c0_i32_0 : i32, i32, i32
  }
}

module attributes {stable_mosaic.version = 11 : i64} {
  func.func @kernel(%arg0: i32, %arg1: memref<1x16x8xf32, #tpu.memory_space<vmem>>, %arg2: memref<4x5x128xf32, #tpu.memory_space<vmem>>, %arg3: memref<4x128x128xbf16, #tpu.memory_space<vmem>>, %arg4: memref<4x1x128xf32, #tpu.memory_space<vmem>>, %arg5: memref<128x128xf32, #tpu.memory_space<vmem>>, %arg6: memref<1x128xf32, #tpu.memory_space<vmem>>, %arg7: memref<128x128xf32, #tpu.memory_space<vmem>>, %arg8: memref<1x128xf32, #tpu.memory_space<vmem>>, %arg9: memref<1x16x8xf32, #tpu.memory_space<vmem>>, %arg10: memref<20x128xf32, #tpu.memory_space<vmem>>, %arg11: memref<16x128xf32, #tpu.memory_space<vmem>>) attributes {dimension_semantics = [#tpu.dimension_semantics<parallel>], iteration_bounds = array<i64: 2>, scalar_prefetch = 0 : i64, scratch_operands = 2 : i64, tpu.core_type = #tpu.core_type<tc>, window_params = [{transform_indices = @transform_0, window_bounds = array<i64: 1, 16, 8>}, {pipeline_mode = #tpu.pipeline_mode<synchronous>, transform_indices = @transform_1, window_bounds = array<i64: 4, 5, 128>}, {pipeline_mode = #tpu.pipeline_mode<synchronous>, transform_indices = @transform_2, window_bounds = array<i64: 4, 128, 128>}, {pipeline_mode = #tpu.pipeline_mode<synchronous>, transform_indices = @transform_3, window_bounds = array<i64: 4, 1, 128>}, {pipeline_mode = #tpu.pipeline_mode<synchronous>, transform_indices = @transform_4, window_bounds = array<i64: 128, 128>}, {pipeline_mode = #tpu.pipeline_mode<synchronous>, transform_indices = @transform_5, window_bounds = array<i64: 1, 128>}, {pipeline_mode = #tpu.pipeline_mode<synchronous>, transform_indices = @transform_6, window_bounds = array<i64: 128, 128>}, {pipeline_mode = #tpu.pipeline_mode<synchronous>, transform_indices = @transform_7, window_bounds = array<i64: 1, 128>}, {transform_indices = @transform_8, window_bounds = array<i64: 1, 16, 8>}]} {
    %cst = arith.constant 0.000000e+00 : f32
    %0 = vector.broadcast %cst : f32 to vector<20x128xf32>
    %c0 = arith.constant 0 : index
    %c0_0 = arith.constant 0 : index
    %1 = vector.load %arg10[%c0, %c0_0] : memref<20x128xf32, #tpu.memory_space<vmem>>, vector<20x128xf32>
    tpu.vector_store %arg10[%c0, %c0_0], %0 {strides = array<i32>} : memref<20x128xf32, #tpu.memory_space<vmem>>, vector<20x128xf32>,
    %c0_1 = arith.constant 0 : index
    %c0_2 = arith.constant 0 : index
    %c0_3 = arith.constant 0 : index
    %2 = vector.load %arg1[%c0_1, %c0_2, %c0_3] : memref<1x16x8xf32, #tpu.memory_space<vmem>>, vector<1x16x8xf32>
    %3 = vector.shape_cast %2 : vector<1x16x8xf32> to vector<16x8xf32>
    %c2 = arith.constant 2 : index
    %c0_4 = arith.constant 0 : index
    %4 = vector.load %arg10[%c2, %c0_4] : memref<20x128xf32, #tpu.memory_space<vmem>>, vector<16x8xf32>
    tpu.vector_store %arg10[%c2, %c0_4], %3 {strides = array<i32>} : memref<20x128xf32, #tpu.memory_space<vmem>>, vector<16x8xf32>,
    %c3 = arith.constant 3 : index
    %c0_5 = arith.constant 0 : index
    %c0_6 = arith.constant 0 : index
    %5 = vector.load %arg2[%c3, %c0_5, %c0_6] : memref<4x5x128xf32, #tpu.memory_space<vmem>>, vector<1x5x128xf32>
    %6 = vector.shape_cast %5 : vector<1x5x128xf32> to vector<5x128xf32>
    %c0_7 = arith.constant 0 : index
    %c0_8 = arith.constant 0 : index
    %7 = vector.load %arg10[%c0_7, %c0_8] : memref<20x128xf32, #tpu.memory_space<vmem>>, vector<16x128xf32>
    %8 = vector.extract_strided_slice %6 {offsets = [0, 0], sizes = [1, 128], strides = [1, 1]} : vector<5x128xf32> to vector<1x128xf32>
    %9 = vector.shape_cast %8 : vector<1x128xf32> to vector<128xf32>
    %10 = vector.shape_cast %9 : vector<128xf32> to vector<1x128xf32>
    %11 = vector.broadcast %10 : vector<1x128xf32> to vector<16x128xf32>
    %12 = arith.mulf %7, %11 : vector<16x128xf32>
    %c1 = arith.constant 1 : index
    %c0_9 = arith.constant 0 : index
    %13 = vector.load %arg10[%c1, %c0_9] : memref<20x128xf32, #tpu.memory_space<vmem>>, vector<16x128xf32>
    %14 = vector.extract_strided_slice %6 {offsets = [1, 0], sizes = [1, 128], strides = [1, 1]} : vector<5x128xf32> to vector<1x128xf32>
    %15 = vector.shape_cast %14 : vector<1x128xf32> to vector<128xf32>
    %16 = vector.shape_cast %15 : vector<128xf32> to vector<1x128xf32>
    %17 = vector.broadcast %16 : vector<1x128xf32> to vector<16x128xf32>
    %18 = arith.mulf %13, %17 : vector<16x128xf32>
    %19 = arith.addf %12, %18 : vector<16x128xf32>
    %c2_10 = arith.constant 2 : index
    %c0_11 = arith.constant 0 : index
    %20 = vector.load %arg10[%c2_10, %c0_11] : memref<20x128xf32, #tpu.memory_space<vmem>>, vector<16x128xf32>
    %21 = vector.extract_strided_slice %6 {offsets = [2, 0], sizes = [1, 128], strides = [1, 1]} : vector<5x128xf32> to vector<1x128xf32>
    %22 = vector.shape_cast %21 : vector<1x128xf32> to vector<128xf32>
    %23 = vector.shape_cast %22 : vector<128xf32> to vector<1x128xf32>
    %24 = vector.broadcast %23 : vector<1x128xf32> to vector<16x128xf32>
    %25 = arith.mulf %20, %24 : vector<16x128xf32>
    %26 = arith.addf %19, %25 : vector<16x128xf32>
    %c3_12 = arith.constant 3 : index
    %c0_13 = arith.constant 0 : index
    %27 = vector.load %arg10[%c3_12, %c0_13] : memref<20x128xf32, #tpu.memory_space<vmem>>, vector<16x128xf32>
    %28 = vector.extract_strided_slice %6 {offsets = [3, 0], sizes = [1, 128], strides = [1, 1]} : vector<5x128xf32> to vector<1x128xf32>
    %29 = vector.shape_cast %28 : vector<1x128xf32> to vector<128xf32>
    %30 = vector.shape_cast %29 : vector<128xf32> to vector<1x128xf32>
    %31 = vector.broadcast %30 : vector<1x128xf32> to vector<16x128xf32>
    %32 = arith.mulf %27, %31 : vector<16x128xf32>
    %33 = arith.addf %26, %32 : vector<16x128xf32>
    %c4 = arith.constant 4 : index
    %c0_14 = arith.constant 0 : index
    %34 = vector.load %arg10[%c4, %c0_14] : memref<20x128xf32, #tpu.memory_space<vmem>>, vector<16x128xf32>
    %35 = vector.extract_strided_slice %6 {offsets = [4, 0], sizes = [1, 128], strides = [1, 1]} : vector<5x128xf32> to vector<1x128xf32>
    %36 = vector.shape_cast %35 : vector<1x128xf32> to vector<128xf32>
    %37 = vector.shape_cast %36 : vector<128xf32> to vector<1x128xf32>
    %38 = vector.broadcast %37 : vector<1x128xf32> to vector<16x128xf32>
    %39 = arith.mulf %34, %38 : vector<16x128xf32>
    %40 = arith.addf %33, %39 : vector<16x128xf32>
    %c3_15 = arith.constant 3 : index
    %c0_16 = arith.constant 0 : index
    %c0_17 = arith.constant 0 : index
    %41 = vector.load %arg3[%c3_15, %c0_16, %c0_17] : memref<4x128x128xbf16, #tpu.memory_space<vmem>>, vector<1x128x128xbf16>
    %42 = vector.shape_cast %41 : vector<1x128x128xbf16> to vector<128x128xbf16>
    %c3_18 = arith.constant 3 : index
    %c0_19 = arith.constant 0 : index
    %c0_20 = arith.constant 0 : index
    %43 = vector.load %arg4[%c3_18, %c0_19, %c0_20] : memref<4x1x128xf32, #tpu.memory_space<vmem>>, vector<1x1x128xf32>
    %44 = vector.shape_cast %43 : vector<1x1x128xf32> to vector<1x128xf32>
    %45 = arith.truncf %40 : vector<16x128xf32> to vector<16x128xbf16>
    %cst_21 = arith.constant dense<0.000000e+00> : vector<16x128xf32>
    %46 = tpu.matmul %45, %42, %cst_21 {dimension_numbers = #tpu.dot_dimension_numbers<[1], [0], [0], [1], [0, 0, 1, 1], [], []>} : vector<16x128xbf16>, vector<128x128xbf16>, vector<16x128xf32> -> vector<16x128xf32>
    %47 = vector.broadcast %44 : vector<1x128xf32> to vector<16x128xf32>
    %48 = arith.addf %46, %47 : vector<16x128xf32>
    %c0_22 = arith.constant 0 : index
    %c0_23 = arith.constant 0 : index
    %49 = vector.load %arg11[%c0_22, %c0_23] : memref<16x128xf32, #tpu.memory_space<vmem>>, vector<16x128xf32>
    tpu.vector_store %arg11[%c0_22, %c0_23], %48 {strides = array<i32>} : memref<16x128xf32, #tpu.memory_space<vmem>>, vector<16x128xf32>,
    %c0_24 = arith.constant 0 : index
    %c0_25 = arith.constant 0 : index
    %c0_26 = arith.constant 0 : index
    %50 = vector.load %arg2[%c0_24, %c0_25, %c0_26] : memref<4x5x128xf32, #tpu.memory_space<vmem>>, vector<1x5x128xf32>
    %51 = vector.shape_cast %50 : vector<1x5x128xf32> to vector<5x128xf32>
    %c0_27 = arith.constant 0 : index
    %c0_28 = arith.constant 0 : index
    %52 = vector.load %arg10[%c0_27, %c0_28] : memref<20x128xf32, #tpu.memory_space<vmem>>, vector<16x128xf32>
    %53 = vector.extract_strided_slice %51 {offsets = [0, 0], sizes = [1, 128], strides = [1, 1]} : vector<5x128xf32> to vector<1x128xf32>
    %54 = vector.shape_cast %53 : vector<1x128xf32> to vector<128xf32>
    %55 = vector.shape_cast %54 : vector<128xf32> to vector<1x128xf32>
    %56 = vector.broadcast %55 : vector<1x128xf32> to vector<16x128xf32>
    %57 = arith.mulf %52, %56 : vector<16x128xf32>
    %c1_29 = arith.constant 1 : index
    %c0_30 = arith.constant 0 : index
    %58 = vector.load %arg10[%c1_29, %c0_30] : memref<20x128xf32, #tpu.memory_space<vmem>>, vector<16x128xf32>
    %59 = vector.extract_strided_slice %51 {offsets = [1, 0], sizes = [1, 128], strides = [1, 1]} : vector<5x128xf32> to vector<1x128xf32>
    %60 = vector.shape_cast %59 : vector<1x128xf32> to vector<128xf32>
    %61 = vector.shape_cast %60 : vector<128xf32> to vector<1x128xf32>
    %62 = vector.broadcast %61 : vector<1x128xf32> to vector<16x128xf32>
    %63 = arith.mulf %58, %62 : vector<16x128xf32>
    %64 = arith.addf %57, %63 : vector<16x128xf32>
    %c2_31 = arith.constant 2 : index
    %c0_32 = arith.constant 0 : index
    %65 = vector.load %arg10[%c2_31, %c0_32] : memref<20x128xf32, #tpu.memory_space<vmem>>, vector<16x128xf32>
    %66 = vector.extract_strided_slice %51 {offsets = [2, 0], sizes = [1, 128], strides = [1, 1]} : vector<5x128xf32> to vector<1x128xf32>
    %67 = vector.shape_cast %66 : vector<1x128xf32> to vector<128xf32>
    %68 = vector.shape_cast %67 : vector<128xf32> to vector<1x128xf32>
    %69 = vector.broadcast %68 : vector<1x128xf32> to vector<16x128xf32>
    %70 = arith.mulf %65, %69 : vector<16x128xf32>
    %71 = arith.addf %64, %70 : vector<16x128xf32>
    %c3_33 = arith.constant 3 : index
    %c0_34 = arith.constant 0 : index
    %72 = vector.load %arg10[%c3_33, %c0_34] : memref<20x128xf32, #tpu.memory_space<vmem>>, vector<16x128xf32>
    %73 = vector.extract_strided_slice %51 {offsets = [3, 0], sizes = [1, 128], strides = [1, 1]} : vector<5x128xf32> to vector<1x128xf32>
    %74 = vector.shape_cast %73 : vector<1x128xf32> to vector<128xf32>
    %75 = vector.shape_cast %74 : vector<128xf32> to vector<1x128xf32>
    %76 = vector.broadcast %75 : vector<1x128xf32> to vector<16x128xf32>
    %77 = arith.mulf %72, %76 : vector<16x128xf32>
    %78 = arith.addf %71, %77 : vector<16x128xf32>
    %c4_35 = arith.constant 4 : index
    %c0_36 = arith.constant 0 : index
    %79 = vector.load %arg10[%c4_35, %c0_36] : memref<20x128xf32, #tpu.memory_space<vmem>>, vector<16x128xf32>
    %80 = vector.extract_strided_slice %51 {offsets = [4, 0], sizes = [1, 128], strides = [1, 1]} : vector<5x128xf32> to vector<1x128xf32>
    %81 = vector.shape_cast %80 : vector<1x128xf32> to vector<128xf32>
    %82 = vector.shape_cast %81 : vector<128xf32> to vector<1x128xf32>
    %83 = vector.broadcast %82 : vector<1x128xf32> to vector<16x128xf32>
    %84 = arith.mulf %79, %83 : vector<16x128xf32>
    %85 = arith.addf %78, %84 : vector<16x128xf32>
    %c0_37 = arith.constant 0 : index
    %c0_38 = arith.constant 0 : index
    %c0_39 = arith.constant 0 : index
    %86 = vector.load %arg3[%c0_37, %c0_38, %c0_39] : memref<4x128x128xbf16, #tpu.memory_space<vmem>>, vector<1x128x128xbf16>
    %87 = vector.shape_cast %86 : vector<1x128x128xbf16> to vector<128x128xbf16>
    %c0_40 = arith.constant 0 : index
    %c0_41 = arith.constant 0 : index
    %c0_42 = arith.constant 0 : index
    %88 = vector.load %arg4[%c0_40, %c0_41, %c0_42] : memref<4x1x128xf32, #tpu.memory_space<vmem>>, vector<1x1x128xf32>
    %89 = vector.shape_cast %88 : vector<1x1x128xf32> to vector<1x128xf32>
    %90 = arith.truncf %85 : vector<16x128xf32> to vector<16x128xbf16>
    %cst_43 = arith.constant dense<0.000000e+00> : vector<16x128xf32>
    %91 = tpu.matmul %90, %87, %cst_43 {dimension_numbers = #tpu.dot_dimension_numbers<[1], [0], [0], [1], [0, 0, 1, 1], [], []>} : vector<16x128xbf16>, vector<128x128xbf16>, vector<16x128xf32> -> vector<16x128xf32>
    %92 = vector.broadcast %89 : vector<1x128xf32> to vector<16x128xf32>
    %93 = arith.addf %91, %92 : vector<16x128xf32>
    %94 = arith.negf %93 : vector<16x128xf32>
    %95 = math.exp %94 : vector<16x128xf32>
    %cst_44 = arith.constant 1.000000e+00 : f32
    %96 = vector.broadcast %cst_44 : f32 to vector<16x128xf32>
    %97 = arith.addf %96, %95 : vector<16x128xf32>
    %98 = arith.divf %96, %97 : vector<16x128xf32>
    %99 = arith.mulf %93, %98 : vector<16x128xf32>
    %c2_45 = arith.constant 2 : index
    %c0_46 = arith.constant 0 : index
    %100 = vector.load %arg10[%c2_45, %c0_46] : memref<20x128xf32, #tpu.memory_space<vmem>>, vector<16x128xf32>
    tpu.vector_store %arg10[%c2_45, %c0_46], %99 {strides = array<i32>} : memref<20x128xf32, #tpu.memory_space<vmem>>, vector<16x128xf32>,
    %c1_47 = arith.constant 1 : index
    %c0_48 = arith.constant 0 : index
    %c0_49 = arith.constant 0 : index
    %101 = vector.load %arg2[%c1_47, %c0_48, %c0_49] : memref<4x5x128xf32, #tpu.memory_space<vmem>>, vector<1x5x128xf32>
    %102 = vector.shape_cast %101 : vector<1x5x128xf32> to vector<5x128xf32>
    %c0_50 = arith.constant 0 : index
    %c0_51 = arith.constant 0 : index
    %103 = vector.load %arg10[%c0_50, %c0_51] : memref<20x128xf32, #tpu.memory_space<vmem>>, vector<16x128xf32>
    %104 = vector.extract_strided_slice %102 {offsets = [0, 0], sizes = [1, 128], strides = [1, 1]} : vector<5x128xf32> to vector<1x128xf32>
    %105 = vector.shape_cast %104 : vector<1x128xf32> to vector<128xf32>
    %106 = vector.shape_cast %105 : vector<128xf32> to vector<1x128xf32>
    %107 = vector.broadcast %106 : vector<1x128xf32> to vector<16x128xf32>
    %108 = arith.mulf %103, %107 : vector<16x128xf32>
    %c1_52 = arith.constant 1 : index
    %c0_53 = arith.constant 0 : index
    %109 = vector.load %arg10[%c1_52, %c0_53] : memref<20x128xf32, #tpu.memory_space<vmem>>, vector<16x128xf32>
    %110 = vector.extract_strided_slice %102 {offsets = [1, 0], sizes = [1, 128], strides = [1, 1]} : vector<5x128xf32> to vector<1x128xf32>
    %111 = vector.shape_cast %110 : vector<1x128xf32> to vector<128xf32>
    %112 = vector.shape_cast %111 : vector<128xf32> to vector<1x128xf32>
    %113 = vector.broadcast %112 : vector<1x128xf32> to vector<16x128xf32>
    %114 = arith.mulf %109, %113 : vector<16x128xf32>
    %115 = arith.addf %108, %114 : vector<16x128xf32>
    %c2_54 = arith.constant 2 : index
    %c0_55 = arith.constant 0 : index
    %116 = vector.load %arg10[%c2_54, %c0_55] : memref<20x128xf32, #tpu.memory_space<vmem>>, vector<16x128xf32>
    %117 = vector.extract_strided_slice %102 {offsets = [2, 0], sizes = [1, 128], strides = [1, 1]} : vector<5x128xf32> to vector<1x128xf32>
    %118 = vector.shape_cast %117 : vector<1x128xf32> to vector<128xf32>
    %119 = vector.shape_cast %118 : vector<128xf32> to vector<1x128xf32>
    %120 = vector.broadcast %119 : vector<1x128xf32> to vector<16x128xf32>
    %121 = arith.mulf %116, %120 : vector<16x128xf32>
    %122 = arith.addf %115, %121 : vector<16x128xf32>
    %c3_56 = arith.constant 3 : index
    %c0_57 = arith.constant 0 : index
    %123 = vector.load %arg10[%c3_56, %c0_57] : memref<20x128xf32, #tpu.memory_space<vmem>>, vector<16x128xf32>
    %124 = vector.extract_strided_slice %102 {offsets = [3, 0], sizes = [1, 128], strides = [1, 1]} : vector<5x128xf32> to vector<1x128xf32>
    %125 = vector.shape_cast %124 : vector<1x128xf32> to vector<128xf32>
    %126 = vector.shape_cast %125 : vector<128xf32> to vector<1x128xf32>
    %127 = vector.broadcast %126 : vector<1x128xf32> to vector<16x128xf32>
    %128 = arith.mulf %123, %127 : vector<16x128xf32>
    %129 = arith.addf %122, %128 : vector<16x128xf32>
    %c4_58 = arith.constant 4 : index
    %c0_59 = arith.constant 0 : index
    %130 = vector.load %arg10[%c4_58, %c0_59] : memref<20x128xf32, #tpu.memory_space<vmem>>, vector<16x128xf32>
    %131 = vector.extract_strided_slice %102 {offsets = [4, 0], sizes = [1, 128], strides = [1, 1]} : vector<5x128xf32> to vector<1x128xf32>
    %132 = vector.shape_cast %131 : vector<1x128xf32> to vector<128xf32>
    %133 = vector.shape_cast %132 : vector<128xf32> to vector<1x128xf32>
    %134 = vector.broadcast %133 : vector<1x128xf32> to vector<16x128xf32>
    %135 = arith.mulf %130, %134 : vector<16x128xf32>
    %136 = arith.addf %129, %135 : vector<16x128xf32>
    %c1_60 = arith.constant 1 : index
    %c0_61 = arith.constant 0 : index
    %c0_62 = arith.constant 0 : index
    %137 = vector.load %arg3[%c1_60, %c0_61, %c0_62] : memref<4x128x128xbf16, #tpu.memory_space<vmem>>, vector<1x128x128xbf16>
    %138 = vector.shape_cast %137 : vector<1x128x128xbf16> to vector<128x128xbf16>
    %c1_63 = arith.constant 1 : index
    %c0_64 = arith.constant 0 : index
    %c0_65 = arith.constant 0 : index
    %139 = vector.load %arg4[%c1_63, %c0_64, %c0_65] : memref<4x1x128xf32, #tpu.memory_space<vmem>>, vector<1x1x128xf32>
    %140 = vector.shape_cast %139 : vector<1x1x128xf32> to vector<1x128xf32>
    %141 = arith.truncf %136 : vector<16x128xf32> to vector<16x128xbf16>
    %cst_66 = arith.constant dense<0.000000e+00> : vector<16x128xf32>
    %142 = tpu.matmul %141, %138, %cst_66 {dimension_numbers = #tpu.dot_dimension_numbers<[1], [0], [0], [1], [0, 0, 1, 1], [], []>} : vector<16x128xbf16>, vector<128x128xbf16>, vector<16x128xf32> -> vector<16x128xf32>
    %143 = vector.broadcast %140 : vector<1x128xf32> to vector<16x128xf32>
    %144 = arith.addf %142, %143 : vector<16x128xf32>
    %145 = arith.negf %144 : vector<16x128xf32>
    %146 = math.exp %145 : vector<16x128xf32>
    %cst_67 = arith.constant 1.000000e+00 : f32
    %147 = vector.broadcast %cst_67 : f32 to vector<16x128xf32>
    %148 = arith.addf %147, %146 : vector<16x128xf32>
    %149 = arith.divf %147, %148 : vector<16x128xf32>
    %150 = arith.mulf %144, %149 : vector<16x128xf32>
    %c2_68 = arith.constant 2 : index
    %c0_69 = arith.constant 0 : index
    %151 = vector.load %arg10[%c2_68, %c0_69] : memref<20x128xf32, #tpu.memory_space<vmem>>, vector<16x128xf32>
    tpu.vector_store %arg10[%c2_68, %c0_69], %150 {strides = array<i32>} : memref<20x128xf32, #tpu.memory_space<vmem>>, vector<16x128xf32>,
    %c2_70 = arith.constant 2 : index
    %c0_71 = arith.constant 0 : index
    %c0_72 = arith.constant 0 : index
    %152 = vector.load %arg2[%c2_70, %c0_71, %c0_72] : memref<4x5x128xf32, #tpu.memory_space<vmem>>, vector<1x5x128xf32>
    %153 = vector.shape_cast %152 : vector<1x5x128xf32> to vector<5x128xf32>
    %c0_73 = arith.constant 0 : index
    %c0_74 = arith.constant 0 : index
    %154 = vector.load %arg10[%c0_73, %c0_74] : memref<20x128xf32, #tpu.memory_space<vmem>>, vector<16x128xf32>
    %155 = vector.extract_strided_slice %153 {offsets = [0, 0], sizes = [1, 128], strides = [1, 1]} : vector<5x128xf32> to vector<1x128xf32>
    %156 = vector.shape_cast %155 : vector<1x128xf32> to vector<128xf32>
    %157 = vector.shape_cast %156 : vector<128xf32> to vector<1x128xf32>
    %158 = vector.broadcast %157 : vector<1x128xf32> to vector<16x128xf32>
    %159 = arith.mulf %154, %158 : vector<16x128xf32>
    %c1_75 = arith.constant 1 : index
    %c0_76 = arith.constant 0 : index
    %160 = vector.load %arg10[%c1_75, %c0_76] : memref<20x128xf32, #tpu.memory_space<vmem>>, vector<16x128xf32>
    %161 = vector.extract_strided_slice %153 {offsets = [1, 0], sizes = [1, 128], strides = [1, 1]} : vector<5x128xf32> to vector<1x128xf32>
    %162 = vector.shape_cast %161 : vector<1x128xf32> to vector<128xf32>
    %163 = vector.shape_cast %162 : vector<128xf32> to vector<1x128xf32>
    %164 = vector.broadcast %163 : vector<1x128xf32> to vector<16x128xf32>
    %165 = arith.mulf %160, %164 : vector<16x128xf32>
    %166 = arith.addf %159, %165 : vector<16x128xf32>
    %c2_77 = arith.constant 2 : index
    %c0_78 = arith.constant 0 : index
    %167 = vector.load %arg10[%c2_77, %c0_78] : memref<20x128xf32, #tpu.memory_space<vmem>>, vector<16x128xf32>
    %168 = vector.extract_strided_slice %153 {offsets = [2, 0], sizes = [1, 128], strides = [1, 1]} : vector<5x128xf32> to vector<1x128xf32>
    %169 = vector.shape_cast %168 : vector<1x128xf32> to vector<128xf32>
    %170 = vector.shape_cast %169 : vector<128xf32> to vector<1x128xf32>
    %171 = vector.broadcast %170 : vector<1x128xf32> to vector<16x128xf32>
    %172 = arith.mulf %167, %171 : vector<16x128xf32>
    %173 = arith.addf %166, %172 : vector<16x128xf32>
    %c3_79 = arith.constant 3 : index
    %c0_80 = arith.constant 0 : index
    %174 = vector.load %arg10[%c3_79, %c0_80] : memref<20x128xf32, #tpu.memory_space<vmem>>, vector<16x128xf32>
    %175 = vector.extract_strided_slice %153 {offsets = [3, 0], sizes = [1, 128], strides = [1, 1]} : vector<5x128xf32> to vector<1x128xf32>
    %176 = vector.shape_cast %175 : vector<1x128xf32> to vector<128xf32>
    %177 = vector.shape_cast %176 : vector<128xf32> to vector<1x128xf32>
    %178 = vector.broadcast %177 : vector<1x128xf32> to vector<16x128xf32>
    %179 = arith.mulf %174, %178 : vector<16x128xf32>
    %180 = arith.addf %173, %179 : vector<16x128xf32>
    %c4_81 = arith.constant 4 : index
    %c0_82 = arith.constant 0 : index
    %181 = vector.load %arg10[%c4_81, %c0_82] : memref<20x128xf32, #tpu.memory_space<vmem>>, vector<16x128xf32>
    %182 = vector.extract_strided_slice %153 {offsets = [4, 0], sizes = [1, 128], strides = [1, 1]} : vector<5x128xf32> to vector<1x128xf32>
    %183 = vector.shape_cast %182 : vector<1x128xf32> to vector<128xf32>
    %184 = vector.shape_cast %183 : vector<128xf32> to vector<1x128xf32>
    %185 = vector.broadcast %184 : vector<1x128xf32> to vector<16x128xf32>
    %186 = arith.mulf %181, %185 : vector<16x128xf32>
    %187 = arith.addf %180, %186 : vector<16x128xf32>
    %c2_83 = arith.constant 2 : index
    %c0_84 = arith.constant 0 : index
    %c0_85 = arith.constant 0 : index
    %188 = vector.load %arg3[%c2_83, %c0_84, %c0_85] : memref<4x128x128xbf16, #tpu.memory_space<vmem>>, vector<1x128x128xbf16>
    %189 = vector.shape_cast %188 : vector<1x128x128xbf16> to vector<128x128xbf16>
    %c2_86 = arith.constant 2 : index
    %c0_87 = arith.constant 0 : index
    %c0_88 = arith.constant 0 : index
    %190 = vector.load %arg4[%c2_86, %c0_87, %c0_88] : memref<4x1x128xf32, #tpu.memory_space<vmem>>, vector<1x1x128xf32>
    %191 = vector.shape_cast %190 : vector<1x1x128xf32> to vector<1x128xf32>
    %192 = arith.truncf %187 : vector<16x128xf32> to vector<16x128xbf16>
    %cst_89 = arith.constant dense<0.000000e+00> : vector<16x128xf32>
    %193 = tpu.matmul %192, %189, %cst_89 {dimension_numbers = #tpu.dot_dimension_numbers<[1], [0], [0], [1], [0, 0, 1, 1], [], []>} : vector<16x128xbf16>, vector<128x128xbf16>, vector<16x128xf32> -> vector<16x128xf32>
    %194 = vector.broadcast %191 : vector<1x128xf32> to vector<16x128xf32>
    %195 = arith.addf %193, %194 : vector<16x128xf32>
    %196 = arith.negf %195 : vector<16x128xf32>
    %197 = math.exp %196 : vector<16x128xf32>
    %cst_90 = arith.constant 1.000000e+00 : f32
    %198 = vector.broadcast %cst_90 : f32 to vector<16x128xf32>
    %199 = arith.addf %198, %197 : vector<16x128xf32>
    %200 = arith.divf %198, %199 : vector<16x128xf32>
    %201 = arith.mulf %195, %200 : vector<16x128xf32>
    %c2_91 = arith.constant 2 : index
    %c0_92 = arith.constant 0 : index
    %202 = vector.load %arg10[%c2_91, %c0_92] : memref<20x128xf32, #tpu.memory_space<vmem>>, vector<16x128xf32>
    tpu.vector_store %arg10[%c2_91, %c0_92], %201 {strides = array<i32>} : memref<20x128xf32, #tpu.memory_space<vmem>>, vector<16x128xf32>,
    %c2_93 = arith.constant 2 : index
    %c0_94 = arith.constant 0 : index
    %203 = vector.load %arg10[%c2_93, %c0_94] : memref<20x128xf32, #tpu.memory_space<vmem>>, vector<16x128xf32>
    %cst_95 = arith.constant 6.250000e-02 : f32
    %204 = vector.broadcast %cst_95 : f32 to vector<1x16xf32>
    %cst_96 = arith.constant dense<0.000000e+00> : vector<1x128xf32>
    %205 = tpu.matmul %204, %203, %cst_96 {dimension_numbers = #tpu.dot_dimension_numbers<[1], [0], [0], [1], [0, 0, 1, 1], [], []>} : vector<1x16xf32>, vector<16x128xf32>, vector<1x128xf32> -> vector<1x128xf32>
    %c0_97 = arith.constant 0 : index
    %c0_98 = arith.constant 0 : index
    %206 = vector.load %arg5[%c0_97, %c0_98] : memref<128x128xf32, #tpu.memory_space<vmem>>, vector<128x128xf32>
    %cst_99 = arith.constant dense<0.000000e+00> : vector<1x128xf32>
    %207 = tpu.matmul %205, %206, %cst_99 {dimension_numbers = #tpu.dot_dimension_numbers<[1], [0], [0], [1], [0, 0, 1, 1], [], []>} : vector<1x128xf32>, vector<128x128xf32>, vector<1x128xf32> -> vector<1x128xf32>
    %c0_100 = arith.constant 0 : index
    %c0_101 = arith.constant 0 : index
    %208 = vector.load %arg6[%c0_100, %c0_101] : memref<1x128xf32, #tpu.memory_space<vmem>>, vector<1x128xf32>
    %209 = arith.addf %207, %208 : vector<1x128xf32>
    %210 = arith.negf %209 : vector<1x128xf32>
    %211 = math.exp %210 : vector<1x128xf32>
    %cst_102 = arith.constant 1.000000e+00 : f32
    %212 = vector.broadcast %cst_102 : f32 to vector<1x128xf32>
    %213 = arith.addf %212, %211 : vector<1x128xf32>
    %214 = arith.divf %212, %213 : vector<1x128xf32>
    %215 = arith.mulf %209, %214 : vector<1x128xf32>
    %c0_103 = arith.constant 0 : index
    %c0_104 = arith.constant 0 : index
    %216 = vector.load %arg7[%c0_103, %c0_104] : memref<128x128xf32, #tpu.memory_space<vmem>>, vector<128x128xf32>
    %cst_105 = arith.constant dense<0.000000e+00> : vector<1x128xf32>
    %217 = tpu.matmul %215, %216, %cst_105 {dimension_numbers = #tpu.dot_dimension_numbers<[1], [0], [0], [1], [0, 0, 1, 1], [], []>} : vector<1x128xf32>, vector<128x128xf32>, vector<1x128xf32> -> vector<1x128xf32>
    %c0_106 = arith.constant 0 : index
    %c0_107 = arith.constant 0 : index
    %218 = vector.load %arg8[%c0_106, %c0_107] : memref<1x128xf32, #tpu.memory_space<vmem>>, vector<1x128xf32>
    %219 = arith.addf %217, %218 : vector<1x128xf32>
    %220 = arith.negf %219 : vector<1x128xf32>
    %221 = math.exp %220 : vector<1x128xf32>
    %cst_108 = arith.constant 1.000000e+00 : f32
    %222 = vector.broadcast %cst_108 : f32 to vector<1x128xf32>
    %223 = arith.addf %222, %221 : vector<1x128xf32>
    %224 = arith.divf %222, %223 : vector<1x128xf32>
    %225 = vector.broadcast %224 : vector<1x128xf32> to vector<16x128xf32>
    %226 = arith.mulf %203, %225 : vector<16x128xf32>
    %c0_109 = arith.constant 0 : index
    %c0_110 = arith.constant 0 : index
    %227 = vector.load %arg11[%c0_109, %c0_110] : memref<16x128xf32, #tpu.memory_space<vmem>>, vector<16x128xf32>
    %228 = arith.addf %226, %227 : vector<16x128xf32>
    %229 = arith.negf %228 : vector<16x128xf32>
    %230 = math.exp %229 : vector<16x128xf32>
    %cst_111 = arith.constant 1.000000e+00 : f32
    %231 = vector.broadcast %cst_111 : f32 to vector<16x128xf32>
    %232 = arith.addf %231, %230 : vector<16x128xf32>
    %233 = arith.divf %231, %232 : vector<16x128xf32>
    %234 = arith.mulf %228, %233 : vector<16x128xf32>
    %235 = vector.extract_strided_slice %234 {offsets = [0, 0], sizes = [16, 8], strides = [1, 1]} : vector<16x128xf32> to vector<16x8xf32>
    %c0_112 = arith.constant 0 : index
    %c0_113 = arith.constant 0 : index
    %c0_114 = arith.constant 0 : index
    %236 = vector.load %arg9[%c0_112, %c0_113, %c0_114] : memref<1x16x8xf32, #tpu.memory_space<vmem>>, vector<1x16x8xf32>
    %237 = vector.shape_cast %236 : vector<1x16x8xf32> to vector<16x8xf32>
    %238 = vector.shape_cast %235 : vector<16x8xf32> to vector<1x16x8xf32>
    tpu.vector_store %arg9[%c0_112, %c0_113, %c0_114], %238 {strides = array<i32>} : memref<1x16x8xf32, #tpu.memory_space<vmem>>, vector<1x16x8xf32>,
    return
  }
  func.func @transform_0(%arg0: i32) -> (i32, i32, i32) {
    %c0_i32 = arith.constant 0 : i32
    %c0_i32_0 = arith.constant 0 : i32
    %c0_i32_1 = arith.constant 0 : i32
    return %arg0, %c0_i32, %c0_i32_0 : i32, i32, i32
  }
  func.func @transform_1(%arg0: i32) -> (i32, i32, i32) {
    %c0_i32 = arith.constant 0 : i32
    %c0_i32_0 = arith.constant 0 : i32
    %c0_i32_1 = arith.constant 0 : i32
    %c0_i32_2 = arith.constant 0 : i32
    return %c0_i32, %c0_i32_0, %c0_i32_1 : i32, i32, i32
  }
  func.func @transform_2(%arg0: i32) -> (i32, i32, i32) {
    %c0_i32 = arith.constant 0 : i32
    %c0_i32_0 = arith.constant 0 : i32
    %c0_i32_1 = arith.constant 0 : i32
    %c0_i32_2 = arith.constant 0 : i32
    return %c0_i32, %c0_i32_0, %c0_i32_1 : i32, i32, i32
  }
  func.func @transform_3(%arg0: i32) -> (i32, i32, i32) {
    %c0_i32 = arith.constant 0 : i32
    %c0_i32_0 = arith.constant 0 : i32
    %c0_i32_1 = arith.constant 0 : i32
    %c0_i32_2 = arith.constant 0 : i32
    return %c0_i32, %c0_i32_0, %c0_i32_1 : i32, i32, i32
  }
  func.func @transform_4(%arg0: i32) -> (i32, i32) {
    %c0_i32 = arith.constant 0 : i32
    %c0_i32_0 = arith.constant 0 : i32
    %c0_i32_1 = arith.constant 0 : i32
    return %c0_i32, %c0_i32_0 : i32, i32
  }
  func.func @transform_5(%arg0: i32) -> (i32, i32) {
    %c0_i32 = arith.constant 0 : i32
    %c0_i32_0 = arith.constant 0 : i32
    %c0_i32_1 = arith.constant 0 : i32
    return %c0_i32, %c0_i32_0 : i32, i32
  }
  func.func @transform_6(%arg0: i32) -> (i32, i32) {
    %c0_i32 = arith.constant 0 : i32
    %c0_i32_0 = arith.constant 0 : i32
    %c0_i32_1 = arith.constant 0 : i32
    return %c0_i32, %c0_i32_0 : i32, i32
  }
  func.func @transform_7(%arg0: i32) -> (i32, i32) {
    %c0_i32 = arith.constant 0 : i32
    %c0_i32_0 = arith.constant 0 : i32
    %c0_i32_1 = arith.constant 0 : i32
    return %c0_i32, %c0_i32_0 : i32, i32
  }
  func.func @transform_8(%arg0: i32) -> (i32, i32, i32) {
    %c0_i32 = arith.constant 0 : i32
    %c0_i32_0 = arith.constant 0 : i32
    %c0_i32_1 = arith.constant 0 : i32
    return %arg0, %c0_i32, %c0_i32_0 : i32, i32, i32
  }
}

module attributes {stable_mosaic.version = 11 : i64} {
  func.func @kernel(%arg0: i32, %arg1: memref<1x16x8xf32, #tpu.memory_space<vmem>>, %arg2: memref<4x5x128xf32, #tpu.memory_space<vmem>>, %arg3: memref<4x128x128xbf16, #tpu.memory_space<vmem>>, %arg4: memref<4x1x128xf32, #tpu.memory_space<vmem>>, %arg5: memref<128x128xf32, #tpu.memory_space<vmem>>, %arg6: memref<1x128xf32, #tpu.memory_space<vmem>>, %arg7: memref<128x128xf32, #tpu.memory_space<vmem>>, %arg8: memref<1x128xf32, #tpu.memory_space<vmem>>, %arg9: memref<1x16x8xf32, #tpu.memory_space<vmem>>, %arg10: memref<20x128xf32, #tpu.memory_space<vmem>>, %arg11: memref<16x128xf32, #tpu.memory_space<vmem>>) attributes {dimension_semantics = [#tpu.dimension_semantics<parallel>], iteration_bounds = array<i64: 2>, scalar_prefetch = 0 : i64, scratch_operands = 2 : i64, tpu.core_type = #tpu.core_type<tc>, window_params = [{transform_indices = @transform_0, window_bounds = array<i64: 1, 16, 8>}, {pipeline_mode = #tpu.pipeline_mode<synchronous>, transform_indices = @transform_1, window_bounds = array<i64: 4, 5, 128>}, {pipeline_mode = #tpu.pipeline_mode<synchronous>, transform_indices = @transform_2, window_bounds = array<i64: 4, 128, 128>}, {pipeline_mode = #tpu.pipeline_mode<synchronous>, transform_indices = @transform_3, window_bounds = array<i64: 4, 1, 128>}, {pipeline_mode = #tpu.pipeline_mode<synchronous>, transform_indices = @transform_4, window_bounds = array<i64: 128, 128>}, {pipeline_mode = #tpu.pipeline_mode<synchronous>, transform_indices = @transform_5, window_bounds = array<i64: 1, 128>}, {pipeline_mode = #tpu.pipeline_mode<synchronous>, transform_indices = @transform_6, window_bounds = array<i64: 128, 128>}, {pipeline_mode = #tpu.pipeline_mode<synchronous>, transform_indices = @transform_7, window_bounds = array<i64: 1, 128>}, {transform_indices = @transform_8, window_bounds = array<i64: 1, 16, 8>}]} {
    %cst = arith.constant 0.000000e+00 : f32
    %0 = vector.broadcast %cst : f32 to vector<20x128xf32>
    %c0 = arith.constant 0 : index
    %c0_0 = arith.constant 0 : index
    %1 = vector.load %arg10[%c0, %c0_0] : memref<20x128xf32, #tpu.memory_space<vmem>>, vector<20x128xf32>
    tpu.vector_store %arg10[%c0, %c0_0], %0 {strides = array<i32>} : memref<20x128xf32, #tpu.memory_space<vmem>>, vector<20x128xf32>,
    %c0_1 = arith.constant 0 : index
    %c0_2 = arith.constant 0 : index
    %c0_3 = arith.constant 0 : index
    %2 = vector.load %arg1[%c0_1, %c0_2, %c0_3] : memref<1x16x8xf32, #tpu.memory_space<vmem>>, vector<1x16x8xf32>
    %3 = vector.shape_cast %2 : vector<1x16x8xf32> to vector<16x8xf32>
    %c2 = arith.constant 2 : index
    %c0_4 = arith.constant 0 : index
    %4 = vector.load %arg10[%c2, %c0_4] : memref<20x128xf32, #tpu.memory_space<vmem>>, vector<16x8xf32>
    tpu.vector_store %arg10[%c2, %c0_4], %3 {strides = array<i32>} : memref<20x128xf32, #tpu.memory_space<vmem>>, vector<16x8xf32>,
    %c3 = arith.constant 3 : index
    %c0_5 = arith.constant 0 : index
    %c0_6 = arith.constant 0 : index
    %5 = vector.load %arg2[%c3, %c0_5, %c0_6] : memref<4x5x128xf32, #tpu.memory_space<vmem>>, vector<1x5x128xf32>
    %6 = vector.shape_cast %5 : vector<1x5x128xf32> to vector<5x128xf32>
    %c0_7 = arith.constant 0 : index
    %c0_8 = arith.constant 0 : index
    %7 = vector.load %arg10[%c0_7, %c0_8] : memref<20x128xf32, #tpu.memory_space<vmem>>, vector<16x128xf32>
    %8 = vector.extract_strided_slice %6 {offsets = [0, 0], sizes = [1, 128], strides = [1, 1]} : vector<5x128xf32> to vector<1x128xf32>
    %9 = vector.shape_cast %8 : vector<1x128xf32> to vector<128xf32>
    %10 = vector.shape_cast %9 : vector<128xf32> to vector<1x128xf32>
    %11 = vector.broadcast %10 : vector<1x128xf32> to vector<16x128xf32>
    %12 = arith.mulf %7, %11 : vector<16x128xf32>
    %c1 = arith.constant 1 : index
    %c0_9 = arith.constant 0 : index
    %13 = vector.load %arg10[%c1, %c0_9] : memref<20x128xf32, #tpu.memory_space<vmem>>, vector<16x128xf32>
    %14 = vector.extract_strided_slice %6 {offsets = [1, 0], sizes = [1, 128], strides = [1, 1]} : vector<5x128xf32> to vector<1x128xf32>
    %15 = vector.shape_cast %14 : vector<1x128xf32> to vector<128xf32>
    %16 = vector.shape_cast %15 : vector<128xf32> to vector<1x128xf32>
    %17 = vector.broadcast %16 : vector<1x128xf32> to vector<16x128xf32>
    %18 = arith.mulf %13, %17 : vector<16x128xf32>
    %19 = arith.addf %12, %18 : vector<16x128xf32>
    %c2_10 = arith.constant 2 : index
    %c0_11 = arith.constant 0 : index
    %20 = vector.load %arg10[%c2_10, %c0_11] : memref<20x128xf32, #tpu.memory_space<vmem>>, vector<16x128xf32>
    %21 = vector.extract_strided_slice %6 {offsets = [2, 0], sizes = [1, 128], strides = [1, 1]} : vector<5x128xf32> to vector<1x128xf32>
    %22 = vector.shape_cast %21 : vector<1x128xf32> to vector<128xf32>
    %23 = vector.shape_cast %22 : vector<128xf32> to vector<1x128xf32>
    %24 = vector.broadcast %23 : vector<1x128xf32> to vector<16x128xf32>
    %25 = arith.mulf %20, %24 : vector<16x128xf32>
    %26 = arith.addf %19, %25 : vector<16x128xf32>
    %c3_12 = arith.constant 3 : index
    %c0_13 = arith.constant 0 : index
    %27 = vector.load %arg10[%c3_12, %c0_13] : memref<20x128xf32, #tpu.memory_space<vmem>>, vector<16x128xf32>
    %28 = vector.extract_strided_slice %6 {offsets = [3, 0], sizes = [1, 128], strides = [1, 1]} : vector<5x128xf32> to vector<1x128xf32>
    %29 = vector.shape_cast %28 : vector<1x128xf32> to vector<128xf32>
    %30 = vector.shape_cast %29 : vector<128xf32> to vector<1x128xf32>
    %31 = vector.broadcast %30 : vector<1x128xf32> to vector<16x128xf32>
    %32 = arith.mulf %27, %31 : vector<16x128xf32>
    %33 = arith.addf %26, %32 : vector<16x128xf32>
    %c4 = arith.constant 4 : index
    %c0_14 = arith.constant 0 : index
    %34 = vector.load %arg10[%c4, %c0_14] : memref<20x128xf32, #tpu.memory_space<vmem>>, vector<16x128xf32>
    %35 = vector.extract_strided_slice %6 {offsets = [4, 0], sizes = [1, 128], strides = [1, 1]} : vector<5x128xf32> to vector<1x128xf32>
    %36 = vector.shape_cast %35 : vector<1x128xf32> to vector<128xf32>
    %37 = vector.shape_cast %36 : vector<128xf32> to vector<1x128xf32>
    %38 = vector.broadcast %37 : vector<1x128xf32> to vector<16x128xf32>
    %39 = arith.mulf %34, %38 : vector<16x128xf32>
    %40 = arith.addf %33, %39 : vector<16x128xf32>
    %c3_15 = arith.constant 3 : index
    %c0_16 = arith.constant 0 : index
    %c0_17 = arith.constant 0 : index
    %41 = vector.load %arg3[%c3_15, %c0_16, %c0_17] : memref<4x128x128xbf16, #tpu.memory_space<vmem>>, vector<1x128x128xbf16>
    %42 = vector.shape_cast %41 : vector<1x128x128xbf16> to vector<128x128xbf16>
    %c3_18 = arith.constant 3 : index
    %c0_19 = arith.constant 0 : index
    %c0_20 = arith.constant 0 : index
    %43 = vector.load %arg4[%c3_18, %c0_19, %c0_20] : memref<4x1x128xf32, #tpu.memory_space<vmem>>, vector<1x1x128xf32>
    %44 = vector.shape_cast %43 : vector<1x1x128xf32> to vector<1x128xf32>
    %45 = arith.truncf %40 : vector<16x128xf32> to vector<16x128xbf16>
    %cst_21 = arith.constant dense<0.000000e+00> : vector<16x128xf32>
    %46 = tpu.matmul %45, %42, %cst_21 {dimension_numbers = #tpu.dot_dimension_numbers<[1], [0], [0], [1], [0, 0, 1, 1], [], []>} : vector<16x128xbf16>, vector<128x128xbf16>, vector<16x128xf32> -> vector<16x128xf32>
    %47 = vector.broadcast %44 : vector<1x128xf32> to vector<16x128xf32>
    %48 = arith.addf %46, %47 : vector<16x128xf32>
    %c0_22 = arith.constant 0 : index
    %c0_23 = arith.constant 0 : index
    %49 = vector.load %arg11[%c0_22, %c0_23] : memref<16x128xf32, #tpu.memory_space<vmem>>, vector<16x128xf32>
    tpu.vector_store %arg11[%c0_22, %c0_23], %48 {strides = array<i32>} : memref<16x128xf32, #tpu.memory_space<vmem>>, vector<16x128xf32>,
    %c0_24 = arith.constant 0 : index
    %c0_25 = arith.constant 0 : index
    %c0_26 = arith.constant 0 : index
    %50 = vector.load %arg2[%c0_24, %c0_25, %c0_26] : memref<4x5x128xf32, #tpu.memory_space<vmem>>, vector<1x5x128xf32>
    %51 = vector.shape_cast %50 : vector<1x5x128xf32> to vector<5x128xf32>
    %c0_27 = arith.constant 0 : index
    %c0_28 = arith.constant 0 : index
    %52 = vector.load %arg10[%c0_27, %c0_28] : memref<20x128xf32, #tpu.memory_space<vmem>>, vector<16x128xf32>
    %53 = vector.extract_strided_slice %51 {offsets = [0, 0], sizes = [1, 128], strides = [1, 1]} : vector<5x128xf32> to vector<1x128xf32>
    %54 = vector.shape_cast %53 : vector<1x128xf32> to vector<128xf32>
    %55 = vector.shape_cast %54 : vector<128xf32> to vector<1x128xf32>
    %56 = vector.broadcast %55 : vector<1x128xf32> to vector<16x128xf32>
    %57 = arith.mulf %52, %56 : vector<16x128xf32>
    %c1_29 = arith.constant 1 : index
    %c0_30 = arith.constant 0 : index
    %58 = vector.load %arg10[%c1_29, %c0_30] : memref<20x128xf32, #tpu.memory_space<vmem>>, vector<16x128xf32>
    %59 = vector.extract_strided_slice %51 {offsets = [1, 0], sizes = [1, 128], strides = [1, 1]} : vector<5x128xf32> to vector<1x128xf32>
    %60 = vector.shape_cast %59 : vector<1x128xf32> to vector<128xf32>
    %61 = vector.shape_cast %60 : vector<128xf32> to vector<1x128xf32>
    %62 = vector.broadcast %61 : vector<1x128xf32> to vector<16x128xf32>
    %63 = arith.mulf %58, %62 : vector<16x128xf32>
    %64 = arith.addf %57, %63 : vector<16x128xf32>
    %c2_31 = arith.constant 2 : index
    %c0_32 = arith.constant 0 : index
    %65 = vector.load %arg10[%c2_31, %c0_32] : memref<20x128xf32, #tpu.memory_space<vmem>>, vector<16x128xf32>
    %66 = vector.extract_strided_slice %51 {offsets = [2, 0], sizes = [1, 128], strides = [1, 1]} : vector<5x128xf32> to vector<1x128xf32>
    %67 = vector.shape_cast %66 : vector<1x128xf32> to vector<128xf32>
    %68 = vector.shape_cast %67 : vector<128xf32> to vector<1x128xf32>
    %69 = vector.broadcast %68 : vector<1x128xf32> to vector<16x128xf32>
    %70 = arith.mulf %65, %69 : vector<16x128xf32>
    %71 = arith.addf %64, %70 : vector<16x128xf32>
    %c3_33 = arith.constant 3 : index
    %c0_34 = arith.constant 0 : index
    %72 = vector.load %arg10[%c3_33, %c0_34] : memref<20x128xf32, #tpu.memory_space<vmem>>, vector<16x128xf32>
    %73 = vector.extract_strided_slice %51 {offsets = [3, 0], sizes = [1, 128], strides = [1, 1]} : vector<5x128xf32> to vector<1x128xf32>
    %74 = vector.shape_cast %73 : vector<1x128xf32> to vector<128xf32>
    %75 = vector.shape_cast %74 : vector<128xf32> to vector<1x128xf32>
    %76 = vector.broadcast %75 : vector<1x128xf32> to vector<16x128xf32>
    %77 = arith.mulf %72, %76 : vector<16x128xf32>
    %78 = arith.addf %71, %77 : vector<16x128xf32>
    %c4_35 = arith.constant 4 : index
    %c0_36 = arith.constant 0 : index
    %79 = vector.load %arg10[%c4_35, %c0_36] : memref<20x128xf32, #tpu.memory_space<vmem>>, vector<16x128xf32>
    %80 = vector.extract_strided_slice %51 {offsets = [4, 0], sizes = [1, 128], strides = [1, 1]} : vector<5x128xf32> to vector<1x128xf32>
    %81 = vector.shape_cast %80 : vector<1x128xf32> to vector<128xf32>
    %82 = vector.shape_cast %81 : vector<128xf32> to vector<1x128xf32>
    %83 = vector.broadcast %82 : vector<1x128xf32> to vector<16x128xf32>
    %84 = arith.mulf %79, %83 : vector<16x128xf32>
    %85 = arith.addf %78, %84 : vector<16x128xf32>
    %c0_37 = arith.constant 0 : index
    %c0_38 = arith.constant 0 : index
    %c0_39 = arith.constant 0 : index
    %86 = vector.load %arg3[%c0_37, %c0_38, %c0_39] : memref<4x128x128xbf16, #tpu.memory_space<vmem>>, vector<1x128x128xbf16>
    %87 = vector.shape_cast %86 : vector<1x128x128xbf16> to vector<128x128xbf16>
    %c0_40 = arith.constant 0 : index
    %c0_41 = arith.constant 0 : index
    %c0_42 = arith.constant 0 : index
    %88 = vector.load %arg4[%c0_40, %c0_41, %c0_42] : memref<4x1x128xf32, #tpu.memory_space<vmem>>, vector<1x1x128xf32>
    %89 = vector.shape_cast %88 : vector<1x1x128xf32> to vector<1x128xf32>
    %90 = arith.truncf %85 : vector<16x128xf32> to vector<16x128xbf16>
    %cst_43 = arith.constant dense<0.000000e+00> : vector<16x128xf32>
    %91 = tpu.matmul %90, %87, %cst_43 {dimension_numbers = #tpu.dot_dimension_numbers<[1], [0], [0], [1], [0, 0, 1, 1], [], []>} : vector<16x128xbf16>, vector<128x128xbf16>, vector<16x128xf32> -> vector<16x128xf32>
    %92 = vector.broadcast %89 : vector<1x128xf32> to vector<16x128xf32>
    %93 = arith.addf %91, %92 : vector<16x128xf32>
    %94 = arith.negf %93 : vector<16x128xf32>
    %95 = math.exp %94 : vector<16x128xf32>
    %cst_44 = arith.constant 1.000000e+00 : f32
    %96 = vector.broadcast %cst_44 : f32 to vector<16x128xf32>
    %97 = arith.addf %96, %95 : vector<16x128xf32>
    %98 = arith.divf %96, %97 : vector<16x128xf32>
    %99 = arith.mulf %93, %98 : vector<16x128xf32>
    %c2_45 = arith.constant 2 : index
    %c0_46 = arith.constant 0 : index
    %100 = vector.load %arg10[%c2_45, %c0_46] : memref<20x128xf32, #tpu.memory_space<vmem>>, vector<16x128xf32>
    tpu.vector_store %arg10[%c2_45, %c0_46], %99 {strides = array<i32>} : memref<20x128xf32, #tpu.memory_space<vmem>>, vector<16x128xf32>,
    %c1_47 = arith.constant 1 : index
    %c0_48 = arith.constant 0 : index
    %c0_49 = arith.constant 0 : index
    %101 = vector.load %arg2[%c1_47, %c0_48, %c0_49] : memref<4x5x128xf32, #tpu.memory_space<vmem>>, vector<1x5x128xf32>
    %102 = vector.shape_cast %101 : vector<1x5x128xf32> to vector<5x128xf32>
    %c0_50 = arith.constant 0 : index
    %c0_51 = arith.constant 0 : index
    %103 = vector.load %arg10[%c0_50, %c0_51] : memref<20x128xf32, #tpu.memory_space<vmem>>, vector<16x128xf32>
    %104 = vector.extract_strided_slice %102 {offsets = [0, 0], sizes = [1, 128], strides = [1, 1]} : vector<5x128xf32> to vector<1x128xf32>
    %105 = vector.shape_cast %104 : vector<1x128xf32> to vector<128xf32>
    %106 = vector.shape_cast %105 : vector<128xf32> to vector<1x128xf32>
    %107 = vector.broadcast %106 : vector<1x128xf32> to vector<16x128xf32>
    %108 = arith.mulf %103, %107 : vector<16x128xf32>
    %c1_52 = arith.constant 1 : index
    %c0_53 = arith.constant 0 : index
    %109 = vector.load %arg10[%c1_52, %c0_53] : memref<20x128xf32, #tpu.memory_space<vmem>>, vector<16x128xf32>
    %110 = vector.extract_strided_slice %102 {offsets = [1, 0], sizes = [1, 128], strides = [1, 1]} : vector<5x128xf32> to vector<1x128xf32>
    %111 = vector.shape_cast %110 : vector<1x128xf32> to vector<128xf32>
    %112 = vector.shape_cast %111 : vector<128xf32> to vector<1x128xf32>
    %113 = vector.broadcast %112 : vector<1x128xf32> to vector<16x128xf32>
    %114 = arith.mulf %109, %113 : vector<16x128xf32>
    %115 = arith.addf %108, %114 : vector<16x128xf32>
    %c2_54 = arith.constant 2 : index
    %c0_55 = arith.constant 0 : index
    %116 = vector.load %arg10[%c2_54, %c0_55] : memref<20x128xf32, #tpu.memory_space<vmem>>, vector<16x128xf32>
    %117 = vector.extract_strided_slice %102 {offsets = [2, 0], sizes = [1, 128], strides = [1, 1]} : vector<5x128xf32> to vector<1x128xf32>
    %118 = vector.shape_cast %117 : vector<1x128xf32> to vector<128xf32>
    %119 = vector.shape_cast %118 : vector<128xf32> to vector<1x128xf32>
    %120 = vector.broadcast %119 : vector<1x128xf32> to vector<16x128xf32>
    %121 = arith.mulf %116, %120 : vector<16x128xf32>
    %122 = arith.addf %115, %121 : vector<16x128xf32>
    %c3_56 = arith.constant 3 : index
    %c0_57 = arith.constant 0 : index
    %123 = vector.load %arg10[%c3_56, %c0_57] : memref<20x128xf32, #tpu.memory_space<vmem>>, vector<16x128xf32>
    %124 = vector.extract_strided_slice %102 {offsets = [3, 0], sizes = [1, 128], strides = [1, 1]} : vector<5x128xf32> to vector<1x128xf32>
    %125 = vector.shape_cast %124 : vector<1x128xf32> to vector<128xf32>
    %126 = vector.shape_cast %125 : vector<128xf32> to vector<1x128xf32>
    %127 = vector.broadcast %126 : vector<1x128xf32> to vector<16x128xf32>
    %128 = arith.mulf %123, %127 : vector<16x128xf32>
    %129 = arith.addf %122, %128 : vector<16x128xf32>
    %c4_58 = arith.constant 4 : index
    %c0_59 = arith.constant 0 : index
    %130 = vector.load %arg10[%c4_58, %c0_59] : memref<20x128xf32, #tpu.memory_space<vmem>>, vector<16x128xf32>
    %131 = vector.extract_strided_slice %102 {offsets = [4, 0], sizes = [1, 128], strides = [1, 1]} : vector<5x128xf32> to vector<1x128xf32>
    %132 = vector.shape_cast %131 : vector<1x128xf32> to vector<128xf32>
    %133 = vector.shape_cast %132 : vector<128xf32> to vector<1x128xf32>
    %134 = vector.broadcast %133 : vector<1x128xf32> to vector<16x128xf32>
    %135 = arith.mulf %130, %134 : vector<16x128xf32>
    %136 = arith.addf %129, %135 : vector<16x128xf32>
    %c1_60 = arith.constant 1 : index
    %c0_61 = arith.constant 0 : index
    %c0_62 = arith.constant 0 : index
    %137 = vector.load %arg3[%c1_60, %c0_61, %c0_62] : memref<4x128x128xbf16, #tpu.memory_space<vmem>>, vector<1x128x128xbf16>
    %138 = vector.shape_cast %137 : vector<1x128x128xbf16> to vector<128x128xbf16>
    %c1_63 = arith.constant 1 : index
    %c0_64 = arith.constant 0 : index
    %c0_65 = arith.constant 0 : index
    %139 = vector.load %arg4[%c1_63, %c0_64, %c0_65] : memref<4x1x128xf32, #tpu.memory_space<vmem>>, vector<1x1x128xf32>
    %140 = vector.shape_cast %139 : vector<1x1x128xf32> to vector<1x128xf32>
    %141 = arith.truncf %136 : vector<16x128xf32> to vector<16x128xbf16>
    %cst_66 = arith.constant dense<0.000000e+00> : vector<16x128xf32>
    %142 = tpu.matmul %141, %138, %cst_66 {dimension_numbers = #tpu.dot_dimension_numbers<[1], [0], [0], [1], [0, 0, 1, 1], [], []>} : vector<16x128xbf16>, vector<128x128xbf16>, vector<16x128xf32> -> vector<16x128xf32>
    %143 = vector.broadcast %140 : vector<1x128xf32> to vector<16x128xf32>
    %144 = arith.addf %142, %143 : vector<16x128xf32>
    %145 = arith.negf %144 : vector<16x128xf32>
    %146 = math.exp %145 : vector<16x128xf32>
    %cst_67 = arith.constant 1.000000e+00 : f32
    %147 = vector.broadcast %cst_67 : f32 to vector<16x128xf32>
    %148 = arith.addf %147, %146 : vector<16x128xf32>
    %149 = arith.divf %147, %148 : vector<16x128xf32>
    %150 = arith.mulf %144, %149 : vector<16x128xf32>
    %c2_68 = arith.constant 2 : index
    %c0_69 = arith.constant 0 : index
    %151 = vector.load %arg10[%c2_68, %c0_69] : memref<20x128xf32, #tpu.memory_space<vmem>>, vector<16x128xf32>
    tpu.vector_store %arg10[%c2_68, %c0_69], %150 {strides = array<i32>} : memref<20x128xf32, #tpu.memory_space<vmem>>, vector<16x128xf32>,
    %c2_70 = arith.constant 2 : index
    %c0_71 = arith.constant 0 : index
    %c0_72 = arith.constant 0 : index
    %152 = vector.load %arg2[%c2_70, %c0_71, %c0_72] : memref<4x5x128xf32, #tpu.memory_space<vmem>>, vector<1x5x128xf32>
    %153 = vector.shape_cast %152 : vector<1x5x128xf32> to vector<5x128xf32>
    %c0_73 = arith.constant 0 : index
    %c0_74 = arith.constant 0 : index
    %154 = vector.load %arg10[%c0_73, %c0_74] : memref<20x128xf32, #tpu.memory_space<vmem>>, vector<16x128xf32>
    %155 = vector.extract_strided_slice %153 {offsets = [0, 0], sizes = [1, 128], strides = [1, 1]} : vector<5x128xf32> to vector<1x128xf32>
    %156 = vector.shape_cast %155 : vector<1x128xf32> to vector<128xf32>
    %157 = vector.shape_cast %156 : vector<128xf32> to vector<1x128xf32>
    %158 = vector.broadcast %157 : vector<1x128xf32> to vector<16x128xf32>
    %159 = arith.mulf %154, %158 : vector<16x128xf32>
    %c1_75 = arith.constant 1 : index
    %c0_76 = arith.constant 0 : index
    %160 = vector.load %arg10[%c1_75, %c0_76] : memref<20x128xf32, #tpu.memory_space<vmem>>, vector<16x128xf32>
    %161 = vector.extract_strided_slice %153 {offsets = [1, 0], sizes = [1, 128], strides = [1, 1]} : vector<5x128xf32> to vector<1x128xf32>
    %162 = vector.shape_cast %161 : vector<1x128xf32> to vector<128xf32>
    %163 = vector.shape_cast %162 : vector<128xf32> to vector<1x128xf32>
    %164 = vector.broadcast %163 : vector<1x128xf32> to vector<16x128xf32>
    %165 = arith.mulf %160, %164 : vector<16x128xf32>
    %166 = arith.addf %159, %165 : vector<16x128xf32>
    %c2_77 = arith.constant 2 : index
    %c0_78 = arith.constant 0 : index
    %167 = vector.load %arg10[%c2_77, %c0_78] : memref<20x128xf32, #tpu.memory_space<vmem>>, vector<16x128xf32>
    %168 = vector.extract_strided_slice %153 {offsets = [2, 0], sizes = [1, 128], strides = [1, 1]} : vector<5x128xf32> to vector<1x128xf32>
    %169 = vector.shape_cast %168 : vector<1x128xf32> to vector<128xf32>
    %170 = vector.shape_cast %169 : vector<128xf32> to vector<1x128xf32>
    %171 = vector.broadcast %170 : vector<1x128xf32> to vector<16x128xf32>
    %172 = arith.mulf %167, %171 : vector<16x128xf32>
    %173 = arith.addf %166, %172 : vector<16x128xf32>
    %c3_79 = arith.constant 3 : index
    %c0_80 = arith.constant 0 : index
    %174 = vector.load %arg10[%c3_79, %c0_80] : memref<20x128xf32, #tpu.memory_space<vmem>>, vector<16x128xf32>
    %175 = vector.extract_strided_slice %153 {offsets = [3, 0], sizes = [1, 128], strides = [1, 1]} : vector<5x128xf32> to vector<1x128xf32>
    %176 = vector.shape_cast %175 : vector<1x128xf32> to vector<128xf32>
    %177 = vector.shape_cast %176 : vector<128xf32> to vector<1x128xf32>
    %178 = vector.broadcast %177 : vector<1x128xf32> to vector<16x128xf32>
    %179 = arith.mulf %174, %178 : vector<16x128xf32>
    %180 = arith.addf %173, %179 : vector<16x128xf32>
    %c4_81 = arith.constant 4 : index
    %c0_82 = arith.constant 0 : index
    %181 = vector.load %arg10[%c4_81, %c0_82] : memref<20x128xf32, #tpu.memory_space<vmem>>, vector<16x128xf32>
    %182 = vector.extract_strided_slice %153 {offsets = [4, 0], sizes = [1, 128], strides = [1, 1]} : vector<5x128xf32> to vector<1x128xf32>
    %183 = vector.shape_cast %182 : vector<1x128xf32> to vector<128xf32>
    %184 = vector.shape_cast %183 : vector<128xf32> to vector<1x128xf32>
    %185 = vector.broadcast %184 : vector<1x128xf32> to vector<16x128xf32>
    %186 = arith.mulf %181, %185 : vector<16x128xf32>
    %187 = arith.addf %180, %186 : vector<16x128xf32>
    %c2_83 = arith.constant 2 : index
    %c0_84 = arith.constant 0 : index
    %c0_85 = arith.constant 0 : index
    %188 = vector.load %arg3[%c2_83, %c0_84, %c0_85] : memref<4x128x128xbf16, #tpu.memory_space<vmem>>, vector<1x128x128xbf16>
    %189 = vector.shape_cast %188 : vector<1x128x128xbf16> to vector<128x128xbf16>
    %c2_86 = arith.constant 2 : index
    %c0_87 = arith.constant 0 : index
    %c0_88 = arith.constant 0 : index
    %190 = vector.load %arg4[%c2_86, %c0_87, %c0_88] : memref<4x1x128xf32, #tpu.memory_space<vmem>>, vector<1x1x128xf32>
    %191 = vector.shape_cast %190 : vector<1x1x128xf32> to vector<1x128xf32>
    %192 = arith.truncf %187 : vector<16x128xf32> to vector<16x128xbf16>
    %cst_89 = arith.constant dense<0.000000e+00> : vector<16x128xf32>
    %193 = tpu.matmul %192, %189, %cst_89 {dimension_numbers = #tpu.dot_dimension_numbers<[1], [0], [0], [1], [0, 0, 1, 1], [], []>} : vector<16x128xbf16>, vector<128x128xbf16>, vector<16x128xf32> -> vector<16x128xf32>
    %194 = vector.broadcast %191 : vector<1x128xf32> to vector<16x128xf32>
    %195 = arith.addf %193, %194 : vector<16x128xf32>
    %196 = arith.negf %195 : vector<16x128xf32>
    %197 = math.exp %196 : vector<16x128xf32>
    %cst_90 = arith.constant 1.000000e+00 : f32
    %198 = vector.broadcast %cst_90 : f32 to vector<16x128xf32>
    %199 = arith.addf %198, %197 : vector<16x128xf32>
    %200 = arith.divf %198, %199 : vector<16x128xf32>
    %201 = arith.mulf %195, %200 : vector<16x128xf32>
    %c2_91 = arith.constant 2 : index
    %c0_92 = arith.constant 0 : index
    %202 = vector.load %arg10[%c2_91, %c0_92] : memref<20x128xf32, #tpu.memory_space<vmem>>, vector<16x128xf32>
    tpu.vector_store %arg10[%c2_91, %c0_92], %201 {strides = array<i32>} : memref<20x128xf32, #tpu.memory_space<vmem>>, vector<16x128xf32>,
    %c2_93 = arith.constant 2 : index
    %c0_94 = arith.constant 0 : index
    %203 = vector.load %arg10[%c2_93, %c0_94] : memref<20x128xf32, #tpu.memory_space<vmem>>, vector<16x128xf32>
    %cst_95 = arith.constant 6.250000e-02 : f32
    %204 = vector.broadcast %cst_95 : f32 to vector<1x16xf32>
    %cst_96 = arith.constant dense<0.000000e+00> : vector<1x128xf32>
    %205 = tpu.matmul %204, %203, %cst_96 {dimension_numbers = #tpu.dot_dimension_numbers<[1], [0], [0], [1], [0, 0, 1, 1], [], []>} : vector<1x16xf32>, vector<16x128xf32>, vector<1x128xf32> -> vector<1x128xf32>
    %c0_97 = arith.constant 0 : index
    %c0_98 = arith.constant 0 : index
    %206 = vector.load %arg5[%c0_97, %c0_98] : memref<128x128xf32, #tpu.memory_space<vmem>>, vector<128x128xf32>
    %cst_99 = arith.constant dense<0.000000e+00> : vector<1x128xf32>
    %207 = tpu.matmul %205, %206, %cst_99 {dimension_numbers = #tpu.dot_dimension_numbers<[1], [0], [0], [1], [0, 0, 1, 1], [], []>} : vector<1x128xf32>, vector<128x128xf32>, vector<1x128xf32> -> vector<1x128xf32>
    %c0_100 = arith.constant 0 : index
    %c0_101 = arith.constant 0 : index
    %208 = vector.load %arg6[%c0_100, %c0_101] : memref<1x128xf32, #tpu.memory_space<vmem>>, vector<1x128xf32>
    %209 = arith.addf %207, %208 : vector<1x128xf32>
    %210 = arith.negf %209 : vector<1x128xf32>
    %211 = math.exp %210 : vector<1x128xf32>
    %cst_102 = arith.constant 1.000000e+00 : f32
    %212 = vector.broadcast %cst_102 : f32 to vector<1x128xf32>
    %213 = arith.addf %212, %211 : vector<1x128xf32>
    %214 = arith.divf %212, %213 : vector<1x128xf32>
    %215 = arith.mulf %209, %214 : vector<1x128xf32>
    %c0_103 = arith.constant 0 : index
    %c0_104 = arith.constant 0 : index
    %216 = vector.load %arg7[%c0_103, %c0_104] : memref<128x128xf32, #tpu.memory_space<vmem>>, vector<128x128xf32>
    %cst_105 = arith.constant dense<0.000000e+00> : vector<1x128xf32>
    %217 = tpu.matmul %215, %216, %cst_105 {dimension_numbers = #tpu.dot_dimension_numbers<[1], [0], [0], [1], [0, 0, 1, 1], [], []>} : vector<1x128xf32>, vector<128x128xf32>, vector<1x128xf32> -> vector<1x128xf32>
    %c0_106 = arith.constant 0 : index
    %c0_107 = arith.constant 0 : index
    %218 = vector.load %arg8[%c0_106, %c0_107] : memref<1x128xf32, #tpu.memory_space<vmem>>, vector<1x128xf32>
    %219 = arith.addf %217, %218 : vector<1x128xf32>
    %220 = arith.negf %219 : vector<1x128xf32>
    %221 = math.exp %220 : vector<1x128xf32>
    %cst_108 = arith.constant 1.000000e+00 : f32
    %222 = vector.broadcast %cst_108 : f32 to vector<1x128xf32>
    %223 = arith.addf %222, %221 : vector<1x128xf32>
    %224 = arith.divf %222, %223 : vector<1x128xf32>
    %225 = vector.broadcast %224 : vector<1x128xf32> to vector<16x128xf32>
    %226 = arith.mulf %203, %225 : vector<16x128xf32>
    %c0_109 = arith.constant 0 : index
    %c0_110 = arith.constant 0 : index
    %227 = vector.load %arg11[%c0_109, %c0_110] : memref<16x128xf32, #tpu.memory_space<vmem>>, vector<16x128xf32>
    %228 = arith.addf %226, %227 : vector<16x128xf32>
    %229 = arith.negf %228 : vector<16x128xf32>
    %230 = math.exp %229 : vector<16x128xf32>
    %cst_111 = arith.constant 1.000000e+00 : f32
    %231 = vector.broadcast %cst_111 : f32 to vector<16x128xf32>
    %232 = arith.addf %231, %230 : vector<16x128xf32>
    %233 = arith.divf %231, %232 : vector<16x128xf32>
    %234 = arith.mulf %228, %233 : vector<16x128xf32>
    %235 = vector.extract_strided_slice %234 {offsets = [0, 0], sizes = [16, 8], strides = [1, 1]} : vector<16x128xf32> to vector<16x8xf32>
    %c0_112 = arith.constant 0 : index
    %c0_113 = arith.constant 0 : index
    %c0_114 = arith.constant 0 : index
    %236 = vector.load %arg9[%c0_112, %c0_113, %c0_114] : memref<1x16x8xf32, #tpu.memory_space<vmem>>, vector<1x16x8xf32>
    %237 = vector.shape_cast %236 : vector<1x16x8xf32> to vector<16x8xf32>
    %238 = vector.shape_cast %235 : vector<16x8xf32> to vector<1x16x8xf32>
    tpu.vector_store %arg9[%c0_112, %c0_113, %c0_114], %238 {strides = array<i32>} : memref<1x16x8xf32, #tpu.memory_space<vmem>>, vector<1x16x8xf32>,
    return
  }
  func.func @transform_0(%arg0: i32) -> (i32, i32, i32) {
    %c0_i32 = arith.constant 0 : i32
    %c0_i32_0 = arith.constant 0 : i32
    %c0_i32_1 = arith.constant 0 : i32
    return %arg0, %c0_i32, %c0_i32_0 : i32, i32, i32
  }
  func.func @transform_1(%arg0: i32) -> (i32, i32, i32) {
    %c0_i32 = arith.constant 0 : i32
    %c0_i32_0 = arith.constant 0 : i32
    %c0_i32_1 = arith.constant 0 : i32
    %c0_i32_2 = arith.constant 0 : i32
    return %c0_i32, %c0_i32_0, %c0_i32_1 : i32, i32, i32
  }
  func.func @transform_2(%arg0: i32) -> (i32, i32, i32) {
    %c0_i32 = arith.constant 0 : i32
    %c0_i32_0 = arith.constant 0 : i32
    %c0_i32_1 = arith.constant 0 : i32
    %c0_i32_2 = arith.constant 0 : i32
    return %c0_i32, %c0_i32_0, %c0_i32_1 : i32, i32, i32
  }
  func.func @transform_3(%arg0: i32) -> (i32, i32, i32) {
    %c0_i32 = arith.constant 0 : i32
    %c0_i32_0 = arith.constant 0 : i32
    %c0_i32_1 = arith.constant 0 : i32
    %c0_i32_2 = arith.constant 0 : i32
    return %c0_i32, %c0_i32_0, %c0_i32_1 : i32, i32, i32
  }
  func.func @transform_4(%arg0: i32) -> (i32, i32) {
    %c0_i32 = arith.constant 0 : i32
    %c0_i32_0 = arith.constant 0 : i32
    %c0_i32_1 = arith.constant 0 : i32
    return %c0_i32, %c0_i32_0 : i32, i32
  }
  func.func @transform_5(%arg0: i32) -> (i32, i32) {
    %c0_i32 = arith.constant 0 : i32
    %c0_i32_0 = arith.constant 0 : i32
    %c0_i32_1 = arith.constant 0 : i32
    return %c0_i32, %c0_i32_0 : i32, i32
  }
  func.func @transform_6(%arg0: i32) -> (i32, i32) {
    %c0_i32 = arith.constant 0 : i32
    %c0_i32_0 = arith.constant 0 : i32
    %c0_i32_1 = arith.constant 0 : i32
    return %c0_i32, %c0_i32_0 : i32, i32
  }
  func.func @transform_7(%arg0: i32) -> (i32, i32) {
    %c0_i32 = arith.constant 0 : i32
    %c0_i32_0 = arith.constant 0 : i32
    %c0_i32_1 = arith.constant 0 : i32
    return %c0_i32, %c0_i32_0 : i32, i32
  }
  func.func @transform_8(%arg0: i32) -> (i32, i32, i32) {
    %c0_i32 = arith.constant 0 : i32
    %c0_i32_0 = arith.constant 0 : i32
    %c0_i32_1 = arith.constant 0 : i32
    return %arg0, %c0_i32, %c0_i32_0 : i32, i32, i32
  }
}

module attributes {stable_mosaic.version = 11 : i64} {
  func.func @kernel(%arg0: i32, %arg1: memref<1x16x8xf32, #tpu.memory_space<vmem>>, %arg2: memref<4x5x128xf32, #tpu.memory_space<vmem>>, %arg3: memref<4x128x128xbf16, #tpu.memory_space<vmem>>, %arg4: memref<4x1x128xf32, #tpu.memory_space<vmem>>, %arg5: memref<128x128xf32, #tpu.memory_space<vmem>>, %arg6: memref<1x128xf32, #tpu.memory_space<vmem>>, %arg7: memref<128x128xf32, #tpu.memory_space<vmem>>, %arg8: memref<1x128xf32, #tpu.memory_space<vmem>>, %arg9: memref<1x16x8xf32, #tpu.memory_space<vmem>>, %arg10: memref<20x128xf32, #tpu.memory_space<vmem>>, %arg11: memref<16x128xf32, #tpu.memory_space<vmem>>) attributes {dimension_semantics = [#tpu.dimension_semantics<parallel>], iteration_bounds = array<i64: 2>, scalar_prefetch = 0 : i64, scratch_operands = 2 : i64, tpu.core_type = #tpu.core_type<tc>, window_params = [{transform_indices = @transform_0, window_bounds = array<i64: 1, 16, 8>}, {pipeline_mode = #tpu.pipeline_mode<synchronous>, transform_indices = @transform_1, window_bounds = array<i64: 4, 5, 128>}, {pipeline_mode = #tpu.pipeline_mode<synchronous>, transform_indices = @transform_2, window_bounds = array<i64: 4, 128, 128>}, {pipeline_mode = #tpu.pipeline_mode<synchronous>, transform_indices = @transform_3, window_bounds = array<i64: 4, 1, 128>}, {pipeline_mode = #tpu.pipeline_mode<synchronous>, transform_indices = @transform_4, window_bounds = array<i64: 128, 128>}, {pipeline_mode = #tpu.pipeline_mode<synchronous>, transform_indices = @transform_5, window_bounds = array<i64: 1, 128>}, {pipeline_mode = #tpu.pipeline_mode<synchronous>, transform_indices = @transform_6, window_bounds = array<i64: 128, 128>}, {pipeline_mode = #tpu.pipeline_mode<synchronous>, transform_indices = @transform_7, window_bounds = array<i64: 1, 128>}, {transform_indices = @transform_8, window_bounds = array<i64: 1, 16, 8>}]} {
    %cst = arith.constant 0.000000e+00 : f32
    %0 = vector.broadcast %cst : f32 to vector<20x128xf32>
    %c0 = arith.constant 0 : index
    %c0_0 = arith.constant 0 : index
    %1 = vector.load %arg10[%c0, %c0_0] : memref<20x128xf32, #tpu.memory_space<vmem>>, vector<20x128xf32>
    tpu.vector_store %arg10[%c0, %c0_0], %0 {strides = array<i32>} : memref<20x128xf32, #tpu.memory_space<vmem>>, vector<20x128xf32>,
    %c0_1 = arith.constant 0 : index
    %c0_2 = arith.constant 0 : index
    %c0_3 = arith.constant 0 : index
    %2 = vector.load %arg1[%c0_1, %c0_2, %c0_3] : memref<1x16x8xf32, #tpu.memory_space<vmem>>, vector<1x16x8xf32>
    %3 = vector.shape_cast %2 : vector<1x16x8xf32> to vector<16x8xf32>
    %c2 = arith.constant 2 : index
    %c0_4 = arith.constant 0 : index
    %4 = vector.load %arg10[%c2, %c0_4] : memref<20x128xf32, #tpu.memory_space<vmem>>, vector<16x8xf32>
    tpu.vector_store %arg10[%c2, %c0_4], %3 {strides = array<i32>} : memref<20x128xf32, #tpu.memory_space<vmem>>, vector<16x8xf32>,
    %c3 = arith.constant 3 : index
    %c0_5 = arith.constant 0 : index
    %c0_6 = arith.constant 0 : index
    %5 = vector.load %arg2[%c3, %c0_5, %c0_6] : memref<4x5x128xf32, #tpu.memory_space<vmem>>, vector<1x5x128xf32>
    %6 = vector.shape_cast %5 : vector<1x5x128xf32> to vector<5x128xf32>
    %c0_7 = arith.constant 0 : index
    %c0_8 = arith.constant 0 : index
    %7 = vector.load %arg10[%c0_7, %c0_8] : memref<20x128xf32, #tpu.memory_space<vmem>>, vector<16x128xf32>
    %8 = vector.extract_strided_slice %6 {offsets = [0, 0], sizes = [1, 128], strides = [1, 1]} : vector<5x128xf32> to vector<1x128xf32>
    %9 = vector.shape_cast %8 : vector<1x128xf32> to vector<128xf32>
    %10 = vector.shape_cast %9 : vector<128xf32> to vector<1x128xf32>
    %11 = vector.broadcast %10 : vector<1x128xf32> to vector<16x128xf32>
    %12 = arith.mulf %7, %11 : vector<16x128xf32>
    %c1 = arith.constant 1 : index
    %c0_9 = arith.constant 0 : index
    %13 = vector.load %arg10[%c1, %c0_9] : memref<20x128xf32, #tpu.memory_space<vmem>>, vector<16x128xf32>
    %14 = vector.extract_strided_slice %6 {offsets = [1, 0], sizes = [1, 128], strides = [1, 1]} : vector<5x128xf32> to vector<1x128xf32>
    %15 = vector.shape_cast %14 : vector<1x128xf32> to vector<128xf32>
    %16 = vector.shape_cast %15 : vector<128xf32> to vector<1x128xf32>
    %17 = vector.broadcast %16 : vector<1x128xf32> to vector<16x128xf32>
    %18 = arith.mulf %13, %17 : vector<16x128xf32>
    %19 = arith.addf %12, %18 : vector<16x128xf32>
    %c2_10 = arith.constant 2 : index
    %c0_11 = arith.constant 0 : index
    %20 = vector.load %arg10[%c2_10, %c0_11] : memref<20x128xf32, #tpu.memory_space<vmem>>, vector<16x128xf32>
    %21 = vector.extract_strided_slice %6 {offsets = [2, 0], sizes = [1, 128], strides = [1, 1]} : vector<5x128xf32> to vector<1x128xf32>
    %22 = vector.shape_cast %21 : vector<1x128xf32> to vector<128xf32>
    %23 = vector.shape_cast %22 : vector<128xf32> to vector<1x128xf32>
    %24 = vector.broadcast %23 : vector<1x128xf32> to vector<16x128xf32>
    %25 = arith.mulf %20, %24 : vector<16x128xf32>
    %26 = arith.addf %19, %25 : vector<16x128xf32>
    %c3_12 = arith.constant 3 : index
    %c0_13 = arith.constant 0 : index
    %27 = vector.load %arg10[%c3_12, %c0_13] : memref<20x128xf32, #tpu.memory_space<vmem>>, vector<16x128xf32>
    %28 = vector.extract_strided_slice %6 {offsets = [3, 0], sizes = [1, 128], strides = [1, 1]} : vector<5x128xf32> to vector<1x128xf32>
    %29 = vector.shape_cast %28 : vector<1x128xf32> to vector<128xf32>
    %30 = vector.shape_cast %29 : vector<128xf32> to vector<1x128xf32>
    %31 = vector.broadcast %30 : vector<1x128xf32> to vector<16x128xf32>
    %32 = arith.mulf %27, %31 : vector<16x128xf32>
    %33 = arith.addf %26, %32 : vector<16x128xf32>
    %c4 = arith.constant 4 : index
    %c0_14 = arith.constant 0 : index
    %34 = vector.load %arg10[%c4, %c0_14] : memref<20x128xf32, #tpu.memory_space<vmem>>, vector<16x128xf32>
    %35 = vector.extract_strided_slice %6 {offsets = [4, 0], sizes = [1, 128], strides = [1, 1]} : vector<5x128xf32> to vector<1x128xf32>
    %36 = vector.shape_cast %35 : vector<1x128xf32> to vector<128xf32>
    %37 = vector.shape_cast %36 : vector<128xf32> to vector<1x128xf32>
    %38 = vector.broadcast %37 : vector<1x128xf32> to vector<16x128xf32>
    %39 = arith.mulf %34, %38 : vector<16x128xf32>
    %40 = arith.addf %33, %39 : vector<16x128xf32>
    %c3_15 = arith.constant 3 : index
    %c0_16 = arith.constant 0 : index
    %c0_17 = arith.constant 0 : index
    %41 = vector.load %arg3[%c3_15, %c0_16, %c0_17] : memref<4x128x128xbf16, #tpu.memory_space<vmem>>, vector<1x128x128xbf16>
    %42 = vector.shape_cast %41 : vector<1x128x128xbf16> to vector<128x128xbf16>
    %c3_18 = arith.constant 3 : index
    %c0_19 = arith.constant 0 : index
    %c0_20 = arith.constant 0 : index
    %43 = vector.load %arg4[%c3_18, %c0_19, %c0_20] : memref<4x1x128xf32, #tpu.memory_space<vmem>>, vector<1x1x128xf32>
    %44 = vector.shape_cast %43 : vector<1x1x128xf32> to vector<1x128xf32>
    %45 = arith.truncf %40 : vector<16x128xf32> to vector<16x128xbf16>
    %cst_21 = arith.constant dense<0.000000e+00> : vector<16x128xf32>
    %46 = tpu.matmul %45, %42, %cst_21 {dimension_numbers = #tpu.dot_dimension_numbers<[1], [0], [0], [1], [0, 0, 1, 1], [], []>} : vector<16x128xbf16>, vector<128x128xbf16>, vector<16x128xf32> -> vector<16x128xf32>
    %47 = vector.broadcast %44 : vector<1x128xf32> to vector<16x128xf32>
    %48 = arith.addf %46, %47 : vector<16x128xf32>
    %c0_22 = arith.constant 0 : index
    %c0_23 = arith.constant 0 : index
    %49 = vector.load %arg11[%c0_22, %c0_23] : memref<16x128xf32, #tpu.memory_space<vmem>>, vector<16x128xf32>
    tpu.vector_store %arg11[%c0_22, %c0_23], %48 {strides = array<i32>} : memref<16x128xf32, #tpu.memory_space<vmem>>, vector<16x128xf32>,
    %c0_24 = arith.constant 0 : index
    %c0_25 = arith.constant 0 : index
    %c0_26 = arith.constant 0 : index
    %50 = vector.load %arg2[%c0_24, %c0_25, %c0_26] : memref<4x5x128xf32, #tpu.memory_space<vmem>>, vector<1x5x128xf32>
    %51 = vector.shape_cast %50 : vector<1x5x128xf32> to vector<5x128xf32>
    %c0_27 = arith.constant 0 : index
    %c0_28 = arith.constant 0 : index
    %52 = vector.load %arg10[%c0_27, %c0_28] : memref<20x128xf32, #tpu.memory_space<vmem>>, vector<16x128xf32>
    %53 = vector.extract_strided_slice %51 {offsets = [0, 0], sizes = [1, 128], strides = [1, 1]} : vector<5x128xf32> to vector<1x128xf32>
    %54 = vector.shape_cast %53 : vector<1x128xf32> to vector<128xf32>
    %55 = vector.shape_cast %54 : vector<128xf32> to vector<1x128xf32>
    %56 = vector.broadcast %55 : vector<1x128xf32> to vector<16x128xf32>
    %57 = arith.mulf %52, %56 : vector<16x128xf32>
    %c1_29 = arith.constant 1 : index
    %c0_30 = arith.constant 0 : index
    %58 = vector.load %arg10[%c1_29, %c0_30] : memref<20x128xf32, #tpu.memory_space<vmem>>, vector<16x128xf32>
    %59 = vector.extract_strided_slice %51 {offsets = [1, 0], sizes = [1, 128], strides = [1, 1]} : vector<5x128xf32> to vector<1x128xf32>
    %60 = vector.shape_cast %59 : vector<1x128xf32> to vector<128xf32>
    %61 = vector.shape_cast %60 : vector<128xf32> to vector<1x128xf32>
    %62 = vector.broadcast %61 : vector<1x128xf32> to vector<16x128xf32>
    %63 = arith.mulf %58, %62 : vector<16x128xf32>
    %64 = arith.addf %57, %63 : vector<16x128xf32>
    %c2_31 = arith.constant 2 : index
    %c0_32 = arith.constant 0 : index
    %65 = vector.load %arg10[%c2_31, %c0_32] : memref<20x128xf32, #tpu.memory_space<vmem>>, vector<16x128xf32>
    %66 = vector.extract_strided_slice %51 {offsets = [2, 0], sizes = [1, 128], strides = [1, 1]} : vector<5x128xf32> to vector<1x128xf32>
    %67 = vector.shape_cast %66 : vector<1x128xf32> to vector<128xf32>
    %68 = vector.shape_cast %67 : vector<128xf32> to vector<1x128xf32>
    %69 = vector.broadcast %68 : vector<1x128xf32> to vector<16x128xf32>
    %70 = arith.mulf %65, %69 : vector<16x128xf32>
    %71 = arith.addf %64, %70 : vector<16x128xf32>
    %c3_33 = arith.constant 3 : index
    %c0_34 = arith.constant 0 : index
    %72 = vector.load %arg10[%c3_33, %c0_34] : memref<20x128xf32, #tpu.memory_space<vmem>>, vector<16x128xf32>
    %73 = vector.extract_strided_slice %51 {offsets = [3, 0], sizes = [1, 128], strides = [1, 1]} : vector<5x128xf32> to vector<1x128xf32>
    %74 = vector.shape_cast %73 : vector<1x128xf32> to vector<128xf32>
    %75 = vector.shape_cast %74 : vector<128xf32> to vector<1x128xf32>
    %76 = vector.broadcast %75 : vector<1x128xf32> to vector<16x128xf32>
    %77 = arith.mulf %72, %76 : vector<16x128xf32>
    %78 = arith.addf %71, %77 : vector<16x128xf32>
    %c4_35 = arith.constant 4 : index
    %c0_36 = arith.constant 0 : index
    %79 = vector.load %arg10[%c4_35, %c0_36] : memref<20x128xf32, #tpu.memory_space<vmem>>, vector<16x128xf32>
    %80 = vector.extract_strided_slice %51 {offsets = [4, 0], sizes = [1, 128], strides = [1, 1]} : vector<5x128xf32> to vector<1x128xf32>
    %81 = vector.shape_cast %80 : vector<1x128xf32> to vector<128xf32>
    %82 = vector.shape_cast %81 : vector<128xf32> to vector<1x128xf32>
    %83 = vector.broadcast %82 : vector<1x128xf32> to vector<16x128xf32>
    %84 = arith.mulf %79, %83 : vector<16x128xf32>
    %85 = arith.addf %78, %84 : vector<16x128xf32>
    %c0_37 = arith.constant 0 : index
    %c0_38 = arith.constant 0 : index
    %c0_39 = arith.constant 0 : index
    %86 = vector.load %arg3[%c0_37, %c0_38, %c0_39] : memref<4x128x128xbf16, #tpu.memory_space<vmem>>, vector<1x128x128xbf16>
    %87 = vector.shape_cast %86 : vector<1x128x128xbf16> to vector<128x128xbf16>
    %c0_40 = arith.constant 0 : index
    %c0_41 = arith.constant 0 : index
    %c0_42 = arith.constant 0 : index
    %88 = vector.load %arg4[%c0_40, %c0_41, %c0_42] : memref<4x1x128xf32, #tpu.memory_space<vmem>>, vector<1x1x128xf32>
    %89 = vector.shape_cast %88 : vector<1x1x128xf32> to vector<1x128xf32>
    %90 = arith.truncf %85 : vector<16x128xf32> to vector<16x128xbf16>
    %cst_43 = arith.constant dense<0.000000e+00> : vector<16x128xf32>
    %91 = tpu.matmul %90, %87, %cst_43 {dimension_numbers = #tpu.dot_dimension_numbers<[1], [0], [0], [1], [0, 0, 1, 1], [], []>} : vector<16x128xbf16>, vector<128x128xbf16>, vector<16x128xf32> -> vector<16x128xf32>
    %92 = vector.broadcast %89 : vector<1x128xf32> to vector<16x128xf32>
    %93 = arith.addf %91, %92 : vector<16x128xf32>
    %94 = arith.negf %93 : vector<16x128xf32>
    %95 = math.exp %94 : vector<16x128xf32>
    %cst_44 = arith.constant 1.000000e+00 : f32
    %96 = vector.broadcast %cst_44 : f32 to vector<16x128xf32>
    %97 = arith.addf %96, %95 : vector<16x128xf32>
    %98 = arith.divf %96, %97 : vector<16x128xf32>
    %99 = arith.mulf %93, %98 : vector<16x128xf32>
    %c2_45 = arith.constant 2 : index
    %c0_46 = arith.constant 0 : index
    %100 = vector.load %arg10[%c2_45, %c0_46] : memref<20x128xf32, #tpu.memory_space<vmem>>, vector<16x128xf32>
    tpu.vector_store %arg10[%c2_45, %c0_46], %99 {strides = array<i32>} : memref<20x128xf32, #tpu.memory_space<vmem>>, vector<16x128xf32>,
    %c1_47 = arith.constant 1 : index
    %c0_48 = arith.constant 0 : index
    %c0_49 = arith.constant 0 : index
    %101 = vector.load %arg2[%c1_47, %c0_48, %c0_49] : memref<4x5x128xf32, #tpu.memory_space<vmem>>, vector<1x5x128xf32>
    %102 = vector.shape_cast %101 : vector<1x5x128xf32> to vector<5x128xf32>
    %c0_50 = arith.constant 0 : index
    %c0_51 = arith.constant 0 : index
    %103 = vector.load %arg10[%c0_50, %c0_51] : memref<20x128xf32, #tpu.memory_space<vmem>>, vector<16x128xf32>
    %104 = vector.extract_strided_slice %102 {offsets = [0, 0], sizes = [1, 128], strides = [1, 1]} : vector<5x128xf32> to vector<1x128xf32>
    %105 = vector.shape_cast %104 : vector<1x128xf32> to vector<128xf32>
    %106 = vector.shape_cast %105 : vector<128xf32> to vector<1x128xf32>
    %107 = vector.broadcast %106 : vector<1x128xf32> to vector<16x128xf32>
    %108 = arith.mulf %103, %107 : vector<16x128xf32>
    %c1_52 = arith.constant 1 : index
    %c0_53 = arith.constant 0 : index
    %109 = vector.load %arg10[%c1_52, %c0_53] : memref<20x128xf32, #tpu.memory_space<vmem>>, vector<16x128xf32>
    %110 = vector.extract_strided_slice %102 {offsets = [1, 0], sizes = [1, 128], strides = [1, 1]} : vector<5x128xf32> to vector<1x128xf32>
    %111 = vector.shape_cast %110 : vector<1x128xf32> to vector<128xf32>
    %112 = vector.shape_cast %111 : vector<128xf32> to vector<1x128xf32>
    %113 = vector.broadcast %112 : vector<1x128xf32> to vector<16x128xf32>
    %114 = arith.mulf %109, %113 : vector<16x128xf32>
    %115 = arith.addf %108, %114 : vector<16x128xf32>
    %c2_54 = arith.constant 2 : index
    %c0_55 = arith.constant 0 : index
    %116 = vector.load %arg10[%c2_54, %c0_55] : memref<20x128xf32, #tpu.memory_space<vmem>>, vector<16x128xf32>
    %117 = vector.extract_strided_slice %102 {offsets = [2, 0], sizes = [1, 128], strides = [1, 1]} : vector<5x128xf32> to vector<1x128xf32>
    %118 = vector.shape_cast %117 : vector<1x128xf32> to vector<128xf32>
    %119 = vector.shape_cast %118 : vector<128xf32> to vector<1x128xf32>
    %120 = vector.broadcast %119 : vector<1x128xf32> to vector<16x128xf32>
    %121 = arith.mulf %116, %120 : vector<16x128xf32>
    %122 = arith.addf %115, %121 : vector<16x128xf32>
    %c3_56 = arith.constant 3 : index
    %c0_57 = arith.constant 0 : index
    %123 = vector.load %arg10[%c3_56, %c0_57] : memref<20x128xf32, #tpu.memory_space<vmem>>, vector<16x128xf32>
    %124 = vector.extract_strided_slice %102 {offsets = [3, 0], sizes = [1, 128], strides = [1, 1]} : vector<5x128xf32> to vector<1x128xf32>
    %125 = vector.shape_cast %124 : vector<1x128xf32> to vector<128xf32>
    %126 = vector.shape_cast %125 : vector<128xf32> to vector<1x128xf32>
    %127 = vector.broadcast %126 : vector<1x128xf32> to vector<16x128xf32>
    %128 = arith.mulf %123, %127 : vector<16x128xf32>
    %129 = arith.addf %122, %128 : vector<16x128xf32>
    %c4_58 = arith.constant 4 : index
    %c0_59 = arith.constant 0 : index
    %130 = vector.load %arg10[%c4_58, %c0_59] : memref<20x128xf32, #tpu.memory_space<vmem>>, vector<16x128xf32>
    %131 = vector.extract_strided_slice %102 {offsets = [4, 0], sizes = [1, 128], strides = [1, 1]} : vector<5x128xf32> to vector<1x128xf32>
    %132 = vector.shape_cast %131 : vector<1x128xf32> to vector<128xf32>
    %133 = vector.shape_cast %132 : vector<128xf32> to vector<1x128xf32>
    %134 = vector.broadcast %133 : vector<1x128xf32> to vector<16x128xf32>
    %135 = arith.mulf %130, %134 : vector<16x128xf32>
    %136 = arith.addf %129, %135 : vector<16x128xf32>
    %c1_60 = arith.constant 1 : index
    %c0_61 = arith.constant 0 : index
    %c0_62 = arith.constant 0 : index
    %137 = vector.load %arg3[%c1_60, %c0_61, %c0_62] : memref<4x128x128xbf16, #tpu.memory_space<vmem>>, vector<1x128x128xbf16>
    %138 = vector.shape_cast %137 : vector<1x128x128xbf16> to vector<128x128xbf16>
    %c1_63 = arith.constant 1 : index
    %c0_64 = arith.constant 0 : index
    %c0_65 = arith.constant 0 : index
    %139 = vector.load %arg4[%c1_63, %c0_64, %c0_65] : memref<4x1x128xf32, #tpu.memory_space<vmem>>, vector<1x1x128xf32>
    %140 = vector.shape_cast %139 : vector<1x1x128xf32> to vector<1x128xf32>
    %141 = arith.truncf %136 : vector<16x128xf32> to vector<16x128xbf16>
    %cst_66 = arith.constant dense<0.000000e+00> : vector<16x128xf32>
    %142 = tpu.matmul %141, %138, %cst_66 {dimension_numbers = #tpu.dot_dimension_numbers<[1], [0], [0], [1], [0, 0, 1, 1], [], []>} : vector<16x128xbf16>, vector<128x128xbf16>, vector<16x128xf32> -> vector<16x128xf32>
    %143 = vector.broadcast %140 : vector<1x128xf32> to vector<16x128xf32>
    %144 = arith.addf %142, %143 : vector<16x128xf32>
    %145 = arith.negf %144 : vector<16x128xf32>
    %146 = math.exp %145 : vector<16x128xf32>
    %cst_67 = arith.constant 1.000000e+00 : f32
    %147 = vector.broadcast %cst_67 : f32 to vector<16x128xf32>
    %148 = arith.addf %147, %146 : vector<16x128xf32>
    %149 = arith.divf %147, %148 : vector<16x128xf32>
    %150 = arith.mulf %144, %149 : vector<16x128xf32>
    %c2_68 = arith.constant 2 : index
    %c0_69 = arith.constant 0 : index
    %151 = vector.load %arg10[%c2_68, %c0_69] : memref<20x128xf32, #tpu.memory_space<vmem>>, vector<16x128xf32>
    tpu.vector_store %arg10[%c2_68, %c0_69], %150 {strides = array<i32>} : memref<20x128xf32, #tpu.memory_space<vmem>>, vector<16x128xf32>,
    %c2_70 = arith.constant 2 : index
    %c0_71 = arith.constant 0 : index
    %c0_72 = arith.constant 0 : index
    %152 = vector.load %arg2[%c2_70, %c0_71, %c0_72] : memref<4x5x128xf32, #tpu.memory_space<vmem>>, vector<1x5x128xf32>
    %153 = vector.shape_cast %152 : vector<1x5x128xf32> to vector<5x128xf32>
    %c0_73 = arith.constant 0 : index
    %c0_74 = arith.constant 0 : index
    %154 = vector.load %arg10[%c0_73, %c0_74] : memref<20x128xf32, #tpu.memory_space<vmem>>, vector<16x128xf32>
    %155 = vector.extract_strided_slice %153 {offsets = [0, 0], sizes = [1, 128], strides = [1, 1]} : vector<5x128xf32> to vector<1x128xf32>
    %156 = vector.shape_cast %155 : vector<1x128xf32> to vector<128xf32>
    %157 = vector.shape_cast %156 : vector<128xf32> to vector<1x128xf32>
    %158 = vector.broadcast %157 : vector<1x128xf32> to vector<16x128xf32>
    %159 = arith.mulf %154, %158 : vector<16x128xf32>
    %c1_75 = arith.constant 1 : index
    %c0_76 = arith.constant 0 : index
    %160 = vector.load %arg10[%c1_75, %c0_76] : memref<20x128xf32, #tpu.memory_space<vmem>>, vector<16x128xf32>
    %161 = vector.extract_strided_slice %153 {offsets = [1, 0], sizes = [1, 128], strides = [1, 1]} : vector<5x128xf32> to vector<1x128xf32>
    %162 = vector.shape_cast %161 : vector<1x128xf32> to vector<128xf32>
    %163 = vector.shape_cast %162 : vector<128xf32> to vector<1x128xf32>
    %164 = vector.broadcast %163 : vector<1x128xf32> to vector<16x128xf32>
    %165 = arith.mulf %160, %164 : vector<16x128xf32>
    %166 = arith.addf %159, %165 : vector<16x128xf32>
    %c2_77 = arith.constant 2 : index
    %c0_78 = arith.constant 0 : index
    %167 = vector.load %arg10[%c2_77, %c0_78] : memref<20x128xf32, #tpu.memory_space<vmem>>, vector<16x128xf32>
    %168 = vector.extract_strided_slice %153 {offsets = [2, 0], sizes = [1, 128], strides = [1, 1]} : vector<5x128xf32> to vector<1x128xf32>
    %169 = vector.shape_cast %168 : vector<1x128xf32> to vector<128xf32>
    %170 = vector.shape_cast %169 : vector<128xf32> to vector<1x128xf32>
    %171 = vector.broadcast %170 : vector<1x128xf32> to vector<16x128xf32>
    %172 = arith.mulf %167, %171 : vector<16x128xf32>
    %173 = arith.addf %166, %172 : vector<16x128xf32>
    %c3_79 = arith.constant 3 : index
    %c0_80 = arith.constant 0 : index
    %174 = vector.load %arg10[%c3_79, %c0_80] : memref<20x128xf32, #tpu.memory_space<vmem>>, vector<16x128xf32>
    %175 = vector.extract_strided_slice %153 {offsets = [3, 0], sizes = [1, 128], strides = [1, 1]} : vector<5x128xf32> to vector<1x128xf32>
    %176 = vector.shape_cast %175 : vector<1x128xf32> to vector<128xf32>
    %177 = vector.shape_cast %176 : vector<128xf32> to vector<1x128xf32>
    %178 = vector.broadcast %177 : vector<1x128xf32> to vector<16x128xf32>
    %179 = arith.mulf %174, %178 : vector<16x128xf32>
    %180 = arith.addf %173, %179 : vector<16x128xf32>
    %c4_81 = arith.constant 4 : index
    %c0_82 = arith.constant 0 : index
    %181 = vector.load %arg10[%c4_81, %c0_82] : memref<20x128xf32, #tpu.memory_space<vmem>>, vector<16x128xf32>
    %182 = vector.extract_strided_slice %153 {offsets = [4, 0], sizes = [1, 128], strides = [1, 1]} : vector<5x128xf32> to vector<1x128xf32>
    %183 = vector.shape_cast %182 : vector<1x128xf32> to vector<128xf32>
    %184 = vector.shape_cast %183 : vector<128xf32> to vector<1x128xf32>
    %185 = vector.broadcast %184 : vector<1x128xf32> to vector<16x128xf32>
    %186 = arith.mulf %181, %185 : vector<16x128xf32>
    %187 = arith.addf %180, %186 : vector<16x128xf32>
    %c2_83 = arith.constant 2 : index
    %c0_84 = arith.constant 0 : index
    %c0_85 = arith.constant 0 : index
    %188 = vector.load %arg3[%c2_83, %c0_84, %c0_85] : memref<4x128x128xbf16, #tpu.memory_space<vmem>>, vector<1x128x128xbf16>
    %189 = vector.shape_cast %188 : vector<1x128x128xbf16> to vector<128x128xbf16>
    %c2_86 = arith.constant 2 : index
    %c0_87 = arith.constant 0 : index
    %c0_88 = arith.constant 0 : index
    %190 = vector.load %arg4[%c2_86, %c0_87, %c0_88] : memref<4x1x128xf32, #tpu.memory_space<vmem>>, vector<1x1x128xf32>
    %191 = vector.shape_cast %190 : vector<1x1x128xf32> to vector<1x128xf32>
    %192 = arith.truncf %187 : vector<16x128xf32> to vector<16x128xbf16>
    %cst_89 = arith.constant dense<0.000000e+00> : vector<16x128xf32>
    %193 = tpu.matmul %192, %189, %cst_89 {dimension_numbers = #tpu.dot_dimension_numbers<[1], [0], [0], [1], [0, 0, 1, 1], [], []>} : vector<16x128xbf16>, vector<128x128xbf16>, vector<16x128xf32> -> vector<16x128xf32>
    %194 = vector.broadcast %191 : vector<1x128xf32> to vector<16x128xf32>
    %195 = arith.addf %193, %194 : vector<16x128xf32>
    %196 = arith.negf %195 : vector<16x128xf32>
    %197 = math.exp %196 : vector<16x128xf32>
    %cst_90 = arith.constant 1.000000e+00 : f32
    %198 = vector.broadcast %cst_90 : f32 to vector<16x128xf32>
    %199 = arith.addf %198, %197 : vector<16x128xf32>
    %200 = arith.divf %198, %199 : vector<16x128xf32>
    %201 = arith.mulf %195, %200 : vector<16x128xf32>
    %c2_91 = arith.constant 2 : index
    %c0_92 = arith.constant 0 : index
    %202 = vector.load %arg10[%c2_91, %c0_92] : memref<20x128xf32, #tpu.memory_space<vmem>>, vector<16x128xf32>
    tpu.vector_store %arg10[%c2_91, %c0_92], %201 {strides = array<i32>} : memref<20x128xf32, #tpu.memory_space<vmem>>, vector<16x128xf32>,
    %c2_93 = arith.constant 2 : index
    %c0_94 = arith.constant 0 : index
    %203 = vector.load %arg10[%c2_93, %c0_94] : memref<20x128xf32, #tpu.memory_space<vmem>>, vector<16x128xf32>
    %cst_95 = arith.constant 6.250000e-02 : f32
    %204 = vector.broadcast %cst_95 : f32 to vector<1x16xf32>
    %cst_96 = arith.constant dense<0.000000e+00> : vector<1x128xf32>
    %205 = tpu.matmul %204, %203, %cst_96 {dimension_numbers = #tpu.dot_dimension_numbers<[1], [0], [0], [1], [0, 0, 1, 1], [], []>} : vector<1x16xf32>, vector<16x128xf32>, vector<1x128xf32> -> vector<1x128xf32>
    %c0_97 = arith.constant 0 : index
    %c0_98 = arith.constant 0 : index
    %206 = vector.load %arg5[%c0_97, %c0_98] : memref<128x128xf32, #tpu.memory_space<vmem>>, vector<128x128xf32>
    %cst_99 = arith.constant dense<0.000000e+00> : vector<1x128xf32>
    %207 = tpu.matmul %205, %206, %cst_99 {dimension_numbers = #tpu.dot_dimension_numbers<[1], [0], [0], [1], [0, 0, 1, 1], [], []>} : vector<1x128xf32>, vector<128x128xf32>, vector<1x128xf32> -> vector<1x128xf32>
    %c0_100 = arith.constant 0 : index
    %c0_101 = arith.constant 0 : index
    %208 = vector.load %arg6[%c0_100, %c0_101] : memref<1x128xf32, #tpu.memory_space<vmem>>, vector<1x128xf32>
    %209 = arith.addf %207, %208 : vector<1x128xf32>
    %210 = arith.negf %209 : vector<1x128xf32>
    %211 = math.exp %210 : vector<1x128xf32>
    %cst_102 = arith.constant 1.000000e+00 : f32
    %212 = vector.broadcast %cst_102 : f32 to vector<1x128xf32>
    %213 = arith.addf %212, %211 : vector<1x128xf32>
    %214 = arith.divf %212, %213 : vector<1x128xf32>
    %215 = arith.mulf %209, %214 : vector<1x128xf32>
    %c0_103 = arith.constant 0 : index
    %c0_104 = arith.constant 0 : index
    %216 = vector.load %arg7[%c0_103, %c0_104] : memref<128x128xf32, #tpu.memory_space<vmem>>, vector<128x128xf32>
    %cst_105 = arith.constant dense<0.000000e+00> : vector<1x128xf32>
    %217 = tpu.matmul %215, %216, %cst_105 {dimension_numbers = #tpu.dot_dimension_numbers<[1], [0], [0], [1], [0, 0, 1, 1], [], []>} : vector<1x128xf32>, vector<128x128xf32>, vector<1x128xf32> -> vector<1x128xf32>
    %c0_106 = arith.constant 0 : index
    %c0_107 = arith.constant 0 : index
    %218 = vector.load %arg8[%c0_106, %c0_107] : memref<1x128xf32, #tpu.memory_space<vmem>>, vector<1x128xf32>
    %219 = arith.addf %217, %218 : vector<1x128xf32>
    %220 = arith.negf %219 : vector<1x128xf32>
    %221 = math.exp %220 : vector<1x128xf32>
    %cst_108 = arith.constant 1.000000e+00 : f32
    %222 = vector.broadcast %cst_108 : f32 to vector<1x128xf32>
    %223 = arith.addf %222, %221 : vector<1x128xf32>
    %224 = arith.divf %222, %223 : vector<1x128xf32>
    %225 = vector.broadcast %224 : vector<1x128xf32> to vector<16x128xf32>
    %226 = arith.mulf %203, %225 : vector<16x128xf32>
    %c0_109 = arith.constant 0 : index
    %c0_110 = arith.constant 0 : index
    %227 = vector.load %arg11[%c0_109, %c0_110] : memref<16x128xf32, #tpu.memory_space<vmem>>, vector<16x128xf32>
    %228 = arith.addf %226, %227 : vector<16x128xf32>
    %229 = arith.negf %228 : vector<16x128xf32>
    %230 = math.exp %229 : vector<16x128xf32>
    %cst_111 = arith.constant 1.000000e+00 : f32
    %231 = vector.broadcast %cst_111 : f32 to vector<16x128xf32>
    %232 = arith.addf %231, %230 : vector<16x128xf32>
    %233 = arith.divf %231, %232 : vector<16x128xf32>
    %234 = arith.mulf %228, %233 : vector<16x128xf32>
    %235 = vector.extract_strided_slice %234 {offsets = [0, 0], sizes = [16, 8], strides = [1, 1]} : vector<16x128xf32> to vector<16x8xf32>
    %c0_112 = arith.constant 0 : index
    %c0_113 = arith.constant 0 : index
    %c0_114 = arith.constant 0 : index
    %236 = vector.load %arg9[%c0_112, %c0_113, %c0_114] : memref<1x16x8xf32, #tpu.memory_space<vmem>>, vector<1x16x8xf32>
    %237 = vector.shape_cast %236 : vector<1x16x8xf32> to vector<16x8xf32>
    %238 = vector.shape_cast %235 : vector<16x8xf32> to vector<1x16x8xf32>
    tpu.vector_store %arg9[%c0_112, %c0_113, %c0_114], %238 {strides = array<i32>} : memref<1x16x8xf32, #tpu.memory_space<vmem>>, vector<1x16x8xf32>,
    return
  }
  func.func @transform_0(%arg0: i32) -> (i32, i32, i32) {
    %c0_i32 = arith.constant 0 : i32
    %c0_i32_0 = arith.constant 0 : i32
    %c0_i32_1 = arith.constant 0 : i32
    return %arg0, %c0_i32, %c0_i32_0 : i32, i32, i32
  }
  func.func @transform_1(%arg0: i32) -> (i32, i32, i32) {
    %c0_i32 = arith.constant 0 : i32
    %c0_i32_0 = arith.constant 0 : i32
    %c0_i32_1 = arith.constant 0 : i32
    %c0_i32_2 = arith.constant 0 : i32
    return %c0_i32, %c0_i32_0, %c0_i32_1 : i32, i32, i32
  }
  func.func @transform_2(%arg0: i32) -> (i32, i32, i32) {
    %c0_i32 = arith.constant 0 : i32
    %c0_i32_0 = arith.constant 0 : i32
    %c0_i32_1 = arith.constant 0 : i32
    %c0_i32_2 = arith.constant 0 : i32
    return %c0_i32, %c0_i32_0, %c0_i32_1 : i32, i32, i32
  }
  func.func @transform_3(%arg0: i32) -> (i32, i32, i32) {
    %c0_i32 = arith.constant 0 : i32
    %c0_i32_0 = arith.constant 0 : i32
    %c0_i32_1 = arith.constant 0 : i32
    %c0_i32_2 = arith.constant 0 : i32
    return %c0_i32, %c0_i32_0, %c0_i32_1 : i32, i32, i32
  }
  func.func @transform_4(%arg0: i32) -> (i32, i32) {
    %c0_i32 = arith.constant 0 : i32
    %c0_i32_0 = arith.constant 0 : i32
    %c0_i32_1 = arith.constant 0 : i32
    return %c0_i32, %c0_i32_0 : i32, i32
  }
  func.func @transform_5(%arg0: i32) -> (i32, i32) {
    %c0_i32 = arith.constant 0 : i32
    %c0_i32_0 = arith.constant 0 : i32
    %c0_i32_1 = arith.constant 0 : i32
    return %c0_i32, %c0_i32_0 : i32, i32
  }
  func.func @transform_6(%arg0: i32) -> (i32, i32) {
    %c0_i32 = arith.constant 0 : i32
    %c0_i32_0 = arith.constant 0 : i32
    %c0_i32_1 = arith.constant 0 : i32
    return %c0_i32, %c0_i32_0 : i32, i32
  }
  func.func @transform_7(%arg0: i32) -> (i32, i32) {
    %c0_i32 = arith.constant 0 : i32
    %c0_i32_0 = arith.constant 0 : i32
    %c0_i32_1 = arith.constant 0 : i32
    return %c0_i32, %c0_i32_0 : i32, i32
  }
  func.func @transform_8(%arg0: i32) -> (i32, i32, i32) {
    %c0_i32 = arith.constant 0 : i32
    %c0_i32_0 = arith.constant 0 : i32
    %c0_i32_1 = arith.constant 0 : i32
    return %arg0, %c0_i32, %c0_i32_0 : i32, i32, i32
  }
}

</mosaic_0001>

<llo_original>
// kernel: tpu_custom_call.1
$region0: #{tpu_custom_call.1}
  #allocation0 [shape = 'u32[]', space=smem, size = 0x4, offset = 0x4, fixed_abs, tag = 'smem constant byte address 0x4 - core index']
  #allocation1 [shape = 'u32[144,128]{1,0:T(1,128)}', space=vmem, size = 0x12000, scoped, tag = 'internal scratch']
  #allocation2 [shape = 'f32[20,128]{1,0:T(8,128)}', space=vmem, size = 0x3000, scoped, tag = 'scratch operand']
  #allocation3 [shape = 'f32[16,128]{1,0:T(8,128)}', space=vmem, size = 0x2000, scoped, tag = 'scratch operand']
  %s0 = inlined_call_operand.vmem [shape: f32[2,16,8], index: 0, kind: input, shape index: {}]
  %s1 = inlined_call_operand.vmem [shape: f32[4,5,128], index: 1, kind: input, shape index: {}]
  %s2 = inlined_call_operand.hbm [shape: bf16[4,128,128], index: 2, kind: input, shape index: {}]
  %s3 = inlined_call_operand.vmem [shape: f32[4,1,128], index: 3, kind: input, shape index: {}]
  %s4 = inlined_call_operand.hbm [shape: f32[128,128], index: 4, kind: input, shape index: {}]
  %s5 = inlined_call_operand.vmem [shape: f32[1,128], index: 5, kind: input, shape index: {}]
  %s6 = inlined_call_operand.hbm [shape: f32[128,128], index: 6, kind: input, shape index: {}]
  %s7 = inlined_call_operand.vmem [shape: f32[1,128], index: 7, kind: input, shape index: {}]
  %s8 = inlined_call_operand.vmem [shape: f32[2,16,8], index: 8, kind: output, shape index: {}]
  %s9 = sld [smem:[#allocation0]]
  $region77: #{tpu_custom_call.1} parent=0
    _
  %s11 = ssub.s32 1, %s9
  %s12 = scalar_select 0, %s11, %s9
  $region1: #{tpu_custom_call.1} parent=0
    #allocation4 [shape = 'u8[131072]{0}', space=vmem, size = 0x20000, scoped, tag = 'input window, operand 2, single buffered']
    #allocation5 [shape = 's32[2]{0}', space=sflag, size = 0x8, scoped, tag = 'scoped memory for tpu_custom_call.1']
    #allocation6 [shape = 'u8[65536]{0}', space=vmem, size = 0x10000, scoped, tag = 'input window, operand 4, single buffered']
    #allocation7 [shape = 's32[1]{0}', space=sflag, size = 0x4, scoped, tag = 'scoped memory for tpu_custom_call.1']
    #allocation8 [shape = 'u8[65536]{0}', space=vmem, size = 0x10000, scoped, tag = 'input window, operand 6, single buffered']
    %13 = vsyncpa [#allocation5], 0
    %14 = vsyncpa [#allocation7], 0
    loop: start=0, step=1, limit=4
    $region2: #{tpu_custom_call.1} parent=1 // loop_pre_header
      _
    $region3: #{tpu_custom_call.1} parent=1 // loop_header
      %s16 = sphi 0, %s20
      %p17 = scmp.ge.s32.totalorder %s16, 4
      %s26 = sphi 0, %s28
      %s29 = sphi 0, %s26
      %s30 = sphi 0, %s29
      %s46 = sphi 0, %s30
      %s50 = sphi 0, %s50
      %s52 = sphi 0, %s50
      %s53 = sphi 0, %s52
      %s67 = sphi 0, %s53
      %s71 = sphi 0, %s71
      %s73 = sphi 0, %s71
      %s74 = sphi 0, %s73
      %s88 = sphi 0, %s74
      %s92 = sphi 0, %s92
      %s94 = sphi 0, %s92
      %s95 = sphi 0, %s94
      %s109 = sphi 0, %s95
      %s113 = sphi 0, %s113
      %s115 = sphi 0, %s113
      %s116 = sphi 0, %s115
      %s130 = sphi 0, %s116
      %s134 = sphi 0, %s134
      %s136 = sphi 0, %s134
      %s137 = sphi 0, %s136
      %s151 = sphi 0, %s137
      %s155 = sphi 0, %s155
      %s157 = sphi 0, %s155
      %s158 = sphi 0, %s157
      %s172 = sphi 0, %s158
      %s176 = sphi 0, %s176
      %s178 = sphi 0, %s176
      %s179 = sphi 0, %s178
      %s193 = sphi 0, %s179
      %s199 = sphi 0, %s201
      %s202 = sphi 0, %s199
      %s203 = sphi 0, %s202
      %s219 = sphi 0, %s203
    $region4: #{tpu_custom_call.1} parent=1 // loop_header_branch
      %19 = sbr.rel (%p17) target = $region8
    $region5: #{tpu_custom_call.1} parent=1 // loop_body
      %s21 = ssub.s32 %s16, 1
      %s22 = ssub.s32 %s16, 2
      %s23 = sadd.s32 %s16, 1
      %s24 = ssub.s32 %s16, %s23
      %p25 = scmp.eq.s32.totalorder %s24, 0
      %s27 = sadd.s32 %s26, 1
      %s28 = scalar_select %p25, %s26, %s27
      %p31 = pneg %p25
      %p32 = scmp.eq.s32.totalorder %s16, 1
      %p33 = por %p31, %p32
      %p34 = scmp.ne.s32.totalorder %s26, %s29
      %p35 = scmp.eq.s32.totalorder %s16, 0
      %p36 = por %p34, %p35
      %p37 = scmp.ne.s32.totalorder %s26, %s29
      %p38 = scmp.eq.s32.totalorder %s21, 1
      %p39 = por %p37, %p38
      %p40 = scmp.ne.s32.totalorder %s29, %s30
      %p41 = scmp.eq.s32.totalorder %s21, 0
      %p42 = por %p40, %p41
      %p43 = scmp.ne.s32.totalorder %s29, %s30
      %p44 = scmp.eq.s32.totalorder %s22, 1
      %p45 = por %p43, %p44
      %p47 = scmp.ne.s32.totalorder %s30, %s46
      %p48 = scmp.eq.s32.totalorder %s22, 0
      %p49 = por %p47, %p48
      %s51 = sadd.s32 %s50, 1
      %p54 = scmp.eq.s32.totalorder %s16, 1
      %p55 = scmp.ne.s32.totalorder %s50, %s52
      %p56 = scmp.eq.s32.totalorder %s16, 0
      %p57 = por %p55, %p56
      %p58 = scmp.ne.s32.totalorder %s50, %s52
      %p59 = scmp.eq.s32.totalorder %s21, 1
      %p60 = por %p58, %p59
      %p61 = scmp.ne.s32.totalorder %s52, %s53
      %p62 = scmp.eq.s32.totalorder %s21, 0
      %p63 = por %p61, %p62
      %p64 = scmp.ne.s32.totalorder %s52, %s53
      %p65 = scmp.eq.s32.totalorder %s22, 1
      %p66 = por %p64, %p65
      %p68 = scmp.ne.s32.totalorder %s53, %s67
      %p69 = scmp.eq.s32.totalorder %s22, 0
      %p70 = por %p68, %p69
      %s72 = sadd.s32 %s71, 1
      %p75 = scmp.eq.s32.totalorder %s16, 1
      %p76 = scmp.ne.s32.totalorder %s71, %s73
      %p77 = scmp.eq.s32.totalorder %s16, 0
      %p78 = por %p76, %p77
      %p79 = scmp.ne.s32.totalorder %s71, %s73
      %p80 = scmp.eq.s32.totalorder %s21, 1
      %p81 = por %p79, %p80
      %p82 = scmp.ne.s32.totalorder %s73, %s74
      %p83 = scmp.eq.s32.totalorder %s21, 0
      %p84 = por %p82, %p83
      %p85 = scmp.ne.s32.totalorder %s73, %s74
      %p86 = scmp.eq.s32.totalorder %s22, 1
      %p87 = por %p85, %p86
      %p89 = scmp.ne.s32.totalorder %s74, %s88
      %p90 = scmp.eq.s32.totalorder %s22, 0
      %p91 = por %p89, %p90
      %s93 = sadd.s32 %s92, 1
      %p96 = scmp.eq.s32.totalorder %s16, 1
      %p97 = scmp.ne.s32.totalorder %s92, %s94
      %p98 = scmp.eq.s32.totalorder %s16, 0
      %p99 = por %p97, %p98
      %p100 = scmp.ne.s32.totalorder %s92, %s94
      %p101 = scmp.eq.s32.totalorder %s21, 1
      %p102 = por %p100, %p101
      %p103 = scmp.ne.s32.totalorder %s94, %s95
      %p104 = scmp.eq.s32.totalorder %s21, 0
      %p105 = por %p103, %p104
      %p106 = scmp.ne.s32.totalorder %s94, %s95
      %p107 = scmp.eq.s32.totalorder %s22, 1
      %p108 = por %p106, %p107
      %p110 = scmp.ne.s32.totalorder %s95, %s109
      %p111 = scmp.eq.s32.totalorder %s22, 0
      %p112 = por %p110, %p111
      %s114 = sadd.s32 %s113, 1
      %p117 = scmp.eq.s32.totalorder %s16, 1
      %p118 = scmp.ne.s32.totalorder %s113, %s115
      %p119 = scmp.eq.s32.totalorder %s16, 0
      %p120 = por %p118, %p119
      %p121 = scmp.ne.s32.totalorder %s113, %s115
      %p122 = scmp.eq.s32.totalorder %s21, 1
      %p123 = por %p121, %p122
      %p124 = scmp.ne.s32.totalorder %s115, %s116
      %p125 = scmp.eq.s32.totalorder %s21, 0
      %p126 = por %p124, %p125
      %p127 = scmp.ne.s32.totalorder %s115, %s116
      %p128 = scmp.eq.s32.totalorder %s22, 1
      %p129 = por %p127, %p128
      %p131 = scmp.ne.s32.totalorder %s116, %s130
      %p132 = scmp.eq.s32.totalorder %s22, 0
      %p133 = por %p131, %p132
      %s135 = sadd.s32 %s134, 1
      %p138 = scmp.eq.s32.totalorder %s16, 1
      %p139 = scmp.ne.s32.totalorder %s134, %s136
      %p140 = scmp.eq.s32.totalorder %s16, 0
      %p141 = por %p139, %p140
      %p142 = scmp.ne.s32.totalorder %s134, %s136
      %p143 = scmp.eq.s32.totalorder %s21, 1
      %p144 = por %p142, %p143
      %p145 = scmp.ne.s32.totalorder %s136, %s137
      %p146 = scmp.eq.s32.totalorder %s21, 0
      %p147 = por %p145, %p146
      %p148 = scmp.ne.s32.totalorder %s136, %s137
      %p149 = scmp.eq.s32.totalorder %s22, 1
      %p150 = por %p148, %p149
      %p152 = scmp.ne.s32.totalorder %s137, %s151
      %p153 = scmp.eq.s32.totalorder %s22, 0
      %p154 = por %p152, %p153
      %s156 = sadd.s32 %s155, 1
      %p159 = scmp.eq.s32.totalorder %s16, 1
      %p160 = scmp.ne.s32.totalorder %s155, %s157
      %p161 = scmp.eq.s32.totalorder %s16, 0
      %p162 = por %p160, %p161
      %p163 = scmp.ne.s32.totalorder %s155, %s157
      %p164 = scmp.eq.s32.totalorder %s21, 1
      %p165 = por %p163, %p164
      %p166 = scmp.ne.s32.totalorder %s157, %s158
      %p167 = scmp.eq.s32.totalorder %s21, 0
      %p168 = por %p166, %p167
      %p169 = scmp.ne.s32.totalorder %s157, %s158
      %p170 = scmp.eq.s32.totalorder %s22, 1
      %p171 = por %p169, %p170
      %p173 = scmp.ne.s32.totalorder %s158, %s172
      %p174 = scmp.eq.s32.totalorder %s22, 0
      %p175 = por %p173, %p174
      %s177 = sadd.s32 %s176, 1
      %p180 = scmp.eq.s32.totalorder %s16, 1
      %p181 = scmp.ne.s32.totalorder %s176, %s178
      %p182 = scmp.eq.s32.totalorder %s16, 0
      %p183 = por %p181, %p182
      %p184 = scmp.ne.s32.totalorder %s176, %s178
      %p185 = scmp.eq.s32.totalorder %s21, 1
      %p186 = por %p184, %p185
      %p187 = scmp.ne.s32.totalorder %s178, %s179
      %p188 = scmp.eq.s32.totalorder %s21, 0
      %p189 = por %p187, %p188
      %p190 = scmp.ne.s32.totalorder %s178, %s179
      %p191 = scmp.eq.s32.totalorder %s22, 1
      %p192 = por %p190, %p191
      %p194 = scmp.ne.s32.totalorder %s179, %s193
      %p195 = scmp.eq.s32.totalorder %s22, 0
      %p196 = por %p194, %p195
      %s197 = ssub.s32 %s16, %s23
      %p198 = scmp.eq.s32.totalorder %s197, 0
      %s200 = sadd.s32 %s199, 1
      %s201 = scalar_select %p198, %s199, %s200
      %p204 = pneg %p198
      %p205 = scmp.eq.s32.totalorder %s16, 1
      %p206 = por %p204, %p205
      %p207 = scmp.ne.s32.totalorder %s199, %s202
      %p208 = scmp.eq.s32.totalorder %s16, 0
      %p209 = por %p207, %p208
      %p210 = scmp.ne.s32.totalorder %s199, %s202
      %p211 = scmp.eq.s32.totalorder %s21, 1
      %p212 = por %p210, %p211
      %p213 = scmp.ne.s32.totalorder %s202, %s203
      %p214 = scmp.eq.s32.totalorder %s21, 0
      %p215 = por %p213, %p214
      %p216 = scmp.ne.s32.totalorder %s202, %s203
      %p217 = scmp.eq.s32.totalorder %s22, 1
      %p218 = por %p216, %p217
      %p220 = scmp.ne.s32.totalorder %s203, %s219
      %p221 = scmp.eq.s32.totalorder %s22, 0
      %p222 = por %p220, %p221
      %p223 = scmp.le.s32.totalorder 1, %s16
      %p224 = scmp.lt.s32.totalorder %s16, 3
      %p225 = pnand %p223, %p224
      %p226 = pneg %p225
      // Predicated region
      $region9: #{tpu_custom_call.1} parent=5 // pred_check
        _
      $region10: #{tpu_custom_call.1} parent=5 // pred_check_branch
        %228 = sbr.rel (%p225) target = $region12
      $region11: #{tpu_custom_call.1} parent=5 // pred_region
        %s229 = ssub.s32 %s16, 1
        // Predicated region
        $region13: #{tpu_custom_call.1} parent=11 // pred_check
          %p230 = pneg %p63
        $region14: #{tpu_custom_call.1} parent=11 // pred_check_branch
          %232 = sbr.rel (%p230) target = $region16
        $region15: #{tpu_custom_call.1} parent=11 // pred_region
          _
        $region16: #{tpu_custom_call.1} parent=11 // pred_fallthru
          _
        // Predicated region
        $region17: #{tpu_custom_call.1} parent=11 // pred_check
          %p233 = pneg %p84
        $region18: #{tpu_custom_call.1} parent=11 // pred_check_branch
          %235 = sbr.rel (%p233) target = $region20
        $region19: #{tpu_custom_call.1} parent=11 // pred_region
          %s237 = ssub.s32 4096, 4096
          %238 = vsyncadd [#allocation5], %s237
          %s239 = sshll.u32 [#allocation4], 4
          %s240 = int_to_ptr.vmem [resolvable:$true] %s239
          %245 = dma.hbm_to_vmem [thread:$0]  %s2, 4096, %s240, [#allocation5], 64, 64, 4
        $region20: #{tpu_custom_call.1} parent=11 // pred_fallthru
          _
        // Predicated region
        $region21: #{tpu_custom_call.1} parent=11 // pred_check
          %p246 = pneg %p105
        $region22: #{tpu_custom_call.1} parent=11 // pred_check_branch
          %248 = sbr.rel (%p246) target = $region24
        $region23: #{tpu_custom_call.1} parent=11 // pred_region
          _
        $region24: #{tpu_custom_call.1} parent=11 // pred_fallthru
          _
        // Predicated region
        $region25: #{tpu_custom_call.1} parent=11 // pred_check
          %p249 = pneg %p126
        $region26: #{tpu_custom_call.1} parent=11 // pred_check_branch
          %251 = sbr.rel (%p249) target = $region28
        $region27: #{tpu_custom_call.1} parent=11 // pred_region
          %s253 = ssub.s32 2048, 2048
          %254 = vsyncadd [#allocation7], %s253
          %s255 = sshll.u32 [#allocation6], 4
          %s256 = int_to_ptr.vmem [resolvable:$true] %s255
          %261 = dma.hbm_to_vmem [thread:$0]  %s4, 2048, %s256, [#allocation7], 128, 128, 8
        $region28: #{tpu_custom_call.1} parent=11 // pred_fallthru
          _
        // Predicated region
        $region29: #{tpu_custom_call.1} parent=11 // pred_check
          %p262 = pneg %p147
        $region30: #{tpu_custom_call.1} parent=11 // pred_check_branch
          %264 = sbr.rel (%p262) target = $region32
        $region31: #{tpu_custom_call.1} parent=11 // pred_region
          _
        $region32: #{tpu_custom_call.1} parent=11 // pred_fallthru
          _
        // Predicated region
        $region33: #{tpu_custom_call.1} parent=11 // pred_check
          %p265 = pneg %p168
        $region34: #{tpu_custom_call.1} parent=11 // pred_check_branch
          %267 = sbr.rel (%p265) target = $region36
        $region35: #{tpu_custom_call.1} parent=11 // pred_region
          %s269 = ssub.s32 2048, 2048
          %270 = vsyncadd [#allocation7], %s269
          %s271 = sshll.u32 [#allocation8], 4
          %s272 = int_to_ptr.vmem [resolvable:$true] %s271
          %277 = dma.hbm_to_vmem [thread:$0]  %s6, 2048, %s272, [#allocation7], 128, 128, 8
        $region36: #{tpu_custom_call.1} parent=11 // pred_fallthru
          _
        // Predicated region
        $region37: #{tpu_custom_call.1} parent=11 // pred_check
          %p278 = pneg %p189
        $region38: #{tpu_custom_call.1} parent=11 // pred_check_branch
          %280 = sbr.rel (%p278) target = $region40
        $region39: #{tpu_custom_call.1} parent=11 // pred_region
          _
        $region40: #{tpu_custom_call.1} parent=11 // pred_fallthru
          _
      $region12: #{tpu_custom_call.1} parent=5 // pred_fallthru
        _
      %p281 = scmp.lt.s32.totalorder %s16, 2
      // Predicated region
      $region41: #{tpu_custom_call.1} parent=5 // pred_check
        %p282 = pneg %p281
      $region42: #{tpu_custom_call.1} parent=5 // pred_check_branch
        %284 = sbr.rel (%p282) target = $region44
      $region43: #{tpu_custom_call.1} parent=5 // pred_region
        // Predicated region
        $region45: #{tpu_custom_call.1} parent=43 // pred_check
          %p285 = pneg %p36
        $region46: #{tpu_custom_call.1} parent=43 // pred_check_branch
          %287 = sbr.rel (%p285) target = $region48
        $region47: #{tpu_custom_call.1} parent=43 // pred_region
          %p288 = scmp.lt.s32.totalorder %s16, 1
          %s289 = scalar_select %p288, %s16, 1
          %s290 = smul.addr %s289, 2
          %s291 = smul.addr %s290, 8
          %s292 = scalar_lea.vmem %s0, %s291
        $region48: #{tpu_custom_call.1} parent=43 // pred_fallthru
          _
      $region44: #{tpu_custom_call.1} parent=5 // pred_fallthru
        _
      %p293 = scmp.le.s32.totalorder 1, %s16
      %p294 = scmp.lt.s32.totalorder %s16, 3
      %p295 = pnand %p293, %p294
      %p296 = pneg %p295
      // Predicated region
      $region49: #{tpu_custom_call.1} parent=5 // pred_check
        _
      $region50: #{tpu_custom_call.1} parent=5 // pred_check_branch
        %298 = sbr.rel (%p295) target = $region52
      $region51: #{tpu_custom_call.1} parent=5 // pred_region
        %s299 = ssub.s32 %s16, 1
        // Predicated region
        $region53: #{tpu_custom_call.1} parent=51 // pred_check
          %p300 = pneg %p84
        $region54: #{tpu_custom_call.1} parent=51 // pred_check_branch
          %302 = sbr.rel (%p300) target = $region56
        $region55: #{tpu_custom_call.1} parent=51 // pred_region
          %303 = dma.done [#allocation5], 4096
        $region56: #{tpu_custom_call.1} parent=51 // pred_fallthru
          _
        // Predicated region
        $region57: #{tpu_custom_call.1} parent=51 // pred_check
          %p304 = pneg %p126
        $region58: #{tpu_custom_call.1} parent=51 // pred_check_branch
          %306 = sbr.rel (%p304) target = $region60
        $region59: #{tpu_custom_call.1} parent=51 // pred_region
          %307 = dma.done [#allocation7], 2048
        $region60: #{tpu_custom_call.1} parent=51 // pred_fallthru
          _
        // Predicated region
        $region61: #{tpu_custom_call.1} parent=51 // pred_check
          %p308 = pneg %p168
        $region62: #{tpu_custom_call.1} parent=51 // pred_check_branch
          %310 = sbr.rel (%p308) target = $region64
        $region63: #{tpu_custom_call.1} parent=51 // pred_region
          %311 = dma.done [#allocation7], 2048
        $region64: #{tpu_custom_call.1} parent=51 // pred_fallthru
          _
        %p312 = scmp.lt.s32.totalorder %s21, 1
        %s313 = scalar_select %p312, %s21, 1
        %s314 = smul.addr %s313, 2
        %s315 = smul.addr %s314, 8
        %s316 = scalar_lea.vmem %s0, %s315
        %p317 = pneg %p42
        %p318 = pneg %p39
        %p319 = pneg %p63
        %p320 = pneg %p60
        %p321 = pneg %p84
        %p322 = pneg %p81
        %p323 = pneg %p105
        %p324 = pneg %p102
        %p325 = pneg %p126
        %p326 = pneg %p123
        %p327 = pneg %p147
        %p328 = pneg %p144
        %p329 = pneg %p168
        %p330 = pneg %p165
        %p331 = pneg %p189
        %p332 = pneg %p186
        %p333 = pneg %p215
        %p334 = pneg %p212
        %p335 = scmp.lt.s32.totalorder %s21, 1
        %s336 = scalar_select %p335, %s21, 1
        %s337 = smul.addr %s336, 2
        %s338 = smul.addr %s337, 8
        %s339 = scalar_lea.vmem %s8, %s338
        %p340 = scmp.lt.s32.totalorder %s21, 1
        %s341 = scalar_select %p340, %s21, 1
        %s342 = smul.addr %s341, 2
        %s343 = smul.addr %s342, 8
        %s344 = scalar_lea.vmem %s0, %s343
        %p345 = scmp.lt.s32.totalorder %s21, 1
        %s346 = scalar_select %p345, %s21, 1
        %s347 = smul.addr %s346, 2
        %s348 = smul.addr %s347, 8
        %s349 = scalar_lea.vmem %s8, %s348
        %351 = vst [vmem:[#allocation2] sm:$0xff] 0.0
        %352 = vst [vmem:[#allocation2 + $0x8] sm:$0xff] 0.0
        %353 = vst [vmem:[#allocation2 + $0x10] sm:$0xf] 0.0
        %v354 = vld [vmem:[%s344] sm:$0xff]
        %v355 = vld [vmem:[%s344 + $0x8] sm:$0xff]
        %vm356 = vcmask 64512
        %357 = vst.msk [vmem:[#allocation2 + $0x2] sm:$0xff] %vm356, %v354
        %358 = vst.msk [vmem:[#allocation2 + $0xa] sm:$0xff] %vm356, %v355
        %s359 = scalar_lea.vmem %s1, 24
        %v360 = vld [vmem:[%s359] sm:$0x1f]
        %v361 = vld [vmem:[#allocation2] sm:$0xff]
        %v362 = vld [vmem:[#allocation2 + $0x8] sm:$0xff]
        %v363 = vlaneseq
        %v364 = vshrl.u32 %v363, 7
        %v365 = vsub.s32 0, %v364
        %v366 = vrot.slane %v360, %v365
        %v367 = vmul.f32 %v361, %v366
        %v368 = vmul.f32 %v362, %v366
        %v369 = vld [vmem:[#allocation2 + $0x1] sm:$0xff]
        %v370 = vld [vmem:[#allocation2 + $0x9] sm:$0xff]
        %v371 = vlaneseq
        %v372 = vshrl.u32 %v371, 7
        %v373 = vsub.s32 1, %v372
        %v374 = vrot.slane %v360, %v373
        %v375 = vmul.f32 %v369, %v374
        %v376 = vmul.f32 %v370, %v374
        %v377 = vadd.f32 %v367, %v375
        %v378 = vadd.f32 %v368, %v376
        %v379 = vld [vmem:[#allocation2 + $0x2] sm:$0xff]
        %v380 = vld [vmem:[#allocation2 + $0xa] sm:$0xff]
        %v381 = vlaneseq
        %v382 = vshrl.u32 %v381, 7
        %v383 = vsub.s32 2, %v382
        %v384 = vrot.slane %v360, %v383
        %v385 = vmul.f32 %v379, %v384
        %v386 = vmul.f32 %v380, %v384
        %v387 = vadd.f32 %v377, %v385
        %v388 = vadd.f32 %v378, %v386
        %v389 = vld [vmem:[#allocation2 + $0x3] sm:$0xff]
        %v390 = vld [vmem:[#allocation2 + $0xb] sm:$0xff]
        %v391 = vlaneseq
        %v392 = vshrl.u32 %v391, 7
        %v393 = vsub.s32 3, %v392
        %v394 = vrot.slane %v360, %v393
        %v395 = vmul.f32 %v389, %v394
        %v396 = vmul.f32 %v390, %v394
        %v397 = vadd.f32 %v387, %v395
        %v398 = vadd.f32 %v388, %v396
        %v399 = vld [vmem:[#allocation2 + $0x4] sm:$0xff]
        %v400 = vld [vmem:[#allocation2 + $0xc] sm:$0xff]
        %v401 = vlaneseq
        %v402 = vshrl.u32 %v401, 7
        %v403 = vsub.s32 4, %v402
        %v404 = vrot.slane %v360, %v403
        %v405 = vmul.f32 %v399, %v404
        %v406 = vmul.f32 %v400, %v404
        %v407 = vadd.f32 %v397, %v405
        %v408 = vadd.f32 %v398, %v406
        %s409 = scalar_lea.vmem [#allocation4], 192
        %v410 = vld [vmem:[%s409] sm:$0xf]
        %v411 = vld [vmem:[%s409 + $0x4] sm:$0xf]
        %v412 = vld [vmem:[%s409 + $0x8] sm:$0xf]
        %v413 = vld [vmem:[%s409 + $0xc] sm:$0xf]
        %v414 = vld [vmem:[%s409 + $0x10] sm:$0xf]
        %v415 = vld [vmem:[%s409 + $0x14] sm:$0xf]
        %v416 = vld [vmem:[%s409 + $0x18] sm:$0xf]
        %v417 = vld [vmem:[%s409 + $0x1c] sm:$0xf]
        %v418 = vld [vmem:[%s409 + $0x20] sm:$0xf]
        %v419 = vld [vmem:[%s409 + $0x24] sm:$0xf]
        %v420 = vld [vmem:[%s409 + $0x28] sm:$0xf]
        %v421 = vld [vmem:[%s409 + $0x2c] sm:$0xf]
        %v422 = vld [vmem:[%s409 + $0x30] sm:$0xf]
        %v423 = vld [vmem:[%s409 + $0x34] sm:$0xf]
        %v424 = vld [vmem:[%s409 + $0x38] sm:$0xf]
        %v425 = vld [vmem:[%s409 + $0x3c] sm:$0xf]
        %s426 = scalar_lea.vmem %s3, 3
        %v427 = vld [vmem:[%s426] sm:$0x1]
        %v428 = vpack.c.bf16 %v408, %v407
        %v430 = vlaneseq
        %v431 = vshrl.u32 %v430, 7
        %v432 = vsub.s32 0, %v431
        %v433 = vrot.slane %v427, %v432
        %v451 = vunpack.c.l.b16 %v410
        %v452 = vunpack.c.l.b16 %v411
        %v453 = vunpack.c.l.b16 %v412
        %v454 = vunpack.c.l.b16 %v413
        %v455 = vunpack.c.l.b16 %v414
        %v456 = vunpack.c.l.b16 %v415
        %v457 = vunpack.c.l.b16 %v416
        %v458 = vunpack.c.l.b16 %v417
        %v459 = vunpack.c.l.b16 %v418
        %v460 = vunpack.c.l.b16 %v419
        %v461 = vunpack.c.l.b16 %v420
        %v462 = vunpack.c.l.b16 %v421
        %v463 = vunpack.c.l.b16 %v422
        %v464 = vunpack.c.l.b16 %v423
        %v465 = vunpack.c.l.b16 %v424
        %v466 = vunpack.c.l.b16 %v425
        %v467 = vpack.c.b16 %v452, %v451
        %v468 = vpack.c.b16 %v454, %v453
        %v469 = vpack.c.b16 %v456, %v455
        %v470 = vpack.c.b16 %v458, %v457
        %v471 = vpack.c.b16 %v460, %v459
        %v472 = vpack.c.b16 %v462, %v461
        %v473 = vpack.c.b16 %v464, %v463
        %v474 = vpack.c.b16 %v466, %v465
        %483 = vmatprep.subr.bf16.mxu0 0
        %484 = vmatpush1.bf16.msra.mxu0 %v474
        %485 = vmatprep.subr.bf16.mxu0 0
        %486 = vmatpush1.bf16.msra.mxu0 %v473
        %487 = vmatprep.subr.bf16.mxu0 0
        %488 = vmatpush1.bf16.msra.mxu0 %v472
        %489 = vmatprep.subr.bf16.mxu0 0
        %490 = vmatpush1.bf16.msra.mxu0 %v471
        %491 = vmatprep.subr.bf16.mxu0 0
        %492 = vmatpush1.bf16.msra.mxu0 %v470
        %493 = vmatprep.subr.bf16.mxu0 0
        %494 = vmatpush1.bf16.msra.mxu0 %v469
        %495 = vmatprep.subr.bf16.mxu0 0
        %496 = vmatpush1.bf16.msra.mxu0 %v468
        %497 = vmatprep.subr.bf16.mxu0 0
        %498 = vmatpush1.bf16.msra.mxu0 %v467
        %499 = vmatprep.subr.bf16.mxu0 0
        %500 = vmatpush2.bf16.msra.mxu0 0
        %501 = vmatprep.subr.bf16.mxu0 0
        %502 = vmatpush2.bf16.msra.mxu0 0
        %503 = vmatprep.subr.bf16.mxu0 0
        %504 = vmatpush2.bf16.msra.mxu0 0
        %505 = vmatprep.subr.bf16.mxu0 0
        %506 = vmatpush2.bf16.msra.mxu0 0
        %507 = vmatprep.subr.bf16.mxu0 0
        %508 = vmatpush2.bf16.msra.mxu0 0
        %509 = vmatprep.subr.bf16.mxu0 0
        %510 = vmatpush2.bf16.msra.mxu0 0
        %511 = vmatprep.subr.bf16.mxu0 0
        %512 = vmatpush2.bf16.msra.mxu0 0
        %513 = vmatprep.subr.bf16.mxu0 0
        %514 = vmatpush2.bf16.msra.mxu0 0
        %515 = vmatprep.mubr.bf16.mxu0 0
        %516 = vmatmul.mubr.bf16.gmra.mxu0 %v428
        %v517 = vpop.f32.mrf.mxu0
        %v518 = vadd.f32 %v433, %v517
        %v519 = vpop.f32.mrf.mxu0
        %v520 = vpop.f32.mrf.mxu0
        %v521 = vadd.f32 %v433, %v520
        %v522 = vpop.f32.mrf.mxu0
        %523 = vdwg.mxu0
        %524 = vst [vmem:[#allocation3] sm:$0xff] %v518
        %525 = vst [vmem:[#allocation3 + $0x8] sm:$0xff] %v521
        %v526 = vld [vmem:[%s1] sm:$0x1f]
        %v527 = vld [vmem:[#allocation2] sm:$0xff]
        %v528 = vld [vmem:[#allocation2 + $0x8] sm:$0xff]
        %v529 = vlaneseq
        %v530 = vshrl.u32 %v529, 7
        %v531 = vsub.s32 0, %v530
        %v532 = vrot.slane %v526, %v531
        %v533 = vmul.f32 %v527, %v532
        %v534 = vmul.f32 %v528, %v532
        %v535 = vld [vmem:[#allocation2 + $0x1] sm:$0xff]
        %v536 = vld [vmem:[#allocation2 + $0x9] sm:$0xff]
        %v537 = vlaneseq
        %v538 = vshrl.u32 %v537, 7
        %v539 = vsub.s32 1, %v538
        %v540 = vrot.slane %v526, %v539
        %v541 = vmul.f32 %v535, %v540
        %v542 = vmul.f32 %v536, %v540
        %v543 = vadd.f32 %v533, %v541
        %v544 = vadd.f32 %v534, %v542
        %v545 = vld [vmem:[#allocation2 + $0x2] sm:$0xff]
        %v546 = vld [vmem:[#allocation2 + $0xa] sm:$0xff]
        %v547 = vlaneseq
        %v548 = vshrl.u32 %v547, 7
        %v549 = vsub.s32 2, %v548
        %v550 = vrot.slane %v526, %v549
        %v551 = vmul.f32 %v545, %v550
        %v552 = vmul.f32 %v546, %v550
        %v553 = vadd.f32 %v543, %v551
        %v554 = vadd.f32 %v544, %v552
        %v555 = vld [vmem:[#allocation2 + $0x3] sm:$0xff]
        %v556 = vld [vmem:[#allocation2 + $0xb] sm:$0xff]
        %v557 = vlaneseq
        %v558 = vshrl.u32 %v557, 7
        %v559 = vsub.s32 3, %v558
        %v560 = vrot.slane %v526, %v559
        %v561 = vmul.f32 %v555, %v560
        %v562 = vmul.f32 %v556, %v560
        %v563 = vadd.f32 %v553, %v561
        %v564 = vadd.f32 %v554, %v562
        %v565 = vld [vmem:[#allocation2 + $0x4] sm:$0xff]
        %v566 = vld [vmem:[#allocation2 + $0xc] sm:$0xff]
        %v567 = vlaneseq
        %v568 = vshrl.u32 %v567, 7
        %v569 = vsub.s32 4, %v568
        %v570 = vrot.slane %v526, %v569
        %v571 = vmul.f32 %v565, %v570
        %v572 = vmul.f32 %v566, %v570
        %v573 = vadd.f32 %v563, %v571
        %v574 = vadd.f32 %v564, %v572
        %v575 = vld [vmem:[#allocation4] sm:$0xf]
        %v576 = vld [vmem:[#allocation4 + $0x4] sm:$0xf]
        %v577 = vld [vmem:[#allocation4 + $0x8] sm:$0xf]
        %v578 = vld [vmem:[#allocation4 + $0xc] sm:$0xf]
        %v579 = vld [vmem:[#allocation4 + $0x10] sm:$0xf]
        %v580 = vld [vmem:[#allocation4 + $0x14] sm:$0xf]
        %v581 = vld [vmem:[#allocation4 + $0x18] sm:$0xf]
        %v582 = vld [vmem:[#allocation4 + $0x1c] sm:$0xf]
        %v583 = vld [vmem:[#allocation4 + $0x20] sm:$0xf]
        %v584 = vld [vmem:[#allocation4 + $0x24] sm:$0xf]
        %v585 = vld [vmem:[#allocation4 + $0x28] sm:$0xf]
        %v586 = vld [vmem:[#allocation4 + $0x2c] sm:$0xf]
        %v587 = vld [vmem:[#allocation4 + $0x30] sm:$0xf]
        %v588 = vld [vmem:[#allocation4 + $0x34] sm:$0xf]
        %v589 = vld [vmem:[#allocation4 + $0x38] sm:$0xf]
        %v590 = vld [vmem:[#allocation4 + $0x3c] sm:$0xf]
        %v591 = vld [vmem:[%s3] sm:$0x1]
        %v592 = vpack.c.bf16 %v574, %v573
        %v594 = vlaneseq
        %v595 = vshrl.u32 %v594, 7
        %v596 = vsub.s32 0, %v595
        %v597 = vrot.slane %v591, %v596
        %v615 = vunpack.c.l.b16 %v575
        %v616 = vunpack.c.l.b16 %v576
        %v617 = vunpack.c.l.b16 %v577
        %v618 = vunpack.c.l.b16 %v578
        %v619 = vunpack.c.l.b16 %v579
        %v620 = vunpack.c.l.b16 %v580
        %v621 = vunpack.c.l.b16 %v581
        %v622 = vunpack.c.l.b16 %v582
        %v623 = vunpack.c.l.b16 %v583
        %v624 = vunpack.c.l.b16 %v584
        %v625 = vunpack.c.l.b16 %v585
        %v626 = vunpack.c.l.b16 %v586
        %v627 = vunpack.c.l.b16 %v587
        %v628 = vunpack.c.l.b16 %v588
        %v629 = vunpack.c.l.b16 %v589
        %v630 = vunpack.c.l.b16 %v590
        %v631 = vpack.c.b16 %v616, %v615
        %v632 = vpack.c.b16 %v618, %v617
        %v633 = vpack.c.b16 %v620, %v619
        %v634 = vpack.c.b16 %v622, %v621
        %v635 = vpack.c.b16 %v624, %v623
        %v636 = vpack.c.b16 %v626, %v625
        %v637 = vpack.c.b16 %v628, %v627
        %v638 = vpack.c.b16 %v630, %v629
        %647 = vmatprep.subr.bf16.mxu0 0
        %648 = vmatpush1.bf16.msra.mxu0 %v638
        %649 = vmatprep.subr.bf16.mxu0 0
        %650 = vmatpush1.bf16.msra.mxu0 %v637
        %651 = vmatprep.subr.bf16.mxu0 0
        %652 = vmatpush1.bf16.msra.mxu0 %v636
        %653 = vmatprep.subr.bf16.mxu0 0
        %654 = vmatpush1.bf16.msra.mxu0 %v635
        %655 = vmatprep.subr.bf16.mxu0 0
        %656 = vmatpush1.bf16.msra.mxu0 %v634
        %657 = vmatprep.subr.bf16.mxu0 0
        %658 = vmatpush1.bf16.msra.mxu0 %v633
        %659 = vmatprep.subr.bf16.mxu0 0
        %660 = vmatpush1.bf16.msra.mxu0 %v632
        %661 = vmatprep.subr.bf16.mxu0 0
        %662 = vmatpush1.bf16.msra.mxu0 %v631
        %663 = vmatprep.subr.bf16.mxu0 0
        %664 = vmatpush2.bf16.msra.mxu0 0
        %665 = vmatprep.subr.bf16.mxu0 0
        %666 = vmatpush2.bf16.msra.mxu0 0
        %667 = vmatprep.subr.bf16.mxu0 0
        %668 = vmatpush2.bf16.msra.mxu0 0
        %669 = vmatprep.subr.bf16.mxu0 0
        %670 = vmatpush2.bf16.msra.mxu0 0
        %671 = vmatprep.subr.bf16.mxu0 0
        %672 = vmatpush2.bf16.msra.mxu0 0
        %673 = vmatprep.subr.bf16.mxu0 0
        %674 = vmatpush2.bf16.msra.mxu0 0
        %675 = vmatprep.subr.bf16.mxu0 0
        %676 = vmatpush2.bf16.msra.mxu0 0
        %677 = vmatprep.subr.bf16.mxu0 0
        %678 = vmatpush2.bf16.msra.mxu0 0
        %679 = vmatprep.mubr.bf16.mxu0 0
        %680 = vmatmul.mubr.bf16.gmra.mxu0 %v592
        %v681 = vpop.f32.mrf.mxu0
        %v682 = vadd.f32 %v597, %v681
        %v683 = vpop.f32.mrf.mxu0
        %v684 = vpop.f32.mrf.mxu0
        %v685 = vadd.f32 %v597, %v684
        %v686 = vpop.f32.mrf.mxu0
        %687 = vdwg.mxu0
        %v688 = vxor.u32 %v682, 2147483648
        %v689 = vxor.u32 %v685, 2147483648
        %v690 = vmul.f32 %v688, 1.442695
        %v691 = vpow.pop %v690
        %v692 = vmul.f32 %v689, 1.442695
        %v693 = vpow.pop %v692
        %v694 = vadd.f32 %v691, 1.0
        %v695 = vadd.f32 %v693, 1.0
        %v696 = vrcp.pop %v694
        %v697 = vmul.f32 1.0, %v696
        %v698 = vrcp.pop %v695
        %v699 = vmul.f32 1.0, %v698
        %v700 = vmul.f32 %v682, %v697
        %v701 = vmul.f32 %v685, %v699
        %702 = vst [vmem:[#allocation2 + $0x2] sm:$0xff] %v700
        %703 = vst [vmem:[#allocation2 + $0xa] sm:$0xff] %v701
        %s704 = scalar_lea.vmem %s1, 8
        %v705 = vld [vmem:[%s704] sm:$0x1f]
        %v706 = vld [vmem:[#allocation2] sm:$0xff]
        %v707 = vld [vmem:[#allocation2 + $0x8] sm:$0xff]
        %v708 = vlaneseq
        %v709 = vshrl.u32 %v708, 7
        %v710 = vsub.s32 0, %v709
        %v711 = vrot.slane %v705, %v710
        %v712 = vmul.f32 %v706, %v711
        %v713 = vmul.f32 %v707, %v711
        %v714 = vld [vmem:[#allocation2 + $0x1] sm:$0xff]
        %v715 = vld [vmem:[#allocation2 + $0x9] sm:$0xff]
        %v716 = vlaneseq
        %v717 = vshrl.u32 %v716, 7
        %v718 = vsub.s32 1, %v717
        %v719 = vrot.slane %v705, %v718
        %v720 = vmul.f32 %v714, %v719
        %v721 = vmul.f32 %v715, %v719
        %v722 = vadd.f32 %v712, %v720
        %v723 = vadd.f32 %v713, %v721
        %v724 = vld [vmem:[#allocation2 + $0x2] sm:$0xff]
        %v725 = vld [vmem:[#allocation2 + $0xa] sm:$0xff]
        %v726 = vlaneseq
        %v727 = vshrl.u32 %v726, 7
        %v728 = vsub.s32 2, %v727
        %v729 = vrot.slane %v705, %v728
        %v730 = vmul.f32 %v724, %v729
        %v731 = vmul.f32 %v725, %v729
        %v732 = vadd.f32 %v722, %v730
        %v733 = vadd.f32 %v723, %v731
        %v734 = vld [vmem:[#allocation2 + $0x3] sm:$0xff]
        %v735 = vld [vmem:[#allocation2 + $0xb] sm:$0xff]
        %v736 = vlaneseq
        %v737 = vshrl.u32 %v736, 7
        %v738 = vsub.s32 3, %v737
        %v739 = vrot.slane %v705, %v738
        %v740 = vmul.f32 %v734, %v739
        %v741 = vmul.f32 %v735, %v739
        %v742 = vadd.f32 %v732, %v740
        %v743 = vadd.f32 %v733, %v741
        %v744 = vld [vmem:[#allocation2 + $0x4] sm:$0xff]
        %v745 = vld [vmem:[#allocation2 + $0xc] sm:$0xff]
        %v746 = vlaneseq
        %v747 = vshrl.u32 %v746, 7
        %v748 = vsub.s32 4, %v747
        %v749 = vrot.slane %v705, %v748
        %v750 = vmul.f32 %v744, %v749
        %v751 = vmul.f32 %v745, %v749
        %v752 = vadd.f32 %v742, %v750
        %v753 = vadd.f32 %v743, %v751
        %s754 = scalar_lea.vmem [#allocation4], 64
        %v755 = vld [vmem:[%s754] sm:$0xf]
        %v756 = vld [vmem:[%s754 + $0x4] sm:$0xf]
        %v757 = vld [vmem:[%s754 + $0x8] sm:$0xf]
        %v758 = vld [vmem:[%s754 + $0xc] sm:$0xf]
        %v759 = vld [vmem:[%s754 + $0x10] sm:$0xf]
        %v760 = vld [vmem:[%s754 + $0x14] sm:$0xf]
        %v761 = vld [vmem:[%s754 + $0x18] sm:$0xf]
        %v762 = vld [vmem:[%s754 + $0x1c] sm:$0xf]
        %v763 = vld [vmem:[%s754 + $0x20] sm:$0xf]
        %v764 = vld [vmem:[%s754 + $0x24] sm:$0xf]
        %v765 = vld [vmem:[%s754 + $0x28] sm:$0xf]
        %v766 = vld [vmem:[%s754 + $0x2c] sm:$0xf]
        %v767 = vld [vmem:[%s754 + $0x30] sm:$0xf]
        %v768 = vld [vmem:[%s754 + $0x34] sm:$0xf]
        %v769 = vld [vmem:[%s754 + $0x38] sm:$0xf]
        %v770 = vld [vmem:[%s754 + $0x3c] sm:$0xf]
        %s771 = scalar_lea.vmem %s3, 1
        %v772 = vld [vmem:[%s771] sm:$0x1]
        %v773 = vpack.c.bf16 %v753, %v752
        %v775 = vlaneseq
        %v776 = vshrl.u32 %v775, 7
        %v777 = vsub.s32 0, %v776
        %v778 = vrot.slane %v772, %v777
        %v796 = vunpack.c.l.b16 %v755
        %v797 = vunpack.c.l.b16 %v756
        %v798 = vunpack.c.l.b16 %v757
        %v799 = vunpack.c.l.b16 %v758
        %v800 = vunpack.c.l.b16 %v759
        %v801 = vunpack.c.l.b16 %v760
        %v802 = vunpack.c.l.b16 %v761
        %v803 = vunpack.c.l.b16 %v762
        %v804 = vunpack.c.l.b16 %v763
        %v805 = vunpack.c.l.b16 %v764
        %v806 = vunpack.c.l.b16 %v765
        %v807 = vunpack.c.l.b16 %v766
        %v808 = vunpack.c.l.b16 %v767
        %v809 = vunpack.c.l.b16 %v768
        %v810 = vunpack.c.l.b16 %v769
        %v811 = vunpack.c.l.b16 %v770
        %v812 = vpack.c.b16 %v797, %v796
        %v813 = vpack.c.b16 %v799, %v798
        %v814 = vpack.c.b16 %v801, %v800
        %v815 = vpack.c.b16 %v803, %v802
        %v816 = vpack.c.b16 %v805, %v804
        %v817 = vpack.c.b16 %v807, %v806
        %v818 = vpack.c.b16 %v809, %v808
        %v819 = vpack.c.b16 %v811, %v810
        %828 = vmatprep.subr.bf16.mxu0 0
        %829 = vmatpush1.bf16.msra.mxu0 %v819
        %830 = vmatprep.subr.bf16.mxu0 0
        %831 = vmatpush1.bf16.msra.mxu0 %v818
        %832 = vmatprep.subr.bf16.mxu0 0
        %833 = vmatpush1.bf16.msra.mxu0 %v817
        %834 = vmatprep.subr.bf16.mxu0 0
        %835 = vmatpush1.bf16.msra.mxu0 %v816
        %836 = vmatprep.subr.bf16.mxu0 0
        %837 = vmatpush1.bf16.msra.mxu0 %v815
        %838 = vmatprep.subr.bf16.mxu0 0
        %839 = vmatpush1.bf16.msra.mxu0 %v814
        %840 = vmatprep.subr.bf16.mxu0 0
        %841 = vmatpush1.bf16.msra.mxu0 %v813
        %842 = vmatprep.subr.bf16.mxu0 0
        %843 = vmatpush1.bf16.msra.mxu0 %v812
        %844 = vmatprep.subr.bf16.mxu0 0
        %845 = vmatpush2.bf16.msra.mxu0 0
        %846 = vmatprep.subr.bf16.mxu0 0
        %847 = vmatpush2.bf16.msra.mxu0 0
        %848 = vmatprep.subr.bf16.mxu0 0
        %849 = vmatpush2.bf16.msra.mxu0 0
        %850 = vmatprep.subr.bf16.mxu0 0
        %851 = vmatpush2.bf16.msra.mxu0 0
        %852 = vmatprep.subr.bf16.mxu0 0
        %853 = vmatpush2.bf16.msra.mxu0 0
        %854 = vmatprep.subr.bf16.mxu0 0
        %855 = vmatpush2.bf16.msra.mxu0 0
        %856 = vmatprep.subr.bf16.mxu0 0
        %857 = vmatpush2.bf16.msra.mxu0 0
        %858 = vmatprep.subr.bf16.mxu0 0
        %859 = vmatpush2.bf16.msra.mxu0 0
        %860 = vmatprep.mubr.bf16.mxu0 0
        %861 = vmatmul.mubr.bf16.gmra.mxu0 %v773
        %v862 = vpop.f32.mrf.mxu0
        %v863 = vadd.f32 %v778, %v862
        %v864 = vpop.f32.mrf.mxu0
        %v865 = vpop.f32.mrf.mxu0
        %v866 = vadd.f32 %v778, %v865
        %v867 = vpop.f32.mrf.mxu0
        %868 = vdwg.mxu0
        %v869 = vxor.u32 %v863, 2147483648
        %v870 = vxor.u32 %v866, 2147483648
        %v871 = vmul.f32 %v869, 1.442695
        %v872 = vpow.pop %v871
        %v873 = vmul.f32 %v870, 1.442695
        %v874 = vpow.pop %v873
        %v875 = vadd.f32 %v872, 1.0
        %v876 = vadd.f32 %v874, 1.0
        %v877 = vrcp.pop %v875
        %v878 = vmul.f32 1.0, %v877
        %v879 = vrcp.pop %v876
        %v880 = vmul.f32 1.0, %v879
        %v881 = vmul.f32 %v863, %v878
        %v882 = vmul.f32 %v866, %v880
        %883 = vst [vmem:[#allocation2 + $0x2] sm:$0xff] %v881
        %884 = vst [vmem:[#allocation2 + $0xa] sm:$0xff] %v882
        %s885 = scalar_lea.vmem %s1, 16
        %v886 = vld [vmem:[%s885] sm:$0x1f]
        %v887 = vld [vmem:[#allocation2] sm:$0xff]
        %v888 = vld [vmem:[#allocation2 + $0x8] sm:$0xff]
        %v889 = vlaneseq
        %v890 = vshrl.u32 %v889, 7
        %v891 = vsub.s32 0, %v890
        %v892 = vrot.slane %v886, %v891
        %v893 = vmul.f32 %v887, %v892
        %v894 = vmul.f32 %v888, %v892
        %v895 = vld [vmem:[#allocation2 + $0x1] sm:$0xff]
        %v896 = vld [vmem:[#allocation2 + $0x9] sm:$0xff]
        %v897 = vlaneseq
        %v898 = vshrl.u32 %v897, 7
        %v899 = vsub.s32 1, %v898
        %v900 = vrot.slane %v886, %v899
        %v901 = vmul.f32 %v895, %v900
        %v902 = vmul.f32 %v896, %v900
        %v903 = vadd.f32 %v893, %v901
        %v904 = vadd.f32 %v894, %v902
        %v905 = vld [vmem:[#allocation2 + $0x2] sm:$0xff]
        %v906 = vld [vmem:[#allocation2 + $0xa] sm:$0xff]
        %v907 = vlaneseq
        %v908 = vshrl.u32 %v907, 7
        %v909 = vsub.s32 2, %v908
        %v910 = vrot.slane %v886, %v909
        %v911 = vmul.f32 %v905, %v910
        %v912 = vmul.f32 %v906, %v910
        %v913 = vadd.f32 %v903, %v911
        %v914 = vadd.f32 %v904, %v912
        %v915 = vld [vmem:[#allocation2 + $0x3] sm:$0xff]
        %v916 = vld [vmem:[#allocation2 + $0xb] sm:$0xff]
        %v917 = vlaneseq
        %v918 = vshrl.u32 %v917, 7
        %v919 = vsub.s32 3, %v918
        %v920 = vrot.slane %v886, %v919
        %v921 = vmul.f32 %v915, %v920
        %v922 = vmul.f32 %v916, %v920
        %v923 = vadd.f32 %v913, %v921
        %v924 = vadd.f32 %v914, %v922
        %v925 = vld [vmem:[#allocation2 + $0x4] sm:$0xff]
        %v926 = vld [vmem:[#allocation2 + $0xc] sm:$0xff]
        %v927 = vlaneseq
        %v928 = vshrl.u32 %v927, 7
        %v929 = vsub.s32 4, %v928
        %v930 = vrot.slane %v886, %v929
        %v931 = vmul.f32 %v925, %v930
        %v932 = vmul.f32 %v926, %v930
        %v933 = vadd.f32 %v923, %v931
        %v934 = vadd.f32 %v924, %v932
        %s935 = scalar_lea.vmem [#allocation4], 128
        %v936 = vld [vmem:[%s935] sm:$0xf]
        %v937 = vld [vmem:[%s935 + $0x4] sm:$0xf]
        %v938 = vld [vmem:[%s935 + $0x8] sm:$0xf]
        %v939 = vld [vmem:[%s935 + $0xc] sm:$0xf]
        %v940 = vld [vmem:[%s935 + $0x10] sm:$0xf]
        %v941 = vld [vmem:[%s935 + $0x14] sm:$0xf]
        %v942 = vld [vmem:[%s935 + $0x18] sm:$0xf]
        %v943 = vld [vmem:[%s935 + $0x1c] sm:$0xf]
        %v944 = vld [vmem:[%s935 + $0x20] sm:$0xf]
        %v945 = vld [vmem:[%s935 + $0x24] sm:$0xf]
        %v946 = vld [vmem:[%s935 + $0x28] sm:$0xf]
        %v947 = vld [vmem:[%s935 + $0x2c] sm:$0xf]
        %v948 = vld [vmem:[%s935 + $0x30] sm:$0xf]
        %v949 = vld [vmem:[%s935 + $0x34] sm:$0xf]
        %v950 = vld [vmem:[%s935 + $0x38] sm:$0xf]
        %v951 = vld [vmem:[%s935 + $0x3c] sm:$0xf]
        %s952 = scalar_lea.vmem %s3, 2
        %v953 = vld [vmem:[%s952] sm:$0x1]
        %v954 = vpack.c.bf16 %v934, %v933
        %v956 = vlaneseq
        %v957 = vshrl.u32 %v956, 7
        %v958 = vsub.s32 0, %v957
        %v959 = vrot.slane %v953, %v958
        %v977 = vunpack.c.l.b16 %v936
        %v978 = vunpack.c.l.b16 %v937
        %v979 = vunpack.c.l.b16 %v938
        %v980 = vunpack.c.l.b16 %v939
        %v981 = vunpack.c.l.b16 %v940
        %v982 = vunpack.c.l.b16 %v941
        %v983 = vunpack.c.l.b16 %v942
        %v984 = vunpack.c.l.b16 %v943
        %v985 = vunpack.c.l.b16 %v944
        %v986 = vunpack.c.l.b16 %v945
        %v987 = vunpack.c.l.b16 %v946
        %v988 = vunpack.c.l.b16 %v947
        %v989 = vunpack.c.l.b16 %v948
        %v990 = vunpack.c.l.b16 %v949
        %v991 = vunpack.c.l.b16 %v950
        %v992 = vunpack.c.l.b16 %v951
        %v993 = vpack.c.b16 %v978, %v977
        %v994 = vpack.c.b16 %v980, %v979
        %v995 = vpack.c.b16 %v982, %v981
        %v996 = vpack.c.b16 %v984, %v983
        %v997 = vpack.c.b16 %v986, %v985
        %v998 = vpack.c.b16 %v988, %v987
        %v999 = vpack.c.b16 %v990, %v989
        %v1000 = vpack.c.b16 %v992, %v991
        %1009 = vmatprep.subr.bf16.mxu0 0
        %1010 = vmatpush1.bf16.msra.mxu0 %v1000
        %1011 = vmatprep.subr.bf16.mxu0 0
        %1012 = vmatpush1.bf16.msra.mxu0 %v999
        %1013 = vmatprep.subr.bf16.mxu0 0
        %1014 = vmatpush1.bf16.msra.mxu0 %v998
        %1015 = vmatprep.subr.bf16.mxu0 0
        %1016 = vmatpush1.bf16.msra.mxu0 %v997
        %1017 = vmatprep.subr.bf16.mxu0 0
        %1018 = vmatpush1.bf16.msra.mxu0 %v996
        %1019 = vmatprep.subr.bf16.mxu0 0
        %1020 = vmatpush1.bf16.msra.mxu0 %v995
        %1021 = vmatprep.subr.bf16.mxu0 0
        %1022 = vmatpush1.bf16.msra.mxu0 %v994
        %1023 = vmatprep.subr.bf16.mxu0 0
        %1024 = vmatpush1.bf16.msra.mxu0 %v993
        %1025 = vmatprep.subr.bf16.mxu0 0
        %1026 = vmatpush2.bf16.msra.mxu0 0
        %1027 = vmatprep.subr.bf16.mxu0 0
        %1028 = vmatpush2.bf16.msra.mxu0 0
        %1029 = vmatprep.subr.bf16.mxu0 0
        %1030 = vmatpush2.bf16.msra.mxu0 0
        %1031 = vmatprep.subr.bf16.mxu0 0
        %1032 = vmatpush2.bf16.msra.mxu0 0
        %1033 = vmatprep.subr.bf16.mxu0 0
        %1034 = vmatpush2.bf16.msra.mxu0 0
        %1035 = vmatprep.subr.bf16.mxu0 0
        %1036 = vmatpush2.bf16.msra.mxu0 0
        %1037 = vmatprep.subr.bf16.mxu0 0
        %1038 = vmatpush2.bf16.msra.mxu0 0
        %1039 = vmatprep.subr.bf16.mxu0 0
        %1040 = vmatpush2.bf16.msra.mxu0 0
        %1041 = vmatprep.mubr.bf16.mxu0 0
        %1042 = vmatmul.mubr.bf16.gmra.mxu0 %v954
        %v1043 = vpop.f32.mrf.mxu0
        %v1044 = vadd.f32 %v959, %v1043
        %v1045 = vpop.f32.mrf.mxu0
        %v1046 = vpop.f32.mrf.mxu0
        %v1047 = vadd.f32 %v959, %v1046
        %v1048 = vpop.f32.mrf.mxu0
        %1049 = vdwg.mxu0
        %v1050 = vxor.u32 %v1044, 2147483648
        %v1051 = vxor.u32 %v1047, 2147483648
        %v1052 = vmul.f32 %v1050, 1.442695
        %v1053 = vpow.pop %v1052
        %v1054 = vmul.f32 %v1051, 1.442695
        %v1055 = vpow.pop %v1054
        %v1056 = vadd.f32 %v1053, 1.0
        %v1057 = vadd.f32 %v1055, 1.0
        %v1058 = vrcp.pop %v1056
        %v1059 = vmul.f32 1.0, %v1058
        %v1060 = vrcp.pop %v1057
        %v1061 = vmul.f32 1.0, %v1060
        %v1062 = vmul.f32 %v1044, %v1059
        %v1063 = vmul.f32 %v1047, %v1061
        %1064 = vst [vmem:[#allocation2 + $0x2] sm:$0xff] %v1062
        %1065 = vst [vmem:[#allocation2 + $0xa] sm:$0xff] %v1063
        %v1066 = vld [vmem:[#allocation2 + $0x2] sm:$0xff]
        %v1067 = vld [vmem:[#allocation2 + $0xa] sm:$0xff]
        %vm1068 = vcmask 130048
        %v1070 = vsel %vm1068, 0.0625, 0
        %1072 = vmatprep.subr.mxu0 0.0
        %1073 = vmatpush1.msra.mxu0 0.0
        %1074 = vmatprep.subr.mxu0 0.0
        %1075 = vmatpush1.msra.mxu0 0.0
        %1076 = vmatprep.subr.mxu0 0.0
        %1077 = vmatpush1.msra.mxu0 0.0
        %1078 = vmatprep.subr.mxu0 0.0
        %1079 = vmatpush1.msra.mxu0 0.0
        %1080 = vmatprep.subr.mxu0 0.0
        %1081 = vmatpush1.msra.mxu0 0.0
        %1082 = vmatprep.subr.mxu0 0.0
        %1083 = vmatpush1.msra.mxu0 0.0
        %1084 = vmatprep.subr.mxu0 0.0
        %1085 = vmatpush1.msra.mxu0 0.0
        %1086 = vmatprep.subr.mxu0 0.0
        %1087 = vmatpush1.msra.mxu0 0.0
        %1088 = vmatprep.subr.mxu0 0.0
        %1089 = vmatpush1.msra.mxu0 0.0
        %1090 = vmatprep.subr.mxu0 0.0
        %1091 = vmatpush1.msra.mxu0 0.0
        %1092 = vmatprep.subr.mxu0 0.0
        %1093 = vmatpush1.msra.mxu0 0.0
        %1094 = vmatprep.subr.mxu0 0.0
        %1095 = vmatpush1.msra.mxu0 0.0
        %1096 = vmatprep.subr.mxu0 0.0
        %1097 = vmatpush1.msra.mxu0 0.0
        %1098 = vmatprep.subr.mxu0 0.0
        %1099 = vmatpush1.msra.mxu0 0.0
        %1100 = vmatprep.subr.mxu0 0.0
        %1101 = vmatpush1.msra.mxu0 %v1067
        %1102 = vmatprep.subr.mxu0 0.0
        %1103 = vmatpush1.msra.mxu0 %v1066
        %1104 = vmatprep.subr.mxu0 0.0
        %1105 = vmatpush2.msra.mxu0 0.0
        %1106 = vmatprep.subr.mxu0 0.0
        %1107 = vmatpush2.msra.mxu0 0.0
        %1108 = vmatprep.subr.mxu0 0.0
        %1109 = vmatpush2.msra.mxu0 0.0
        %1110 = vmatprep.subr.mxu0 0.0
        %1111 = vmatpush2.msra.mxu0 0.0
        %1112 = vmatprep.subr.mxu0 0.0
        %1113 = vmatpush2.msra.mxu0 0.0
        %1114 = vmatprep.subr.mxu0 0.0
        %1115 = vmatpush2.msra.mxu0 0.0
        %1116 = vmatprep.subr.mxu0 0.0
        %1117 = vmatpush2.msra.mxu0 0.0
        %1118 = vmatprep.subr.mxu0 0.0
        %1119 = vmatpush2.msra.mxu0 0.0
        %1120 = vmatprep.subr.mxu0 0.0
        %1121 = vmatpush2.msra.mxu0 0.0
        %1122 = vmatprep.subr.mxu0 0.0
        %1123 = vmatpush2.msra.mxu0 0.0
        %1124 = vmatprep.subr.mxu0 0.0
        %1125 = vmatpush2.msra.mxu0 0.0
        %1126 = vmatprep.subr.mxu0 0.0
        %1127 = vmatpush2.msra.mxu0 0.0
        %1128 = vmatprep.subr.mxu0 0.0
        %1129 = vmatpush2.msra.mxu0 0.0
        %1130 = vmatprep.subr.mxu0 0.0
        %1131 = vmatpush2.msra.mxu0 0.0
        %1132 = vmatprep.subr.mxu0 0.0
        %1133 = vmatpush2.msra.mxu0 0.0
        %1134 = vmatprep.subr.mxu0 0.0
        %1135 = vmatpush2.msra.mxu0 0.0
        %1136 = vmatprep.mubr.f32.mxu0 0.0
        %1137 = vmatmul.mubr.f32.gmra.mxu0 %v1070
        %v1138 = vpop.f32.mrf.mxu0
        %v1139 = vadd.f32 0.0, %v1138
        %v1140 = vpop.f32.mrf.mxu0
        %1141 = vdwg.mxu0
        %v1142 = vld [vmem:[#allocation6] sm:$0xff]
        %v1143 = vld [vmem:[#allocation6 + $0x8] sm:$0xff]
        %v1144 = vld [vmem:[#allocation6 + $0x10] sm:$0xff]
        %v1145 = vld [vmem:[#allocation6 + $0x18] sm:$0xff]
        %v1146 = vld [vmem:[#allocation6 + $0x20] sm:$0xff]
        %v1147 = vld [vmem:[#allocation6 + $0x28] sm:$0xff]
        %v1148 = vld [vmem:[#allocation6 + $0x30] sm:$0xff]
        %v1149 = vld [vmem:[#allocation6 + $0x38] sm:$0xff]
        %v1150 = vld [vmem:[#allocation6 + $0x40] sm:$0xff]
        %v1151 = vld [vmem:[#allocation6 + $0x48] sm:$0xff]
        %v1152 = vld [vmem:[#allocation6 + $0x50] sm:$0xff]
        %v1153 = vld [vmem:[#allocation6 + $0x58] sm:$0xff]
        %v1154 = vld [vmem:[#allocation6 + $0x60] sm:$0xff]
        %v1155 = vld [vmem:[#allocation6 + $0x68] sm:$0xff]
        %v1156 = vld [vmem:[#allocation6 + $0x70] sm:$0xff]
        %v1157 = vld [vmem:[#allocation6 + $0x78] sm:$0xff]
        %v1158 = vld [vmem:[%s5] sm:$0x1]
        %1159 = vmatprep.subr.mxu0 0.0
        %1160 = vmatpush1.msra.mxu0 %v1157
        %1161 = vmatprep.subr.mxu0 0.0
        %1162 = vmatpush1.msra.mxu0 %v1156
        %1163 = vmatprep.subr.mxu0 0.0
        %1164 = vmatpush1.msra.mxu0 %v1155
        %1165 = vmatprep.subr.mxu0 0.0
        %1166 = vmatpush1.msra.mxu0 %v1154
        %1167 = vmatprep.subr.mxu0 0.0
        %1168 = vmatpush1.msra.mxu0 %v1153
        %1169 = vmatprep.subr.mxu0 0.0
        %1170 = vmatpush1.msra.mxu0 %v1152
        %1171 = vmatprep.subr.mxu0 0.0
        %1172 = vmatpush1.msra.mxu0 %v1151
        %1173 = vmatprep.subr.mxu0 0.0
        %1174 = vmatpush1.msra.mxu0 %v1150
        %1175 = vmatprep.subr.mxu0 0.0
        %1176 = vmatpush1.msra.mxu0 %v1149
        %1177 = vmatprep.subr.mxu0 0.0
        %1178 = vmatpush1.msra.mxu0 %v1148
        %1179 = vmatprep.subr.mxu0 0.0
        %1180 = vmatpush1.msra.mxu0 %v1147
        %1181 = vmatprep.subr.mxu0 0.0
        %1182 = vmatpush1.msra.mxu0 %v1146
        %1183 = vmatprep.subr.mxu0 0.0
        %1184 = vmatpush1.msra.mxu0 %v1145
        %1185 = vmatprep.subr.mxu0 0.0
        %1186 = vmatpush1.msra.mxu0 %v1144
        %1187 = vmatprep.subr.mxu0 0.0
        %1188 = vmatpush1.msra.mxu0 %v1143
        %1189 = vmatprep.subr.mxu0 0.0
        %1190 = vmatpush1.msra.mxu0 %v1142
        %1191 = vmatprep.subr.mxu0 0.0
        %1192 = vmatpush2.msra.mxu0 0.0
        %1193 = vmatprep.subr.mxu0 0.0
        %1194 = vmatpush2.msra.mxu0 0.0
        %1195 = vmatprep.subr.mxu0 0.0
        %1196 = vmatpush2.msra.mxu0 0.0
        %1197 = vmatprep.subr.mxu0 0.0
        %1198 = vmatpush2.msra.mxu0 0.0
        %1199 = vmatprep.subr.mxu0 0.0
        %1200 = vmatpush2.msra.mxu0 0.0
        %1201 = vmatprep.subr.mxu0 0.0
        %1202 = vmatpush2.msra.mxu0 0.0
        %1203 = vmatprep.subr.mxu0 0.0
        %1204 = vmatpush2.msra.mxu0 0.0
        %1205 = vmatprep.subr.mxu0 0.0
        %1206 = vmatpush2.msra.mxu0 0.0
        %1207 = vmatprep.subr.mxu0 0.0
        %1208 = vmatpush2.msra.mxu0 0.0
        %1209 = vmatprep.subr.mxu0 0.0
        %1210 = vmatpush2.msra.mxu0 0.0
        %1211 = vmatprep.subr.mxu0 0.0
        %1212 = vmatpush2.msra.mxu0 0.0
        %1213 = vmatprep.subr.mxu0 0.0
        %1214 = vmatpush2.msra.mxu0 0.0
        %1215 = vmatprep.subr.mxu0 0.0
        %1216 = vmatpush2.msra.mxu0 0.0
        %1217 = vmatprep.subr.mxu0 0.0
        %1218 = vmatpush2.msra.mxu0 0.0
        %1219 = vmatprep.subr.mxu0 0.0
        %1220 = vmatpush2.msra.mxu0 0.0
        %1221 = vmatprep.subr.mxu0 0.0
        %1222 = vmatpush2.msra.mxu0 0.0
        %1223 = vmatprep.mubr.f32.mxu0 0.0
        %1224 = vmatmul.mubr.f32.gmra.mxu0 %v1139
        %v1225 = vpop.f32.mrf.mxu0
        %v1226 = vadd.f32 %v1158, %v1225
        %v1227 = vpop.f32.mrf.mxu0
        %1228 = vdwg.mxu0
        %v1229 = vxor.u32 %v1226, 2147483648
        %v1230 = vmul.f32 %v1229, 1.442695
        %v1231 = vpow.pop %v1230
        %v1232 = vadd.f32 %v1231, 1.0
        %v1233 = vrcp.pop %v1232
        %v1234 = vmul.f32 1.0, %v1233
        %v1235 = vmul.f32 %v1226, %v1234
        %v1236 = vld [vmem:[#allocation8] sm:$0xff]
        %v1237 = vld [vmem:[#allocation8 + $0x8] sm:$0xff]
        %v1238 = vld [vmem:[#allocation8 + $0x10] sm:$0xff]
        %v1239 = vld [vmem:[#allocation8 + $0x18] sm:$0xff]
        %v1240 = vld [vmem:[#allocation8 + $0x20] sm:$0xff]
        %v1241 = vld [vmem:[#allocation8 + $0x28] sm:$0xff]
        %v1242 = vld [vmem:[#allocation8 + $0x30] sm:$0xff]
        %v1243 = vld [vmem:[#allocation8 + $0x38] sm:$0xff]
        %v1244 = vld [vmem:[#allocation8 + $0x40] sm:$0xff]
        %v1245 = vld [vmem:[#allocation8 + $0x48] sm:$0xff]
        %v1246 = vld [vmem:[#allocation8 + $0x50] sm:$0xff]
        %v1247 = vld [vmem:[#allocation8 + $0x58] sm:$0xff]
        %v1248 = vld [vmem:[#allocation8 + $0x60] sm:$0xff]
        %v1249 = vld [vmem:[#allocation8 + $0x68] sm:$0xff]
        %v1250 = vld [vmem:[#allocation8 + $0x70] sm:$0xff]
        %v1251 = vld [vmem:[#allocation8 + $0x78] sm:$0xff]
        %v1252 = vld [vmem:[%s7] sm:$0x1]
        %1253 = vmatprep.subr.mxu0 0.0
        %1254 = vmatpush1.msra.mxu0 %v1251
        %1255 = vmatprep.subr.mxu0 0.0
        %1256 = vmatpush1.msra.mxu0 %v1250
        %1257 = vmatprep.subr.mxu0 0.0
        %1258 = vmatpush1.msra.mxu0 %v1249
        %1259 = vmatprep.subr.mxu0 0.0
        %1260 = vmatpush1.msra.mxu0 %v1248
        %1261 = vmatprep.subr.mxu0 0.0
        %1262 = vmatpush1.msra.mxu0 %v1247
        %1263 = vmatprep.subr.mxu0 0.0
        %1264 = vmatpush1.msra.mxu0 %v1246
        %1265 = vmatprep.subr.mxu0 0.0
        %1266 = vmatpush1.msra.mxu0 %v1245
        %1267 = vmatprep.subr.mxu0 0.0
        %1268 = vmatpush1.msra.mxu0 %v1244
        %1269 = vmatprep.subr.mxu0 0.0
        %1270 = vmatpush1.msra.mxu0 %v1243
        %1271 = vmatprep.subr.mxu0 0.0
        %1272 = vmatpush1.msra.mxu0 %v1242
        %1273 = vmatprep.subr.mxu0 0.0
        %1274 = vmatpush1.msra.mxu0 %v1241
        %1275 = vmatprep.subr.mxu0 0.0
        %1276 = vmatpush1.msra.mxu0 %v1240
        %1277 = vmatprep.subr.mxu0 0.0
        %1278 = vmatpush1.msra.mxu0 %v1239
        %1279 = vmatprep.subr.mxu0 0.0
        %1280 = vmatpush1.msra.mxu0 %v1238
        %1281 = vmatprep.subr.mxu0 0.0
        %1282 = vmatpush1.msra.mxu0 %v1237
        %1283 = vmatprep.subr.mxu0 0.0
        %1284 = vmatpush1.msra.mxu0 %v1236
        %1285 = vmatprep.subr.mxu0 0.0
        %1286 = vmatpush2.msra.mxu0 0.0
        %1287 = vmatprep.subr.mxu0 0.0
        %1288 = vmatpush2.msra.mxu0 0.0
        %1289 = vmatprep.subr.mxu0 0.0
        %1290 = vmatpush2.msra.mxu0 0.0
        %1291 = vmatprep.subr.mxu0 0.0
        %1292 = vmatpush2.msra.mxu0 0.0
        %1293 = vmatprep.subr.mxu0 0.0
        %1294 = vmatpush2.msra.mxu0 0.0
        %1295 = vmatprep.subr.mxu0 0.0
        %1296 = vmatpush2.msra.mxu0 0.0
        %1297 = vmatprep.subr.mxu0 0.0
        %1298 = vmatpush2.msra.mxu0 0.0
        %1299 = vmatprep.subr.mxu0 0.0
        %1300 = vmatpush2.msra.mxu0 0.0
        %1301 = vmatprep.subr.mxu0 0.0
        %1302 = vmatpush2.msra.mxu0 0.0
        %1303 = vmatprep.subr.mxu0 0.0
        %1304 = vmatpush2.msra.mxu0 0.0
        %1305 = vmatprep.subr.mxu0 0.0
        %1306 = vmatpush2.msra.mxu0 0.0
        %1307 = vmatprep.subr.mxu0 0.0
        %1308 = vmatpush2.msra.mxu0 0.0
        %1309 = vmatprep.subr.mxu0 0.0
        %1310 = vmatpush2.msra.mxu0 0.0
        %1311 = vmatprep.subr.mxu0 0.0
        %1312 = vmatpush2.msra.mxu0 0.0
        %1313 = vmatprep.subr.mxu0 0.0
        %1314 = vmatpush2.msra.mxu0 0.0
        %1315 = vmatprep.subr.mxu0 0.0
        %1316 = vmatpush2.msra.mxu0 0.0
        %1317 = vmatprep.mubr.f32.mxu0 0.0
        %1318 = vmatmul.mubr.f32.gmra.mxu0 %v1235
        %v1319 = vpop.f32.mrf.mxu0
        %v1320 = vadd.f32 %v1252, %v1319
        %v1321 = vpop.f32.mrf.mxu0
        %1322 = vdwg.mxu0
        %v1323 = vxor.u32 %v1320, 2147483648
        %v1324 = vmul.f32 %v1323, 1.442695
        %v1325 = vpow.pop %v1324
        %v1326 = vadd.f32 %v1325, 1.0
        %v1327 = vrcp.pop %v1326
        %v1328 = vmul.f32 1.0, %v1327
        %v1329 = vlaneseq
        %v1330 = vshrl.u32 %v1329, 7
        %v1331 = vsub.s32 0, %v1330
        %v1332 = vrot.slane %v1328, %v1331
        %v1333 = vmul.f32 %v1066, %v1332
        %v1334 = vmul.f32 %v1067, %v1332
        %v1335 = vld [vmem:[#allocation3] sm:$0xff]
        %v1336 = vld [vmem:[#allocation3 + $0x8] sm:$0xff]
        %v1337 = vadd.f32 %v1333, %v1335
        %v1338 = vadd.f32 %v1334, %v1336
        %v1339 = vxor.u32 %v1337, 2147483648
        %v1340 = vxor.u32 %v1338, 2147483648
        %v1341 = vmul.f32 %v1339, 1.442695
        %v1342 = vpow.pop %v1341
        %v1343 = vmul.f32 %v1340, 1.442695
        %v1344 = vpow.pop %v1343
        %v1345 = vadd.f32 %v1342, 1.0
        %v1346 = vadd.f32 %v1344, 1.0
        %v1347 = vrcp.pop %v1345
        %v1348 = vmul.f32 1.0, %v1347
        %v1349 = vrcp.pop %v1346
        %v1350 = vmul.f32 1.0, %v1349
        %v1351 = vmul.f32 %v1337, %v1348
        %v1352 = vmul.f32 %v1338, %v1350
        %1353 = vst.msk [vmem:[%s349] sm:$0xff] %vm356, %v1351
        %1354 = vst.msk [vmem:[%s349 + $0x8] sm:$0xff] %vm356, %v1352
        %p1355 = scmp.lt.s32.totalorder %s21, 1
        %s1356 = scalar_select %p1355, %s21, 1
        %s1357 = smul.addr %s1356, 2
        %s1358 = smul.addr %s1357, 8
        %s1359 = scalar_lea.vmem %s8, %s1358
        // Predicated region
        $region65: #{tpu_custom_call.1} parent=51 // pred_check
          %p1360 = pneg %p212
        $region66: #{tpu_custom_call.1} parent=51 // pred_check_branch
          %1362 = sbr.rel (%p1360) target = $region68
        $region67: #{tpu_custom_call.1} parent=51 // pred_region
          _
        $region68: #{tpu_custom_call.1} parent=51 // pred_fallthru
          _
      $region52: #{tpu_custom_call.1} parent=5 // pred_fallthru
        _
      %p1363 = scmp.le.s32.totalorder 2, %s16
      // Predicated region
      $region69: #{tpu_custom_call.1} parent=5 // pred_check
        %p1364 = pneg %p1363
      $region70: #{tpu_custom_call.1} parent=5 // pred_check_branch
        %1366 = sbr.rel (%p1364) target = $region72
      $region71: #{tpu_custom_call.1} parent=5 // pred_region
        %s1367 = ssub.s32 %s16, 2
        // Predicated region
        $region73: #{tpu_custom_call.1} parent=71 // pred_check
          %p1368 = pneg %p218
        $region74: #{tpu_custom_call.1} parent=71 // pred_check_branch
          %1370 = sbr.rel (%p1368) target = $region76
        $region75: #{tpu_custom_call.1} parent=71 // pred_region
          %p1371 = scmp.lt.s32.totalorder %s22, 1
          %s1372 = scalar_select %p1371, %s22, 1
          %s1373 = smul.addr %s1372, 2
          %s1374 = smul.addr %s1373, 8
          %s1375 = scalar_lea.vmem %s8, %s1374
        $region76: #{tpu_custom_call.1} parent=71 // pred_fallthru
          _
      $region72: #{tpu_custom_call.1} parent=5 // pred_fallthru
        _
    $region6: #{tpu_custom_call.1} parent=1 // loop_footer
      %s20 = sadd.s32 1, %s16
    $region7: #{tpu_custom_call.1} parent=1 // loop_footer_branch
      %15 = sbr.rel target = $region3
    $region8: #{tpu_custom_call.1} parent=1 // loop_exit
      _
    %1376 = vsyncpa [#allocation5], 1
    %s1377 = scalar_lea.sflag [#allocation5], 1
    %1378 = vsyncpa %s1377, 1
    %1379 = vsyncpa [#allocation7], 1

// kernel: tpu_custom_call.1
$region0: #{tpu_custom_call.1}
  #allocation0 [shape = 'u32[]', space=smem, size = 0x4, offset = 0x4, fixed_abs, tag = 'smem constant byte address 0x4 - core index']
  #allocation1 [shape = 'u32[144,128]{1,0:T(1,128)}', space=vmem, size = 0x12000, scoped, tag = 'internal scratch']
  #allocation2 [shape = 'f32[20,128]{1,0:T(8,128)}', space=vmem, size = 0x3000, scoped, tag = 'scratch operand']
  #allocation3 [shape = 'f32[16,128]{1,0:T(8,128)}', space=vmem, size = 0x2000, scoped, tag = 'scratch operand']
  %s0 = inlined_call_operand.vmem [shape: f32[2,16,8], index: 0, kind: input, shape index: {}]
  %s1 = inlined_call_operand.vmem [shape: f32[4,5,128], index: 1, kind: input, shape index: {}]
  %s2 = inlined_call_operand.hbm [shape: bf16[4,128,128], index: 2, kind: input, shape index: {}]
  %s3 = inlined_call_operand.vmem [shape: f32[4,1,128], index: 3, kind: input, shape index: {}]
  %s4 = inlined_call_operand.hbm [shape: f32[128,128], index: 4, kind: input, shape index: {}]
  %s5 = inlined_call_operand.vmem [shape: f32[1,128], index: 5, kind: input, shape index: {}]
  %s6 = inlined_call_operand.hbm [shape: f32[128,128], index: 6, kind: input, shape index: {}]
  %s7 = inlined_call_operand.vmem [shape: f32[1,128], index: 7, kind: input, shape index: {}]
  %s8 = inlined_call_operand.vmem [shape: f32[2,16,8], index: 8, kind: output, shape index: {}]
  %s9 = sld [smem:[#allocation0]]
  $region77: #{tpu_custom_call.1} parent=0
    _
  %s11 = ssub.s32 1, %s9
  %s12 = scalar_select 0, %s11, %s9
  $region1: #{tpu_custom_call.1} parent=0
    #allocation4 [shape = 'u8[131072]{0}', space=vmem, size = 0x20000, scoped, tag = 'input window, operand 2, single buffered']
    #allocation5 [shape = 's32[2]{0}', space=sflag, size = 0x8, scoped, tag = 'scoped memory for tpu_custom_call.1']
    #allocation6 [shape = 'u8[65536]{0}', space=vmem, size = 0x10000, scoped, tag = 'input window, operand 4, single buffered']
    #allocation7 [shape = 's32[1]{0}', space=sflag, size = 0x4, scoped, tag = 'scoped memory for tpu_custom_call.1']
    #allocation8 [shape = 'u8[65536]{0}', space=vmem, size = 0x10000, scoped, tag = 'input window, operand 6, single buffered']
    %13 = vsyncpa [#allocation5], 0
    %14 = vsyncpa [#allocation7], 0
    loop: start=0, step=1, limit=4
    $region2: #{tpu_custom_call.1} parent=1 // loop_pre_header
      _
    $region3: #{tpu_custom_call.1} parent=1 // loop_header
      %s16 = sphi 0, %s20
      %p17 = scmp.ge.s32.totalorder %s16, 4
      %s26 = sphi 0, %s28
      %s29 = sphi 0, %s26
      %s30 = sphi 0, %s29
      %s46 = sphi 0, %s30
      %s50 = sphi 0, %s50
      %s52 = sphi 0, %s50
      %s53 = sphi 0, %s52
      %s67 = sphi 0, %s53
      %s71 = sphi 0, %s71
      %s73 = sphi 0, %s71
      %s74 = sphi 0, %s73
      %s88 = sphi 0, %s74
      %s92 = sphi 0, %s92
      %s94 = sphi 0, %s92
      %s95 = sphi 0, %s94
      %s109 = sphi 0, %s95
      %s113 = sphi 0, %s113
      %s115 = sphi 0, %s113
      %s116 = sphi 0, %s115
      %s130 = sphi 0, %s116
      %s134 = sphi 0, %s134
      %s136 = sphi 0, %s134
      %s137 = sphi 0, %s136
      %s151 = sphi 0, %s137
      %s155 = sphi 0, %s155
      %s157 = sphi 0, %s155
      %s158 = sphi 0, %s157
      %s172 = sphi 0, %s158
      %s176 = sphi 0, %s176
      %s178 = sphi 0, %s176
      %s179 = sphi 0, %s178
      %s193 = sphi 0, %s179
      %s199 = sphi 0, %s201
      %s202 = sphi 0, %s199
      %s203 = sphi 0, %s202
      %s219 = sphi 0, %s203
    $region4: #{tpu_custom_call.1} parent=1 // loop_header_branch
      %19 = sbr.rel (%p17) target = $region8
    $region5: #{tpu_custom_call.1} parent=1 // loop_body
      %s21 = ssub.s32 %s16, 1
      %s22 = ssub.s32 %s16, 2
      %s23 = sadd.s32 %s16, 1
      %s24 = ssub.s32 %s16, %s23
      %p25 = scmp.eq.s32.totalorder %s24, 0
      %s27 = sadd.s32 %s26, 1
      %s28 = scalar_select %p25, %s26, %s27
      %p31 = pneg %p25
      %p32 = scmp.eq.s32.totalorder %s16, 1
      %p33 = por %p31, %p32
      %p34 = scmp.ne.s32.totalorder %s26, %s29
      %p35 = scmp.eq.s32.totalorder %s16, 0
      %p36 = por %p34, %p35
      %p37 = scmp.ne.s32.totalorder %s26, %s29
      %p38 = scmp.eq.s32.totalorder %s21, 1
      %p39 = por %p37, %p38
      %p40 = scmp.ne.s32.totalorder %s29, %s30
      %p41 = scmp.eq.s32.totalorder %s21, 0
      %p42 = por %p40, %p41
      %p43 = scmp.ne.s32.totalorder %s29, %s30
      %p44 = scmp.eq.s32.totalorder %s22, 1
      %p45 = por %p43, %p44
      %p47 = scmp.ne.s32.totalorder %s30, %s46
      %p48 = scmp.eq.s32.totalorder %s22, 0
      %p49 = por %p47, %p48
      %s51 = sadd.s32 %s50, 1
      %p54 = scmp.eq.s32.totalorder %s16, 1
      %p55 = scmp.ne.s32.totalorder %s50, %s52
      %p56 = scmp.eq.s32.totalorder %s16, 0
      %p57 = por %p55, %p56
      %p58 = scmp.ne.s32.totalorder %s50, %s52
      %p59 = scmp.eq.s32.totalorder %s21, 1
      %p60 = por %p58, %p59
      %p61 = scmp.ne.s32.totalorder %s52, %s53
      %p62 = scmp.eq.s32.totalorder %s21, 0
      %p63 = por %p61, %p62
      %p64 = scmp.ne.s32.totalorder %s52, %s53
      %p65 = scmp.eq.s32.totalorder %s22, 1
      %p66 = por %p64, %p65
      %p68 = scmp.ne.s32.totalorder %s53, %s67
      %p69 = scmp.eq.s32.totalorder %s22, 0
      %p70 = por %p68, %p69
      %s72 = sadd.s32 %s71, 1
      %p75 = scmp.eq.s32.totalorder %s16, 1
      %p76 = scmp.ne.s32.totalorder %s71, %s73
      %p77 = scmp.eq.s32.totalorder %s16, 0
      %p78 = por %p76, %p77
      %p79 = scmp.ne.s32.totalorder %s71, %s73
      %p80 = scmp.eq.s32.totalorder %s21, 1
      %p81 = por %p79, %p80
      %p82 = scmp.ne.s32.totalorder %s73, %s74
      %p83 = scmp.eq.s32.totalorder %s21, 0
      %p84 = por %p82, %p83
      %p85 = scmp.ne.s32.totalorder %s73, %s74
      %p86 = scmp.eq.s32.totalorder %s22, 1
      %p87 = por %p85, %p86
      %p89 = scmp.ne.s32.totalorder %s74, %s88
      %p90 = scmp.eq.s32.totalorder %s22, 0
      %p91 = por %p89, %p90
      %s93 = sadd.s32 %s92, 1
      %p96 = scmp.eq.s32.totalorder %s16, 1
      %p97 = scmp.ne.s32.totalorder %s92, %s94
      %p98 = scmp.eq.s32.totalorder %s16, 0
      %p99 = por %p97, %p98
      %p100 = scmp.ne.s32.totalorder %s92, %s94
      %p101 = scmp.eq.s32.totalorder %s21, 1
      %p102 = por %p100, %p101
      %p103 = scmp.ne.s32.totalorder %s94, %s95
      %p104 = scmp.eq.s32.totalorder %s21, 0
      %p105 = por %p103, %p104
      %p106 = scmp.ne.s32.totalorder %s94, %s95
      %p107 = scmp.eq.s32.totalorder %s22, 1
      %p108 = por %p106, %p107
      %p110 = scmp.ne.s32.totalorder %s95, %s109
      %p111 = scmp.eq.s32.totalorder %s22, 0
      %p112 = por %p110, %p111
      %s114 = sadd.s32 %s113, 1
      %p117 = scmp.eq.s32.totalorder %s16, 1
      %p118 = scmp.ne.s32.totalorder %s113, %s115
      %p119 = scmp.eq.s32.totalorder %s16, 0
      %p120 = por %p118, %p119
      %p121 = scmp.ne.s32.totalorder %s113, %s115
      %p122 = scmp.eq.s32.totalorder %s21, 1
      %p123 = por %p121, %p122
      %p124 = scmp.ne.s32.totalorder %s115, %s116
      %p125 = scmp.eq.s32.totalorder %s21, 0
      %p126 = por %p124, %p125
      %p127 = scmp.ne.s32.totalorder %s115, %s116
      %p128 = scmp.eq.s32.totalorder %s22, 1
      %p129 = por %p127, %p128
      %p131 = scmp.ne.s32.totalorder %s116, %s130
      %p132 = scmp.eq.s32.totalorder %s22, 0
      %p133 = por %p131, %p132
      %s135 = sadd.s32 %s134, 1
      %p138 = scmp.eq.s32.totalorder %s16, 1
      %p139 = scmp.ne.s32.totalorder %s134, %s136
      %p140 = scmp.eq.s32.totalorder %s16, 0
      %p141 = por %p139, %p140
      %p142 = scmp.ne.s32.totalorder %s134, %s136
      %p143 = scmp.eq.s32.totalorder %s21, 1
      %p144 = por %p142, %p143
      %p145 = scmp.ne.s32.totalorder %s136, %s137
      %p146 = scmp.eq.s32.totalorder %s21, 0
      %p147 = por %p145, %p146
      %p148 = scmp.ne.s32.totalorder %s136, %s137
      %p149 = scmp.eq.s32.totalorder %s22, 1
      %p150 = por %p148, %p149
      %p152 = scmp.ne.s32.totalorder %s137, %s151
      %p153 = scmp.eq.s32.totalorder %s22, 0
      %p154 = por %p152, %p153
      %s156 = sadd.s32 %s155, 1
      %p159 = scmp.eq.s32.totalorder %s16, 1
      %p160 = scmp.ne.s32.totalorder %s155, %s157
      %p161 = scmp.eq.s32.totalorder %s16, 0
      %p162 = por %p160, %p161
      %p163 = scmp.ne.s32.totalorder %s155, %s157
      %p164 = scmp.eq.s32.totalorder %s21, 1
      %p165 = por %p163, %p164
      %p166 = scmp.ne.s32.totalorder %s157, %s158
      %p167 = scmp.eq.s32.totalorder %s21, 0
      %p168 = por %p166, %p167
      %p169 = scmp.ne.s32.totalorder %s157, %s158
      %p170 = scmp.eq.s32.totalorder %s22, 1
      %p171 = por %p169, %p170
      %p173 = scmp.ne.s32.totalorder %s158, %s172
      %p174 = scmp.eq.s32.totalorder %s22, 0
      %p175 = por %p173, %p174
      %s177 = sadd.s32 %s176, 1
      %p180 = scmp.eq.s32.totalorder %s16, 1
      %p181 = scmp.ne.s32.totalorder %s176, %s178
      %p182 = scmp.eq.s32.totalorder %s16, 0
      %p183 = por %p181, %p182
      %p184 = scmp.ne.s32.totalorder %s176, %s178
      %p185 = scmp.eq.s32.totalorder %s21, 1
      %p186 = por %p184, %p185
      %p187 = scmp.ne.s32.totalorder %s178, %s179
      %p188 = scmp.eq.s32.totalorder %s21, 0
      %p189 = por %p187, %p188
      %p190 = scmp.ne.s32.totalorder %s178, %s179
      %p191 = scmp.eq.s32.totalorder %s22, 1
      %p192 = por %p190, %p191
      %p194 = scmp.ne.s32.totalorder %s179, %s193
      %p195 = scmp.eq.s32.totalorder %s22, 0
      %p196 = por %p194, %p195
      %s197 = ssub.s32 %s16, %s23
      %p198 = scmp.eq.s32.totalorder %s197, 0
      %s200 = sadd.s32 %s199, 1
      %s201 = scalar_select %p198, %s199, %s200
      %p204 = pneg %p198
      %p205 = scmp.eq.s32.totalorder %s16, 1
      %p206 = por %p204, %p205
      %p207 = scmp.ne.s32.totalorder %s199, %s202
      %p208 = scmp.eq.s32.totalorder %s16, 0
      %p209 = por %p207, %p208
      %p210 = scmp.ne.s32.totalorder %s199, %s202
      %p211 = scmp.eq.s32.totalorder %s21, 1
      %p212 = por %p210, %p211
      %p213 = scmp.ne.s32.totalorder %s202, %s203
      %p214 = scmp.eq.s32.totalorder %s21, 0
      %p215 = por %p213, %p214
      %p216 = scmp.ne.s32.totalorder %s202, %s203
      %p217 = scmp.eq.s32.totalorder %s22, 1
      %p218 = por %p216, %p217
      %p220 = scmp.ne.s32.totalorder %s203, %s219
      %p221 = scmp.eq.s32.totalorder %s22, 0
      %p222 = por %p220, %p221
      %p223 = scmp.le.s32.totalorder 1, %s16
      %p224 = scmp.lt.s32.totalorder %s16, 3
      %p225 = pnand %p223, %p224
      %p226 = pneg %p225
      // Predicated region
      $region9: #{tpu_custom_call.1} parent=5 // pred_check
        _
      $region10: #{tpu_custom_call.1} parent=5 // pred_check_branch
        %228 = sbr.rel (%p225) target = $region12
      $region11: #{tpu_custom_call.1} parent=5 // pred_region
        %s229 = ssub.s32 %s16, 1
        // Predicated region
        $region13: #{tpu_custom_call.1} parent=11 // pred_check
          %p230 = pneg %p63
        $region14: #{tpu_custom_call.1} parent=11 // pred_check_branch
          %232 = sbr.rel (%p230) target = $region16
        $region15: #{tpu_custom_call.1} parent=11 // pred_region
          _
        $region16: #{tpu_custom_call.1} parent=11 // pred_fallthru
          _
        // Predicated region
        $region17: #{tpu_custom_call.1} parent=11 // pred_check
          %p233 = pneg %p84
        $region18: #{tpu_custom_call.1} parent=11 // pred_check_branch
          %235 = sbr.rel (%p233) target = $region20
        $region19: #{tpu_custom_call.1} parent=11 // pred_region
          %s237 = ssub.s32 4096, 4096
          %238 = vsyncadd [#allocation5], %s237
          %s239 = sshll.u32 [#allocation4], 4
          %s240 = int_to_ptr.vmem [resolvable:$true] %s239
          %245 = dma.hbm_to_vmem [thread:$0]  %s2, 4096, %s240, [#allocation5], 64, 64, 4
        $region20: #{tpu_custom_call.1} parent=11 // pred_fallthru
          _
        // Predicated region
        $region21: #{tpu_custom_call.1} parent=11 // pred_check
          %p246 = pneg %p105
        $region22: #{tpu_custom_call.1} parent=11 // pred_check_branch
          %248 = sbr.rel (%p246) target = $region24
        $region23: #{tpu_custom_call.1} parent=11 // pred_region
          _
        $region24: #{tpu_custom_call.1} parent=11 // pred_fallthru
          _
        // Predicated region
        $region25: #{tpu_custom_call.1} parent=11 // pred_check
          %p249 = pneg %p126
        $region26: #{tpu_custom_call.1} parent=11 // pred_check_branch
          %251 = sbr.rel (%p249) target = $region28
        $region27: #{tpu_custom_call.1} parent=11 // pred_region
          %s253 = ssub.s32 2048, 2048
          %254 = vsyncadd [#allocation7], %s253
          %s255 = sshll.u32 [#allocation6], 4
          %s256 = int_to_ptr.vmem [resolvable:$true] %s255
          %261 = dma.hbm_to_vmem [thread:$0]  %s4, 2048, %s256, [#allocation7], 128, 128, 8
        $region28: #{tpu_custom_call.1} parent=11 // pred_fallthru
          _
        // Predicated region
        $region29: #{tpu_custom_call.1} parent=11 // pred_check
          %p262 = pneg %p147
        $region30: #{tpu_custom_call.1} parent=11 // pred_check_branch
          %264 = sbr.rel (%p262) target = $region32
        $region31: #{tpu_custom_call.1} parent=11 // pred_region
          _
        $region32: #{tpu_custom_call.1} parent=11 // pred_fallthru
          _
        // Predicated region
        $region33: #{tpu_custom_call.1} parent=11 // pred_check
          %p265 = pneg %p168
        $region34: #{tpu_custom_call.1} parent=11 // pred_check_branch
          %267 = sbr.rel (%p265) target = $region36
        $region35: #{tpu_custom_call.1} parent=11 // pred_region
          %s269 = ssub.s32 2048, 2048
          %270 = vsyncadd [#allocation7], %s269
          %s271 = sshll.u32 [#allocation8], 4
          %s272 = int_to_ptr.vmem [resolvable:$true] %s271
          %277 = dma.hbm_to_vmem [thread:$0]  %s6, 2048, %s272, [#allocation7], 128, 128, 8
        $region36: #{tpu_custom_call.1} parent=11 // pred_fallthru
          _
        // Predicated region
        $region37: #{tpu_custom_call.1} parent=11 // pred_check
          %p278 = pneg %p189
        $region38: #{tpu_custom_call.1} parent=11 // pred_check_branch
          %280 = sbr.rel (%p278) target = $region40
        $region39: #{tpu_custom_call.1} parent=11 // pred_region
          _
        $region40: #{tpu_custom_call.1} parent=11 // pred_fallthru
          _
      $region12: #{tpu_custom_call.1} parent=5 // pred_fallthru
        _
      %p281 = scmp.lt.s32.totalorder %s16, 2
      // Predicated region
      $region41: #{tpu_custom_call.1} parent=5 // pred_check
        %p282 = pneg %p281
      $region42: #{tpu_custom_call.1} parent=5 // pred_check_branch
        %284 = sbr.rel (%p282) target = $region44
      $region43: #{tpu_custom_call.1} parent=5 // pred_region
        // Predicated region
        $region45: #{tpu_custom_call.1} parent=43 // pred_check
          %p285 = pneg %p36
        $region46: #{tpu_custom_call.1} parent=43 // pred_check_branch
          %287 = sbr.rel (%p285) target = $region48
        $region47: #{tpu_custom_call.1} parent=43 // pred_region
          %p288 = scmp.lt.s32.totalorder %s16, 1
          %s289 = scalar_select %p288, %s16, 1
          %s290 = smul.addr %s289, 2
          %s291 = smul.addr %s290, 8
          %s292 = scalar_lea.vmem %s0, %s291
        $region48: #{tpu_custom_call.1} parent=43 // pred_fallthru
          _
      $region44: #{tpu_custom_call.1} parent=5 // pred_fallthru
        _
      %p293 = scmp.le.s32.totalorder 1, %s16
      %p294 = scmp.lt.s32.totalorder %s16, 3
      %p295 = pnand %p293, %p294
      %p296 = pneg %p295
      // Predicated region
      $region49: #{tpu_custom_call.1} parent=5 // pred_check
        _
      $region50: #{tpu_custom_call.1} parent=5 // pred_check_branch
        %298 = sbr.rel (%p295) target = $region52
      $region51: #{tpu_custom_call.1} parent=5 // pred_region
        %s299 = ssub.s32 %s16, 1
        // Predicated region
        $region53: #{tpu_custom_call.1} parent=51 // pred_check
          %p300 = pneg %p84
        $region54: #{tpu_custom_call.1} parent=51 // pred_check_branch
          %302 = sbr.rel (%p300) target = $region56
        $region55: #{tpu_custom_call.1} parent=51 // pred_region
          %303 = dma.done [#allocation5], 4096
        $region56: #{tpu_custom_call.1} parent=51 // pred_fallthru
          _
        // Predicated region
        $region57: #{tpu_custom_call.1} parent=51 // pred_check
          %p304 = pneg %p126
        $region58: #{tpu_custom_call.1} parent=51 // pred_check_branch
          %306 = sbr.rel (%p304) target = $region60
        $region59: #{tpu_custom_call.1} parent=51 // pred_region
          %307 = dma.done [#allocation7], 2048
        $region60: #{tpu_custom_call.1} parent=51 // pred_fallthru
          _
        // Predicated region
        $region61: #{tpu_custom_call.1} parent=51 // pred_check
          %p308 = pneg %p168
        $region62: #{tpu_custom_call.1} parent=51 // pred_check_branch
          %310 = sbr.rel (%p308) target = $region64
        $region63: #{tpu_custom_call.1} parent=51 // pred_region
          %311 = dma.done [#allocation7], 2048
        $region64: #{tpu_custom_call.1} parent=51 // pred_fallthru
          _
        %p312 = scmp.lt.s32.totalorder %s21, 1
        %s313 = scalar_select %p312, %s21, 1
        %s314 = smul.addr %s313, 2
        %s315 = smul.addr %s314, 8
        %s316 = scalar_lea.vmem %s0, %s315
        %p317 = pneg %p42
        %p318 = pneg %p39
        %p319 = pneg %p63
        %p320 = pneg %p60
        %p321 = pneg %p84
        %p322 = pneg %p81
        %p323 = pneg %p105
        %p324 = pneg %p102
        %p325 = pneg %p126
        %p326 = pneg %p123
        %p327 = pneg %p147
        %p328 = pneg %p144
        %p329 = pneg %p168
        %p330 = pneg %p165
        %p331 = pneg %p189
        %p332 = pneg %p186
        %p333 = pneg %p215
        %p334 = pneg %p212
        %p335 = scmp.lt.s32.totalorder %s21, 1
        %s336 = scalar_select %p335, %s21, 1
        %s337 = smul.addr %s336, 2
        %s338 = smul.addr %s337, 8
        %s339 = scalar_lea.vmem %s8, %s338
        %p340 = scmp.lt.s32.totalorder %s21, 1
        %s341 = scalar_select %p340, %s21, 1
        %s342 = smul.addr %s341, 2
        %s343 = smul.addr %s342, 8
        %s344 = scalar_lea.vmem %s0, %s343
        %p345 = scmp.lt.s32.totalorder %s21, 1
        %s346 = scalar_select %p345, %s21, 1
        %s347 = smul.addr %s346, 2
        %s348 = smul.addr %s347, 8
        %s349 = scalar_lea.vmem %s8, %s348
        %351 = vst [vmem:[#allocation2] sm:$0xff] 0.0
        %352 = vst [vmem:[#allocation2 + $0x8] sm:$0xff] 0.0
        %353 = vst [vmem:[#allocation2 + $0x10] sm:$0xf] 0.0
        %v354 = vld [vmem:[%s344] sm:$0xff]
        %v355 = vld [vmem:[%s344 + $0x8] sm:$0xff]
        %vm356 = vcmask 64512
        %357 = vst.msk [vmem:[#allocation2 + $0x2] sm:$0xff] %vm356, %v354
        %358 = vst.msk [vmem:[#allocation2 + $0xa] sm:$0xff] %vm356, %v355
        %s359 = scalar_lea.vmem %s1, 24
        %v360 = vld [vmem:[%s359] sm:$0x1f]
        %v361 = vld [vmem:[#allocation2] sm:$0xff]
        %v362 = vld [vmem:[#allocation2 + $0x8] sm:$0xff]
        %v363 = vlaneseq
        %v364 = vshrl.u32 %v363, 7
        %v365 = vsub.s32 0, %v364
        %v366 = vrot.slane %v360, %v365
        %v367 = vmul.f32 %v361, %v366
        %v368 = vmul.f32 %v362, %v366
        %v369 = vld [vmem:[#allocation2 + $0x1] sm:$0xff]
        %v370 = vld [vmem:[#allocation2 + $0x9] sm:$0xff]
        %v371 = vlaneseq
        %v372 = vshrl.u32 %v371, 7
        %v373 = vsub.s32 1, %v372
        %v374 = vrot.slane %v360, %v373
        %v375 = vmul.f32 %v369, %v374
        %v376 = vmul.f32 %v370, %v374
        %v377 = vadd.f32 %v367, %v375
        %v378 = vadd.f32 %v368, %v376
        %v379 = vld [vmem:[#allocation2 + $0x2] sm:$0xff]
        %v380 = vld [vmem:[#allocation2 + $0xa] sm:$0xff]
        %v381 = vlaneseq
        %v382 = vshrl.u32 %v381, 7
        %v383 = vsub.s32 2, %v382
        %v384 = vrot.slane %v360, %v383
        %v385 = vmul.f32 %v379, %v384
        %v386 = vmul.f32 %v380, %v384
        %v387 = vadd.f32 %v377, %v385
        %v388 = vadd.f32 %v378, %v386
        %v389 = vld [vmem:[#allocation2 + $0x3] sm:$0xff]
        %v390 = vld [vmem:[#allocation2 + $0xb] sm:$0xff]
        %v391 = vlaneseq
        %v392 = vshrl.u32 %v391, 7
        %v393 = vsub.s32 3, %v392
        %v394 = vrot.slane %v360, %v393
        %v395 = vmul.f32 %v389, %v394
        %v396 = vmul.f32 %v390, %v394
        %v397 = vadd.f32 %v387, %v395
        %v398 = vadd.f32 %v388, %v396
        %v399 = vld [vmem:[#allocation2 + $0x4] sm:$0xff]
        %v400 = vld [vmem:[#allocation2 + $0xc] sm:$0xff]
        %v401 = vlaneseq
        %v402 = vshrl.u32 %v401, 7
        %v403 = vsub.s32 4, %v402
        %v404 = vrot.slane %v360, %v403
        %v405 = vmul.f32 %v399, %v404
        %v406 = vmul.f32 %v400, %v404
        %v407 = vadd.f32 %v397, %v405
        %v408 = vadd.f32 %v398, %v406
        %s409 = scalar_lea.vmem [#allocation4], 192
        %v410 = vld [vmem:[%s409] sm:$0xf]
        %v411 = vld [vmem:[%s409 + $0x4] sm:$0xf]
        %v412 = vld [vmem:[%s409 + $0x8] sm:$0xf]
        %v413 = vld [vmem:[%s409 + $0xc] sm:$0xf]
        %v414 = vld [vmem:[%s409 + $0x10] sm:$0xf]
        %v415 = vld [vmem:[%s409 + $0x14] sm:$0xf]
        %v416 = vld [vmem:[%s409 + $0x18] sm:$0xf]
        %v417 = vld [vmem:[%s409 + $0x1c] sm:$0xf]
        %v418 = vld [vmem:[%s409 + $0x20] sm:$0xf]
        %v419 = vld [vmem:[%s409 + $0x24] sm:$0xf]
        %v420 = vld [vmem:[%s409 + $0x28] sm:$0xf]
        %v421 = vld [vmem:[%s409 + $0x2c] sm:$0xf]
        %v422 = vld [vmem:[%s409 + $0x30] sm:$0xf]
        %v423 = vld [vmem:[%s409 + $0x34] sm:$0xf]
        %v424 = vld [vmem:[%s409 + $0x38] sm:$0xf]
        %v425 = vld [vmem:[%s409 + $0x3c] sm:$0xf]
        %s426 = scalar_lea.vmem %s3, 3
        %v427 = vld [vmem:[%s426] sm:$0x1]
        %v428 = vpack.c.bf16 %v408, %v407
        %v430 = vlaneseq
        %v431 = vshrl.u32 %v430, 7
        %v432 = vsub.s32 0, %v431
        %v433 = vrot.slane %v427, %v432
        %v451 = vunpack.c.l.b16 %v410
        %v452 = vunpack.c.l.b16 %v411
        %v453 = vunpack.c.l.b16 %v412
        %v454 = vunpack.c.l.b16 %v413
        %v455 = vunpack.c.l.b16 %v414
        %v456 = vunpack.c.l.b16 %v415
        %v457 = vunpack.c.l.b16 %v416
        %v458 = vunpack.c.l.b16 %v417
        %v459 = vunpack.c.l.b16 %v418
        %v460 = vunpack.c.l.b16 %v419
        %v461 = vunpack.c.l.b16 %v420
        %v462 = vunpack.c.l.b16 %v421
        %v463 = vunpack.c.l.b16 %v422
        %v464 = vunpack.c.l.b16 %v423
        %v465 = vunpack.c.l.b16 %v424
        %v466 = vunpack.c.l.b16 %v425
        %v467 = vpack.c.b16 %v452, %v451
        %v468 = vpack.c.b16 %v454, %v453
        %v469 = vpack.c.b16 %v456, %v455
        %v470 = vpack.c.b16 %v458, %v457
        %v471 = vpack.c.b16 %v460, %v459
        %v472 = vpack.c.b16 %v462, %v461
        %v473 = vpack.c.b16 %v464, %v463
        %v474 = vpack.c.b16 %v466, %v465
        %483 = vmatprep.subr.bf16.mxu0 0
        %484 = vmatpush1.bf16.msra.mxu0 %v474
        %485 = vmatprep.subr.bf16.mxu0 0
        %486 = vmatpush1.bf16.msra.mxu0 %v473
        %487 = vmatprep.subr.bf16.mxu0 0
        %488 = vmatpush1.bf16.msra.mxu0 %v472
        %489 = vmatprep.subr.bf16.mxu0 0
        %490 = vmatpush1.bf16.msra.mxu0 %v471
        %491 = vmatprep.subr.bf16.mxu0 0
        %492 = vmatpush1.bf16.msra.mxu0 %v470
        %493 = vmatprep.subr.bf16.mxu0 0
        %494 = vmatpush1.bf16.msra.mxu0 %v469
        %495 = vmatprep.subr.bf16.mxu0 0
        %496 = vmatpush1.bf16.msra.mxu0 %v468
        %497 = vmatprep.subr.bf16.mxu0 0
        %498 = vmatpush1.bf16.msra.mxu0 %v467
        %499 = vmatprep.subr.bf16.mxu0 0
        %500 = vmatpush2.bf16.msra.mxu0 0
        %501 = vmatprep.subr.bf16.mxu0 0
        %502 = vmatpush2.bf16.msra.mxu0 0
        %503 = vmatprep.subr.bf16.mxu0 0
        %504 = vmatpush2.bf16.msra.mxu0 0
        %505 = vmatprep.subr.bf16.mxu0 0
        %506 = vmatpush2.bf16.msra.mxu0 0
        %507 = vmatprep.subr.bf16.mxu0 0
        %508 = vmatpush2.bf16.msra.mxu0 0
        %509 = vmatprep.subr.bf16.mxu0 0
        %510 = vmatpush2.bf16.msra.mxu0 0
        %511 = vmatprep.subr.bf16.mxu0 0
        %512 = vmatpush2.bf16.msra.mxu0 0
        %513 = vmatprep.subr.bf16.mxu0 0
        %514 = vmatpush2.bf16.msra.mxu0 0
        %515 = vmatprep.mubr.bf16.mxu0 0
        %516 = vmatmul.mubr.bf16.gmra.mxu0 %v428
        %v517 = vpop.f32.mrf.mxu0
        %v518 = vadd.f32 %v433, %v517
        %v519 = vpop.f32.mrf.mxu0
        %v520 = vpop.f32.mrf.mxu0
        %v521 = vadd.f32 %v433, %v520
        %v522 = vpop.f32.mrf.mxu0
        %523 = vdwg.mxu0
        %524 = vst [vmem:[#allocation3] sm:$0xff] %v518
        %525 = vst [vmem:[#allocation3 + $0x8] sm:$0xff] %v521
        %v526 = vld [vmem:[%s1] sm:$0x1f]
        %v527 = vld [vmem:[#allocation2] sm:$0xff]
        %v528 = vld [vmem:[#allocation2 + $0x8] sm:$0xff]
        %v529 = vlaneseq
        %v530 = vshrl.u32 %v529, 7
        %v531 = vsub.s32 0, %v530
        %v532 = vrot.slane %v526, %v531
        %v533 = vmul.f32 %v527, %v532
        %v534 = vmul.f32 %v528, %v532
        %v535 = vld [vmem:[#allocation2 + $0x1] sm:$0xff]
        %v536 = vld [vmem:[#allocation2 + $0x9] sm:$0xff]
        %v537 = vlaneseq
        %v538 = vshrl.u32 %v537, 7
        %v539 = vsub.s32 1, %v538
        %v540 = vrot.slane %v526, %v539
        %v541 = vmul.f32 %v535, %v540
        %v542 = vmul.f32 %v536, %v540
        %v543 = vadd.f32 %v533, %v541
        %v544 = vadd.f32 %v534, %v542
        %v545 = vld [vmem:[#allocation2 + $0x2] sm:$0xff]
        %v546 = vld [vmem:[#allocation2 + $0xa] sm:$0xff]
        %v547 = vlaneseq
        %v548 = vshrl.u32 %v547, 7
        %v549 = vsub.s32 2, %v548
        %v550 = vrot.slane %v526, %v549
        %v551 = vmul.f32 %v545, %v550
        %v552 = vmul.f32 %v546, %v550
        %v553 = vadd.f32 %v543, %v551
        %v554 = vadd.f32 %v544, %v552
        %v555 = vld [vmem:[#allocation2 + $0x3] sm:$0xff]
        %v556 = vld [vmem:[#allocation2 + $0xb] sm:$0xff]
        %v557 = vlaneseq
        %v558 = vshrl.u32 %v557, 7
        %v559 = vsub.s32 3, %v558
        %v560 = vrot.slane %v526, %v559
        %v561 = vmul.f32 %v555, %v560
        %v562 = vmul.f32 %v556, %v560
        %v563 = vadd.f32 %v553, %v561
        %v564 = vadd.f32 %v554, %v562
        %v565 = vld [vmem:[#allocation2 + $0x4] sm:$0xff]
        %v566 = vld [vmem:[#allocation2 + $0xc] sm:$0xff]
        %v567 = vlaneseq
        %v568 = vshrl.u32 %v567, 7
        %v569 = vsub.s32 4, %v568
        %v570 = vrot.slane %v526, %v569
        %v571 = vmul.f32 %v565, %v570
        %v572 = vmul.f32 %v566, %v570
        %v573 = vadd.f32 %v563, %v571
        %v574 = vadd.f32 %v564, %v572
        %v575 = vld [vmem:[#allocation4] sm:$0xf]
        %v576 = vld [vmem:[#allocation4 + $0x4] sm:$0xf]
        %v577 = vld [vmem:[#allocation4 + $0x8] sm:$0xf]
        %v578 = vld [vmem:[#allocation4 + $0xc] sm:$0xf]
        %v579 = vld [vmem:[#allocation4 + $0x10] sm:$0xf]
        %v580 = vld [vmem:[#allocation4 + $0x14] sm:$0xf]
        %v581 = vld [vmem:[#allocation4 + $0x18] sm:$0xf]
        %v582 = vld [vmem:[#allocation4 + $0x1c] sm:$0xf]
        %v583 = vld [vmem:[#allocation4 + $0x20] sm:$0xf]
        %v584 = vld [vmem:[#allocation4 + $0x24] sm:$0xf]
        %v585 = vld [vmem:[#allocation4 + $0x28] sm:$0xf]
        %v586 = vld [vmem:[#allocation4 + $0x2c] sm:$0xf]
        %v587 = vld [vmem:[#allocation4 + $0x30] sm:$0xf]
        %v588 = vld [vmem:[#allocation4 + $0x34] sm:$0xf]
        %v589 = vld [vmem:[#allocation4 + $0x38] sm:$0xf]
        %v590 = vld [vmem:[#allocation4 + $0x3c] sm:$0xf]
        %v591 = vld [vmem:[%s3] sm:$0x1]
        %v592 = vpack.c.bf16 %v574, %v573
        %v594 = vlaneseq
        %v595 = vshrl.u32 %v594, 7
        %v596 = vsub.s32 0, %v595
        %v597 = vrot.slane %v591, %v596
        %v615 = vunpack.c.l.b16 %v575
        %v616 = vunpack.c.l.b16 %v576
        %v617 = vunpack.c.l.b16 %v577
        %v618 = vunpack.c.l.b16 %v578
        %v619 = vunpack.c.l.b16 %v579
        %v620 = vunpack.c.l.b16 %v580
        %v621 = vunpack.c.l.b16 %v581
        %v622 = vunpack.c.l.b16 %v582
        %v623 = vunpack.c.l.b16 %v583
        %v624 = vunpack.c.l.b16 %v584
        %v625 = vunpack.c.l.b16 %v585
        %v626 = vunpack.c.l.b16 %v586
        %v627 = vunpack.c.l.b16 %v587
        %v628 = vunpack.c.l.b16 %v588
        %v629 = vunpack.c.l.b16 %v589
        %v630 = vunpack.c.l.b16 %v590
        %v631 = vpack.c.b16 %v616, %v615
        %v632 = vpack.c.b16 %v618, %v617
        %v633 = vpack.c.b16 %v620, %v619
        %v634 = vpack.c.b16 %v622, %v621
        %v635 = vpack.c.b16 %v624, %v623
        %v636 = vpack.c.b16 %v626, %v625
        %v637 = vpack.c.b16 %v628, %v627
        %v638 = vpack.c.b16 %v630, %v629
        %647 = vmatprep.subr.bf16.mxu0 0
        %648 = vmatpush1.bf16.msra.mxu0 %v638
        %649 = vmatprep.subr.bf16.mxu0 0
        %650 = vmatpush1.bf16.msra.mxu0 %v637
        %651 = vmatprep.subr.bf16.mxu0 0
        %652 = vmatpush1.bf16.msra.mxu0 %v636
        %653 = vmatprep.subr.bf16.mxu0 0
        %654 = vmatpush1.bf16.msra.mxu0 %v635
        %655 = vmatprep.subr.bf16.mxu0 0
        %656 = vmatpush1.bf16.msra.mxu0 %v634
        %657 = vmatprep.subr.bf16.mxu0 0
        %658 = vmatpush1.bf16.msra.mxu0 %v633
        %659 = vmatprep.subr.bf16.mxu0 0
        %660 = vmatpush1.bf16.msra.mxu0 %v632
        %661 = vmatprep.subr.bf16.mxu0 0
        %662 = vmatpush1.bf16.msra.mxu0 %v631
        %663 = vmatprep.subr.bf16.mxu0 0
        %664 = vmatpush2.bf16.msra.mxu0 0
        %665 = vmatprep.subr.bf16.mxu0 0
        %666 = vmatpush2.bf16.msra.mxu0 0
        %667 = vmatprep.subr.bf16.mxu0 0
        %668 = vmatpush2.bf16.msra.mxu0 0
        %669 = vmatprep.subr.bf16.mxu0 0
        %670 = vmatpush2.bf16.msra.mxu0 0
        %671 = vmatprep.subr.bf16.mxu0 0
        %672 = vmatpush2.bf16.msra.mxu0 0
        %673 = vmatprep.subr.bf16.mxu0 0
        %674 = vmatpush2.bf16.msra.mxu0 0
        %675 = vmatprep.subr.bf16.mxu0 0
        %676 = vmatpush2.bf16.msra.mxu0 0
        %677 = vmatprep.subr.bf16.mxu0 0
        %678 = vmatpush2.bf16.msra.mxu0 0
        %679 = vmatprep.mubr.bf16.mxu0 0
        %680 = vmatmul.mubr.bf16.gmra.mxu0 %v592
        %v681 = vpop.f32.mrf.mxu0
        %v682 = vadd.f32 %v597, %v681
        %v683 = vpop.f32.mrf.mxu0
        %v684 = vpop.f32.mrf.mxu0
        %v685 = vadd.f32 %v597, %v684
        %v686 = vpop.f32.mrf.mxu0
        %687 = vdwg.mxu0
        %v688 = vxor.u32 %v682, 2147483648
        %v689 = vxor.u32 %v685, 2147483648
        %v690 = vmul.f32 %v688, 1.442695
        %v691 = vpow.pop %v690
        %v692 = vmul.f32 %v689, 1.442695
        %v693 = vpow.pop %v692
        %v694 = vadd.f32 %v691, 1.0
        %v695 = vadd.f32 %v693, 1.0
        %v696 = vrcp.pop %v694
        %v697 = vmul.f32 1.0, %v696
        %v698 = vrcp.pop %v695
        %v699 = vmul.f32 1.0, %v698
        %v700 = vmul.f32 %v682, %v697
        %v701 = vmul.f32 %v685, %v699
        %702 = vst [vmem:[#allocation2 + $0x2] sm:$0xff] %v700
        %703 = vst [vmem:[#allocation2 + $0xa] sm:$0xff] %v701
        %s704 = scalar_lea.vmem %s1, 8
        %v705 = vld [vmem:[%s704] sm:$0x1f]
        %v706 = vld [vmem:[#allocation2] sm:$0xff]
        %v707 = vld [vmem:[#allocation2 + $0x8] sm:$0xff]
        %v708 = vlaneseq
        %v709 = vshrl.u32 %v708, 7
        %v710 = vsub.s32 0, %v709
        %v711 = vrot.slane %v705, %v710
        %v712 = vmul.f32 %v706, %v711
        %v713 = vmul.f32 %v707, %v711
        %v714 = vld [vmem:[#allocation2 + $0x1] sm:$0xff]
        %v715 = vld [vmem:[#allocation2 + $0x9] sm:$0xff]
        %v716 = vlaneseq
        %v717 = vshrl.u32 %v716, 7
        %v718 = vsub.s32 1, %v717
        %v719 = vrot.slane %v705, %v718
        %v720 = vmul.f32 %v714, %v719
        %v721 = vmul.f32 %v715, %v719
        %v722 = vadd.f32 %v712, %v720
        %v723 = vadd.f32 %v713, %v721
        %v724 = vld [vmem:[#allocation2 + $0x2] sm:$0xff]
        %v725 = vld [vmem:[#allocation2 + $0xa] sm:$0xff]
        %v726 = vlaneseq
        %v727 = vshrl.u32 %v726, 7
        %v728 = vsub.s32 2, %v727
        %v729 = vrot.slane %v705, %v728
        %v730 = vmul.f32 %v724, %v729
        %v731 = vmul.f32 %v725, %v729
        %v732 = vadd.f32 %v722, %v730
        %v733 = vadd.f32 %v723, %v731
        %v734 = vld [vmem:[#allocation2 + $0x3] sm:$0xff]
        %v735 = vld [vmem:[#allocation2 + $0xb] sm:$0xff]
        %v736 = vlaneseq
        %v737 = vshrl.u32 %v736, 7
        %v738 = vsub.s32 3, %v737
        %v739 = vrot.slane %v705, %v738
        %v740 = vmul.f32 %v734, %v739
        %v741 = vmul.f32 %v735, %v739
        %v742 = vadd.f32 %v732, %v740
        %v743 = vadd.f32 %v733, %v741
        %v744 = vld [vmem:[#allocation2 + $0x4] sm:$0xff]
        %v745 = vld [vmem:[#allocation2 + $0xc] sm:$0xff]
        %v746 = vlaneseq
        %v747 = vshrl.u32 %v746, 7
        %v748 = vsub.s32 4, %v747
        %v749 = vrot.slane %v705, %v748
        %v750 = vmul.f32 %v744, %v749
        %v751 = vmul.f32 %v745, %v749
        %v752 = vadd.f32 %v742, %v750
        %v753 = vadd.f32 %v743, %v751
        %s754 = scalar_lea.vmem [#allocation4], 64
        %v755 = vld [vmem:[%s754] sm:$0xf]
        %v756 = vld [vmem:[%s754 + $0x4] sm:$0xf]
        %v757 = vld [vmem:[%s754 + $0x8] sm:$0xf]
        %v758 = vld [vmem:[%s754 + $0xc] sm:$0xf]
        %v759 = vld [vmem:[%s754 + $0x10] sm:$0xf]
        %v760 = vld [vmem:[%s754 + $0x14] sm:$0xf]
        %v761 = vld [vmem:[%s754 + $0x18] sm:$0xf]
        %v762 = vld [vmem:[%s754 + $0x1c] sm:$0xf]
        %v763 = vld [vmem:[%s754 + $0x20] sm:$0xf]
        %v764 = vld [vmem:[%s754 + $0x24] sm:$0xf]
        %v765 = vld [vmem:[%s754 + $0x28] sm:$0xf]
        %v766 = vld [vmem:[%s754 + $0x2c] sm:$0xf]
        %v767 = vld [vmem:[%s754 + $0x30] sm:$0xf]
        %v768 = vld [vmem:[%s754 + $0x34] sm:$0xf]
        %v769 = vld [vmem:[%s754 + $0x38] sm:$0xf]
        %v770 = vld [vmem:[%s754 + $0x3c] sm:$0xf]
        %s771 = scalar_lea.vmem %s3, 1
        %v772 = vld [vmem:[%s771] sm:$0x1]
        %v773 = vpack.c.bf16 %v753, %v752
        %v775 = vlaneseq
        %v776 = vshrl.u32 %v775, 7
        %v777 = vsub.s32 0, %v776
        %v778 = vrot.slane %v772, %v777
        %v796 = vunpack.c.l.b16 %v755
        %v797 = vunpack.c.l.b16 %v756
        %v798 = vunpack.c.l.b16 %v757
        %v799 = vunpack.c.l.b16 %v758
        %v800 = vunpack.c.l.b16 %v759
        %v801 = vunpack.c.l.b16 %v760
        %v802 = vunpack.c.l.b16 %v761
        %v803 = vunpack.c.l.b16 %v762
        %v804 = vunpack.c.l.b16 %v763
        %v805 = vunpack.c.l.b16 %v764
        %v806 = vunpack.c.l.b16 %v765
        %v807 = vunpack.c.l.b16 %v766
        %v808 = vunpack.c.l.b16 %v767
        %v809 = vunpack.c.l.b16 %v768
        %v810 = vunpack.c.l.b16 %v769
        %v811 = vunpack.c.l.b16 %v770
        %v812 = vpack.c.b16 %v797, %v796
        %v813 = vpack.c.b16 %v799, %v798
        %v814 = vpack.c.b16 %v801, %v800
        %v815 = vpack.c.b16 %v803, %v802
        %v816 = vpack.c.b16 %v805, %v804
        %v817 = vpack.c.b16 %v807, %v806
        %v818 = vpack.c.b16 %v809, %v808
        %v819 = vpack.c.b16 %v811, %v810
        %828 = vmatprep.subr.bf16.mxu0 0
        %829 = vmatpush1.bf16.msra.mxu0 %v819
        %830 = vmatprep.subr.bf16.mxu0 0
        %831 = vmatpush1.bf16.msra.mxu0 %v818
        %832 = vmatprep.subr.bf16.mxu0 0
        %833 = vmatpush1.bf16.msra.mxu0 %v817
        %834 = vmatprep.subr.bf16.mxu0 0
        %835 = vmatpush1.bf16.msra.mxu0 %v816
        %836 = vmatprep.subr.bf16.mxu0 0
        %837 = vmatpush1.bf16.msra.mxu0 %v815
        %838 = vmatprep.subr.bf16.mxu0 0
        %839 = vmatpush1.bf16.msra.mxu0 %v814
        %840 = vmatprep.subr.bf16.mxu0 0
        %841 = vmatpush1.bf16.msra.mxu0 %v813
        %842 = vmatprep.subr.bf16.mxu0 0
        %843 = vmatpush1.bf16.msra.mxu0 %v812
        %844 = vmatprep.subr.bf16.mxu0 0
        %845 = vmatpush2.bf16.msra.mxu0 0
        %846 = vmatprep.subr.bf16.mxu0 0
        %847 = vmatpush2.bf16.msra.mxu0 0
        %848 = vmatprep.subr.bf16.mxu0 0
        %849 = vmatpush2.bf16.msra.mxu0 0
        %850 = vmatprep.subr.bf16.mxu0 0
        %851 = vmatpush2.bf16.msra.mxu0 0
        %852 = vmatprep.subr.bf16.mxu0 0
        %853 = vmatpush2.bf16.msra.mxu0 0
        %854 = vmatprep.subr.bf16.mxu0 0
        %855 = vmatpush2.bf16.msra.mxu0 0
        %856 = vmatprep.subr.bf16.mxu0 0
        %857 = vmatpush2.bf16.msra.mxu0 0
        %858 = vmatprep.subr.bf16.mxu0 0
        %859 = vmatpush2.bf16.msra.mxu0 0
        %860 = vmatprep.mubr.bf16.mxu0 0
        %861 = vmatmul.mubr.bf16.gmra.mxu0 %v773
        %v862 = vpop.f32.mrf.mxu0
        %v863 = vadd.f32 %v778, %v862
        %v864 = vpop.f32.mrf.mxu0
        %v865 = vpop.f32.mrf.mxu0
        %v866 = vadd.f32 %v778, %v865
        %v867 = vpop.f32.mrf.mxu0
        %868 = vdwg.mxu0
        %v869 = vxor.u32 %v863, 2147483648
        %v870 = vxor.u32 %v866, 2147483648
        %v871 = vmul.f32 %v869, 1.442695
        %v872 = vpow.pop %v871
        %v873 = vmul.f32 %v870, 1.442695
        %v874 = vpow.pop %v873
        %v875 = vadd.f32 %v872, 1.0
        %v876 = vadd.f32 %v874, 1.0
        %v877 = vrcp.pop %v875
        %v878 = vmul.f32 1.0, %v877
        %v879 = vrcp.pop %v876
        %v880 = vmul.f32 1.0, %v879
        %v881 = vmul.f32 %v863, %v878
        %v882 = vmul.f32 %v866, %v880
        %883 = vst [vmem:[#allocation2 + $0x2] sm:$0xff] %v881
        %884 = vst [vmem:[#allocation2 + $0xa] sm:$0xff] %v882
        %s885 = scalar_lea.vmem %s1, 16
        %v886 = vld [vmem:[%s885] sm:$0x1f]
        %v887 = vld [vmem:[#allocation2] sm:$0xff]
        %v888 = vld [vmem:[#allocation2 + $0x8] sm:$0xff]
        %v889 = vlaneseq
        %v890 = vshrl.u32 %v889, 7
        %v891 = vsub.s32 0, %v890
        %v892 = vrot.slane %v886, %v891
        %v893 = vmul.f32 %v887, %v892
        %v894 = vmul.f32 %v888, %v892
        %v895 = vld [vmem:[#allocation2 + $0x1] sm:$0xff]
        %v896 = vld [vmem:[#allocation2 + $0x9] sm:$0xff]
        %v897 = vlaneseq
        %v898 = vshrl.u32 %v897, 7
        %v899 = vsub.s32 1, %v898
        %v900 = vrot.slane %v886, %v899
        %v901 = vmul.f32 %v895, %v900
        %v902 = vmul.f32 %v896, %v900
        %v903 = vadd.f32 %v893, %v901
        %v904 = vadd.f32 %v894, %v902
        %v905 = vld [vmem:[#allocation2 + $0x2] sm:$0xff]
        %v906 = vld [vmem:[#allocation2 + $0xa] sm:$0xff]
        %v907 = vlaneseq
        %v908 = vshrl.u32 %v907, 7
        %v909 = vsub.s32 2, %v908
        %v910 = vrot.slane %v886, %v909
        %v911 = vmul.f32 %v905, %v910
        %v912 = vmul.f32 %v906, %v910
        %v913 = vadd.f32 %v903, %v911
        %v914 = vadd.f32 %v904, %v912
        %v915 = vld [vmem:[#allocation2 + $0x3] sm:$0xff]
        %v916 = vld [vmem:[#allocation2 + $0xb] sm:$0xff]
        %v917 = vlaneseq
        %v918 = vshrl.u32 %v917, 7
        %v919 = vsub.s32 3, %v918
        %v920 = vrot.slane %v886, %v919
        %v921 = vmul.f32 %v915, %v920
        %v922 = vmul.f32 %v916, %v920
        %v923 = vadd.f32 %v913, %v921
        %v924 = vadd.f32 %v914, %v922
        %v925 = vld [vmem:[#allocation2 + $0x4] sm:$0xff]
        %v926 = vld [vmem:[#allocation2 + $0xc] sm:$0xff]
        %v927 = vlaneseq
        %v928 = vshrl.u32 %v927, 7
        %v929 = vsub.s32 4, %v928
        %v930 = vrot.slane %v886, %v929
        %v931 = vmul.f32 %v925, %v930
        %v932 = vmul.f32 %v926, %v930
        %v933 = vadd.f32 %v923, %v931
        %v934 = vadd.f32 %v924, %v932
        %s935 = scalar_lea.vmem [#allocation4], 128
        %v936 = vld [vmem:[%s935] sm:$0xf]
        %v937 = vld [vmem:[%s935 + $0x4] sm:$0xf]
        %v938 = vld [vmem:[%s935 + $0x8] sm:$0xf]
        %v939 = vld [vmem:[%s935 + $0xc] sm:$0xf]
        %v940 = vld [vmem:[%s935 + $0x10] sm:$0xf]
        %v941 = vld [vmem:[%s935 + $0x14] sm:$0xf]
        %v942 = vld [vmem:[%s935 + $0x18] sm:$0xf]
        %v943 = vld [vmem:[%s935 + $0x1c] sm:$0xf]
        %v944 = vld [vmem:[%s935 + $0x20] sm:$0xf]
        %v945 = vld [vmem:[%s935 + $0x24] sm:$0xf]
        %v946 = vld [vmem:[%s935 + $0x28] sm:$0xf]
        %v947 = vld [vmem:[%s935 + $0x2c] sm:$0xf]
        %v948 = vld [vmem:[%s935 + $0x30] sm:$0xf]
        %v949 = vld [vmem:[%s935 + $0x34] sm:$0xf]
        %v950 = vld [vmem:[%s935 + $0x38] sm:$0xf]
        %v951 = vld [vmem:[%s935 + $0x3c] sm:$0xf]
        %s952 = scalar_lea.vmem %s3, 2
        %v953 = vld [vmem:[%s952] sm:$0x1]
        %v954 = vpack.c.bf16 %v934, %v933
        %v956 = vlaneseq
        %v957 = vshrl.u32 %v956, 7
        %v958 = vsub.s32 0, %v957
        %v959 = vrot.slane %v953, %v958
        %v977 = vunpack.c.l.b16 %v936
        %v978 = vunpack.c.l.b16 %v937
        %v979 = vunpack.c.l.b16 %v938
        %v980 = vunpack.c.l.b16 %v939
        %v981 = vunpack.c.l.b16 %v940
        %v982 = vunpack.c.l.b16 %v941
        %v983 = vunpack.c.l.b16 %v942
        %v984 = vunpack.c.l.b16 %v943
        %v985 = vunpack.c.l.b16 %v944
        %v986 = vunpack.c.l.b16 %v945
        %v987 = vunpack.c.l.b16 %v946
        %v988 = vunpack.c.l.b16 %v947
        %v989 = vunpack.c.l.b16 %v948
        %v990 = vunpack.c.l.b16 %v949
        %v991 = vunpack.c.l.b16 %v950
        %v992 = vunpack.c.l.b16 %v951
        %v993 = vpack.c.b16 %v978, %v977
        %v994 = vpack.c.b16 %v980, %v979
        %v995 = vpack.c.b16 %v982, %v981
        %v996 = vpack.c.b16 %v984, %v983
        %v997 = vpack.c.b16 %v986, %v985
        %v998 = vpack.c.b16 %v988, %v987
        %v999 = vpack.c.b16 %v990, %v989
        %v1000 = vpack.c.b16 %v992, %v991
        %1009 = vmatprep.subr.bf16.mxu0 0
        %1010 = vmatpush1.bf16.msra.mxu0 %v1000
        %1011 = vmatprep.subr.bf16.mxu0 0
        %1012 = vmatpush1.bf16.msra.mxu0 %v999
        %1013 = vmatprep.subr.bf16.mxu0 0
        %1014 = vmatpush1.bf16.msra.mxu0 %v998
        %1015 = vmatprep.subr.bf16.mxu0 0
        %1016 = vmatpush1.bf16.msra.mxu0 %v997
        %1017 = vmatprep.subr.bf16.mxu0 0
        %1018 = vmatpush1.bf16.msra.mxu0 %v996
        %1019 = vmatprep.subr.bf16.mxu0 0
        %1020 = vmatpush1.bf16.msra.mxu0 %v995
        %1021 = vmatprep.subr.bf16.mxu0 0
        %1022 = vmatpush1.bf16.msra.mxu0 %v994
        %1023 = vmatprep.subr.bf16.mxu0 0
        %1024 = vmatpush1.bf16.msra.mxu0 %v993
        %1025 = vmatprep.subr.bf16.mxu0 0
        %1026 = vmatpush2.bf16.msra.mxu0 0
        %1027 = vmatprep.subr.bf16.mxu0 0
        %1028 = vmatpush2.bf16.msra.mxu0 0
        %1029 = vmatprep.subr.bf16.mxu0 0
        %1030 = vmatpush2.bf16.msra.mxu0 0
        %1031 = vmatprep.subr.bf16.mxu0 0
        %1032 = vmatpush2.bf16.msra.mxu0 0
        %1033 = vmatprep.subr.bf16.mxu0 0
        %1034 = vmatpush2.bf16.msra.mxu0 0
        %1035 = vmatprep.subr.bf16.mxu0 0
        %1036 = vmatpush2.bf16.msra.mxu0 0
        %1037 = vmatprep.subr.bf16.mxu0 0
        %1038 = vmatpush2.bf16.msra.mxu0 0
        %1039 = vmatprep.subr.bf16.mxu0 0
        %1040 = vmatpush2.bf16.msra.mxu0 0
        %1041 = vmatprep.mubr.bf16.mxu0 0
        %1042 = vmatmul.mubr.bf16.gmra.mxu0 %v954
        %v1043 = vpop.f32.mrf.mxu0
        %v1044 = vadd.f32 %v959, %v1043
        %v1045 = vpop.f32.mrf.mxu0
        %v1046 = vpop.f32.mrf.mxu0
        %v1047 = vadd.f32 %v959, %v1046
        %v1048 = vpop.f32.mrf.mxu0
        %1049 = vdwg.mxu0
        %v1050 = vxor.u32 %v1044, 2147483648
        %v1051 = vxor.u32 %v1047, 2147483648
        %v1052 = vmul.f32 %v1050, 1.442695
        %v1053 = vpow.pop %v1052
        %v1054 = vmul.f32 %v1051, 1.442695
        %v1055 = vpow.pop %v1054
        %v1056 = vadd.f32 %v1053, 1.0
        %v1057 = vadd.f32 %v1055, 1.0
        %v1058 = vrcp.pop %v1056
        %v1059 = vmul.f32 1.0, %v1058
        %v1060 = vrcp.pop %v1057
        %v1061 = vmul.f32 1.0, %v1060
        %v1062 = vmul.f32 %v1044, %v1059
        %v1063 = vmul.f32 %v1047, %v1061
        %1064 = vst [vmem:[#allocation2 + $0x2] sm:$0xff] %v1062
        %1065 = vst [vmem:[#allocation2 + $0xa] sm:$0xff] %v1063
        %v1066 = vld [vmem:[#allocation2 + $0x2] sm:$0xff]
        %v1067 = vld [vmem:[#allocation2 + $0xa] sm:$0xff]
        %vm1068 = vcmask 130048
        %v1070 = vsel %vm1068, 0.0625, 0
        %1072 = vmatprep.subr.mxu0 0.0
        %1073 = vmatpush1.msra.mxu0 0.0
        %1074 = vmatprep.subr.mxu0 0.0
        %1075 = vmatpush1.msra.mxu0 0.0
        %1076 = vmatprep.subr.mxu0 0.0
        %1077 = vmatpush1.msra.mxu0 0.0
        %1078 = vmatprep.subr.mxu0 0.0
        %1079 = vmatpush1.msra.mxu0 0.0
        %1080 = vmatprep.subr.mxu0 0.0
        %1081 = vmatpush1.msra.mxu0 0.0
        %1082 = vmatprep.subr.mxu0 0.0
        %1083 = vmatpush1.msra.mxu0 0.0
        %1084 = vmatprep.subr.mxu0 0.0
        %1085 = vmatpush1.msra.mxu0 0.0
        %1086 = vmatprep.subr.mxu0 0.0
        %1087 = vmatpush1.msra.mxu0 0.0
        %1088 = vmatprep.subr.mxu0 0.0
        %1089 = vmatpush1.msra.mxu0 0.0
        %1090 = vmatprep.subr.mxu0 0.0
        %1091 = vmatpush1.msra.mxu0 0.0
        %1092 = vmatprep.subr.mxu0 0.0
        %1093 = vmatpush1.msra.mxu0 0.0
        %1094 = vmatprep.subr.mxu0 0.0
        %1095 = vmatpush1.msra.mxu0 0.0
        %1096 = vmatprep.subr.mxu0 0.0
        %1097 = vmatpush1.msra.mxu0 0.0
        %1098 = vmatprep.subr.mxu0 0.0
        %1099 = vmatpush1.msra.mxu0 0.0
        %1100 = vmatprep.subr.mxu0 0.0
        %1101 = vmatpush1.msra.mxu0 %v1067
        %1102 = vmatprep.subr.mxu0 0.0
        %1103 = vmatpush1.msra.mxu0 %v1066
        %1104 = vmatprep.subr.mxu0 0.0
        %1105 = vmatpush2.msra.mxu0 0.0
        %1106 = vmatprep.subr.mxu0 0.0
        %1107 = vmatpush2.msra.mxu0 0.0
        %1108 = vmatprep.subr.mxu0 0.0
        %1109 = vmatpush2.msra.mxu0 0.0
        %1110 = vmatprep.subr.mxu0 0.0
        %1111 = vmatpush2.msra.mxu0 0.0
        %1112 = vmatprep.subr.mxu0 0.0
        %1113 = vmatpush2.msra.mxu0 0.0
        %1114 = vmatprep.subr.mxu0 0.0
        %1115 = vmatpush2.msra.mxu0 0.0
        %1116 = vmatprep.subr.mxu0 0.0
        %1117 = vmatpush2.msra.mxu0 0.0
        %1118 = vmatprep.subr.mxu0 0.0
        %1119 = vmatpush2.msra.mxu0 0.0
        %1120 = vmatprep.subr.mxu0 0.0
        %1121 = vmatpush2.msra.mxu0 0.0
        %1122 = vmatprep.subr.mxu0 0.0
        %1123 = vmatpush2.msra.mxu0 0.0
        %1124 = vmatprep.subr.mxu0 0.0
        %1125 = vmatpush2.msra.mxu0 0.0
        %1126 = vmatprep.subr.mxu0 0.0
        %1127 = vmatpush2.msra.mxu0 0.0
        %1128 = vmatprep.subr.mxu0 0.0
        %1129 = vmatpush2.msra.mxu0 0.0
        %1130 = vmatprep.subr.mxu0 0.0
        %1131 = vmatpush2.msra.mxu0 0.0
        %1132 = vmatprep.subr.mxu0 0.0
        %1133 = vmatpush2.msra.mxu0 0.0
        %1134 = vmatprep.subr.mxu0 0.0
        %1135 = vmatpush2.msra.mxu0 0.0
        %1136 = vmatprep.mubr.f32.mxu0 0.0
        %1137 = vmatmul.mubr.f32.gmra.mxu0 %v1070
        %v1138 = vpop.f32.mrf.mxu0
        %v1139 = vadd.f32 0.0, %v1138
        %v1140 = vpop.f32.mrf.mxu0
        %1141 = vdwg.mxu0
        %v1142 = vld [vmem:[#allocation6] sm:$0xff]
        %v1143 = vld [vmem:[#allocation6 + $0x8] sm:$0xff]
        %v1144 = vld [vmem:[#allocation6 + $0x10] sm:$0xff]
        %v1145 = vld [vmem:[#allocation6 + $0x18] sm:$0xff]
        %v1146 = vld [vmem:[#allocation6 + $0x20] sm:$0xff]
        %v1147 = vld [vmem:[#allocation6 + $0x28] sm:$0xff]
        %v1148 = vld [vmem:[#allocation6 + $0x30] sm:$0xff]
        %v1149 = vld [vmem:[#allocation6 + $0x38] sm:$0xff]
        %v1150 = vld [vmem:[#allocation6 + $0x40] sm:$0xff]
        %v1151 = vld [vmem:[#allocation6 + $0x48] sm:$0xff]
        %v1152 = vld [vmem:[#allocation6 + $0x50] sm:$0xff]
        %v1153 = vld [vmem:[#allocation6 + $0x58] sm:$0xff]
        %v1154 = vld [vmem:[#allocation6 + $0x60] sm:$0xff]
        %v1155 = vld [vmem:[#allocation6 + $0x68] sm:$0xff]
        %v1156 = vld [vmem:[#allocation6 + $0x70] sm:$0xff]
        %v1157 = vld [vmem:[#allocation6 + $0x78] sm:$0xff]
        %v1158 = vld [vmem:[%s5] sm:$0x1]
        %1159 = vmatprep.subr.mxu0 0.0
        %1160 = vmatpush1.msra.mxu0 %v1157
        %1161 = vmatprep.subr.mxu0 0.0
        %1162 = vmatpush1.msra.mxu0 %v1156
        %1163 = vmatprep.subr.mxu0 0.0
        %1164 = vmatpush1.msra.mxu0 %v1155
        %1165 = vmatprep.subr.mxu0 0.0
        %1166 = vmatpush1.msra.mxu0 %v1154
        %1167 = vmatprep.subr.mxu0 0.0
        %1168 = vmatpush1.msra.mxu0 %v1153
        %1169 = vmatprep.subr.mxu0 0.0
        %1170 = vmatpush1.msra.mxu0 %v1152
        %1171 = vmatprep.subr.mxu0 0.0
        %1172 = vmatpush1.msra.mxu0 %v1151
        %1173 = vmatprep.subr.mxu0 0.0
        %1174 = vmatpush1.msra.mxu0 %v1150
        %1175 = vmatprep.subr.mxu0 0.0
        %1176 = vmatpush1.msra.mxu0 %v1149
        %1177 = vmatprep.subr.mxu0 0.0
        %1178 = vmatpush1.msra.mxu0 %v1148
        %1179 = vmatprep.subr.mxu0 0.0
        %1180 = vmatpush1.msra.mxu0 %v1147
        %1181 = vmatprep.subr.mxu0 0.0
        %1182 = vmatpush1.msra.mxu0 %v1146
        %1183 = vmatprep.subr.mxu0 0.0
        %1184 = vmatpush1.msra.mxu0 %v1145
        %1185 = vmatprep.subr.mxu0 0.0
        %1186 = vmatpush1.msra.mxu0 %v1144
        %1187 = vmatprep.subr.mxu0 0.0
        %1188 = vmatpush1.msra.mxu0 %v1143
        %1189 = vmatprep.subr.mxu0 0.0
        %1190 = vmatpush1.msra.mxu0 %v1142
        %1191 = vmatprep.subr.mxu0 0.0
        %1192 = vmatpush2.msra.mxu0 0.0
        %1193 = vmatprep.subr.mxu0 0.0
        %1194 = vmatpush2.msra.mxu0 0.0
        %1195 = vmatprep.subr.mxu0 0.0
        %1196 = vmatpush2.msra.mxu0 0.0
        %1197 = vmatprep.subr.mxu0 0.0
        %1198 = vmatpush2.msra.mxu0 0.0
        %1199 = vmatprep.subr.mxu0 0.0
        %1200 = vmatpush2.msra.mxu0 0.0
        %1201 = vmatprep.subr.mxu0 0.0
        %1202 = vmatpush2.msra.mxu0 0.0
        %1203 = vmatprep.subr.mxu0 0.0
        %1204 = vmatpush2.msra.mxu0 0.0
        %1205 = vmatprep.subr.mxu0 0.0
        %1206 = vmatpush2.msra.mxu0 0.0
        %1207 = vmatprep.subr.mxu0 0.0
        %1208 = vmatpush2.msra.mxu0 0.0
        %1209 = vmatprep.subr.mxu0 0.0
        %1210 = vmatpush2.msra.mxu0 0.0
        %1211 = vmatprep.subr.mxu0 0.0
        %1212 = vmatpush2.msra.mxu0 0.0
        %1213 = vmatprep.subr.mxu0 0.0
        %1214 = vmatpush2.msra.mxu0 0.0
        %1215 = vmatprep.subr.mxu0 0.0
        %1216 = vmatpush2.msra.mxu0 0.0
        %1217 = vmatprep.subr.mxu0 0.0
        %1218 = vmatpush2.msra.mxu0 0.0
        %1219 = vmatprep.subr.mxu0 0.0
        %1220 = vmatpush2.msra.mxu0 0.0
        %1221 = vmatprep.subr.mxu0 0.0
        %1222 = vmatpush2.msra.mxu0 0.0
        %1223 = vmatprep.mubr.f32.mxu0 0.0
        %1224 = vmatmul.mubr.f32.gmra.mxu0 %v1139
        %v1225 = vpop.f32.mrf.mxu0
        %v1226 = vadd.f32 %v1158, %v1225
        %v1227 = vpop.f32.mrf.mxu0
        %1228 = vdwg.mxu0
        %v1229 = vxor.u32 %v1226, 2147483648
        %v1230 = vmul.f32 %v1229, 1.442695
        %v1231 = vpow.pop %v1230
        %v1232 = vadd.f32 %v1231, 1.0
        %v1233 = vrcp.pop %v1232
        %v1234 = vmul.f32 1.0, %v1233
        %v1235 = vmul.f32 %v1226, %v1234
        %v1236 = vld [vmem:[#allocation8] sm:$0xff]
        %v1237 = vld [vmem:[#allocation8 + $0x8] sm:$0xff]
        %v1238 = vld [vmem:[#allocation8 + $0x10] sm:$0xff]
        %v1239 = vld [vmem:[#allocation8 + $0x18] sm:$0xff]
        %v1240 = vld [vmem:[#allocation8 + $0x20] sm:$0xff]
        %v1241 = vld [vmem:[#allocation8 + $0x28] sm:$0xff]
        %v1242 = vld [vmem:[#allocation8 + $0x30] sm:$0xff]
        %v1243 = vld [vmem:[#allocation8 + $0x38] sm:$0xff]
        %v1244 = vld [vmem:[#allocation8 + $0x40] sm:$0xff]
        %v1245 = vld [vmem:[#allocation8 + $0x48] sm:$0xff]
        %v1246 = vld [vmem:[#allocation8 + $0x50] sm:$0xff]
        %v1247 = vld [vmem:[#allocation8 + $0x58] sm:$0xff]
        %v1248 = vld [vmem:[#allocation8 + $0x60] sm:$0xff]
        %v1249 = vld [vmem:[#allocation8 + $0x68] sm:$0xff]
        %v1250 = vld [vmem:[#allocation8 + $0x70] sm:$0xff]
        %v1251 = vld [vmem:[#allocation8 + $0x78] sm:$0xff]
        %v1252 = vld [vmem:[%s7] sm:$0x1]
        %1253 = vmatprep.subr.mxu0 0.0
        %1254 = vmatpush1.msra.mxu0 %v1251
        %1255 = vmatprep.subr.mxu0 0.0
        %1256 = vmatpush1.msra.mxu0 %v1250
        %1257 = vmatprep.subr.mxu0 0.0
        %1258 = vmatpush1.msra.mxu0 %v1249
        %1259 = vmatprep.subr.mxu0 0.0
        %1260 = vmatpush1.msra.mxu0 %v1248
        %1261 = vmatprep.subr.mxu0 0.0
        %1262 = vmatpush1.msra.mxu0 %v1247
        %1263 = vmatprep.subr.mxu0 0.0
        %1264 = vmatpush1.msra.mxu0 %v1246
        %1265 = vmatprep.subr.mxu0 0.0
        %1266 = vmatpush1.msra.mxu0 %v1245
        %1267 = vmatprep.subr.mxu0 0.0
        %1268 = vmatpush1.msra.mxu0 %v1244
        %1269 = vmatprep.subr.mxu0 0.0
        %1270 = vmatpush1.msra.mxu0 %v1243
        %1271 = vmatprep.subr.mxu0 0.0
        %1272 = vmatpush1.msra.mxu0 %v1242
        %1273 = vmatprep.subr.mxu0 0.0
        %1274 = vmatpush1.msra.mxu0 %v1241
        %1275 = vmatprep.subr.mxu0 0.0
        %1276 = vmatpush1.msra.mxu0 %v1240
        %1277 = vmatprep.subr.mxu0 0.0
        %1278 = vmatpush1.msra.mxu0 %v1239
        %1279 = vmatprep.subr.mxu0 0.0
        %1280 = vmatpush1.msra.mxu0 %v1238
        %1281 = vmatprep.subr.mxu0 0.0
        %1282 = vmatpush1.msra.mxu0 %v1237
        %1283 = vmatprep.subr.mxu0 0.0
        %1284 = vmatpush1.msra.mxu0 %v1236
        %1285 = vmatprep.subr.mxu0 0.0
        %1286 = vmatpush2.msra.mxu0 0.0
        %1287 = vmatprep.subr.mxu0 0.0
        %1288 = vmatpush2.msra.mxu0 0.0
        %1289 = vmatprep.subr.mxu0 0.0
        %1290 = vmatpush2.msra.mxu0 0.0
        %1291 = vmatprep.subr.mxu0 0.0
        %1292 = vmatpush2.msra.mxu0 0.0
        %1293 = vmatprep.subr.mxu0 0.0
        %1294 = vmatpush2.msra.mxu0 0.0
        %1295 = vmatprep.subr.mxu0 0.0
        %1296 = vmatpush2.msra.mxu0 0.0
        %1297 = vmatprep.subr.mxu0 0.0
        %1298 = vmatpush2.msra.mxu0 0.0
        %1299 = vmatprep.subr.mxu0 0.0
        %1300 = vmatpush2.msra.mxu0 0.0
        %1301 = vmatprep.subr.mxu0 0.0
        %1302 = vmatpush2.msra.mxu0 0.0
        %1303 = vmatprep.subr.mxu0 0.0
        %1304 = vmatpush2.msra.mxu0 0.0
        %1305 = vmatprep.subr.mxu0 0.0
        %1306 = vmatpush2.msra.mxu0 0.0
        %1307 = vmatprep.subr.mxu0 0.0
        %1308 = vmatpush2.msra.mxu0 0.0
        %1309 = vmatprep.subr.mxu0 0.0
        %1310 = vmatpush2.msra.mxu0 0.0
        %1311 = vmatprep.subr.mxu0 0.0
        %1312 = vmatpush2.msra.mxu0 0.0
        %1313 = vmatprep.subr.mxu0 0.0
        %1314 = vmatpush2.msra.mxu0 0.0
        %1315 = vmatprep.subr.mxu0 0.0
        %1316 = vmatpush2.msra.mxu0 0.0
        %1317 = vmatprep.mubr.f32.mxu0 0.0
        %1318 = vmatmul.mubr.f32.gmra.mxu0 %v1235
        %v1319 = vpop.f32.mrf.mxu0
        %v1320 = vadd.f32 %v1252, %v1319
        %v1321 = vpop.f32.mrf.mxu0
        %1322 = vdwg.mxu0
        %v1323 = vxor.u32 %v1320, 2147483648
        %v1324 = vmul.f32 %v1323, 1.442695
        %v1325 = vpow.pop %v1324
        %v1326 = vadd.f32 %v1325, 1.0
        %v1327 = vrcp.pop %v1326
        %v1328 = vmul.f32 1.0, %v1327
        %v1329 = vlaneseq
        %v1330 = vshrl.u32 %v1329, 7
        %v1331 = vsub.s32 0, %v1330
        %v1332 = vrot.slane %v1328, %v1331
        %v1333 = vmul.f32 %v1066, %v1332
        %v1334 = vmul.f32 %v1067, %v1332
        %v1335 = vld [vmem:[#allocation3] sm:$0xff]
        %v1336 = vld [vmem:[#allocation3 + $0x8] sm:$0xff]
        %v1337 = vadd.f32 %v1333, %v1335
        %v1338 = vadd.f32 %v1334, %v1336
        %v1339 = vxor.u32 %v1337, 2147483648
        %v1340 = vxor.u32 %v1338, 2147483648
        %v1341 = vmul.f32 %v1339, 1.442695
        %v1342 = vpow.pop %v1341
        %v1343 = vmul.f32 %v1340, 1.442695
        %v1344 = vpow.pop %v1343
        %v1345 = vadd.f32 %v1342, 1.0
        %v1346 = vadd.f32 %v1344, 1.0
        %v1347 = vrcp.pop %v1345
        %v1348 = vmul.f32 1.0, %v1347
        %v1349 = vrcp.pop %v1346
        %v1350 = vmul.f32 1.0, %v1349
        %v1351 = vmul.f32 %v1337, %v1348
        %v1352 = vmul.f32 %v1338, %v1350
        %1353 = vst.msk [vmem:[%s349] sm:$0xff] %vm356, %v1351
        %1354 = vst.msk [vmem:[%s349 + $0x8] sm:$0xff] %vm356, %v1352
        %p1355 = scmp.lt.s32.totalorder %s21, 1
        %s1356 = scalar_select %p1355, %s21, 1
        %s1357 = smul.addr %s1356, 2
        %s1358 = smul.addr %s1357, 8
        %s1359 = scalar_lea.vmem %s8, %s1358
        // Predicated region
        $region65: #{tpu_custom_call.1} parent=51 // pred_check
          %p1360 = pneg %p212
        $region66: #{tpu_custom_call.1} parent=51 // pred_check_branch
          %1362 = sbr.rel (%p1360) target = $region68
        $region67: #{tpu_custom_call.1} parent=51 // pred_region
          _
        $region68: #{tpu_custom_call.1} parent=51 // pred_fallthru
          _
      $region52: #{tpu_custom_call.1} parent=5 // pred_fallthru
        _
      %p1363 = scmp.le.s32.totalorder 2, %s16
      // Predicated region
      $region69: #{tpu_custom_call.1} parent=5 // pred_check
        %p1364 = pneg %p1363
      $region70: #{tpu_custom_call.1} parent=5 // pred_check_branch
        %1366 = sbr.rel (%p1364) target = $region72
      $region71: #{tpu_custom_call.1} parent=5 // pred_region
        %s1367 = ssub.s32 %s16, 2
        // Predicated region
        $region73: #{tpu_custom_call.1} parent=71 // pred_check
          %p1368 = pneg %p218
        $region74: #{tpu_custom_call.1} parent=71 // pred_check_branch
          %1370 = sbr.rel (%p1368) target = $region76
        $region75: #{tpu_custom_call.1} parent=71 // pred_region
          %p1371 = scmp.lt.s32.totalorder %s22, 1
          %s1372 = scalar_select %p1371, %s22, 1
          %s1373 = smul.addr %s1372, 2
          %s1374 = smul.addr %s1373, 8
          %s1375 = scalar_lea.vmem %s8, %s1374
        $region76: #{tpu_custom_call.1} parent=71 // pred_fallthru
          _
      $region72: #{tpu_custom_call.1} parent=5 // pred_fallthru
        _
    $region6: #{tpu_custom_call.1} parent=1 // loop_footer
      %s20 = sadd.s32 1, %s16
    $region7: #{tpu_custom_call.1} parent=1 // loop_footer_branch
      %15 = sbr.rel target = $region3
    $region8: #{tpu_custom_call.1} parent=1 // loop_exit
      _
    %1376 = vsyncpa [#allocation5], 1
    %s1377 = scalar_lea.sflag [#allocation5], 1
    %1378 = vsyncpa %s1377, 1
    %1379 = vsyncpa [#allocation7], 1

// kernel: tpu_custom_call.1
$region0: #{tpu_custom_call.1}
  #allocation0 [shape = 'u32[]', space=smem, size = 0x4, offset = 0x4, fixed_abs, tag = 'smem constant byte address 0x4 - core index']
  #allocation1 [shape = 'u32[144,128]{1,0:T(1,128)}', space=vmem, size = 0x12000, scoped, tag = 'internal scratch']
  #allocation2 [shape = 'f32[20,128]{1,0:T(8,128)}', space=vmem, size = 0x3000, scoped, tag = 'scratch operand']
  #allocation3 [shape = 'f32[16,128]{1,0:T(8,128)}', space=vmem, size = 0x2000, scoped, tag = 'scratch operand']
  %s0 = inlined_call_operand.vmem [shape: f32[2,16,8], index: 0, kind: input, shape index: {}]
  %s1 = inlined_call_operand.vmem [shape: f32[4,5,128], index: 1, kind: input, shape index: {}]
  %s2 = inlined_call_operand.hbm [shape: bf16[4,128,128], index: 2, kind: input, shape index: {}]
  %s3 = inlined_call_operand.vmem [shape: f32[4,1,128], index: 3, kind: input, shape index: {}]
  %s4 = inlined_call_operand.hbm [shape: f32[128,128], index: 4, kind: input, shape index: {}]
  %s5 = inlined_call_operand.vmem [shape: f32[1,128], index: 5, kind: input, shape index: {}]
  %s6 = inlined_call_operand.hbm [shape: f32[128,128], index: 6, kind: input, shape index: {}]
  %s7 = inlined_call_operand.vmem [shape: f32[1,128], index: 7, kind: input, shape index: {}]
  %s8 = inlined_call_operand.vmem [shape: f32[2,16,8], index: 8, kind: output, shape index: {}]
  %s9 = sld [smem:[#allocation0]]
  $region77: #{tpu_custom_call.1} parent=0
    _
  %s11 = ssub.s32 1, %s9
  %s12 = scalar_select 0, %s11, %s9
  $region1: #{tpu_custom_call.1} parent=0
    #allocation4 [shape = 'u8[131072]{0}', space=vmem, size = 0x20000, scoped, tag = 'input window, operand 2, single buffered']
    #allocation5 [shape = 's32[2]{0}', space=sflag, size = 0x8, scoped, tag = 'scoped memory for tpu_custom_call.1']
    #allocation6 [shape = 'u8[65536]{0}', space=vmem, size = 0x10000, scoped, tag = 'input window, operand 4, single buffered']
    #allocation7 [shape = 's32[1]{0}', space=sflag, size = 0x4, scoped, tag = 'scoped memory for tpu_custom_call.1']
    #allocation8 [shape = 'u8[65536]{0}', space=vmem, size = 0x10000, scoped, tag = 'input window, operand 6, single buffered']
    %13 = vsyncpa [#allocation5], 0
    %14 = vsyncpa [#allocation7], 0
    loop: start=0, step=1, limit=4
    $region2: #{tpu_custom_call.1} parent=1 // loop_pre_header
      _
    $region3: #{tpu_custom_call.1} parent=1 // loop_header
      %s16 = sphi 0, %s20
      %p17 = scmp.ge.s32.totalorder %s16, 4
      %s26 = sphi 0, %s28
      %s29 = sphi 0, %s26
      %s30 = sphi 0, %s29
      %s46 = sphi 0, %s30
      %s50 = sphi 0, %s50
      %s52 = sphi 0, %s50
      %s53 = sphi 0, %s52
      %s67 = sphi 0, %s53
      %s71 = sphi 0, %s71
      %s73 = sphi 0, %s71
      %s74 = sphi 0, %s73
      %s88 = sphi 0, %s74
      %s92 = sphi 0, %s92
      %s94 = sphi 0, %s92
      %s95 = sphi 0, %s94
      %s109 = sphi 0, %s95
      %s113 = sphi 0, %s113
      %s115 = sphi 0, %s113
      %s116 = sphi 0, %s115
      %s130 = sphi 0, %s116
      %s134 = sphi 0, %s134
      %s136 = sphi 0, %s134
      %s137 = sphi 0, %s136
      %s151 = sphi 0, %s137
      %s155 = sphi 0, %s155
      %s157 = sphi 0, %s155
      %s158 = sphi 0, %s157
      %s172 = sphi 0, %s158
      %s176 = sphi 0, %s176
      %s178 = sphi 0, %s176
      %s179 = sphi 0, %s178
      %s193 = sphi 0, %s179
      %s199 = sphi 0, %s201
      %s202 = sphi 0, %s199
      %s203 = sphi 0, %s202
      %s219 = sphi 0, %s203
    $region4: #{tpu_custom_call.1} parent=1 // loop_header_branch
      %19 = sbr.rel (%p17) target = $region8
    $region5: #{tpu_custom_call.1} parent=1 // loop_body
      %s21 = ssub.s32 %s16, 1
      %s22 = ssub.s32 %s16, 2
      %s23 = sadd.s32 %s16, 1
      %s24 = ssub.s32 %s16, %s23
      %p25 = scmp.eq.s32.totalorder %s24, 0
      %s27 = sadd.s32 %s26, 1
      %s28 = scalar_select %p25, %s26, %s27
      %p31 = pneg %p25
      %p32 = scmp.eq.s32.totalorder %s16, 1
      %p33 = por %p31, %p32
      %p34 = scmp.ne.s32.totalorder %s26, %s29
      %p35 = scmp.eq.s32.totalorder %s16, 0
      %p36 = por %p34, %p35
      %p37 = scmp.ne.s32.totalorder %s26, %s29
      %p38 = scmp.eq.s32.totalorder %s21, 1
      %p39 = por %p37, %p38
      %p40 = scmp.ne.s32.totalorder %s29, %s30
      %p41 = scmp.eq.s32.totalorder %s21, 0
      %p42 = por %p40, %p41
      %p43 = scmp.ne.s32.totalorder %s29, %s30
      %p44 = scmp.eq.s32.totalorder %s22, 1
      %p45 = por %p43, %p44
      %p47 = scmp.ne.s32.totalorder %s30, %s46
      %p48 = scmp.eq.s32.totalorder %s22, 0
      %p49 = por %p47, %p48
      %s51 = sadd.s32 %s50, 1
      %p54 = scmp.eq.s32.totalorder %s16, 1
      %p55 = scmp.ne.s32.totalorder %s50, %s52
      %p56 = scmp.eq.s32.totalorder %s16, 0
      %p57 = por %p55, %p56
      %p58 = scmp.ne.s32.totalorder %s50, %s52
      %p59 = scmp.eq.s32.totalorder %s21, 1
      %p60 = por %p58, %p59
      %p61 = scmp.ne.s32.totalorder %s52, %s53
      %p62 = scmp.eq.s32.totalorder %s21, 0
      %p63 = por %p61, %p62
      %p64 = scmp.ne.s32.totalorder %s52, %s53
      %p65 = scmp.eq.s32.totalorder %s22, 1
      %p66 = por %p64, %p65
      %p68 = scmp.ne.s32.totalorder %s53, %s67
      %p69 = scmp.eq.s32.totalorder %s22, 0
      %p70 = por %p68, %p69
      %s72 = sadd.s32 %s71, 1
      %p75 = scmp.eq.s32.totalorder %s16, 1
      %p76 = scmp.ne.s32.totalorder %s71, %s73
      %p77 = scmp.eq.s32.totalorder %s16, 0
      %p78 = por %p76, %p77
      %p79 = scmp.ne.s32.totalorder %s71, %s73
      %p80 = scmp.eq.s32.totalorder %s21, 1
      %p81 = por %p79, %p80
      %p82 = scmp.ne.s32.totalorder %s73, %s74
      %p83 = scmp.eq.s32.totalorder %s21, 0
      %p84 = por %p82, %p83
      %p85 = scmp.ne.s32.totalorder %s73, %s74
      %p86 = scmp.eq.s32.totalorder %s22, 1
      %p87 = por %p85, %p86
      %p89 = scmp.ne.s32.totalorder %s74, %s88
      %p90 = scmp.eq.s32.totalorder %s22, 0
      %p91 = por %p89, %p90
      %s93 = sadd.s32 %s92, 1
      %p96 = scmp.eq.s32.totalorder %s16, 1
      %p97 = scmp.ne.s32.totalorder %s92, %s94
      %p98 = scmp.eq.s32.totalorder %s16, 0
      %p99 = por %p97, %p98
      %p100 = scmp.ne.s32.totalorder %s92, %s94
      %p101 = scmp.eq.s32.totalorder %s21, 1
      %p102 = por %p100, %p101
      %p103 = scmp.ne.s32.totalorder %s94, %s95
      %p104 = scmp.eq.s32.totalorder %s21, 0
      %p105 = por %p103, %p104
      %p106 = scmp.ne.s32.totalorder %s94, %s95
      %p107 = scmp.eq.s32.totalorder %s22, 1
      %p108 = por %p106, %p107
      %p110 = scmp.ne.s32.totalorder %s95, %s109
      %p111 = scmp.eq.s32.totalorder %s22, 0
      %p112 = por %p110, %p111
      %s114 = sadd.s32 %s113, 1
      %p117 = scmp.eq.s32.totalorder %s16, 1
      %p118 = scmp.ne.s32.totalorder %s113, %s115
      %p119 = scmp.eq.s32.totalorder %s16, 0
      %p120 = por %p118, %p119
      %p121 = scmp.ne.s32.totalorder %s113, %s115
      %p122 = scmp.eq.s32.totalorder %s21, 1
      %p123 = por %p121, %p122
      %p124 = scmp.ne.s32.totalorder %s115, %s116
      %p125 = scmp.eq.s32.totalorder %s21, 0
      %p126 = por %p124, %p125
      %p127 = scmp.ne.s32.totalorder %s115, %s116
      %p128 = scmp.eq.s32.totalorder %s22, 1
      %p129 = por %p127, %p128
      %p131 = scmp.ne.s32.totalorder %s116, %s130
      %p132 = scmp.eq.s32.totalorder %s22, 0
      %p133 = por %p131, %p132
      %s135 = sadd.s32 %s134, 1
      %p138 = scmp.eq.s32.totalorder %s16, 1
      %p139 = scmp.ne.s32.totalorder %s134, %s136
      %p140 = scmp.eq.s32.totalorder %s16, 0
      %p141 = por %p139, %p140
      %p142 = scmp.ne.s32.totalorder %s134, %s136
      %p143 = scmp.eq.s32.totalorder %s21, 1
      %p144 = por %p142, %p143
      %p145 = scmp.ne.s32.totalorder %s136, %s137
      %p146 = scmp.eq.s32.totalorder %s21, 0
      %p147 = por %p145, %p146
      %p148 = scmp.ne.s32.totalorder %s136, %s137
      %p149 = scmp.eq.s32.totalorder %s22, 1
      %p150 = por %p148, %p149
      %p152 = scmp.ne.s32.totalorder %s137, %s151
      %p153 = scmp.eq.s32.totalorder %s22, 0
      %p154 = por %p152, %p153
      %s156 = sadd.s32 %s155, 1
      %p159 = scmp.eq.s32.totalorder %s16, 1
      %p160 = scmp.ne.s32.totalorder %s155, %s157
      %p161 = scmp.eq.s32.totalorder %s16, 0
      %p162 = por %p160, %p161
      %p163 = scmp.ne.s32.totalorder %s155, %s157
      %p164 = scmp.eq.s32.totalorder %s21, 1
      %p165 = por %p163, %p164
      %p166 = scmp.ne.s32.totalorder %s157, %s158
      %p167 = scmp.eq.s32.totalorder %s21, 0
      %p168 = por %p166, %p167
      %p169 = scmp.ne.s32.totalorder %s157, %s158
      %p170 = scmp.eq.s32.totalorder %s22, 1
      %p171 = por %p169, %p170
      %p173 = scmp.ne.s32.totalorder %s158, %s172
      %p174 = scmp.eq.s32.totalorder %s22, 0
      %p175 = por %p173, %p174
      %s177 = sadd.s32 %s176, 1
      %p180 = scmp.eq.s32.totalorder %s16, 1
      %p181 = scmp.ne.s32.totalorder %s176, %s178
      %p182 = scmp.eq.s32.totalorder %s16, 0
      %p183 = por %p181, %p182
      %p184 = scmp.ne.s32.totalorder %s176, %s178
      %p185 = scmp.eq.s32.totalorder %s21, 1
      %p186 = por %p184, %p185
      %p187 = scmp.ne.s32.totalorder %s178, %s179
      %p188 = scmp.eq.s32.totalorder %s21, 0
      %p189 = por %p187, %p188
      %p190 = scmp.ne.s32.totalorder %s178, %s179
      %p191 = scmp.eq.s32.totalorder %s22, 1
      %p192 = por %p190, %p191
      %p194 = scmp.ne.s32.totalorder %s179, %s193
      %p195 = scmp.eq.s32.totalorder %s22, 0
      %p196 = por %p194, %p195
      %s197 = ssub.s32 %s16, %s23
      %p198 = scmp.eq.s32.totalorder %s197, 0
      %s200 = sadd.s32 %s199, 1
      %s201 = scalar_select %p198, %s199, %s200
      %p204 = pneg %p198
      %p205 = scmp.eq.s32.totalorder %s16, 1
      %p206 = por %p204, %p205
      %p207 = scmp.ne.s32.totalorder %s199, %s202
      %p208 = scmp.eq.s32.totalorder %s16, 0
      %p209 = por %p207, %p208
      %p210 = scmp.ne.s32.totalorder %s199, %s202
      %p211 = scmp.eq.s32.totalorder %s21, 1
      %p212 = por %p210, %p211
      %p213 = scmp.ne.s32.totalorder %s202, %s203
      %p214 = scmp.eq.s32.totalorder %s21, 0
      %p215 = por %p213, %p214
      %p216 = scmp.ne.s32.totalorder %s202, %s203
      %p217 = scmp.eq.s32.totalorder %s22, 1
      %p218 = por %p216, %p217
      %p220 = scmp.ne.s32.totalorder %s203, %s219
      %p221 = scmp.eq.s32.totalorder %s22, 0
      %p222 = por %p220, %p221
      %p223 = scmp.le.s32.totalorder 1, %s16
      %p224 = scmp.lt.s32.totalorder %s16, 3
      %p225 = pnand %p223, %p224
      %p226 = pneg %p225
      // Predicated region
      $region9: #{tpu_custom_call.1} parent=5 // pred_check
        _
      $region10: #{tpu_custom_call.1} parent=5 // pred_check_branch
        %228 = sbr.rel (%p225) target = $region12
      $region11: #{tpu_custom_call.1} parent=5 // pred_region
        %s229 = ssub.s32 %s16, 1
        // Predicated region
        $region13: #{tpu_custom_call.1} parent=11 // pred_check
          %p230 = pneg %p63
        $region14: #{tpu_custom_call.1} parent=11 // pred_check_branch
          %232 = sbr.rel (%p230) target = $region16
        $region15: #{tpu_custom_call.1} parent=11 // pred_region
          _
        $region16: #{tpu_custom_call.1} parent=11 // pred_fallthru
          _
        // Predicated region
        $region17: #{tpu_custom_call.1} parent=11 // pred_check
          %p233 = pneg %p84
        $region18: #{tpu_custom_call.1} parent=11 // pred_check_branch
          %235 = sbr.rel (%p233) target = $region20
        $region19: #{tpu_custom_call.1} parent=11 // pred_region
          %s237 = ssub.s32 4096, 4096
          %238 = vsyncadd [#allocation5], %s237
          %s239 = sshll.u32 [#allocation4], 4
          %s240 = int_to_ptr.vmem [resolvable:$true] %s239
          %245 = dma.hbm_to_vmem [thread:$0]  %s2, 4096, %s240, [#allocation5], 64, 64, 4
        $region20: #{tpu_custom_call.1} parent=11 // pred_fallthru
          _
        // Predicated region
        $region21: #{tpu_custom_call.1} parent=11 // pred_check
          %p246 = pneg %p105
        $region22: #{tpu_custom_call.1} parent=11 // pred_check_branch
          %248 = sbr.rel (%p246) target = $region24
        $region23: #{tpu_custom_call.1} parent=11 // pred_region
          _
        $region24: #{tpu_custom_call.1} parent=11 // pred_fallthru
          _
        // Predicated region
        $region25: #{tpu_custom_call.1} parent=11 // pred_check
          %p249 = pneg %p126
        $region26: #{tpu_custom_call.1} parent=11 // pred_check_branch
          %251 = sbr.rel (%p249) target = $region28
        $region27: #{tpu_custom_call.1} parent=11 // pred_region
          %s253 = ssub.s32 2048, 2048
          %254 = vsyncadd [#allocation7], %s253
          %s255 = sshll.u32 [#allocation6], 4
          %s256 = int_to_ptr.vmem [resolvable:$true] %s255
          %261 = dma.hbm_to_vmem [thread:$0]  %s4, 2048, %s256, [#allocation7], 128, 128, 8
        $region28: #{tpu_custom_call.1} parent=11 // pred_fallthru
          _
        // Predicated region
        $region29: #{tpu_custom_call.1} parent=11 // pred_check
          %p262 = pneg %p147
        $region30: #{tpu_custom_call.1} parent=11 // pred_check_branch
          %264 = sbr.rel (%p262) target = $region32
        $region31: #{tpu_custom_call.1} parent=11 // pred_region
          _
        $region32: #{tpu_custom_call.1} parent=11 // pred_fallthru
          _
        // Predicated region
        $region33: #{tpu_custom_call.1} parent=11 // pred_check
          %p265 = pneg %p168
        $region34: #{tpu_custom_call.1} parent=11 // pred_check_branch
          %267 = sbr.rel (%p265) target = $region36
        $region35: #{tpu_custom_call.1} parent=11 // pred_region
          %s269 = ssub.s32 2048, 2048
          %270 = vsyncadd [#allocation7], %s269
          %s271 = sshll.u32 [#allocation8], 4
          %s272 = int_to_ptr.vmem [resolvable:$true] %s271
          %277 = dma.hbm_to_vmem [thread:$0]  %s6, 2048, %s272, [#allocation7], 128, 128, 8
        $region36: #{tpu_custom_call.1} parent=11 // pred_fallthru
          _
        // Predicated region
        $region37: #{tpu_custom_call.1} parent=11 // pred_check
          %p278 = pneg %p189
        $region38: #{tpu_custom_call.1} parent=11 // pred_check_branch
          %280 = sbr.rel (%p278) target = $region40
        $region39: #{tpu_custom_call.1} parent=11 // pred_region
          _
        $region40: #{tpu_custom_call.1} parent=11 // pred_fallthru
          _
      $region12: #{tpu_custom_call.1} parent=5 // pred_fallthru
        _
      %p281 = scmp.lt.s32.totalorder %s16, 2
      // Predicated region
      $region41: #{tpu_custom_call.1} parent=5 // pred_check
        %p282 = pneg %p281
      $region42: #{tpu_custom_call.1} parent=5 // pred_check_branch
        %284 = sbr.rel (%p282) target = $region44
      $region43: #{tpu_custom_call.1} parent=5 // pred_region
        // Predicated region
        $region45: #{tpu_custom_call.1} parent=43 // pred_check
          %p285 = pneg %p36
        $region46: #{tpu_custom_call.1} parent=43 // pred_check_branch
          %287 = sbr.rel (%p285) target = $region48
        $region47: #{tpu_custom_call.1} parent=43 // pred_region
          %p288 = scmp.lt.s32.totalorder %s16, 1
          %s289 = scalar_select %p288, %s16, 1
          %s290 = smul.addr %s289, 2
          %s291 = smul.addr %s290, 8
          %s292 = scalar_lea.vmem %s0, %s291
        $region48: #{tpu_custom_call.1} parent=43 // pred_fallthru
          _
      $region44: #{tpu_custom_call.1} parent=5 // pred_fallthru
        _
      %p293 = scmp.le.s32.totalorder 1, %s16
      %p294 = scmp.lt.s32.totalorder %s16, 3
      %p295 = pnand %p293, %p294
      %p296 = pneg %p295
      // Predicated region
      $region49: #{tpu_custom_call.1} parent=5 // pred_check
        _
      $region50: #{tpu_custom_call.1} parent=5 // pred_check_branch
        %298 = sbr.rel (%p295) target = $region52
      $region51: #{tpu_custom_call.1} parent=5 // pred_region
        %s299 = ssub.s32 %s16, 1
        // Predicated region
        $region53: #{tpu_custom_call.1} parent=51 // pred_check
          %p300 = pneg %p84
        $region54: #{tpu_custom_call.1} parent=51 // pred_check_branch
          %302 = sbr.rel (%p300) target = $region56
        $region55: #{tpu_custom_call.1} parent=51 // pred_region
          %303 = dma.done [#allocation5], 4096
        $region56: #{tpu_custom_call.1} parent=51 // pred_fallthru
          _
        // Predicated region
        $region57: #{tpu_custom_call.1} parent=51 // pred_check
          %p304 = pneg %p126
        $region58: #{tpu_custom_call.1} parent=51 // pred_check_branch
          %306 = sbr.rel (%p304) target = $region60
        $region59: #{tpu_custom_call.1} parent=51 // pred_region
          %307 = dma.done [#allocation7], 2048
        $region60: #{tpu_custom_call.1} parent=51 // pred_fallthru
          _
        // Predicated region
        $region61: #{tpu_custom_call.1} parent=51 // pred_check
          %p308 = pneg %p168
        $region62: #{tpu_custom_call.1} parent=51 // pred_check_branch
          %310 = sbr.rel (%p308) target = $region64
        $region63: #{tpu_custom_call.1} parent=51 // pred_region
          %311 = dma.done [#allocation7], 2048
        $region64: #{tpu_custom_call.1} parent=51 // pred_fallthru
          _
        %p312 = scmp.lt.s32.totalorder %s21, 1
        %s313 = scalar_select %p312, %s21, 1
        %s314 = smul.addr %s313, 2
        %s315 = smul.addr %s314, 8
        %s316 = scalar_lea.vmem %s0, %s315
        %p317 = pneg %p42
        %p318 = pneg %p39
        %p319 = pneg %p63
        %p320 = pneg %p60
        %p321 = pneg %p84
        %p322 = pneg %p81
        %p323 = pneg %p105
        %p324 = pneg %p102
        %p325 = pneg %p126
        %p326 = pneg %p123
        %p327 = pneg %p147
        %p328 = pneg %p144
        %p329 = pneg %p168
        %p330 = pneg %p165
        %p331 = pneg %p189
        %p332 = pneg %p186
        %p333 = pneg %p215
        %p334 = pneg %p212
        %p335 = scmp.lt.s32.totalorder %s21, 1
        %s336 = scalar_select %p335, %s21, 1
        %s337 = smul.addr %s336, 2
        %s338 = smul.addr %s337, 8
        %s339 = scalar_lea.vmem %s8, %s338
        %p340 = scmp.lt.s32.totalorder %s21, 1
        %s341 = scalar_select %p340, %s21, 1
        %s342 = smul.addr %s341, 2
        %s343 = smul.addr %s342, 8
        %s344 = scalar_lea.vmem %s0, %s343
        %p345 = scmp.lt.s32.totalorder %s21, 1
        %s346 = scalar_select %p345, %s21, 1
        %s347 = smul.addr %s346, 2
        %s348 = smul.addr %s347, 8
        %s349 = scalar_lea.vmem %s8, %s348
        %351 = vst [vmem:[#allocation2] sm:$0xff] 0.0
        %352 = vst [vmem:[#allocation2 + $0x8] sm:$0xff] 0.0
        %353 = vst [vmem:[#allocation2 + $0x10] sm:$0xf] 0.0
        %v354 = vld [vmem:[%s344] sm:$0xff]
        %v355 = vld [vmem:[%s344 + $0x8] sm:$0xff]
        %vm356 = vcmask 64512
        %357 = vst.msk [vmem:[#allocation2 + $0x2] sm:$0xff] %vm356, %v354
        %358 = vst.msk [vmem:[#allocation2 + $0xa] sm:$0xff] %vm356, %v355
        %s359 = scalar_lea.vmem %s1, 24
        %v360 = vld [vmem:[%s359] sm:$0x1f]
        %v361 = vld [vmem:[#allocation2] sm:$0xff]
        %v362 = vld [vmem:[#allocation2 + $0x8] sm:$0xff]
        %v363 = vlaneseq
        %v364 = vshrl.u32 %v363, 7
        %v365 = vsub.s32 0, %v364
        %v366 = vrot.slane %v360, %v365
        %v367 = vmul.f32 %v361, %v366
        %v368 = vmul.f32 %v362, %v366
        %v369 = vld [vmem:[#allocation2 + $0x1] sm:$0xff]
        %v370 = vld [vmem:[#allocation2 + $0x9] sm:$0xff]
        %v371 = vlaneseq
        %v372 = vshrl.u32 %v371, 7
        %v373 = vsub.s32 1, %v372
        %v374 = vrot.slane %v360, %v373
        %v375 = vmul.f32 %v369, %v374
        %v376 = vmul.f32 %v370, %v374
        %v377 = vadd.f32 %v367, %v375
        %v378 = vadd.f32 %v368, %v376
        %v379 = vld [vmem:[#allocation2 + $0x2] sm:$0xff]
        %v380 = vld [vmem:[#allocation2 + $0xa] sm:$0xff]
        %v381 = vlaneseq
        %v382 = vshrl.u32 %v381, 7
        %v383 = vsub.s32 2, %v382
        %v384 = vrot.slane %v360, %v383
        %v385 = vmul.f32 %v379, %v384
        %v386 = vmul.f32 %v380, %v384
        %v387 = vadd.f32 %v377, %v385
        %v388 = vadd.f32 %v378, %v386
        %v389 = vld [vmem:[#allocation2 + $0x3] sm:$0xff]
        %v390 = vld [vmem:[#allocation2 + $0xb] sm:$0xff]
        %v391 = vlaneseq
        %v392 = vshrl.u32 %v391, 7
        %v393 = vsub.s32 3, %v392
        %v394 = vrot.slane %v360, %v393
        %v395 = vmul.f32 %v389, %v394
        %v396 = vmul.f32 %v390, %v394
        %v397 = vadd.f32 %v387, %v395
        %v398 = vadd.f32 %v388, %v396
        %v399 = vld [vmem:[#allocation2 + $0x4] sm:$0xff]
        %v400 = vld [vmem:[#allocation2 + $0xc] sm:$0xff]
        %v401 = vlaneseq
        %v402 = vshrl.u32 %v401, 7
        %v403 = vsub.s32 4, %v402
        %v404 = vrot.slane %v360, %v403
        %v405 = vmul.f32 %v399, %v404
        %v406 = vmul.f32 %v400, %v404
        %v407 = vadd.f32 %v397, %v405
        %v408 = vadd.f32 %v398, %v406
        %s409 = scalar_lea.vmem [#allocation4], 192
        %v410 = vld [vmem:[%s409] sm:$0xf]
        %v411 = vld [vmem:[%s409 + $0x4] sm:$0xf]
        %v412 = vld [vmem:[%s409 + $0x8] sm:$0xf]
        %v413 = vld [vmem:[%s409 + $0xc] sm:$0xf]
        %v414 = vld [vmem:[%s409 + $0x10] sm:$0xf]
        %v415 = vld [vmem:[%s409 + $0x14] sm:$0xf]
        %v416 = vld [vmem:[%s409 + $0x18] sm:$0xf]
        %v417 = vld [vmem:[%s409 + $0x1c] sm:$0xf]
        %v418 = vld [vmem:[%s409 + $0x20] sm:$0xf]
        %v419 = vld [vmem:[%s409 + $0x24] sm:$0xf]
        %v420 = vld [vmem:[%s409 + $0x28] sm:$0xf]
        %v421 = vld [vmem:[%s409 + $0x2c] sm:$0xf]
        %v422 = vld [vmem:[%s409 + $0x30] sm:$0xf]
        %v423 = vld [vmem:[%s409 + $0x34] sm:$0xf]
        %v424 = vld [vmem:[%s409 + $0x38] sm:$0xf]
        %v425 = vld [vmem:[%s409 + $0x3c] sm:$0xf]
        %s426 = scalar_lea.vmem %s3, 3
        %v427 = vld [vmem:[%s426] sm:$0x1]
        %v428 = vpack.c.bf16 %v408, %v407
        %v430 = vlaneseq
        %v431 = vshrl.u32 %v430, 7
        %v432 = vsub.s32 0, %v431
        %v433 = vrot.slane %v427, %v432
        %v451 = vunpack.c.l.b16 %v410
        %v452 = vunpack.c.l.b16 %v411
        %v453 = vunpack.c.l.b16 %v412
        %v454 = vunpack.c.l.b16 %v413
        %v455 = vunpack.c.l.b16 %v414
        %v456 = vunpack.c.l.b16 %v415
        %v457 = vunpack.c.l.b16 %v416
        %v458 = vunpack.c.l.b16 %v417
        %v459 = vunpack.c.l.b16 %v418
        %v460 = vunpack.c.l.b16 %v419
        %v461 = vunpack.c.l.b16 %v420
        %v462 = vunpack.c.l.b16 %v421
        %v463 = vunpack.c.l.b16 %v422
        %v464 = vunpack.c.l.b16 %v423
        %v465 = vunpack.c.l.b16 %v424
        %v466 = vunpack.c.l.b16 %v425
        %v467 = vpack.c.b16 %v452, %v451
        %v468 = vpack.c.b16 %v454, %v453
        %v469 = vpack.c.b16 %v456, %v455
        %v470 = vpack.c.b16 %v458, %v457
        %v471 = vpack.c.b16 %v460, %v459
        %v472 = vpack.c.b16 %v462, %v461
        %v473 = vpack.c.b16 %v464, %v463
        %v474 = vpack.c.b16 %v466, %v465
        %483 = vmatprep.subr.bf16.mxu0 0
        %484 = vmatpush1.bf16.msra.mxu0 %v474
        %485 = vmatprep.subr.bf16.mxu0 0
        %486 = vmatpush1.bf16.msra.mxu0 %v473
        %487 = vmatprep.subr.bf16.mxu0 0
        %488 = vmatpush1.bf16.msra.mxu0 %v472
        %489 = vmatprep.subr.bf16.mxu0 0
        %490 = vmatpush1.bf16.msra.mxu0 %v471
        %491 = vmatprep.subr.bf16.mxu0 0
        %492 = vmatpush1.bf16.msra.mxu0 %v470
        %493 = vmatprep.subr.bf16.mxu0 0
        %494 = vmatpush1.bf16.msra.mxu0 %v469
        %495 = vmatprep.subr.bf16.mxu0 0
        %496 = vmatpush1.bf16.msra.mxu0 %v468
        %497 = vmatprep.subr.bf16.mxu0 0
        %498 = vmatpush1.bf16.msra.mxu0 %v467
        %499 = vmatprep.subr.bf16.mxu0 0
        %500 = vmatpush2.bf16.msra.mxu0 0
        %501 = vmatprep.subr.bf16.mxu0 0
        %502 = vmatpush2.bf16.msra.mxu0 0
        %503 = vmatprep.subr.bf16.mxu0 0
        %504 = vmatpush2.bf16.msra.mxu0 0
        %505 = vmatprep.subr.bf16.mxu0 0
        %506 = vmatpush2.bf16.msra.mxu0 0
        %507 = vmatprep.subr.bf16.mxu0 0
        %508 = vmatpush2.bf16.msra.mxu0 0
        %509 = vmatprep.subr.bf16.mxu0 0
        %510 = vmatpush2.bf16.msra.mxu0 0
        %511 = vmatprep.subr.bf16.mxu0 0
        %512 = vmatpush2.bf16.msra.mxu0 0
        %513 = vmatprep.subr.bf16.mxu0 0
        %514 = vmatpush2.bf16.msra.mxu0 0
        %515 = vmatprep.mubr.bf16.mxu0 0
        %516 = vmatmul.mubr.bf16.gmra.mxu0 %v428
        %v517 = vpop.f32.mrf.mxu0
        %v518 = vadd.f32 %v433, %v517
        %v519 = vpop.f32.mrf.mxu0
        %v520 = vpop.f32.mrf.mxu0
        %v521 = vadd.f32 %v433, %v520
        %v522 = vpop.f32.mrf.mxu0
        %523 = vdwg.mxu0
        %524 = vst [vmem:[#allocation3] sm:$0xff] %v518
        %525 = vst [vmem:[#allocation3 + $0x8] sm:$0xff] %v521
        %v526 = vld [vmem:[%s1] sm:$0x1f]
        %v527 = vld [vmem:[#allocation2] sm:$0xff]
        %v528 = vld [vmem:[#allocation2 + $0x8] sm:$0xff]
        %v529 = vlaneseq
        %v530 = vshrl.u32 %v529, 7
        %v531 = vsub.s32 0, %v530
        %v532 = vrot.slane %v526, %v531
        %v533 = vmul.f32 %v527, %v532
        %v534 = vmul.f32 %v528, %v532
        %v535 = vld [vmem:[#allocation2 + $0x1] sm:$0xff]
        %v536 = vld [vmem:[#allocation2 + $0x9] sm:$0xff]
        %v537 = vlaneseq
        %v538 = vshrl.u32 %v537, 7
        %v539 = vsub.s32 1, %v538
        %v540 = vrot.slane %v526, %v539
        %v541 = vmul.f32 %v535, %v540
        %v542 = vmul.f32 %v536, %v540
        %v543 = vadd.f32 %v533, %v541
        %v544 = vadd.f32 %v534, %v542
        %v545 = vld [vmem:[#allocation2 + $0x2] sm:$0xff]
        %v546 = vld [vmem:[#allocation2 + $0xa] sm:$0xff]
        %v547 = vlaneseq
        %v548 = vshrl.u32 %v547, 7
        %v549 = vsub.s32 2, %v548
        %v550 = vrot.slane %v526, %v549
        %v551 = vmul.f32 %v545, %v550
        %v552 = vmul.f32 %v546, %v550
        %v553 = vadd.f32 %v543, %v551
        %v554 = vadd.f32 %v544, %v552
        %v555 = vld [vmem:[#allocation2 + $0x3] sm:$0xff]
        %v556 = vld [vmem:[#allocation2 + $0xb] sm:$0xff]
        %v557 = vlaneseq
        %v558 = vshrl.u32 %v557, 7
        %v559 = vsub.s32 3, %v558
        %v560 = vrot.slane %v526, %v559
        %v561 = vmul.f32 %v555, %v560
        %v562 = vmul.f32 %v556, %v560
        %v563 = vadd.f32 %v553, %v561
        %v564 = vadd.f32 %v554, %v562
        %v565 = vld [vmem:[#allocation2 + $0x4] sm:$0xff]
        %v566 = vld [vmem:[#allocation2 + $0xc] sm:$0xff]
        %v567 = vlaneseq
        %v568 = vshrl.u32 %v567, 7
        %v569 = vsub.s32 4, %v568
        %v570 = vrot.slane %v526, %v569
        %v571 = vmul.f32 %v565, %v570
        %v572 = vmul.f32 %v566, %v570
        %v573 = vadd.f32 %v563, %v571
        %v574 = vadd.f32 %v564, %v572
        %v575 = vld [vmem:[#allocation4] sm:$0xf]
        %v576 = vld [vmem:[#allocation4 + $0x4] sm:$0xf]
        %v577 = vld [vmem:[#allocation4 + $0x8] sm:$0xf]
        %v578 = vld [vmem:[#allocation4 + $0xc] sm:$0xf]
        %v579 = vld [vmem:[#allocation4 + $0x10] sm:$0xf]
        %v580 = vld [vmem:[#allocation4 + $0x14] sm:$0xf]
        %v581 = vld [vmem:[#allocation4 + $0x18] sm:$0xf]
        %v582 = vld [vmem:[#allocation4 + $0x1c] sm:$0xf]
        %v583 = vld [vmem:[#allocation4 + $0x20] sm:$0xf]
        %v584 = vld [vmem:[#allocation4 + $0x24] sm:$0xf]
        %v585 = vld [vmem:[#allocation4 + $0x28] sm:$0xf]
        %v586 = vld [vmem:[#allocation4 + $0x2c] sm:$0xf]
        %v587 = vld [vmem:[#allocation4 + $0x30] sm:$0xf]
        %v588 = vld [vmem:[#allocation4 + $0x34] sm:$0xf]
        %v589 = vld [vmem:[#allocation4 + $0x38] sm:$0xf]
        %v590 = vld [vmem:[#allocation4 + $0x3c] sm:$0xf]
        %v591 = vld [vmem:[%s3] sm:$0x1]
        %v592 = vpack.c.bf16 %v574, %v573
        %v594 = vlaneseq
        %v595 = vshrl.u32 %v594, 7
        %v596 = vsub.s32 0, %v595
        %v597 = vrot.slane %v591, %v596
        %v615 = vunpack.c.l.b16 %v575
        %v616 = vunpack.c.l.b16 %v576
        %v617 = vunpack.c.l.b16 %v577
        %v618 = vunpack.c.l.b16 %v578
        %v619 = vunpack.c.l.b16 %v579
        %v620 = vunpack.c.l.b16 %v580
        %v621 = vunpack.c.l.b16 %v581
        %v622 = vunpack.c.l.b16 %v582
        %v623 = vunpack.c.l.b16 %v583
        %v624 = vunpack.c.l.b16 %v584
        %v625 = vunpack.c.l.b16 %v585
        %v626 = vunpack.c.l.b16 %v586
        %v627 = vunpack.c.l.b16 %v587
        %v628 = vunpack.c.l.b16 %v588
        %v629 = vunpack.c.l.b16 %v589
        %v630 = vunpack.c.l.b16 %v590
        %v631 = vpack.c.b16 %v616, %v615
        %v632 = vpack.c.b16 %v618, %v617
        %v633 = vpack.c.b16 %v620, %v619
        %v634 = vpack.c.b16 %v622, %v621
        %v635 = vpack.c.b16 %v624, %v623
        %v636 = vpack.c.b16 %v626, %v625
        %v637 = vpack.c.b16 %v628, %v627
        %v638 = vpack.c.b16 %v630, %v629
        %647 = vmatprep.subr.bf16.mxu0 0
        %648 = vmatpush1.bf16.msra.mxu0 %v638
        %649 = vmatprep.subr.bf16.mxu0 0
        %650 = vmatpush1.bf16.msra.mxu0 %v637
        %651 = vmatprep.subr.bf16.mxu0 0
        %652 = vmatpush1.bf16.msra.mxu0 %v636
        %653 = vmatprep.subr.bf16.mxu0 0
        %654 = vmatpush1.bf16.msra.mxu0 %v635
        %655 = vmatprep.subr.bf16.mxu0 0
        %656 = vmatpush1.bf16.msra.mxu0 %v634
        %657 = vmatprep.subr.bf16.mxu0 0
        %658 = vmatpush1.bf16.msra.mxu0 %v633
        %659 = vmatprep.subr.bf16.mxu0 0
        %660 = vmatpush1.bf16.msra.mxu0 %v632
        %661 = vmatprep.subr.bf16.mxu0 0
        %662 = vmatpush1.bf16.msra.mxu0 %v631
        %663 = vmatprep.subr.bf16.mxu0 0
        %664 = vmatpush2.bf16.msra.mxu0 0
        %665 = vmatprep.subr.bf16.mxu0 0
        %666 = vmatpush2.bf16.msra.mxu0 0
        %667 = vmatprep.subr.bf16.mxu0 0
        %668 = vmatpush2.bf16.msra.mxu0 0
        %669 = vmatprep.subr.bf16.mxu0 0
        %670 = vmatpush2.bf16.msra.mxu0 0
        %671 = vmatprep.subr.bf16.mxu0 0
        %672 = vmatpush2.bf16.msra.mxu0 0
        %673 = vmatprep.subr.bf16.mxu0 0
        %674 = vmatpush2.bf16.msra.mxu0 0
        %675 = vmatprep.subr.bf16.mxu0 0
        %676 = vmatpush2.bf16.msra.mxu0 0
        %677 = vmatprep.subr.bf16.mxu0 0
        %678 = vmatpush2.bf16.msra.mxu0 0
        %679 = vmatprep.mubr.bf16.mxu0 0
        %680 = vmatmul.mubr.bf16.gmra.mxu0 %v592
        %v681 = vpop.f32.mrf.mxu0
        %v682 = vadd.f32 %v597, %v681
        %v683 = vpop.f32.mrf.mxu0
        %v684 = vpop.f32.mrf.mxu0
        %v685 = vadd.f32 %v597, %v684
        %v686 = vpop.f32.mrf.mxu0
        %687 = vdwg.mxu0
        %v688 = vxor.u32 %v682, 2147483648
        %v689 = vxor.u32 %v685, 2147483648
        %v690 = vmul.f32 %v688, 1.442695
        %v691 = vpow.pop %v690
        %v692 = vmul.f32 %v689, 1.442695
        %v693 = vpow.pop %v692
        %v694 = vadd.f32 %v691, 1.0
        %v695 = vadd.f32 %v693, 1.0
        %v696 = vrcp.pop %v694
        %v697 = vmul.f32 1.0, %v696
        %v698 = vrcp.pop %v695
        %v699 = vmul.f32 1.0, %v698
        %v700 = vmul.f32 %v682, %v697
        %v701 = vmul.f32 %v685, %v699
        %702 = vst [vmem:[#allocation2 + $0x2] sm:$0xff] %v700
        %703 = vst [vmem:[#allocation2 + $0xa] sm:$0xff] %v701
        %s704 = scalar_lea.vmem %s1, 8
        %v705 = vld [vmem:[%s704] sm:$0x1f]
        %v706 = vld [vmem:[#allocation2] sm:$0xff]
        %v707 = vld [vmem:[#allocation2 + $0x8] sm:$0xff]
        %v708 = vlaneseq
        %v709 = vshrl.u32 %v708, 7
        %v710 = vsub.s32 0, %v709
        %v711 = vrot.slane %v705, %v710
        %v712 = vmul.f32 %v706, %v711
        %v713 = vmul.f32 %v707, %v711
        %v714 = vld [vmem:[#allocation2 + $0x1] sm:$0xff]
        %v715 = vld [vmem:[#allocation2 + $0x9] sm:$0xff]
        %v716 = vlaneseq
        %v717 = vshrl.u32 %v716, 7
        %v718 = vsub.s32 1, %v717
        %v719 = vrot.slane %v705, %v718
        %v720 = vmul.f32 %v714, %v719
        %v721 = vmul.f32 %v715, %v719
        %v722 = vadd.f32 %v712, %v720
        %v723 = vadd.f32 %v713, %v721
        %v724 = vld [vmem:[#allocation2 + $0x2] sm:$0xff]
        %v725 = vld [vmem:[#allocation2 + $0xa] sm:$0xff]
        %v726 = vlaneseq
        %v727 = vshrl.u32 %v726, 7
        %v728 = vsub.s32 2, %v727
        %v729 = vrot.slane %v705, %v728
        %v730 = vmul.f32 %v724, %v729
        %v731 = vmul.f32 %v725, %v729
        %v732 = vadd.f32 %v722, %v730
        %v733 = vadd.f32 %v723, %v731
        %v734 = vld [vmem:[#allocation2 + $0x3] sm:$0xff]
        %v735 = vld [vmem:[#allocation2 + $0xb] sm:$0xff]
        %v736 = vlaneseq
        %v737 = vshrl.u32 %v736, 7
        %v738 = vsub.s32 3, %v737
        %v739 = vrot.slane %v705, %v738
        %v740 = vmul.f32 %v734, %v739
        %v741 = vmul.f32 %v735, %v739
        %v742 = vadd.f32 %v732, %v740
        %v743 = vadd.f32 %v733, %v741
        %v744 = vld [vmem:[#allocation2 + $0x4] sm:$0xff]
        %v745 = vld [vmem:[#allocation2 + $0xc] sm:$0xff]
        %v746 = vlaneseq
        %v747 = vshrl.u32 %v746, 7
        %v748 = vsub.s32 4, %v747
        %v749 = vrot.slane %v705, %v748
        %v750 = vmul.f32 %v744, %v749
        %v751 = vmul.f32 %v745, %v749
        %v752 = vadd.f32 %v742, %v750
        %v753 = vadd.f32 %v743, %v751
        %s754 = scalar_lea.vmem [#allocation4], 64
        %v755 = vld [vmem:[%s754] sm:$0xf]
        %v756 = vld [vmem:[%s754 + $0x4] sm:$0xf]
        %v757 = vld [vmem:[%s754 + $0x8] sm:$0xf]
        %v758 = vld [vmem:[%s754 + $0xc] sm:$0xf]
        %v759 = vld [vmem:[%s754 + $0x10] sm:$0xf]
        %v760 = vld [vmem:[%s754 + $0x14] sm:$0xf]
        %v761 = vld [vmem:[%s754 + $0x18] sm:$0xf]
        %v762 = vld [vmem:[%s754 + $0x1c] sm:$0xf]
        %v763 = vld [vmem:[%s754 + $0x20] sm:$0xf]
        %v764 = vld [vmem:[%s754 + $0x24] sm:$0xf]
        %v765 = vld [vmem:[%s754 + $0x28] sm:$0xf]
        %v766 = vld [vmem:[%s754 + $0x2c] sm:$0xf]
        %v767 = vld [vmem:[%s754 + $0x30] sm:$0xf]
        %v768 = vld [vmem:[%s754 + $0x34] sm:$0xf]
        %v769 = vld [vmem:[%s754 + $0x38] sm:$0xf]
        %v770 = vld [vmem:[%s754 + $0x3c] sm:$0xf]
        %s771 = scalar_lea.vmem %s3, 1
        %v772 = vld [vmem:[%s771] sm:$0x1]
        %v773 = vpack.c.bf16 %v753, %v752
        %v775 = vlaneseq
        %v776 = vshrl.u32 %v775, 7
        %v777 = vsub.s32 0, %v776
        %v778 = vrot.slane %v772, %v777
        %v796 = vunpack.c.l.b16 %v755
        %v797 = vunpack.c.l.b16 %v756
        %v798 = vunpack.c.l.b16 %v757
        %v799 = vunpack.c.l.b16 %v758
        %v800 = vunpack.c.l.b16 %v759
        %v801 = vunpack.c.l.b16 %v760
        %v802 = vunpack.c.l.b16 %v761
        %v803 = vunpack.c.l.b16 %v762
        %v804 = vunpack.c.l.b16 %v763
        %v805 = vunpack.c.l.b16 %v764
        %v806 = vunpack.c.l.b16 %v765
        %v807 = vunpack.c.l.b16 %v766
        %v808 = vunpack.c.l.b16 %v767
        %v809 = vunpack.c.l.b16 %v768
        %v810 = vunpack.c.l.b16 %v769
        %v811 = vunpack.c.l.b16 %v770
        %v812 = vpack.c.b16 %v797, %v796
        %v813 = vpack.c.b16 %v799, %v798
        %v814 = vpack.c.b16 %v801, %v800
        %v815 = vpack.c.b16 %v803, %v802
        %v816 = vpack.c.b16 %v805, %v804
        %v817 = vpack.c.b16 %v807, %v806
        %v818 = vpack.c.b16 %v809, %v808
        %v819 = vpack.c.b16 %v811, %v810
        %828 = vmatprep.subr.bf16.mxu0 0
        %829 = vmatpush1.bf16.msra.mxu0 %v819
        %830 = vmatprep.subr.bf16.mxu0 0
        %831 = vmatpush1.bf16.msra.mxu0 %v818
        %832 = vmatprep.subr.bf16.mxu0 0
        %833 = vmatpush1.bf16.msra.mxu0 %v817
        %834 = vmatprep.subr.bf16.mxu0 0
        %835 = vmatpush1.bf16.msra.mxu0 %v816
        %836 = vmatprep.subr.bf16.mxu0 0
        %837 = vmatpush1.bf16.msra.mxu0 %v815
        %838 = vmatprep.subr.bf16.mxu0 0
        %839 = vmatpush1.bf16.msra.mxu0 %v814
        %840 = vmatprep.subr.bf16.mxu0 0
        %841 = vmatpush1.bf16.msra.mxu0 %v813
        %842 = vmatprep.subr.bf16.mxu0 0
        %843 = vmatpush1.bf16.msra.mxu0 %v812
        %844 = vmatprep.subr.bf16.mxu0 0
        %845 = vmatpush2.bf16.msra.mxu0 0
        %846 = vmatprep.subr.bf16.mxu0 0
        %847 = vmatpush2.bf16.msra.mxu0 0
        %848 = vmatprep.subr.bf16.mxu0 0
        %849 = vmatpush2.bf16.msra.mxu0 0
        %850 = vmatprep.subr.bf16.mxu0 0
        %851 = vmatpush2.bf16.msra.mxu0 0
        %852 = vmatprep.subr.bf16.mxu0 0
        %853 = vmatpush2.bf16.msra.mxu0 0
        %854 = vmatprep.subr.bf16.mxu0 0
        %855 = vmatpush2.bf16.msra.mxu0 0
        %856 = vmatprep.subr.bf16.mxu0 0
        %857 = vmatpush2.bf16.msra.mxu0 0
        %858 = vmatprep.subr.bf16.mxu0 0
        %859 = vmatpush2.bf16.msra.mxu0 0
        %860 = vmatprep.mubr.bf16.mxu0 0
        %861 = vmatmul.mubr.bf16.gmra.mxu0 %v773
        %v862 = vpop.f32.mrf.mxu0
        %v863 = vadd.f32 %v778, %v862
        %v864 = vpop.f32.mrf.mxu0
        %v865 = vpop.f32.mrf.mxu0
        %v866 = vadd.f32 %v778, %v865
        %v867 = vpop.f32.mrf.mxu0
        %868 = vdwg.mxu0
        %v869 = vxor.u32 %v863, 2147483648
        %v870 = vxor.u32 %v866, 2147483648
        %v871 = vmul.f32 %v869, 1.442695
        %v872 = vpow.pop %v871
        %v873 = vmul.f32 %v870, 1.442695
        %v874 = vpow.pop %v873
        %v875 = vadd.f32 %v872, 1.0
        %v876 = vadd.f32 %v874, 1.0
        %v877 = vrcp.pop %v875
        %v878 = vmul.f32 1.0, %v877
        %v879 = vrcp.pop %v876
        %v880 = vmul.f32 1.0, %v879
        %v881 = vmul.f32 %v863, %v878
        %v882 = vmul.f32 %v866, %v880
        %883 = vst [vmem:[#allocation2 + $0x2] sm:$0xff] %v881
        %884 = vst [vmem:[#allocation2 + $0xa] sm:$0xff] %v882
        %s885 = scalar_lea.vmem %s1, 16
        %v886 = vld [vmem:[%s885] sm:$0x1f]
        %v887 = vld [vmem:[#allocation2] sm:$0xff]
        %v888 = vld [vmem:[#allocation2 + $0x8] sm:$0xff]
        %v889 = vlaneseq
        %v890 = vshrl.u32 %v889, 7
        %v891 = vsub.s32 0, %v890
        %v892 = vrot.slane %v886, %v891
        %v893 = vmul.f32 %v887, %v892
        %v894 = vmul.f32 %v888, %v892
        %v895 = vld [vmem:[#allocation2 + $0x1] sm:$0xff]
        %v896 = vld [vmem:[#allocation2 + $0x9] sm:$0xff]
        %v897 = vlaneseq
        %v898 = vshrl.u32 %v897, 7
        %v899 = vsub.s32 1, %v898
        %v900 = vrot.slane %v886, %v899
        %v901 = vmul.f32 %v895, %v900
        %v902 = vmul.f32 %v896, %v900
        %v903 = vadd.f32 %v893, %v901
        %v904 = vadd.f32 %v894, %v902
        %v905 = vld [vmem:[#allocation2 + $0x2] sm:$0xff]
        %v906 = vld [vmem:[#allocation2 + $0xa] sm:$0xff]
        %v907 = vlaneseq
        %v908 = vshrl.u32 %v907, 7
        %v909 = vsub.s32 2, %v908
        %v910 = vrot.slane %v886, %v909
        %v911 = vmul.f32 %v905, %v910
        %v912 = vmul.f32 %v906, %v910
        %v913 = vadd.f32 %v903, %v911
        %v914 = vadd.f32 %v904, %v912
        %v915 = vld [vmem:[#allocation2 + $0x3] sm:$0xff]
        %v916 = vld [vmem:[#allocation2 + $0xb] sm:$0xff]
        %v917 = vlaneseq
        %v918 = vshrl.u32 %v917, 7
        %v919 = vsub.s32 3, %v918
        %v920 = vrot.slane %v886, %v919
        %v921 = vmul.f32 %v915, %v920
        %v922 = vmul.f32 %v916, %v920
        %v923 = vadd.f32 %v913, %v921
        %v924 = vadd.f32 %v914, %v922
        %v925 = vld [vmem:[#allocation2 + $0x4] sm:$0xff]
        %v926 = vld [vmem:[#allocation2 + $0xc] sm:$0xff]
        %v927 = vlaneseq
        %v928 = vshrl.u32 %v927, 7
        %v929 = vsub.s32 4, %v928
        %v930 = vrot.slane %v886, %v929
        %v931 = vmul.f32 %v925, %v930
        %v932 = vmul.f32 %v926, %v930
        %v933 = vadd.f32 %v923, %v931
        %v934 = vadd.f32 %v924, %v932
        %s935 = scalar_lea.vmem [#allocation4], 128
        %v936 = vld [vmem:[%s935] sm:$0xf]
        %v937 = vld [vmem:[%s935 + $0x4] sm:$0xf]
        %v938 = vld [vmem:[%s935 + $0x8] sm:$0xf]
        %v939 = vld [vmem:[%s935 + $0xc] sm:$0xf]
        %v940 = vld [vmem:[%s935 + $0x10] sm:$0xf]
        %v941 = vld [vmem:[%s935 + $0x14] sm:$0xf]
        %v942 = vld [vmem:[%s935 + $0x18] sm:$0xf]
        %v943 = vld [vmem:[%s935 + $0x1c] sm:$0xf]
        %v944 = vld [vmem:[%s935 + $0x20] sm:$0xf]
        %v945 = vld [vmem:[%s935 + $0x24] sm:$0xf]
        %v946 = vld [vmem:[%s935 + $0x28] sm:$0xf]
        %v947 = vld [vmem:[%s935 + $0x2c] sm:$0xf]
        %v948 = vld [vmem:[%s935 + $0x30] sm:$0xf]
        %v949 = vld [vmem:[%s935 + $0x34] sm:$0xf]
        %v950 = vld [vmem:[%s935 + $0x38] sm:$0xf]
        %v951 = vld [vmem:[%s935 + $0x3c] sm:$0xf]
        %s952 = scalar_lea.vmem %s3, 2
        %v953 = vld [vmem:[%s952] sm:$0x1]
        %v954 = vpack.c.bf16 %v934, %v933
        %v956 = vlaneseq
        %v957 = vshrl.u32 %v956, 7
        %v958 = vsub.s32 0, %v957
        %v959 = vrot.slane %v953, %v958
        %v977 = vunpack.c.l.b16 %v936
        %v978 = vunpack.c.l.b16 %v937
        %v979 = vunpack.c.l.b16 %v938
        %v980 = vunpack.c.l.b16 %v939
        %v981 = vunpack.c.l.b16 %v940
        %v982 = vunpack.c.l.b16 %v941
        %v983 = vunpack.c.l.b16 %v942
        %v984 = vunpack.c.l.b16 %v943
        %v985 = vunpack.c.l.b16 %v944
        %v986 = vunpack.c.l.b16 %v945
        %v987 = vunpack.c.l.b16 %v946
        %v988 = vunpack.c.l.b16 %v947
        %v989 = vunpack.c.l.b16 %v948
        %v990 = vunpack.c.l.b16 %v949
        %v991 = vunpack.c.l.b16 %v950
        %v992 = vunpack.c.l.b16 %v951
        %v993 = vpack.c.b16 %v978, %v977
        %v994 = vpack.c.b16 %v980, %v979
        %v995 = vpack.c.b16 %v982, %v981
        %v996 = vpack.c.b16 %v984, %v983
        %v997 = vpack.c.b16 %v986, %v985
        %v998 = vpack.c.b16 %v988, %v987
        %v999 = vpack.c.b16 %v990, %v989
        %v1000 = vpack.c.b16 %v992, %v991
        %1009 = vmatprep.subr.bf16.mxu0 0
        %1010 = vmatpush1.bf16.msra.mxu0 %v1000
        %1011 = vmatprep.subr.bf16.mxu0 0
        %1012 = vmatpush1.bf16.msra.mxu0 %v999
        %1013 = vmatprep.subr.bf16.mxu0 0
        %1014 = vmatpush1.bf16.msra.mxu0 %v998
        %1015 = vmatprep.subr.bf16.mxu0 0
        %1016 = vmatpush1.bf16.msra.mxu0 %v997
        %1017 = vmatprep.subr.bf16.mxu0 0
        %1018 = vmatpush1.bf16.msra.mxu0 %v996
        %1019 = vmatprep.subr.bf16.mxu0 0
        %1020 = vmatpush1.bf16.msra.mxu0 %v995
        %1021 = vmatprep.subr.bf16.mxu0 0
        %1022 = vmatpush1.bf16.msra.mxu0 %v994
        %1023 = vmatprep.subr.bf16.mxu0 0
        %1024 = vmatpush1.bf16.msra.mxu0 %v993
        %1025 = vmatprep.subr.bf16.mxu0 0
        %1026 = vmatpush2.bf16.msra.mxu0 0
        %1027 = vmatprep.subr.bf16.mxu0 0
        %1028 = vmatpush2.bf16.msra.mxu0 0
        %1029 = vmatprep.subr.bf16.mxu0 0
        %1030 = vmatpush2.bf16.msra.mxu0 0
        %1031 = vmatprep.subr.bf16.mxu0 0
        %1032 = vmatpush2.bf16.msra.mxu0 0
        %1033 = vmatprep.subr.bf16.mxu0 0
        %1034 = vmatpush2.bf16.msra.mxu0 0
        %1035 = vmatprep.subr.bf16.mxu0 0
        %1036 = vmatpush2.bf16.msra.mxu0 0
        %1037 = vmatprep.subr.bf16.mxu0 0
        %1038 = vmatpush2.bf16.msra.mxu0 0
        %1039 = vmatprep.subr.bf16.mxu0 0
        %1040 = vmatpush2.bf16.msra.mxu0 0
        %1041 = vmatprep.mubr.bf16.mxu0 0
        %1042 = vmatmul.mubr.bf16.gmra.mxu0 %v954
        %v1043 = vpop.f32.mrf.mxu0
        %v1044 = vadd.f32 %v959, %v1043
        %v1045 = vpop.f32.mrf.mxu0
        %v1046 = vpop.f32.mrf.mxu0
        %v1047 = vadd.f32 %v959, %v1046
        %v1048 = vpop.f32.mrf.mxu0
        %1049 = vdwg.mxu0
        %v1050 = vxor.u32 %v1044, 2147483648
        %v1051 = vxor.u32 %v1047, 2147483648
        %v1052 = vmul.f32 %v1050, 1.442695
        %v1053 = vpow.pop %v1052
        %v1054 = vmul.f32 %v1051, 1.442695
        %v1055 = vpow.pop %v1054
        %v1056 = vadd.f32 %v1053, 1.0
        %v1057 = vadd.f32 %v1055, 1.0
        %v1058 = vrcp.pop %v1056
        %v1059 = vmul.f32 1.0, %v1058
        %v1060 = vrcp.pop %v1057
        %v1061 = vmul.f32 1.0, %v1060
        %v1062 = vmul.f32 %v1044, %v1059
        %v1063 = vmul.f32 %v1047, %v1061
        %1064 = vst [vmem:[#allocation2 + $0x2] sm:$0xff] %v1062
        %1065 = vst [vmem:[#allocation2 + $0xa] sm:$0xff] %v1063
        %v1066 = vld [vmem:[#allocation2 + $0x2] sm:$0xff]
        %v1067 = vld [vmem:[#allocation2 + $0xa] sm:$0xff]
        %vm1068 = vcmask 130048
        %v1070 = vsel %vm1068, 0.0625, 0
        %1072 = vmatprep.subr.mxu0 0.0
        %1073 = vmatpush1.msra.mxu0 0.0
        %1074 = vmatprep.subr.mxu0 0.0
        %1075 = vmatpush1.msra.mxu0 0.0
        %1076 = vmatprep.subr.mxu0 0.0
        %1077 = vmatpush1.msra.mxu0 0.0
        %1078 = vmatprep.subr.mxu0 0.0
        %1079 = vmatpush1.msra.mxu0 0.0
        %1080 = vmatprep.subr.mxu0 0.0
        %1081 = vmatpush1.msra.mxu0 0.0
        %1082 = vmatprep.subr.mxu0 0.0
        %1083 = vmatpush1.msra.mxu0 0.0
        %1084 = vmatprep.subr.mxu0 0.0
        %1085 = vmatpush1.msra.mxu0 0.0
        %1086 = vmatprep.subr.mxu0 0.0
        %1087 = vmatpush1.msra.mxu0 0.0
        %1088 = vmatprep.subr.mxu0 0.0
        %1089 = vmatpush1.msra.mxu0 0.0
        %1090 = vmatprep.subr.mxu0 0.0
        %1091 = vmatpush1.msra.mxu0 0.0
        %1092 = vmatprep.subr.mxu0 0.0
        %1093 = vmatpush1.msra.mxu0 0.0
        %1094 = vmatprep.subr.mxu0 0.0
        %1095 = vmatpush1.msra.mxu0 0.0
        %1096 = vmatprep.subr.mxu0 0.0
        %1097 = vmatpush1.msra.mxu0 0.0
        %1098 = vmatprep.subr.mxu0 0.0
        %1099 = vmatpush1.msra.mxu0 0.0
        %1100 = vmatprep.subr.mxu0 0.0
        %1101 = vmatpush1.msra.mxu0 %v1067
        %1102 = vmatprep.subr.mxu0 0.0
        %1103 = vmatpush1.msra.mxu0 %v1066
        %1104 = vmatprep.subr.mxu0 0.0
        %1105 = vmatpush2.msra.mxu0 0.0
        %1106 = vmatprep.subr.mxu0 0.0
        %1107 = vmatpush2.msra.mxu0 0.0
        %1108 = vmatprep.subr.mxu0 0.0
        %1109 = vmatpush2.msra.mxu0 0.0
        %1110 = vmatprep.subr.mxu0 0.0
        %1111 = vmatpush2.msra.mxu0 0.0
        %1112 = vmatprep.subr.mxu0 0.0
        %1113 = vmatpush2.msra.mxu0 0.0
        %1114 = vmatprep.subr.mxu0 0.0
        %1115 = vmatpush2.msra.mxu0 0.0
        %1116 = vmatprep.subr.mxu0 0.0
        %1117 = vmatpush2.msra.mxu0 0.0
        %1118 = vmatprep.subr.mxu0 0.0
        %1119 = vmatpush2.msra.mxu0 0.0
        %1120 = vmatprep.subr.mxu0 0.0
        %1121 = vmatpush2.msra.mxu0 0.0
        %1122 = vmatprep.subr.mxu0 0.0
        %1123 = vmatpush2.msra.mxu0 0.0
        %1124 = vmatprep.subr.mxu0 0.0
        %1125 = vmatpush2.msra.mxu0 0.0
        %1126 = vmatprep.subr.mxu0 0.0
        %1127 = vmatpush2.msra.mxu0 0.0
        %1128 = vmatprep.subr.mxu0 0.0
        %1129 = vmatpush2.msra.mxu0 0.0
        %1130 = vmatprep.subr.mxu0 0.0
        %1131 = vmatpush2.msra.mxu0 0.0
        %1132 = vmatprep.subr.mxu0 0.0
        %1133 = vmatpush2.msra.mxu0 0.0
        %1134 = vmatprep.subr.mxu0 0.0
        %1135 = vmatpush2.msra.mxu0 0.0
        %1136 = vmatprep.mubr.f32.mxu0 0.0
        %1137 = vmatmul.mubr.f32.gmra.mxu0 %v1070
        %v1138 = vpop.f32.mrf.mxu0
        %v1139 = vadd.f32 0.0, %v1138
        %v1140 = vpop.f32.mrf.mxu0
        %1141 = vdwg.mxu0
        %v1142 = vld [vmem:[#allocation6] sm:$0xff]
        %v1143 = vld [vmem:[#allocation6 + $0x8] sm:$0xff]
        %v1144 = vld [vmem:[#allocation6 + $0x10] sm:$0xff]
        %v1145 = vld [vmem:[#allocation6 + $0x18] sm:$0xff]
        %v1146 = vld [vmem:[#allocation6 + $0x20] sm:$0xff]
        %v1147 = vld [vmem:[#allocation6 + $0x28] sm:$0xff]
        %v1148 = vld [vmem:[#allocation6 + $0x30] sm:$0xff]
        %v1149 = vld [vmem:[#allocation6 + $0x38] sm:$0xff]
        %v1150 = vld [vmem:[#allocation6 + $0x40] sm:$0xff]
        %v1151 = vld [vmem:[#allocation6 + $0x48] sm:$0xff]
        %v1152 = vld [vmem:[#allocation6 + $0x50] sm:$0xff]
        %v1153 = vld [vmem:[#allocation6 + $0x58] sm:$0xff]
        %v1154 = vld [vmem:[#allocation6 + $0x60] sm:$0xff]
        %v1155 = vld [vmem:[#allocation6 + $0x68] sm:$0xff]
        %v1156 = vld [vmem:[#allocation6 + $0x70] sm:$0xff]
        %v1157 = vld [vmem:[#allocation6 + $0x78] sm:$0xff]
        %v1158 = vld [vmem:[%s5] sm:$0x1]
        %1159 = vmatprep.subr.mxu0 0.0
        %1160 = vmatpush1.msra.mxu0 %v1157
        %1161 = vmatprep.subr.mxu0 0.0
        %1162 = vmatpush1.msra.mxu0 %v1156
        %1163 = vmatprep.subr.mxu0 0.0
        %1164 = vmatpush1.msra.mxu0 %v1155
        %1165 = vmatprep.subr.mxu0 0.0
        %1166 = vmatpush1.msra.mxu0 %v1154
        %1167 = vmatprep.subr.mxu0 0.0
        %1168 = vmatpush1.msra.mxu0 %v1153
        %1169 = vmatprep.subr.mxu0 0.0
        %1170 = vmatpush1.msra.mxu0 %v1152
        %1171 = vmatprep.subr.mxu0 0.0
        %1172 = vmatpush1.msra.mxu0 %v1151
        %1173 = vmatprep.subr.mxu0 0.0
        %1174 = vmatpush1.msra.mxu0 %v1150
        %1175 = vmatprep.subr.mxu0 0.0
        %1176 = vmatpush1.msra.mxu0 %v1149
        %1177 = vmatprep.subr.mxu0 0.0
        %1178 = vmatpush1.msra.mxu0 %v1148
        %1179 = vmatprep.subr.mxu0 0.0
        %1180 = vmatpush1.msra.mxu0 %v1147
        %1181 = vmatprep.subr.mxu0 0.0
        %1182 = vmatpush1.msra.mxu0 %v1146
        %1183 = vmatprep.subr.mxu0 0.0
        %1184 = vmatpush1.msra.mxu0 %v1145
        %1185 = vmatprep.subr.mxu0 0.0
        %1186 = vmatpush1.msra.mxu0 %v1144
        %1187 = vmatprep.subr.mxu0 0.0
        %1188 = vmatpush1.msra.mxu0 %v1143
        %1189 = vmatprep.subr.mxu0 0.0
        %1190 = vmatpush1.msra.mxu0 %v1142
        %1191 = vmatprep.subr.mxu0 0.0
        %1192 = vmatpush2.msra.mxu0 0.0
        %1193 = vmatprep.subr.mxu0 0.0
        %1194 = vmatpush2.msra.mxu0 0.0
        %1195 = vmatprep.subr.mxu0 0.0
        %1196 = vmatpush2.msra.mxu0 0.0
        %1197 = vmatprep.subr.mxu0 0.0
        %1198 = vmatpush2.msra.mxu0 0.0
        %1199 = vmatprep.subr.mxu0 0.0
        %1200 = vmatpush2.msra.mxu0 0.0
        %1201 = vmatprep.subr.mxu0 0.0
        %1202 = vmatpush2.msra.mxu0 0.0
        %1203 = vmatprep.subr.mxu0 0.0
        %1204 = vmatpush2.msra.mxu0 0.0
        %1205 = vmatprep.subr.mxu0 0.0
        %1206 = vmatpush2.msra.mxu0 0.0
        %1207 = vmatprep.subr.mxu0 0.0
        %1208 = vmatpush2.msra.mxu0 0.0
        %1209 = vmatprep.subr.mxu0 0.0
        %1210 = vmatpush2.msra.mxu0 0.0
        %1211 = vmatprep.subr.mxu0 0.0
        %1212 = vmatpush2.msra.mxu0 0.0
        %1213 = vmatprep.subr.mxu0 0.0
        %1214 = vmatpush2.msra.mxu0 0.0
        %1215 = vmatprep.subr.mxu0 0.0
        %1216 = vmatpush2.msra.mxu0 0.0
        %1217 = vmatprep.subr.mxu0 0.0
        %1218 = vmatpush2.msra.mxu0 0.0
        %1219 = vmatprep.subr.mxu0 0.0
        %1220 = vmatpush2.msra.mxu0 0.0
        %1221 = vmatprep.subr.mxu0 0.0
        %1222 = vmatpush2.msra.mxu0 0.0
        %1223 = vmatprep.mubr.f32.mxu0 0.0
        %1224 = vmatmul.mubr.f32.gmra.mxu0 %v1139
        %v1225 = vpop.f32.mrf.mxu0
        %v1226 = vadd.f32 %v1158, %v1225
        %v1227 = vpop.f32.mrf.mxu0
        %1228 = vdwg.mxu0
        %v1229 = vxor.u32 %v1226, 2147483648
        %v1230 = vmul.f32 %v1229, 1.442695
        %v1231 = vpow.pop %v1230
        %v1232 = vadd.f32 %v1231, 1.0
        %v1233 = vrcp.pop %v1232
        %v1234 = vmul.f32 1.0, %v1233
        %v1235 = vmul.f32 %v1226, %v1234
        %v1236 = vld [vmem:[#allocation8] sm:$0xff]
        %v1237 = vld [vmem:[#allocation8 + $0x8] sm:$0xff]
        %v1238 = vld [vmem:[#allocation8 + $0x10] sm:$0xff]
        %v1239 = vld [vmem:[#allocation8 + $0x18] sm:$0xff]
        %v1240 = vld [vmem:[#allocation8 + $0x20] sm:$0xff]
        %v1241 = vld [vmem:[#allocation8 + $0x28] sm:$0xff]
        %v1242 = vld [vmem:[#allocation8 + $0x30] sm:$0xff]
        %v1243 = vld [vmem:[#allocation8 + $0x38] sm:$0xff]
        %v1244 = vld [vmem:[#allocation8 + $0x40] sm:$0xff]
        %v1245 = vld [vmem:[#allocation8 + $0x48] sm:$0xff]
        %v1246 = vld [vmem:[#allocation8 + $0x50] sm:$0xff]
        %v1247 = vld [vmem:[#allocation8 + $0x58] sm:$0xff]
        %v1248 = vld [vmem:[#allocation8 + $0x60] sm:$0xff]
        %v1249 = vld [vmem:[#allocation8 + $0x68] sm:$0xff]
        %v1250 = vld [vmem:[#allocation8 + $0x70] sm:$0xff]
        %v1251 = vld [vmem:[#allocation8 + $0x78] sm:$0xff]
        %v1252 = vld [vmem:[%s7] sm:$0x1]
        %1253 = vmatprep.subr.mxu0 0.0
        %1254 = vmatpush1.msra.mxu0 %v1251
        %1255 = vmatprep.subr.mxu0 0.0
        %1256 = vmatpush1.msra.mxu0 %v1250
        %1257 = vmatprep.subr.mxu0 0.0
        %1258 = vmatpush1.msra.mxu0 %v1249
        %1259 = vmatprep.subr.mxu0 0.0
        %1260 = vmatpush1.msra.mxu0 %v1248
        %1261 = vmatprep.subr.mxu0 0.0
        %1262 = vmatpush1.msra.mxu0 %v1247
        %1263 = vmatprep.subr.mxu0 0.0
        %1264 = vmatpush1.msra.mxu0 %v1246
        %1265 = vmatprep.subr.mxu0 0.0
        %1266 = vmatpush1.msra.mxu0 %v1245
        %1267 = vmatprep.subr.mxu0 0.0
        %1268 = vmatpush1.msra.mxu0 %v1244
        %1269 = vmatprep.subr.mxu0 0.0
        %1270 = vmatpush1.msra.mxu0 %v1243
        %1271 = vmatprep.subr.mxu0 0.0
        %1272 = vmatpush1.msra.mxu0 %v1242
        %1273 = vmatprep.subr.mxu0 0.0
        %1274 = vmatpush1.msra.mxu0 %v1241
        %1275 = vmatprep.subr.mxu0 0.0
        %1276 = vmatpush1.msra.mxu0 %v1240
        %1277 = vmatprep.subr.mxu0 0.0
        %1278 = vmatpush1.msra.mxu0 %v1239
        %1279 = vmatprep.subr.mxu0 0.0
        %1280 = vmatpush1.msra.mxu0 %v1238
        %1281 = vmatprep.subr.mxu0 0.0
        %1282 = vmatpush1.msra.mxu0 %v1237
        %1283 = vmatprep.subr.mxu0 0.0
        %1284 = vmatpush1.msra.mxu0 %v1236
        %1285 = vmatprep.subr.mxu0 0.0
        %1286 = vmatpush2.msra.mxu0 0.0
        %1287 = vmatprep.subr.mxu0 0.0
        %1288 = vmatpush2.msra.mxu0 0.0
        %1289 = vmatprep.subr.mxu0 0.0
        %1290 = vmatpush2.msra.mxu0 0.0
        %1291 = vmatprep.subr.mxu0 0.0
        %1292 = vmatpush2.msra.mxu0 0.0
        %1293 = vmatprep.subr.mxu0 0.0
        %1294 = vmatpush2.msra.mxu0 0.0
        %1295 = vmatprep.subr.mxu0 0.0
        %1296 = vmatpush2.msra.mxu0 0.0
        %1297 = vmatprep.subr.mxu0 0.0
        %1298 = vmatpush2.msra.mxu0 0.0
        %1299 = vmatprep.subr.mxu0 0.0
        %1300 = vmatpush2.msra.mxu0 0.0
        %1301 = vmatprep.subr.mxu0 0.0
        %1302 = vmatpush2.msra.mxu0 0.0
        %1303 = vmatprep.subr.mxu0 0.0
        %1304 = vmatpush2.msra.mxu0 0.0
        %1305 = vmatprep.subr.mxu0 0.0
        %1306 = vmatpush2.msra.mxu0 0.0
        %1307 = vmatprep.subr.mxu0 0.0
        %1308 = vmatpush2.msra.mxu0 0.0
        %1309 = vmatprep.subr.mxu0 0.0
        %1310 = vmatpush2.msra.mxu0 0.0
        %1311 = vmatprep.subr.mxu0 0.0
        %1312 = vmatpush2.msra.mxu0 0.0
        %1313 = vmatprep.subr.mxu0 0.0
        %1314 = vmatpush2.msra.mxu0 0.0
        %1315 = vmatprep.subr.mxu0 0.0
        %1316 = vmatpush2.msra.mxu0 0.0
        %1317 = vmatprep.mubr.f32.mxu0 0.0
        %1318 = vmatmul.mubr.f32.gmra.mxu0 %v1235
        %v1319 = vpop.f32.mrf.mxu0
        %v1320 = vadd.f32 %v1252, %v1319
        %v1321 = vpop.f32.mrf.mxu0
        %1322 = vdwg.mxu0
        %v1323 = vxor.u32 %v1320, 2147483648
        %v1324 = vmul.f32 %v1323, 1.442695
        %v1325 = vpow.pop %v1324
        %v1326 = vadd.f32 %v1325, 1.0
        %v1327 = vrcp.pop %v1326
        %v1328 = vmul.f32 1.0, %v1327
        %v1329 = vlaneseq
        %v1330 = vshrl.u32 %v1329, 7
        %v1331 = vsub.s32 0, %v1330
        %v1332 = vrot.slane %v1328, %v1331
        %v1333 = vmul.f32 %v1066, %v1332
        %v1334 = vmul.f32 %v1067, %v1332
        %v1335 = vld [vmem:[#allocation3] sm:$0xff]
        %v1336 = vld [vmem:[#allocation3 + $0x8] sm:$0xff]
        %v1337 = vadd.f32 %v1333, %v1335
        %v1338 = vadd.f32 %v1334, %v1336
        %v1339 = vxor.u32 %v1337, 2147483648
        %v1340 = vxor.u32 %v1338, 2147483648
        %v1341 = vmul.f32 %v1339, 1.442695
        %v1342 = vpow.pop %v1341
        %v1343 = vmul.f32 %v1340, 1.442695
        %v1344 = vpow.pop %v1343
        %v1345 = vadd.f32 %v1342, 1.0
        %v1346 = vadd.f32 %v1344, 1.0
        %v1347 = vrcp.pop %v1345
        %v1348 = vmul.f32 1.0, %v1347
        %v1349 = vrcp.pop %v1346
        %v1350 = vmul.f32 1.0, %v1349
        %v1351 = vmul.f32 %v1337, %v1348
        %v1352 = vmul.f32 %v1338, %v1350
        %1353 = vst.msk [vmem:[%s349] sm:$0xff] %vm356, %v1351
        %1354 = vst.msk [vmem:[%s349 + $0x8] sm:$0xff] %vm356, %v1352
        %p1355 = scmp.lt.s32.totalorder %s21, 1
        %s1356 = scalar_select %p1355, %s21, 1
        %s1357 = smul.addr %s1356, 2
        %s1358 = smul.addr %s1357, 8
        %s1359 = scalar_lea.vmem %s8, %s1358
        // Predicated region
        $region65: #{tpu_custom_call.1} parent=51 // pred_check
          %p1360 = pneg %p212
        $region66: #{tpu_custom_call.1} parent=51 // pred_check_branch
          %1362 = sbr.rel (%p1360) target = $region68
        $region67: #{tpu_custom_call.1} parent=51 // pred_region
          _
        $region68: #{tpu_custom_call.1} parent=51 // pred_fallthru
          _
      $region52: #{tpu_custom_call.1} parent=5 // pred_fallthru
        _
      %p1363 = scmp.le.s32.totalorder 2, %s16
      // Predicated region
      $region69: #{tpu_custom_call.1} parent=5 // pred_check
        %p1364 = pneg %p1363
      $region70: #{tpu_custom_call.1} parent=5 // pred_check_branch
        %1366 = sbr.rel (%p1364) target = $region72
      $region71: #{tpu_custom_call.1} parent=5 // pred_region
        %s1367 = ssub.s32 %s16, 2
        // Predicated region
        $region73: #{tpu_custom_call.1} parent=71 // pred_check
          %p1368 = pneg %p218
        $region74: #{tpu_custom_call.1} parent=71 // pred_check_branch
          %1370 = sbr.rel (%p1368) target = $region76
        $region75: #{tpu_custom_call.1} parent=71 // pred_region
          %p1371 = scmp.lt.s32.totalorder %s22, 1
          %s1372 = scalar_select %p1371, %s22, 1
          %s1373 = smul.addr %s1372, 2
          %s1374 = smul.addr %s1373, 8
          %s1375 = scalar_lea.vmem %s8, %s1374
        $region76: #{tpu_custom_call.1} parent=71 // pred_fallthru
          _
      $region72: #{tpu_custom_call.1} parent=5 // pred_fallthru
        _
    $region6: #{tpu_custom_call.1} parent=1 // loop_footer
      %s20 = sadd.s32 1, %s16
    $region7: #{tpu_custom_call.1} parent=1 // loop_footer_branch
      %15 = sbr.rel target = $region3
    $region8: #{tpu_custom_call.1} parent=1 // loop_exit
      _
    %1376 = vsyncpa [#allocation5], 1
    %s1377 = scalar_lea.sflag [#allocation5], 1
    %1378 = vsyncpa %s1377, 1
    %1379 = vsyncpa [#allocation7], 1

// kernel: tpu_custom_call.1
$region0: #{tpu_custom_call.1}
  #allocation0 [shape = 'u32[]', space=smem, size = 0x4, offset = 0x4, fixed_abs, tag = 'smem constant byte address 0x4 - core index']
  #allocation1 [shape = 'u32[144,128]{1,0:T(1,128)}', space=vmem, size = 0x12000, scoped, tag = 'internal scratch']
  #allocation2 [shape = 'f32[20,128]{1,0:T(8,128)}', space=vmem, size = 0x3000, scoped, tag = 'scratch operand']
  #allocation3 [shape = 'f32[16,128]{1,0:T(8,128)}', space=vmem, size = 0x2000, scoped, tag = 'scratch operand']
  %s0 = inlined_call_operand.vmem [shape: f32[2,16,8], index: 0, kind: input, shape index: {}]
  %s1 = inlined_call_operand.vmem [shape: f32[4,5,128], index: 1, kind: input, shape index: {}]
  %s2 = inlined_call_operand.hbm [shape: bf16[4,128,128], index: 2, kind: input, shape index: {}]
  %s3 = inlined_call_operand.vmem [shape: f32[4,1,128], index: 3, kind: input, shape index: {}]
  %s4 = inlined_call_operand.hbm [shape: f32[128,128], index: 4, kind: input, shape index: {}]
  %s5 = inlined_call_operand.vmem [shape: f32[1,128], index: 5, kind: input, shape index: {}]
  %s6 = inlined_call_operand.hbm [shape: f32[128,128], index: 6, kind: input, shape index: {}]
  %s7 = inlined_call_operand.vmem [shape: f32[1,128], index: 7, kind: input, shape index: {}]
  %s8 = inlined_call_operand.vmem [shape: f32[2,16,8], index: 8, kind: output, shape index: {}]
  %s9 = sld [smem:[#allocation0]]
  $region77: #{tpu_custom_call.1} parent=0
    _
  %s11 = ssub.s32 1, %s9
  %s12 = scalar_select 0, %s11, %s9
  $region1: #{tpu_custom_call.1} parent=0
    #allocation4 [shape = 'u8[131072]{0}', space=vmem, size = 0x20000, scoped, tag = 'input window, operand 2, single buffered']
    #allocation5 [shape = 's32[2]{0}', space=sflag, size = 0x8, scoped, tag = 'scoped memory for tpu_custom_call.1']
    #allocation6 [shape = 'u8[65536]{0}', space=vmem, size = 0x10000, scoped, tag = 'input window, operand 4, single buffered']
    #allocation7 [shape = 's32[1]{0}', space=sflag, size = 0x4, scoped, tag = 'scoped memory for tpu_custom_call.1']
    #allocation8 [shape = 'u8[65536]{0}', space=vmem, size = 0x10000, scoped, tag = 'input window, operand 6, single buffered']
    %13 = vsyncpa [#allocation5], 0
    %14 = vsyncpa [#allocation7], 0
    loop: start=0, step=1, limit=4
    $region2: #{tpu_custom_call.1} parent=1 // loop_pre_header
      _
    $region3: #{tpu_custom_call.1} parent=1 // loop_header
      %s16 = sphi 0, %s20
      %p17 = scmp.ge.s32.totalorder %s16, 4
      %s26 = sphi 0, %s28
      %s29 = sphi 0, %s26
      %s30 = sphi 0, %s29
      %s46 = sphi 0, %s30
      %s50 = sphi 0, %s50
      %s52 = sphi 0, %s50
      %s53 = sphi 0, %s52
      %s67 = sphi 0, %s53
      %s71 = sphi 0, %s71
      %s73 = sphi 0, %s71
      %s74 = sphi 0, %s73
      %s88 = sphi 0, %s74
      %s92 = sphi 0, %s92
      %s94 = sphi 0, %s92
      %s95 = sphi 0, %s94
      %s109 = sphi 0, %s95
      %s113 = sphi 0, %s113
      %s115 = sphi 0, %s113
      %s116 = sphi 0, %s115
      %s130 = sphi 0, %s116
      %s134 = sphi 0, %s134
      %s136 = sphi 0, %s134
      %s137 = sphi 0, %s136
      %s151 = sphi 0, %s137
      %s155 = sphi 0, %s155
      %s157 = sphi 0, %s155
      %s158 = sphi 0, %s157
      %s172 = sphi 0, %s158
      %s176 = sphi 0, %s176
      %s178 = sphi 0, %s176
      %s179 = sphi 0, %s178
      %s193 = sphi 0, %s179
      %s199 = sphi 0, %s201
      %s202 = sphi 0, %s199
      %s203 = sphi 0, %s202
      %s219 = sphi 0, %s203
    $region4: #{tpu_custom_call.1} parent=1 // loop_header_branch
      %19 = sbr.rel (%p17) target = $region8
    $region5: #{tpu_custom_call.1} parent=1 // loop_body
      %s21 = ssub.s32 %s16, 1
      %s22 = ssub.s32 %s16, 2
      %s23 = sadd.s32 %s16, 1
      %s24 = ssub.s32 %s16, %s23
      %p25 = scmp.eq.s32.totalorder %s24, 0
      %s27 = sadd.s32 %s26, 1
      %s28 = scalar_select %p25, %s26, %s27
      %p31 = pneg %p25
      %p32 = scmp.eq.s32.totalorder %s16, 1
      %p33 = por %p31, %p32
      %p34 = scmp.ne.s32.totalorder %s26, %s29
      %p35 = scmp.eq.s32.totalorder %s16, 0
      %p36 = por %p34, %p35
      %p37 = scmp.ne.s32.totalorder %s26, %s29
      %p38 = scmp.eq.s32.totalorder %s21, 1
      %p39 = por %p37, %p38
      %p40 = scmp.ne.s32.totalorder %s29, %s30
      %p41 = scmp.eq.s32.totalorder %s21, 0
      %p42 = por %p40, %p41
      %p43 = scmp.ne.s32.totalorder %s29, %s30
      %p44 = scmp.eq.s32.totalorder %s22, 1
      %p45 = por %p43, %p44
      %p47 = scmp.ne.s32.totalorder %s30, %s46
      %p48 = scmp.eq.s32.totalorder %s22, 0
      %p49 = por %p47, %p48
      %s51 = sadd.s32 %s50, 1
      %p54 = scmp.eq.s32.totalorder %s16, 1
      %p55 = scmp.ne.s32.totalorder %s50, %s52
      %p56 = scmp.eq.s32.totalorder %s16, 0
      %p57 = por %p55, %p56
      %p58 = scmp.ne.s32.totalorder %s50, %s52
      %p59 = scmp.eq.s32.totalorder %s21, 1
      %p60 = por %p58, %p59
      %p61 = scmp.ne.s32.totalorder %s52, %s53
      %p62 = scmp.eq.s32.totalorder %s21, 0
      %p63 = por %p61, %p62
      %p64 = scmp.ne.s32.totalorder %s52, %s53
      %p65 = scmp.eq.s32.totalorder %s22, 1
      %p66 = por %p64, %p65
      %p68 = scmp.ne.s32.totalorder %s53, %s67
      %p69 = scmp.eq.s32.totalorder %s22, 0
      %p70 = por %p68, %p69
      %s72 = sadd.s32 %s71, 1
      %p75 = scmp.eq.s32.totalorder %s16, 1
      %p76 = scmp.ne.s32.totalorder %s71, %s73
      %p77 = scmp.eq.s32.totalorder %s16, 0
      %p78 = por %p76, %p77
      %p79 = scmp.ne.s32.totalorder %s71, %s73
      %p80 = scmp.eq.s32.totalorder %s21, 1
      %p81 = por %p79, %p80
      %p82 = scmp.ne.s32.totalorder %s73, %s74
      %p83 = scmp.eq.s32.totalorder %s21, 0
      %p84 = por %p82, %p83
      %p85 = scmp.ne.s32.totalorder %s73, %s74
      %p86 = scmp.eq.s32.totalorder %s22, 1
      %p87 = por %p85, %p86
      %p89 = scmp.ne.s32.totalorder %s74, %s88
      %p90 = scmp.eq.s32.totalorder %s22, 0
      %p91 = por %p89, %p90
      %s93 = sadd.s32 %s92, 1
      %p96 = scmp.eq.s32.totalorder %s16, 1
      %p97 = scmp.ne.s32.totalorder %s92, %s94
      %p98 = scmp.eq.s32.totalorder %s16, 0
      %p99 = por %p97, %p98
      %p100 = scmp.ne.s32.totalorder %s92, %s94
      %p101 = scmp.eq.s32.totalorder %s21, 1
      %p102 = por %p100, %p101
      %p103 = scmp.ne.s32.totalorder %s94, %s95
      %p104 = scmp.eq.s32.totalorder %s21, 0
      %p105 = por %p103, %p104
      %p106 = scmp.ne.s32.totalorder %s94, %s95
      %p107 = scmp.eq.s32.totalorder %s22, 1
      %p108 = por %p106, %p107
      %p110 = scmp.ne.s32.totalorder %s95, %s109
      %p111 = scmp.eq.s32.totalorder %s22, 0
      %p112 = por %p110, %p111
      %s114 = sadd.s32 %s113, 1
      %p117 = scmp.eq.s32.totalorder %s16, 1
      %p118 = scmp.ne.s32.totalorder %s113, %s115
      %p119 = scmp.eq.s32.totalorder %s16, 0
      %p120 = por %p118, %p119
      %p121 = scmp.ne.s32.totalorder %s113, %s115
      %p122 = scmp.eq.s32.totalorder %s21, 1
      %p123 = por %p121, %p122
      %p124 = scmp.ne.s32.totalorder %s115, %s116
      %p125 = scmp.eq.s32.totalorder %s21, 0
      %p126 = por %p124, %p125
      %p127 = scmp.ne.s32.totalorder %s115, %s116
      %p128 = scmp.eq.s32.totalorder %s22, 1
      %p129 = por %p127, %p128
      %p131 = scmp.ne.s32.totalorder %s116, %s130
      %p132 = scmp.eq.s32.totalorder %s22, 0
      %p133 = por %p131, %p132
      %s135 = sadd.s32 %s134, 1
      %p138 = scmp.eq.s32.totalorder %s16, 1
      %p139 = scmp.ne.s32.totalorder %s134, %s136
      %p140 = scmp.eq.s32.totalorder %s16, 0
      %p141 = por %p139, %p140
      %p142 = scmp.ne.s32.totalorder %s134, %s136
      %p143 = scmp.eq.s32.totalorder %s21, 1
      %p144 = por %p142, %p143
      %p145 = scmp.ne.s32.totalorder %s136, %s137
      %p146 = scmp.eq.s32.totalorder %s21, 0
      %p147 = por %p145, %p146
      %p148 = scmp.ne.s32.totalorder %s136, %s137
      %p149 = scmp.eq.s32.totalorder %s22, 1
      %p150 = por %p148, %p149
      %p152 = scmp.ne.s32.totalorder %s137, %s151
      %p153 = scmp.eq.s32.totalorder %s22, 0
      %p154 = por %p152, %p153
      %s156 = sadd.s32 %s155, 1
      %p159 = scmp.eq.s32.totalorder %s16, 1
      %p160 = scmp.ne.s32.totalorder %s155, %s157
      %p161 = scmp.eq.s32.totalorder %s16, 0
      %p162 = por %p160, %p161
      %p163 = scmp.ne.s32.totalorder %s155, %s157
      %p164 = scmp.eq.s32.totalorder %s21, 1
      %p165 = por %p163, %p164
      %p166 = scmp.ne.s32.totalorder %s157, %s158
      %p167 = scmp.eq.s32.totalorder %s21, 0
      %p168 = por %p166, %p167
      %p169 = scmp.ne.s32.totalorder %s157, %s158
      %p170 = scmp.eq.s32.totalorder %s22, 1
      %p171 = por %p169, %p170
      %p173 = scmp.ne.s32.totalorder %s158, %s172
      %p174 = scmp.eq.s32.totalorder %s22, 0
      %p175 = por %p173, %p174
      %s177 = sadd.s32 %s176, 1
      %p180 = scmp.eq.s32.totalorder %s16, 1
      %p181 = scmp.ne.s32.totalorder %s176, %s178
      %p182 = scmp.eq.s32.totalorder %s16, 0
      %p183 = por %p181, %p182
      %p184 = scmp.ne.s32.totalorder %s176, %s178
      %p185 = scmp.eq.s32.totalorder %s21, 1
      %p186 = por %p184, %p185
      %p187 = scmp.ne.s32.totalorder %s178, %s179
      %p188 = scmp.eq.s32.totalorder %s21, 0
      %p189 = por %p187, %p188
      %p190 = scmp.ne.s32.totalorder %s178, %s179
      %p191 = scmp.eq.s32.totalorder %s22, 1
      %p192 = por %p190, %p191
      %p194 = scmp.ne.s32.totalorder %s179, %s193
      %p195 = scmp.eq.s32.totalorder %s22, 0
      %p196 = por %p194, %p195
      %s197 = ssub.s32 %s16, %s23
      %p198 = scmp.eq.s32.totalorder %s197, 0
      %s200 = sadd.s32 %s199, 1
      %s201 = scalar_select %p198, %s199, %s200
      %p204 = pneg %p198
      %p205 = scmp.eq.s32.totalorder %s16, 1
      %p206 = por %p204, %p205
      %p207 = scmp.ne.s32.totalorder %s199, %s202
      %p208 = scmp.eq.s32.totalorder %s16, 0
      %p209 = por %p207, %p208
      %p210 = scmp.ne.s32.totalorder %s199, %s202
      %p211 = scmp.eq.s32.totalorder %s21, 1
      %p212 = por %p210, %p211
      %p213 = scmp.ne.s32.totalorder %s202, %s203
      %p214 = scmp.eq.s32.totalorder %s21, 0
      %p215 = por %p213, %p214
      %p216 = scmp.ne.s32.totalorder %s202, %s203
      %p217 = scmp.eq.s32.totalorder %s22, 1
      %p218 = por %p216, %p217
      %p220 = scmp.ne.s32.totalorder %s203, %s219
      %p221 = scmp.eq.s32.totalorder %s22, 0
      %p222 = por %p220, %p221
      %p223 = scmp.le.s32.totalorder 1, %s16
      %p224 = scmp.lt.s32.totalorder %s16, 3
      %p225 = pnand %p223, %p224
      %p226 = pneg %p225
      // Predicated region
      $region9: #{tpu_custom_call.1} parent=5 // pred_check
        _
      $region10: #{tpu_custom_call.1} parent=5 // pred_check_branch
        %228 = sbr.rel (%p225) target = $region12
      $region11: #{tpu_custom_call.1} parent=5 // pred_region
        %s229 = ssub.s32 %s16, 1
        // Predicated region
        $region13: #{tpu_custom_call.1} parent=11 // pred_check
          %p230 = pneg %p63
        $region14: #{tpu_custom_call.1} parent=11 // pred_check_branch
          %232 = sbr.rel (%p230) target = $region16
        $region15: #{tpu_custom_call.1} parent=11 // pred_region
          _
        $region16: #{tpu_custom_call.1} parent=11 // pred_fallthru
          _
        // Predicated region
        $region17: #{tpu_custom_call.1} parent=11 // pred_check
          %p233 = pneg %p84
        $region18: #{tpu_custom_call.1} parent=11 // pred_check_branch
          %235 = sbr.rel (%p233) target = $region20
        $region19: #{tpu_custom_call.1} parent=11 // pred_region
          %s237 = ssub.s32 4096, 4096
          %238 = vsyncadd [#allocation5], %s237
          %s239 = sshll.u32 [#allocation4], 4
          %s240 = int_to_ptr.vmem [resolvable:$true] %s239
          %245 = dma.hbm_to_vmem [thread:$0]  %s2, 4096, %s240, [#allocation5], 64, 64, 4
        $region20: #{tpu_custom_call.1} parent=11 // pred_fallthru
          _
        // Predicated region
        $region21: #{tpu_custom_call.1} parent=11 // pred_check
          %p246 = pneg %p105
        $region22: #{tpu_custom_call.1} parent=11 // pred_check_branch
          %248 = sbr.rel (%p246) target = $region24
        $region23: #{tpu_custom_call.1} parent=11 // pred_region
          _
        $region24: #{tpu_custom_call.1} parent=11 // pred_fallthru
          _
        // Predicated region
        $region25: #{tpu_custom_call.1} parent=11 // pred_check
          %p249 = pneg %p126
        $region26: #{tpu_custom_call.1} parent=11 // pred_check_branch
          %251 = sbr.rel (%p249) target = $region28
        $region27: #{tpu_custom_call.1} parent=11 // pred_region
          %s253 = ssub.s32 2048, 2048
          %254 = vsyncadd [#allocation7], %s253
          %s255 = sshll.u32 [#allocation6], 4
          %s256 = int_to_ptr.vmem [resolvable:$true] %s255
          %261 = dma.hbm_to_vmem [thread:$0]  %s4, 2048, %s256, [#allocation7], 128, 128, 8
        $region28: #{tpu_custom_call.1} parent=11 // pred_fallthru
          _
        // Predicated region
        $region29: #{tpu_custom_call.1} parent=11 // pred_check
          %p262 = pneg %p147
        $region30: #{tpu_custom_call.1} parent=11 // pred_check_branch
          %264 = sbr.rel (%p262) target = $region32
        $region31: #{tpu_custom_call.1} parent=11 // pred_region
          _
        $region32: #{tpu_custom_call.1} parent=11 // pred_fallthru
          _
        // Predicated region
        $region33: #{tpu_custom_call.1} parent=11 // pred_check
          %p265 = pneg %p168
        $region34: #{tpu_custom_call.1} parent=11 // pred_check_branch
          %267 = sbr.rel (%p265) target = $region36
        $region35: #{tpu_custom_call.1} parent=11 // pred_region
          %s269 = ssub.s32 2048, 2048
          %270 = vsyncadd [#allocation7], %s269
          %s271 = sshll.u32 [#allocation8], 4
          %s272 = int_to_ptr.vmem [resolvable:$true] %s271
          %277 = dma.hbm_to_vmem [thread:$0]  %s6, 2048, %s272, [#allocation7], 128, 128, 8
        $region36: #{tpu_custom_call.1} parent=11 // pred_fallthru
          _
        // Predicated region
        $region37: #{tpu_custom_call.1} parent=11 // pred_check
          %p278 = pneg %p189
        $region38: #{tpu_custom_call.1} parent=11 // pred_check_branch
          %280 = sbr.rel (%p278) target = $region40
        $region39: #{tpu_custom_call.1} parent=11 // pred_region
          _
        $region40: #{tpu_custom_call.1} parent=11 // pred_fallthru
          _
      $region12: #{tpu_custom_call.1} parent=5 // pred_fallthru
        _
      %p281 = scmp.lt.s32.totalorder %s16, 2
      // Predicated region
      $region41: #{tpu_custom_call.1} parent=5 // pred_check
        %p282 = pneg %p281
      $region42: #{tpu_custom_call.1} parent=5 // pred_check_branch
        %284 = sbr.rel (%p282) target = $region44
      $region43: #{tpu_custom_call.1} parent=5 // pred_region
        // Predicated region
        $region45: #{tpu_custom_call.1} parent=43 // pred_check
          %p285 = pneg %p36
        $region46: #{tpu_custom_call.1} parent=43 // pred_check_branch
          %287 = sbr.rel (%p285) target = $region48
        $region47: #{tpu_custom_call.1} parent=43 // pred_region
          %p288 = scmp.lt.s32.totalorder %s16, 1
          %s289 = scalar_select %p288, %s16, 1
          %s290 = smul.addr %s289, 2
          %s291 = smul.addr %s290, 8
          %s292 = scalar_lea.vmem %s0, %s291
        $region48: #{tpu_custom_call.1} parent=43 // pred_fallthru
          _
      $region44: #{tpu_custom_call.1} parent=5 // pred_fallthru
        _
      %p293 = scmp.le.s32.totalorder 1, %s16
      %p294 = scmp.lt.s32.totalorder %s16, 3
      %p295 = pnand %p293, %p294
      %p296 = pneg %p295
      // Predicated region
      $region49: #{tpu_custom_call.1} parent=5 // pred_check
        _
      $region50: #{tpu_custom_call.1} parent=5 // pred_check_branch
        %298 = sbr.rel (%p295) target = $region52
      $region51: #{tpu_custom_call.1} parent=5 // pred_region
        %s299 = ssub.s32 %s16, 1
        // Predicated region
        $region53: #{tpu_custom_call.1} parent=51 // pred_check
          %p300 = pneg %p84
        $region54: #{tpu_custom_call.1} parent=51 // pred_check_branch
          %302 = sbr.rel (%p300) target = $region56
        $region55: #{tpu_custom_call.1} parent=51 // pred_region
          %303 = dma.done [#allocation5], 4096
        $region56: #{tpu_custom_call.1} parent=51 // pred_fallthru
          _
        // Predicated region
        $region57: #{tpu_custom_call.1} parent=51 // pred_check
          %p304 = pneg %p126
        $region58: #{tpu_custom_call.1} parent=51 // pred_check_branch
          %306 = sbr.rel (%p304) target = $region60
        $region59: #{tpu_custom_call.1} parent=51 // pred_region
          %307 = dma.done [#allocation7], 2048
        $region60: #{tpu_custom_call.1} parent=51 // pred_fallthru
          _
        // Predicated region
        $region61: #{tpu_custom_call.1} parent=51 // pred_check
          %p308 = pneg %p168
        $region62: #{tpu_custom_call.1} parent=51 // pred_check_branch
          %310 = sbr.rel (%p308) target = $region64
        $region63: #{tpu_custom_call.1} parent=51 // pred_region
          %311 = dma.done [#allocation7], 2048
        $region64: #{tpu_custom_call.1} parent=51 // pred_fallthru
          _
        %p312 = scmp.lt.s32.totalorder %s21, 1
        %s313 = scalar_select %p312, %s21, 1
        %s314 = smul.addr %s313, 2
        %s315 = smul.addr %s314, 8
        %s316 = scalar_lea.vmem %s0, %s315
        %p317 = pneg %p42
        %p318 = pneg %p39
        %p319 = pneg %p63
        %p320 = pneg %p60
        %p321 = pneg %p84
        %p322 = pneg %p81
        %p323 = pneg %p105
        %p324 = pneg %p102
        %p325 = pneg %p126
        %p326 = pneg %p123
        %p327 = pneg %p147
        %p328 = pneg %p144
        %p329 = pneg %p168
        %p330 = pneg %p165
        %p331 = pneg %p189
        %p332 = pneg %p186
        %p333 = pneg %p215
        %p334 = pneg %p212
        %p335 = scmp.lt.s32.totalorder %s21, 1
        %s336 = scalar_select %p335, %s21, 1
        %s337 = smul.addr %s336, 2
        %s338 = smul.addr %s337, 8
        %s339 = scalar_lea.vmem %s8, %s338
        %p340 = scmp.lt.s32.totalorder %s21, 1
        %s341 = scalar_select %p340, %s21, 1
        %s342 = smul.addr %s341, 2
        %s343 = smul.addr %s342, 8
        %s344 = scalar_lea.vmem %s0, %s343
        %p345 = scmp.lt.s32.totalorder %s21, 1
        %s346 = scalar_select %p345, %s21, 1
        %s347 = smul.addr %s346, 2
        %s348 = smul.addr %s347, 8
        %s349 = scalar_lea.vmem %s8, %s348
        %351 = vst [vmem:[#allocation2] sm:$0xff] 0.0
        %352 = vst [vmem:[#allocation2 + $0x8] sm:$0xff] 0.0
        %353 = vst [vmem:[#allocation2 + $0x10] sm:$0xf] 0.0
        %v354 = vld [vmem:[%s344] sm:$0xff]
        %v355 = vld [vmem:[%s344 + $0x8] sm:$0xff]
        %vm356 = vcmask 64512
        %357 = vst.msk [vmem:[#allocation2 + $0x2] sm:$0xff] %vm356, %v354
        %358 = vst.msk [vmem:[#allocation2 + $0xa] sm:$0xff] %vm356, %v355
        %s359 = scalar_lea.vmem %s1, 24
        %v360 = vld [vmem:[%s359] sm:$0x1f]
        %v361 = vld [vmem:[#allocation2] sm:$0xff]
        %v362 = vld [vmem:[#allocation2 + $0x8] sm:$0xff]
        %v363 = vlaneseq
        %v364 = vshrl.u32 %v363, 7
        %v365 = vsub.s32 0, %v364
        %v366 = vrot.slane %v360, %v365
        %v367 = vmul.f32 %v361, %v366
        %v368 = vmul.f32 %v362, %v366
        %v369 = vld [vmem:[#allocation2 + $0x1] sm:$0xff]
        %v370 = vld [vmem:[#allocation2 + $0x9] sm:$0xff]
        %v371 = vlaneseq
        %v372 = vshrl.u32 %v371, 7
        %v373 = vsub.s32 1, %v372
        %v374 = vrot.slane %v360, %v373
        %v375 = vmul.f32 %v369, %v374
        %v376 = vmul.f32 %v370, %v374
        %v377 = vadd.f32 %v367, %v375
        %v378 = vadd.f32 %v368, %v376
        %v379 = vld [vmem:[#allocation2 + $0x2] sm:$0xff]
        %v380 = vld [vmem:[#allocation2 + $0xa] sm:$0xff]
        %v381 = vlaneseq
        %v382 = vshrl.u32 %v381, 7
        %v383 = vsub.s32 2, %v382
        %v384 = vrot.slane %v360, %v383
        %v385 = vmul.f32 %v379, %v384
        %v386 = vmul.f32 %v380, %v384
        %v387 = vadd.f32 %v377, %v385
        %v388 = vadd.f32 %v378, %v386
        %v389 = vld [vmem:[#allocation2 + $0x3] sm:$0xff]
        %v390 = vld [vmem:[#allocation2 + $0xb] sm:$0xff]
        %v391 = vlaneseq
        %v392 = vshrl.u32 %v391, 7
        %v393 = vsub.s32 3, %v392
        %v394 = vrot.slane %v360, %v393
        %v395 = vmul.f32 %v389, %v394
        %v396 = vmul.f32 %v390, %v394
        %v397 = vadd.f32 %v387, %v395
        %v398 = vadd.f32 %v388, %v396
        %v399 = vld [vmem:[#allocation2 + $0x4] sm:$0xff]
        %v400 = vld [vmem:[#allocation2 + $0xc] sm:$0xff]
        %v401 = vlaneseq
        %v402 = vshrl.u32 %v401, 7
        %v403 = vsub.s32 4, %v402
        %v404 = vrot.slane %v360, %v403
        %v405 = vmul.f32 %v399, %v404
        %v406 = vmul.f32 %v400, %v404
        %v407 = vadd.f32 %v397, %v405
        %v408 = vadd.f32 %v398, %v406
        %s409 = scalar_lea.vmem [#allocation4], 192
        %v410 = vld [vmem:[%s409] sm:$0xf]
        %v411 = vld [vmem:[%s409 + $0x4] sm:$0xf]
        %v412 = vld [vmem:[%s409 + $0x8] sm:$0xf]
        %v413 = vld [vmem:[%s409 + $0xc] sm:$0xf]
        %v414 = vld [vmem:[%s409 + $0x10] sm:$0xf]
        %v415 = vld [vmem:[%s409 + $0x14] sm:$0xf]
        %v416 = vld [vmem:[%s409 + $0x18] sm:$0xf]
        %v417 = vld [vmem:[%s409 + $0x1c] sm:$0xf]
        %v418 = vld [vmem:[%s409 + $0x20] sm:$0xf]
        %v419 = vld [vmem:[%s409 + $0x24] sm:$0xf]
        %v420 = vld [vmem:[%s409 + $0x28] sm:$0xf]
        %v421 = vld [vmem:[%s409 + $0x2c] sm:$0xf]
        %v422 = vld [vmem:[%s409 + $0x30] sm:$0xf]
        %v423 = vld [vmem:[%s409 + $0x34] sm:$0xf]
        %v424 = vld [vmem:[%s409 + $0x38] sm:$0xf]
        %v425 = vld [vmem:[%s409 + $0x3c] sm:$0xf]
        %s426 = scalar_lea.vmem %s3, 3
        %v427 = vld [vmem:[%s426] sm:$0x1]
        %v428 = vpack.c.bf16 %v408, %v407
        %v430 = vlaneseq
        %v431 = vshrl.u32 %v430, 7
        %v432 = vsub.s32 0, %v431
        %v433 = vrot.slane %v427, %v432
        %v451 = vunpack.c.l.b16 %v410
        %v452 = vunpack.c.l.b16 %v411
        %v453 = vunpack.c.l.b16 %v412
        %v454 = vunpack.c.l.b16 %v413
        %v455 = vunpack.c.l.b16 %v414
        %v456 = vunpack.c.l.b16 %v415
        %v457 = vunpack.c.l.b16 %v416
        %v458 = vunpack.c.l.b16 %v417
        %v459 = vunpack.c.l.b16 %v418
        %v460 = vunpack.c.l.b16 %v419
        %v461 = vunpack.c.l.b16 %v420
        %v462 = vunpack.c.l.b16 %v421
        %v463 = vunpack.c.l.b16 %v422
        %v464 = vunpack.c.l.b16 %v423
        %v465 = vunpack.c.l.b16 %v424
        %v466 = vunpack.c.l.b16 %v425
        %v467 = vpack.c.b16 %v452, %v451
        %v468 = vpack.c.b16 %v454, %v453
        %v469 = vpack.c.b16 %v456, %v455
        %v470 = vpack.c.b16 %v458, %v457
        %v471 = vpack.c.b16 %v460, %v459
        %v472 = vpack.c.b16 %v462, %v461
        %v473 = vpack.c.b16 %v464, %v463
        %v474 = vpack.c.b16 %v466, %v465
        %483 = vmatprep.subr.bf16.mxu0 0
        %484 = vmatpush1.bf16.msra.mxu0 %v474
        %485 = vmatprep.subr.bf16.mxu0 0
        %486 = vmatpush1.bf16.msra.mxu0 %v473
        %487 = vmatprep.subr.bf16.mxu0 0
        %488 = vmatpush1.bf16.msra.mxu0 %v472
        %489 = vmatprep.subr.bf16.mxu0 0
        %490 = vmatpush1.bf16.msra.mxu0 %v471
        %491 = vmatprep.subr.bf16.mxu0 0
        %492 = vmatpush1.bf16.msra.mxu0 %v470
        %493 = vmatprep.subr.bf16.mxu0 0
        %494 = vmatpush1.bf16.msra.mxu0 %v469
        %495 = vmatprep.subr.bf16.mxu0 0
        %496 = vmatpush1.bf16.msra.mxu0 %v468
        %497 = vmatprep.subr.bf16.mxu0 0
        %498 = vmatpush1.bf16.msra.mxu0 %v467
        %499 = vmatprep.subr.bf16.mxu0 0
        %500 = vmatpush2.bf16.msra.mxu0 0
        %501 = vmatprep.subr.bf16.mxu0 0
        %502 = vmatpush2.bf16.msra.mxu0 0
        %503 = vmatprep.subr.bf16.mxu0 0
        %504 = vmatpush2.bf16.msra.mxu0 0
        %505 = vmatprep.subr.bf16.mxu0 0
        %506 = vmatpush2.bf16.msra.mxu0 0
        %507 = vmatprep.subr.bf16.mxu0 0
        %508 = vmatpush2.bf16.msra.mxu0 0
        %509 = vmatprep.subr.bf16.mxu0 0
        %510 = vmatpush2.bf16.msra.mxu0 0
        %511 = vmatprep.subr.bf16.mxu0 0
        %512 = vmatpush2.bf16.msra.mxu0 0
        %513 = vmatprep.subr.bf16.mxu0 0
        %514 = vmatpush2.bf16.msra.mxu0 0
        %515 = vmatprep.mubr.bf16.mxu0 0
        %516 = vmatmul.mubr.bf16.gmra.mxu0 %v428
        %v517 = vpop.f32.mrf.mxu0
        %v518 = vadd.f32 %v433, %v517
        %v519 = vpop.f32.mrf.mxu0
        %v520 = vpop.f32.mrf.mxu0
        %v521 = vadd.f32 %v433, %v520
        %v522 = vpop.f32.mrf.mxu0
        %523 = vdwg.mxu0
        %524 = vst [vmem:[#allocation3] sm:$0xff] %v518
        %525 = vst [vmem:[#allocation3 + $0x8] sm:$0xff] %v521
        %v526 = vld [vmem:[%s1] sm:$0x1f]
        %v527 = vld [vmem:[#allocation2] sm:$0xff]
        %v528 = vld [vmem:[#allocation2 + $0x8] sm:$0xff]
        %v529 = vlaneseq
        %v530 = vshrl.u32 %v529, 7
        %v531 = vsub.s32 0, %v530
        %v532 = vrot.slane %v526, %v531
        %v533 = vmul.f32 %v527, %v532
        %v534 = vmul.f32 %v528, %v532
        %v535 = vld [vmem:[#allocation2 + $0x1] sm:$0xff]
        %v536 = vld [vmem:[#allocation2 + $0x9] sm:$0xff]
        %v537 = vlaneseq
        %v538 = vshrl.u32 %v537, 7
        %v539 = vsub.s32 1, %v538
        %v540 = vrot.slane %v526, %v539
        %v541 = vmul.f32 %v535, %v540
        %v542 = vmul.f32 %v536, %v540
        %v543 = vadd.f32 %v533, %v541
        %v544 = vadd.f32 %v534, %v542
        %v545 = vld [vmem:[#allocation2 + $0x2] sm:$0xff]
        %v546 = vld [vmem:[#allocation2 + $0xa] sm:$0xff]
        %v547 = vlaneseq
        %v548 = vshrl.u32 %v547, 7
        %v549 = vsub.s32 2, %v548
        %v550 = vrot.slane %v526, %v549
        %v551 = vmul.f32 %v545, %v550
        %v552 = vmul.f32 %v546, %v550
        %v553 = vadd.f32 %v543, %v551
        %v554 = vadd.f32 %v544, %v552
        %v555 = vld [vmem:[#allocation2 + $0x3] sm:$0xff]
        %v556 = vld [vmem:[#allocation2 + $0xb] sm:$0xff]
        %v557 = vlaneseq
        %v558 = vshrl.u32 %v557, 7
        %v559 = vsub.s32 3, %v558
        %v560 = vrot.slane %v526, %v559
        %v561 = vmul.f32 %v555, %v560
        %v562 = vmul.f32 %v556, %v560
        %v563 = vadd.f32 %v553, %v561
        %v564 = vadd.f32 %v554, %v562
        %v565 = vld [vmem:[#allocation2 + $0x4] sm:$0xff]
        %v566 = vld [vmem:[#allocation2 + $0xc] sm:$0xff]
        %v567 = vlaneseq
        %v568 = vshrl.u32 %v567, 7
        %v569 = vsub.s32 4, %v568
        %v570 = vrot.slane %v526, %v569
        %v571 = vmul.f32 %v565, %v570
        %v572 = vmul.f32 %v566, %v570
        %v573 = vadd.f32 %v563, %v571
        %v574 = vadd.f32 %v564, %v572
        %v575 = vld [vmem:[#allocation4] sm:$0xf]
        %v576 = vld [vmem:[#allocation4 + $0x4] sm:$0xf]
        %v577 = vld [vmem:[#allocation4 + $0x8] sm:$0xf]
        %v578 = vld [vmem:[#allocation4 + $0xc] sm:$0xf]
        %v579 = vld [vmem:[#allocation4 + $0x10] sm:$0xf]
        %v580 = vld [vmem:[#allocation4 + $0x14] sm:$0xf]
        %v581 = vld [vmem:[#allocation4 + $0x18] sm:$0xf]
        %v582 = vld [vmem:[#allocation4 + $0x1c] sm:$0xf]
        %v583 = vld [vmem:[#allocation4 + $0x20] sm:$0xf]
        %v584 = vld [vmem:[#allocation4 + $0x24] sm:$0xf]
        %v585 = vld [vmem:[#allocation4 + $0x28] sm:$0xf]
        %v586 = vld [vmem:[#allocation4 + $0x2c] sm:$0xf]
        %v587 = vld [vmem:[#allocation4 + $0x30] sm:$0xf]
        %v588 = vld [vmem:[#allocation4 + $0x34] sm:$0xf]
        %v589 = vld [vmem:[#allocation4 + $0x38] sm:$0xf]
        %v590 = vld [vmem:[#allocation4 + $0x3c] sm:$0xf]
        %v591 = vld [vmem:[%s3] sm:$0x1]
        %v592 = vpack.c.bf16 %v574, %v573
        %v594 = vlaneseq
        %v595 = vshrl.u32 %v594, 7
        %v596 = vsub.s32 0, %v595
        %v597 = vrot.slane %v591, %v596
        %v615 = vunpack.c.l.b16 %v575
        %v616 = vunpack.c.l.b16 %v576
        %v617 = vunpack.c.l.b16 %v577
        %v618 = vunpack.c.l.b16 %v578
        %v619 = vunpack.c.l.b16 %v579
        %v620 = vunpack.c.l.b16 %v580
        %v621 = vunpack.c.l.b16 %v581
        %v622 = vunpack.c.l.b16 %v582
        %v623 = vunpack.c.l.b16 %v583
        %v624 = vunpack.c.l.b16 %v584
        %v625 = vunpack.c.l.b16 %v585
        %v626 = vunpack.c.l.b16 %v586
        %v627 = vunpack.c.l.b16 %v587
        %v628 = vunpack.c.l.b16 %v588
        %v629 = vunpack.c.l.b16 %v589
        %v630 = vunpack.c.l.b16 %v590
        %v631 = vpack.c.b16 %v616, %v615
        %v632 = vpack.c.b16 %v618, %v617
        %v633 = vpack.c.b16 %v620, %v619
        %v634 = vpack.c.b16 %v622, %v621
        %v635 = vpack.c.b16 %v624, %v623
        %v636 = vpack.c.b16 %v626, %v625
        %v637 = vpack.c.b16 %v628, %v627
        %v638 = vpack.c.b16 %v630, %v629
        %647 = vmatprep.subr.bf16.mxu0 0
        %648 = vmatpush1.bf16.msra.mxu0 %v638
        %649 = vmatprep.subr.bf16.mxu0 0
        %650 = vmatpush1.bf16.msra.mxu0 %v637
        %651 = vmatprep.subr.bf16.mxu0 0
        %652 = vmatpush1.bf16.msra.mxu0 %v636
        %653 = vmatprep.subr.bf16.mxu0 0
        %654 = vmatpush1.bf16.msra.mxu0 %v635
        %655 = vmatprep.subr.bf16.mxu0 0
        %656 = vmatpush1.bf16.msra.mxu0 %v634
        %657 = vmatprep.subr.bf16.mxu0 0
        %658 = vmatpush1.bf16.msra.mxu0 %v633
        %659 = vmatprep.subr.bf16.mxu0 0
        %660 = vmatpush1.bf16.msra.mxu0 %v632
        %661 = vmatprep.subr.bf16.mxu0 0
        %662 = vmatpush1.bf16.msra.mxu0 %v631
        %663 = vmatprep.subr.bf16.mxu0 0
        %664 = vmatpush2.bf16.msra.mxu0 0
        %665 = vmatprep.subr.bf16.mxu0 0
        %666 = vmatpush2.bf16.msra.mxu0 0
        %667 = vmatprep.subr.bf16.mxu0 0
        %668 = vmatpush2.bf16.msra.mxu0 0
        %669 = vmatprep.subr.bf16.mxu0 0
        %670 = vmatpush2.bf16.msra.mxu0 0
        %671 = vmatprep.subr.bf16.mxu0 0
        %672 = vmatpush2.bf16.msra.mxu0 0
        %673 = vmatprep.subr.bf16.mxu0 0
        %674 = vmatpush2.bf16.msra.mxu0 0
        %675 = vmatprep.subr.bf16.mxu0 0
        %676 = vmatpush2.bf16.msra.mxu0 0
        %677 = vmatprep.subr.bf16.mxu0 0
        %678 = vmatpush2.bf16.msra.mxu0 0
        %679 = vmatprep.mubr.bf16.mxu0 0
        %680 = vmatmul.mubr.bf16.gmra.mxu0 %v592
        %v681 = vpop.f32.mrf.mxu0
        %v682 = vadd.f32 %v597, %v681
        %v683 = vpop.f32.mrf.mxu0
        %v684 = vpop.f32.mrf.mxu0
        %v685 = vadd.f32 %v597, %v684
        %v686 = vpop.f32.mrf.mxu0
        %687 = vdwg.mxu0
        %v688 = vxor.u32 %v682, 2147483648
        %v689 = vxor.u32 %v685, 2147483648
        %v690 = vmul.f32 %v688, 1.442695
        %v691 = vpow.pop %v690
        %v692 = vmul.f32 %v689, 1.442695
        %v693 = vpow.pop %v692
        %v694 = vadd.f32 %v691, 1.0
        %v695 = vadd.f32 %v693, 1.0
        %v696 = vrcp.pop %v694
        %v697 = vmul.f32 1.0, %v696
        %v698 = vrcp.pop %v695
        %v699 = vmul.f32 1.0, %v698
        %v700 = vmul.f32 %v682, %v697
        %v701 = vmul.f32 %v685, %v699
        %702 = vst [vmem:[#allocation2 + $0x2] sm:$0xff] %v700
        %703 = vst [vmem:[#allocation2 + $0xa] sm:$0xff] %v701
        %s704 = scalar_lea.vmem %s1, 8
        %v705 = vld [vmem:[%s704] sm:$0x1f]
        %v706 = vld [vmem:[#allocation2] sm:$0xff]
        %v707 = vld [vmem:[#allocation2 + $0x8] sm:$0xff]
        %v708 = vlaneseq
        %v709 = vshrl.u32 %v708, 7
        %v710 = vsub.s32 0, %v709
        %v711 = vrot.slane %v705, %v710
        %v712 = vmul.f32 %v706, %v711
        %v713 = vmul.f32 %v707, %v711
        %v714 = vld [vmem:[#allocation2 + $0x1] sm:$0xff]
        %v715 = vld [vmem:[#allocation2 + $0x9] sm:$0xff]
        %v716 = vlaneseq
        %v717 = vshrl.u32 %v716, 7
        %v718 = vsub.s32 1, %v717
        %v719 = vrot.slane %v705, %v718
        %v720 = vmul.f32 %v714, %v719
        %v721 = vmul.f32 %v715, %v719
        %v722 = vadd.f32 %v712, %v720
        %v723 = vadd.f32 %v713, %v721
        %v724 = vld [vmem:[#allocation2 + $0x2] sm:$0xff]
        %v725 = vld [vmem:[#allocation2 + $0xa] sm:$0xff]
        %v726 = vlaneseq
        %v727 = vshrl.u32 %v726, 7
        %v728 = vsub.s32 2, %v727
        %v729 = vrot.slane %v705, %v728
        %v730 = vmul.f32 %v724, %v729
        %v731 = vmul.f32 %v725, %v729
        %v732 = vadd.f32 %v722, %v730
        %v733 = vadd.f32 %v723, %v731
        %v734 = vld [vmem:[#allocation2 + $0x3] sm:$0xff]
        %v735 = vld [vmem:[#allocation2 + $0xb] sm:$0xff]
        %v736 = vlaneseq
        %v737 = vshrl.u32 %v736, 7
        %v738 = vsub.s32 3, %v737
        %v739 = vrot.slane %v705, %v738
        %v740 = vmul.f32 %v734, %v739
        %v741 = vmul.f32 %v735, %v739
        %v742 = vadd.f32 %v732, %v740
        %v743 = vadd.f32 %v733, %v741
        %v744 = vld [vmem:[#allocation2 + $0x4] sm:$0xff]
        %v745 = vld [vmem:[#allocation2 + $0xc] sm:$0xff]
        %v746 = vlaneseq
        %v747 = vshrl.u32 %v746, 7
        %v748 = vsub.s32 4, %v747
        %v749 = vrot.slane %v705, %v748
        %v750 = vmul.f32 %v744, %v749
        %v751 = vmul.f32 %v745, %v749
        %v752 = vadd.f32 %v742, %v750
        %v753 = vadd.f32 %v743, %v751
        %s754 = scalar_lea.vmem [#allocation4], 64
        %v755 = vld [vmem:[%s754] sm:$0xf]
        %v756 = vld [vmem:[%s754 + $0x4] sm:$0xf]
        %v757 = vld [vmem:[%s754 + $0x8] sm:$0xf]
        %v758 = vld [vmem:[%s754 + $0xc] sm:$0xf]
        %v759 = vld [vmem:[%s754 + $0x10] sm:$0xf]
        %v760 = vld [vmem:[%s754 + $0x14] sm:$0xf]
        %v761 = vld [vmem:[%s754 + $0x18] sm:$0xf]
        %v762 = vld [vmem:[%s754 + $0x1c] sm:$0xf]
        %v763 = vld [vmem:[%s754 + $0x20] sm:$0xf]
        %v764 = vld [vmem:[%s754 + $0x24] sm:$0xf]
        %v765 = vld [vmem:[%s754 + $0x28] sm:$0xf]
        %v766 = vld [vmem:[%s754 + $0x2c] sm:$0xf]
        %v767 = vld [vmem:[%s754 + $0x30] sm:$0xf]
        %v768 = vld [vmem:[%s754 + $0x34] sm:$0xf]
        %v769 = vld [vmem:[%s754 + $0x38] sm:$0xf]
        %v770 = vld [vmem:[%s754 + $0x3c] sm:$0xf]
        %s771 = scalar_lea.vmem %s3, 1
        %v772 = vld [vmem:[%s771] sm:$0x1]
        %v773 = vpack.c.bf16 %v753, %v752
        %v775 = vlaneseq
        %v776 = vshrl.u32 %v775, 7
        %v777 = vsub.s32 0, %v776
        %v778 = vrot.slane %v772, %v777
        %v796 = vunpack.c.l.b16 %v755
        %v797 = vunpack.c.l.b16 %v756
        %v798 = vunpack.c.l.b16 %v757
        %v799 = vunpack.c.l.b16 %v758
        %v800 = vunpack.c.l.b16 %v759
        %v801 = vunpack.c.l.b16 %v760
        %v802 = vunpack.c.l.b16 %v761
        %v803 = vunpack.c.l.b16 %v762
        %v804 = vunpack.c.l.b16 %v763
        %v805 = vunpack.c.l.b16 %v764
        %v806 = vunpack.c.l.b16 %v765
        %v807 = vunpack.c.l.b16 %v766
        %v808 = vunpack.c.l.b16 %v767
        %v809 = vunpack.c.l.b16 %v768
        %v810 = vunpack.c.l.b16 %v769
        %v811 = vunpack.c.l.b16 %v770
        %v812 = vpack.c.b16 %v797, %v796
        %v813 = vpack.c.b16 %v799, %v798
        %v814 = vpack.c.b16 %v801, %v800
        %v815 = vpack.c.b16 %v803, %v802
        %v816 = vpack.c.b16 %v805, %v804
        %v817 = vpack.c.b16 %v807, %v806
        %v818 = vpack.c.b16 %v809, %v808
        %v819 = vpack.c.b16 %v811, %v810
        %828 = vmatprep.subr.bf16.mxu0 0
        %829 = vmatpush1.bf16.msra.mxu0 %v819
        %830 = vmatprep.subr.bf16.mxu0 0
        %831 = vmatpush1.bf16.msra.mxu0 %v818
        %832 = vmatprep.subr.bf16.mxu0 0
        %833 = vmatpush1.bf16.msra.mxu0 %v817
        %834 = vmatprep.subr.bf16.mxu0 0
        %835 = vmatpush1.bf16.msra.mxu0 %v816
        %836 = vmatprep.subr.bf16.mxu0 0
        %837 = vmatpush1.bf16.msra.mxu0 %v815
        %838 = vmatprep.subr.bf16.mxu0 0
        %839 = vmatpush1.bf16.msra.mxu0 %v814
        %840 = vmatprep.subr.bf16.mxu0 0
        %841 = vmatpush1.bf16.msra.mxu0 %v813
        %842 = vmatprep.subr.bf16.mxu0 0
        %843 = vmatpush1.bf16.msra.mxu0 %v812
        %844 = vmatprep.subr.bf16.mxu0 0
        %845 = vmatpush2.bf16.msra.mxu0 0
        %846 = vmatprep.subr.bf16.mxu0 0
        %847 = vmatpush2.bf16.msra.mxu0 0
        %848 = vmatprep.subr.bf16.mxu0 0
        %849 = vmatpush2.bf16.msra.mxu0 0
        %850 = vmatprep.subr.bf16.mxu0 0
        %851 = vmatpush2.bf16.msra.mxu0 0
        %852 = vmatprep.subr.bf16.mxu0 0
        %853 = vmatpush2.bf16.msra.mxu0 0
        %854 = vmatprep.subr.bf16.mxu0 0
        %855 = vmatpush2.bf16.msra.mxu0 0
        %856 = vmatprep.subr.bf16.mxu0 0
        %857 = vmatpush2.bf16.msra.mxu0 0
        %858 = vmatprep.subr.bf16.mxu0 0
        %859 = vmatpush2.bf16.msra.mxu0 0
        %860 = vmatprep.mubr.bf16.mxu0 0
        %861 = vmatmul.mubr.bf16.gmra.mxu0 %v773
        %v862 = vpop.f32.mrf.mxu0
        %v863 = vadd.f32 %v778, %v862
        %v864 = vpop.f32.mrf.mxu0
        %v865 = vpop.f32.mrf.mxu0
        %v866 = vadd.f32 %v778, %v865
        %v867 = vpop.f32.mrf.mxu0
        %868 = vdwg.mxu0
        %v869 = vxor.u32 %v863, 2147483648
        %v870 = vxor.u32 %v866, 2147483648
        %v871 = vmul.f32 %v869, 1.442695
        %v872 = vpow.pop %v871
        %v873 = vmul.f32 %v870, 1.442695
        %v874 = vpow.pop %v873
        %v875 = vadd.f32 %v872, 1.0
        %v876 = vadd.f32 %v874, 1.0
        %v877 = vrcp.pop %v875
        %v878 = vmul.f32 1.0, %v877
        %v879 = vrcp.pop %v876
        %v880 = vmul.f32 1.0, %v879
        %v881 = vmul.f32 %v863, %v878
        %v882 = vmul.f32 %v866, %v880
        %883 = vst [vmem:[#allocation2 + $0x2] sm:$0xff] %v881
        %884 = vst [vmem:[#allocation2 + $0xa] sm:$0xff] %v882
        %s885 = scalar_lea.vmem %s1, 16
        %v886 = vld [vmem:[%s885] sm:$0x1f]
        %v887 = vld [vmem:[#allocation2] sm:$0xff]
        %v888 = vld [vmem:[#allocation2 + $0x8] sm:$0xff]
        %v889 = vlaneseq
        %v890 = vshrl.u32 %v889, 7
        %v891 = vsub.s32 0, %v890
        %v892 = vrot.slane %v886, %v891
        %v893 = vmul.f32 %v887, %v892
        %v894 = vmul.f32 %v888, %v892
        %v895 = vld [vmem:[#allocation2 + $0x1] sm:$0xff]
        %v896 = vld [vmem:[#allocation2 + $0x9] sm:$0xff]
        %v897 = vlaneseq
        %v898 = vshrl.u32 %v897, 7
        %v899 = vsub.s32 1, %v898
        %v900 = vrot.slane %v886, %v899
        %v901 = vmul.f32 %v895, %v900
        %v902 = vmul.f32 %v896, %v900
        %v903 = vadd.f32 %v893, %v901
        %v904 = vadd.f32 %v894, %v902
        %v905 = vld [vmem:[#allocation2 + $0x2] sm:$0xff]
        %v906 = vld [vmem:[#allocation2 + $0xa] sm:$0xff]
        %v907 = vlaneseq
        %v908 = vshrl.u32 %v907, 7
        %v909 = vsub.s32 2, %v908
        %v910 = vrot.slane %v886, %v909
        %v911 = vmul.f32 %v905, %v910
        %v912 = vmul.f32 %v906, %v910
        %v913 = vadd.f32 %v903, %v911
        %v914 = vadd.f32 %v904, %v912
        %v915 = vld [vmem:[#allocation2 + $0x3] sm:$0xff]
        %v916 = vld [vmem:[#allocation2 + $0xb] sm:$0xff]
        %v917 = vlaneseq
        %v918 = vshrl.u32 %v917, 7
        %v919 = vsub.s32 3, %v918
        %v920 = vrot.slane %v886, %v919
        %v921 = vmul.f32 %v915, %v920
        %v922 = vmul.f32 %v916, %v920
        %v923 = vadd.f32 %v913, %v921
        %v924 = vadd.f32 %v914, %v922
        %v925 = vld [vmem:[#allocation2 + $0x4] sm:$0xff]
        %v926 = vld [vmem:[#allocation2 + $0xc] sm:$0xff]
        %v927 = vlaneseq
        %v928 = vshrl.u32 %v927, 7
        %v929 = vsub.s32 4, %v928
        %v930 = vrot.slane %v886, %v929
        %v931 = vmul.f32 %v925, %v930
        %v932 = vmul.f32 %v926, %v930
        %v933 = vadd.f32 %v923, %v931
        %v934 = vadd.f32 %v924, %v932
        %s935 = scalar_lea.vmem [#allocation4], 128
        %v936 = vld [vmem:[%s935] sm:$0xf]
        %v937 = vld [vmem:[%s935 + $0x4] sm:$0xf]
        %v938 = vld [vmem:[%s935 + $0x8] sm:$0xf]
        %v939 = vld [vmem:[%s935 + $0xc] sm:$0xf]
        %v940 = vld [vmem:[%s935 + $0x10] sm:$0xf]
        %v941 = vld [vmem:[%s935 + $0x14] sm:$0xf]
        %v942 = vld [vmem:[%s935 + $0x18] sm:$0xf]
        %v943 = vld [vmem:[%s935 + $0x1c] sm:$0xf]
        %v944 = vld [vmem:[%s935 + $0x20] sm:$0xf]
        %v945 = vld [vmem:[%s935 + $0x24] sm:$0xf]
        %v946 = vld [vmem:[%s935 + $0x28] sm:$0xf]
        %v947 = vld [vmem:[%s935 + $0x2c] sm:$0xf]
        %v948 = vld [vmem:[%s935 + $0x30] sm:$0xf]
        %v949 = vld [vmem:[%s935 + $0x34] sm:$0xf]
        %v950 = vld [vmem:[%s935 + $0x38] sm:$0xf]
        %v951 = vld [vmem:[%s935 + $0x3c] sm:$0xf]
        %s952 = scalar_lea.vmem %s3, 2
        %v953 = vld [vmem:[%s952] sm:$0x1]
        %v954 = vpack.c.bf16 %v934, %v933
        %v956 = vlaneseq
        %v957 = vshrl.u32 %v956, 7
        %v958 = vsub.s32 0, %v957
        %v959 = vrot.slane %v953, %v958
        %v977 = vunpack.c.l.b16 %v936
        %v978 = vunpack.c.l.b16 %v937
        %v979 = vunpack.c.l.b16 %v938
        %v980 = vunpack.c.l.b16 %v939
        %v981 = vunpack.c.l.b16 %v940
        %v982 = vunpack.c.l.b16 %v941
        %v983 = vunpack.c.l.b16 %v942
        %v984 = vunpack.c.l.b16 %v943
        %v985 = vunpack.c.l.b16 %v944
        %v986 = vunpack.c.l.b16 %v945
        %v987 = vunpack.c.l.b16 %v946
        %v988 = vunpack.c.l.b16 %v947
        %v989 = vunpack.c.l.b16 %v948
        %v990 = vunpack.c.l.b16 %v949
        %v991 = vunpack.c.l.b16 %v950
        %v992 = vunpack.c.l.b16 %v951
        %v993 = vpack.c.b16 %v978, %v977
        %v994 = vpack.c.b16 %v980, %v979
        %v995 = vpack.c.b16 %v982, %v981
        %v996 = vpack.c.b16 %v984, %v983
        %v997 = vpack.c.b16 %v986, %v985
        %v998 = vpack.c.b16 %v988, %v987
        %v999 = vpack.c.b16 %v990, %v989
        %v1000 = vpack.c.b16 %v992, %v991
        %1009 = vmatprep.subr.bf16.mxu0 0
        %1010 = vmatpush1.bf16.msra.mxu0 %v1000
        %1011 = vmatprep.subr.bf16.mxu0 0
        %1012 = vmatpush1.bf16.msra.mxu0 %v999
        %1013 = vmatprep.subr.bf16.mxu0 0
        %1014 = vmatpush1.bf16.msra.mxu0 %v998
        %1015 = vmatprep.subr.bf16.mxu0 0
        %1016 = vmatpush1.bf16.msra.mxu0 %v997
        %1017 = vmatprep.subr.bf16.mxu0 0
        %1018 = vmatpush1.bf16.msra.mxu0 %v996
        %1019 = vmatprep.subr.bf16.mxu0 0
        %1020 = vmatpush1.bf16.msra.mxu0 %v995
        %1021 = vmatprep.subr.bf16.mxu0 0
        %1022 = vmatpush1.bf16.msra.mxu0 %v994
        %1023 = vmatprep.subr.bf16.mxu0 0
        %1024 = vmatpush1.bf16.msra.mxu0 %v993
        %1025 = vmatprep.subr.bf16.mxu0 0
        %1026 = vmatpush2.bf16.msra.mxu0 0
        %1027 = vmatprep.subr.bf16.mxu0 0
        %1028 = vmatpush2.bf16.msra.mxu0 0
        %1029 = vmatprep.subr.bf16.mxu0 0
        %1030 = vmatpush2.bf16.msra.mxu0 0
        %1031 = vmatprep.subr.bf16.mxu0 0
        %1032 = vmatpush2.bf16.msra.mxu0 0
        %1033 = vmatprep.subr.bf16.mxu0 0
        %1034 = vmatpush2.bf16.msra.mxu0 0
        %1035 = vmatprep.subr.bf16.mxu0 0
        %1036 = vmatpush2.bf16.msra.mxu0 0
        %1037 = vmatprep.subr.bf16.mxu0 0
        %1038 = vmatpush2.bf16.msra.mxu0 0
        %1039 = vmatprep.subr.bf16.mxu0 0
        %1040 = vmatpush2.bf16.msra.mxu0 0
        %1041 = vmatprep.mubr.bf16.mxu0 0
        %1042 = vmatmul.mubr.bf16.gmra.mxu0 %v954
        %v1043 = vpop.f32.mrf.mxu0
        %v1044 = vadd.f32 %v959, %v1043
        %v1045 = vpop.f32.mrf.mxu0
        %v1046 = vpop.f32.mrf.mxu0
        %v1047 = vadd.f32 %v959, %v1046
        %v1048 = vpop.f32.mrf.mxu0
        %1049 = vdwg.mxu0
        %v1050 = vxor.u32 %v1044, 2147483648
        %v1051 = vxor.u32 %v1047, 2147483648
        %v1052 = vmul.f32 %v1050, 1.442695
        %v1053 = vpow.pop %v1052
        %v1054 = vmul.f32 %v1051, 1.442695
        %v1055 = vpow.pop %v1054
        %v1056 = vadd.f32 %v1053, 1.0
        %v1057 = vadd.f32 %v1055, 1.0
        %v1058 = vrcp.pop %v1056
        %v1059 = vmul.f32 1.0, %v1058
        %v1060 = vrcp.pop %v1057
        %v1061 = vmul.f32 1.0, %v1060
        %v1062 = vmul.f32 %v1044, %v1059
        %v1063 = vmul.f32 %v1047, %v1061
        %1064 = vst [vmem:[#allocation2 + $0x2] sm:$0xff] %v1062
        %1065 = vst [vmem:[#allocation2 + $0xa] sm:$0xff] %v1063
        %v1066 = vld [vmem:[#allocation2 + $0x2] sm:$0xff]
        %v1067 = vld [vmem:[#allocation2 + $0xa] sm:$0xff]
        %vm1068 = vcmask 130048
        %v1070 = vsel %vm1068, 0.0625, 0
        %1072 = vmatprep.subr.mxu0 0.0
        %1073 = vmatpush1.msra.mxu0 0.0
        %1074 = vmatprep.subr.mxu0 0.0
        %1075 = vmatpush1.msra.mxu0 0.0
        %1076 = vmatprep.subr.mxu0 0.0
        %1077 = vmatpush1.msra.mxu0 0.0
        %1078 = vmatprep.subr.mxu0 0.0
        %1079 = vmatpush1.msra.mxu0 0.0
        %1080 = vmatprep.subr.mxu0 0.0
        %1081 = vmatpush1.msra.mxu0 0.0
        %1082 = vmatprep.subr.mxu0 0.0
        %1083 = vmatpush1.msra.mxu0 0.0
        %1084 = vmatprep.subr.mxu0 0.0
        %1085 = vmatpush1.msra.mxu0 0.0
        %1086 = vmatprep.subr.mxu0 0.0
        %1087 = vmatpush1.msra.mxu0 0.0
        %1088 = vmatprep.subr.mxu0 0.0
        %1089 = vmatpush1.msra.mxu0 0.0
        %1090 = vmatprep.subr.mxu0 0.0
        %1091 = vmatpush1.msra.mxu0 0.0
        %1092 = vmatprep.subr.mxu0 0.0
        %1093 = vmatpush1.msra.mxu0 0.0
        %1094 = vmatprep.subr.mxu0 0.0
        %1095 = vmatpush1.msra.mxu0 0.0
        %1096 = vmatprep.subr.mxu0 0.0
        %1097 = vmatpush1.msra.mxu0 0.0
        %1098 = vmatprep.subr.mxu0 0.0
        %1099 = vmatpush1.msra.mxu0 0.0
        %1100 = vmatprep.subr.mxu0 0.0
        %1101 = vmatpush1.msra.mxu0 %v1067
        %1102 = vmatprep.subr.mxu0 0.0
        %1103 = vmatpush1.msra.mxu0 %v1066
        %1104 = vmatprep.subr.mxu0 0.0
        %1105 = vmatpush2.msra.mxu0 0.0
        %1106 = vmatprep.subr.mxu0 0.0
        %1107 = vmatpush2.msra.mxu0 0.0
        %1108 = vmatprep.subr.mxu0 0.0
        %1109 = vmatpush2.msra.mxu0 0.0
        %1110 = vmatprep.subr.mxu0 0.0
        %1111 = vmatpush2.msra.mxu0 0.0
        %1112 = vmatprep.subr.mxu0 0.0
        %1113 = vmatpush2.msra.mxu0 0.0
        %1114 = vmatprep.subr.mxu0 0.0
        %1115 = vmatpush2.msra.mxu0 0.0
        %1116 = vmatprep.subr.mxu0 0.0
        %1117 = vmatpush2.msra.mxu0 0.0
        %1118 = vmatprep.subr.mxu0 0.0
        %1119 = vmatpush2.msra.mxu0 0.0
        %1120 = vmatprep.subr.mxu0 0.0
        %1121 = vmatpush2.msra.mxu0 0.0
        %1122 = vmatprep.subr.mxu0 0.0
        %1123 = vmatpush2.msra.mxu0 0.0
        %1124 = vmatprep.subr.mxu0 0.0
        %1125 = vmatpush2.msra.mxu0 0.0
        %1126 = vmatprep.subr.mxu0 0.0
        %1127 = vmatpush2.msra.mxu0 0.0
        %1128 = vmatprep.subr.mxu0 0.0
        %1129 = vmatpush2.msra.mxu0 0.0
        %1130 = vmatprep.subr.mxu0 0.0
        %1131 = vmatpush2.msra.mxu0 0.0
        %1132 = vmatprep.subr.mxu0 0.0
        %1133 = vmatpush2.msra.mxu0 0.0
        %1134 = vmatprep.subr.mxu0 0.0
        %1135 = vmatpush2.msra.mxu0 0.0
        %1136 = vmatprep.mubr.f32.mxu0 0.0
        %1137 = vmatmul.mubr.f32.gmra.mxu0 %v1070
        %v1138 = vpop.f32.mrf.mxu0
        %v1139 = vadd.f32 0.0, %v1138
        %v1140 = vpop.f32.mrf.mxu0
        %1141 = vdwg.mxu0
        %v1142 = vld [vmem:[#allocation6] sm:$0xff]
        %v1143 = vld [vmem:[#allocation6 + $0x8] sm:$0xff]
        %v1144 = vld [vmem:[#allocation6 + $0x10] sm:$0xff]
        %v1145 = vld [vmem:[#allocation6 + $0x18] sm:$0xff]
        %v1146 = vld [vmem:[#allocation6 + $0x20] sm:$0xff]
        %v1147 = vld [vmem:[#allocation6 + $0x28] sm:$0xff]
        %v1148 = vld [vmem:[#allocation6 + $0x30] sm:$0xff]
        %v1149 = vld [vmem:[#allocation6 + $0x38] sm:$0xff]
        %v1150 = vld [vmem:[#allocation6 + $0x40] sm:$0xff]
        %v1151 = vld [vmem:[#allocation6 + $0x48] sm:$0xff]
        %v1152 = vld [vmem:[#allocation6 + $0x50] sm:$0xff]
        %v1153 = vld [vmem:[#allocation6 + $0x58] sm:$0xff]
        %v1154 = vld [vmem:[#allocation6 + $0x60] sm:$0xff]
        %v1155 = vld [vmem:[#allocation6 + $0x68] sm:$0xff]
        %v1156 = vld [vmem:[#allocation6 + $0x70] sm:$0xff]
        %v1157 = vld [vmem:[#allocation6 + $0x78] sm:$0xff]
        %v1158 = vld [vmem:[%s5] sm:$0x1]
        %1159 = vmatprep.subr.mxu0 0.0
        %1160 = vmatpush1.msra.mxu0 %v1157
        %1161 = vmatprep.subr.mxu0 0.0
        %1162 = vmatpush1.msra.mxu0 %v1156
        %1163 = vmatprep.subr.mxu0 0.0
        %1164 = vmatpush1.msra.mxu0 %v1155
        %1165 = vmatprep.subr.mxu0 0.0
        %1166 = vmatpush1.msra.mxu0 %v1154
        %1167 = vmatprep.subr.mxu0 0.0
        %1168 = vmatpush1.msra.mxu0 %v1153
        %1169 = vmatprep.subr.mxu0 0.0
        %1170 = vmatpush1.msra.mxu0 %v1152
        %1171 = vmatprep.subr.mxu0 0.0
        %1172 = vmatpush1.msra.mxu0 %v1151
        %1173 = vmatprep.subr.mxu0 0.0
        %1174 = vmatpush1.msra.mxu0 %v1150
        %1175 = vmatprep.subr.mxu0 0.0
        %1176 = vmatpush1.msra.mxu0 %v1149
        %1177 = vmatprep.subr.mxu0 0.0
        %1178 = vmatpush1.msra.mxu0 %v1148
        %1179 = vmatprep.subr.mxu0 0.0
        %1180 = vmatpush1.msra.mxu0 %v1147
        %1181 = vmatprep.subr.mxu0 0.0
        %1182 = vmatpush1.msra.mxu0 %v1146
        %1183 = vmatprep.subr.mxu0 0.0
        %1184 = vmatpush1.msra.mxu0 %v1145
        %1185 = vmatprep.subr.mxu0 0.0
        %1186 = vmatpush1.msra.mxu0 %v1144
        %1187 = vmatprep.subr.mxu0 0.0
        %1188 = vmatpush1.msra.mxu0 %v1143
        %1189 = vmatprep.subr.mxu0 0.0
        %1190 = vmatpush1.msra.mxu0 %v1142
        %1191 = vmatprep.subr.mxu0 0.0
        %1192 = vmatpush2.msra.mxu0 0.0
        %1193 = vmatprep.subr.mxu0 0.0
        %1194 = vmatpush2.msra.mxu0 0.0
        %1195 = vmatprep.subr.mxu0 0.0
        %1196 = vmatpush2.msra.mxu0 0.0
        %1197 = vmatprep.subr.mxu0 0.0
        %1198 = vmatpush2.msra.mxu0 0.0
        %1199 = vmatprep.subr.mxu0 0.0
        %1200 = vmatpush2.msra.mxu0 0.0
        %1201 = vmatprep.subr.mxu0 0.0
        %1202 = vmatpush2.msra.mxu0 0.0
        %1203 = vmatprep.subr.mxu0 0.0
        %1204 = vmatpush2.msra.mxu0 0.0
        %1205 = vmatprep.subr.mxu0 0.0
        %1206 = vmatpush2.msra.mxu0 0.0
        %1207 = vmatprep.subr.mxu0 0.0
        %1208 = vmatpush2.msra.mxu0 0.0
        %1209 = vmatprep.subr.mxu0 0.0
        %1210 = vmatpush2.msra.mxu0 0.0
        %1211 = vmatprep.subr.mxu0 0.0
        %1212 = vmatpush2.msra.mxu0 0.0
        %1213 = vmatprep.subr.mxu0 0.0
        %1214 = vmatpush2.msra.mxu0 0.0
        %1215 = vmatprep.subr.mxu0 0.0
        %1216 = vmatpush2.msra.mxu0 0.0
        %1217 = vmatprep.subr.mxu0 0.0
        %1218 = vmatpush2.msra.mxu0 0.0
        %1219 = vmatprep.subr.mxu0 0.0
        %1220 = vmatpush2.msra.mxu0 0.0
        %1221 = vmatprep.subr.mxu0 0.0
        %1222 = vmatpush2.msra.mxu0 0.0
        %1223 = vmatprep.mubr.f32.mxu0 0.0
        %1224 = vmatmul.mubr.f32.gmra.mxu0 %v1139
        %v1225 = vpop.f32.mrf.mxu0
        %v1226 = vadd.f32 %v1158, %v1225
        %v1227 = vpop.f32.mrf.mxu0
        %1228 = vdwg.mxu0
        %v1229 = vxor.u32 %v1226, 2147483648
        %v1230 = vmul.f32 %v1229, 1.442695
        %v1231 = vpow.pop %v1230
        %v1232 = vadd.f32 %v1231, 1.0
        %v1233 = vrcp.pop %v1232
        %v1234 = vmul.f32 1.0, %v1233
        %v1235 = vmul.f32 %v1226, %v1234
        %v1236 = vld [vmem:[#allocation8] sm:$0xff]
        %v1237 = vld [vmem:[#allocation8 + $0x8] sm:$0xff]
        %v1238 = vld [vmem:[#allocation8 + $0x10] sm:$0xff]
        %v1239 = vld [vmem:[#allocation8 + $0x18] sm:$0xff]
        %v1240 = vld [vmem:[#allocation8 + $0x20] sm:$0xff]
        %v1241 = vld [vmem:[#allocation8 + $0x28] sm:$0xff]
        %v1242 = vld [vmem:[#allocation8 + $0x30] sm:$0xff]
        %v1243 = vld [vmem:[#allocation8 + $0x38] sm:$0xff]
        %v1244 = vld [vmem:[#allocation8 + $0x40] sm:$0xff]
        %v1245 = vld [vmem:[#allocation8 + $0x48] sm:$0xff]
        %v1246 = vld [vmem:[#allocation8 + $0x50] sm:$0xff]
        %v1247 = vld [vmem:[#allocation8 + $0x58] sm:$0xff]
        %v1248 = vld [vmem:[#allocation8 + $0x60] sm:$0xff]
        %v1249 = vld [vmem:[#allocation8 + $0x68] sm:$0xff]
        %v1250 = vld [vmem:[#allocation8 + $0x70] sm:$0xff]
        %v1251 = vld [vmem:[#allocation8 + $0x78] sm:$0xff]
        %v1252 = vld [vmem:[%s7] sm:$0x1]
        %1253 = vmatprep.subr.mxu0 0.0
        %1254 = vmatpush1.msra.mxu0 %v1251
        %1255 = vmatprep.subr.mxu0 0.0
        %1256 = vmatpush1.msra.mxu0 %v1250
        %1257 = vmatprep.subr.mxu0 0.0
        %1258 = vmatpush1.msra.mxu0 %v1249
        %1259 = vmatprep.subr.mxu0 0.0
        %1260 = vmatpush1.msra.mxu0 %v1248
        %1261 = vmatprep.subr.mxu0 0.0
        %1262 = vmatpush1.msra.mxu0 %v1247
        %1263 = vmatprep.subr.mxu0 0.0
        %1264 = vmatpush1.msra.mxu0 %v1246
        %1265 = vmatprep.subr.mxu0 0.0
        %1266 = vmatpush1.msra.mxu0 %v1245
        %1267 = vmatprep.subr.mxu0 0.0
        %1268 = vmatpush1.msra.mxu0 %v1244
        %1269 = vmatprep.subr.mxu0 0.0
        %1270 = vmatpush1.msra.mxu0 %v1243
        %1271 = vmatprep.subr.mxu0 0.0
        %1272 = vmatpush1.msra.mxu0 %v1242
        %1273 = vmatprep.subr.mxu0 0.0
        %1274 = vmatpush1.msra.mxu0 %v1241
        %1275 = vmatprep.subr.mxu0 0.0
        %1276 = vmatpush1.msra.mxu0 %v1240
        %1277 = vmatprep.subr.mxu0 0.0
        %1278 = vmatpush1.msra.mxu0 %v1239
        %1279 = vmatprep.subr.mxu0 0.0
        %1280 = vmatpush1.msra.mxu0 %v1238
        %1281 = vmatprep.subr.mxu0 0.0
        %1282 = vmatpush1.msra.mxu0 %v1237
        %1283 = vmatprep.subr.mxu0 0.0
        %1284 = vmatpush1.msra.mxu0 %v1236
        %1285 = vmatprep.subr.mxu0 0.0
        %1286 = vmatpush2.msra.mxu0 0.0
        %1287 = vmatprep.subr.mxu0 0.0
        %1288 = vmatpush2.msra.mxu0 0.0
        %1289 = vmatprep.subr.mxu0 0.0
        %1290 = vmatpush2.msra.mxu0 0.0
        %1291 = vmatprep.subr.mxu0 0.0
        %1292 = vmatpush2.msra.mxu0 0.0
        %1293 = vmatprep.subr.mxu0 0.0
        %1294 = vmatpush2.msra.mxu0 0.0
        %1295 = vmatprep.subr.mxu0 0.0
        %1296 = vmatpush2.msra.mxu0 0.0
        %1297 = vmatprep.subr.mxu0 0.0
        %1298 = vmatpush2.msra.mxu0 0.0
        %1299 = vmatprep.subr.mxu0 0.0
        %1300 = vmatpush2.msra.mxu0 0.0
        %1301 = vmatprep.subr.mxu0 0.0
        %1302 = vmatpush2.msra.mxu0 0.0
        %1303 = vmatprep.subr.mxu0 0.0
        %1304 = vmatpush2.msra.mxu0 0.0
        %1305 = vmatprep.subr.mxu0 0.0
        %1306 = vmatpush2.msra.mxu0 0.0
        %1307 = vmatprep.subr.mxu0 0.0
        %1308 = vmatpush2.msra.mxu0 0.0
        %1309 = vmatprep.subr.mxu0 0.0
        %1310 = vmatpush2.msra.mxu0 0.0
        %1311 = vmatprep.subr.mxu0 0.0
        %1312 = vmatpush2.msra.mxu0 0.0
        %1313 = vmatprep.subr.mxu0 0.0
        %1314 = vmatpush2.msra.mxu0 0.0
        %1315 = vmatprep.subr.mxu0 0.0
        %1316 = vmatpush2.msra.mxu0 0.0
        %1317 = vmatprep.mubr.f32.mxu0 0.0
        %1318 = vmatmul.mubr.f32.gmra.mxu0 %v1235
        %v1319 = vpop.f32.mrf.mxu0
        %v1320 = vadd.f32 %v1252, %v1319
        %v1321 = vpop.f32.mrf.mxu0
        %1322 = vdwg.mxu0
        %v1323 = vxor.u32 %v1320, 2147483648
        %v1324 = vmul.f32 %v1323, 1.442695
        %v1325 = vpow.pop %v1324
        %v1326 = vadd.f32 %v1325, 1.0
        %v1327 = vrcp.pop %v1326
        %v1328 = vmul.f32 1.0, %v1327
        %v1329 = vlaneseq
        %v1330 = vshrl.u32 %v1329, 7
        %v1331 = vsub.s32 0, %v1330
        %v1332 = vrot.slane %v1328, %v1331
        %v1333 = vmul.f32 %v1066, %v1332
        %v1334 = vmul.f32 %v1067, %v1332
        %v1335 = vld [vmem:[#allocation3] sm:$0xff]
        %v1336 = vld [vmem:[#allocation3 + $0x8] sm:$0xff]
        %v1337 = vadd.f32 %v1333, %v1335
        %v1338 = vadd.f32 %v1334, %v1336
        %v1339 = vxor.u32 %v1337, 2147483648
        %v1340 = vxor.u32 %v1338, 2147483648
        %v1341 = vmul.f32 %v1339, 1.442695
        %v1342 = vpow.pop %v1341
        %v1343 = vmul.f32 %v1340, 1.442695
        %v1344 = vpow.pop %v1343
        %v1345 = vadd.f32 %v1342, 1.0
        %v1346 = vadd.f32 %v1344, 1.0
        %v1347 = vrcp.pop %v1345
        %v1348 = vmul.f32 1.0, %v1347
        %v1349 = vrcp.pop %v1346
        %v1350 = vmul.f32 1.0, %v1349
        %v1351 = vmul.f32 %v1337, %v1348
        %v1352 = vmul.f32 %v1338, %v1350
        %1353 = vst.msk [vmem:[%s349] sm:$0xff] %vm356, %v1351
        %1354 = vst.msk [vmem:[%s349 + $0x8] sm:$0xff] %vm356, %v1352
        %p1355 = scmp.lt.s32.totalorder %s21, 1
        %s1356 = scalar_select %p1355, %s21, 1
        %s1357 = smul.addr %s1356, 2
        %s1358 = smul.addr %s1357, 8
        %s1359 = scalar_lea.vmem %s8, %s1358
        // Predicated region
        $region65: #{tpu_custom_call.1} parent=51 // pred_check
          %p1360 = pneg %p212
        $region66: #{tpu_custom_call.1} parent=51 // pred_check_branch
          %1362 = sbr.rel (%p1360) target = $region68
        $region67: #{tpu_custom_call.1} parent=51 // pred_region
          _
        $region68: #{tpu_custom_call.1} parent=51 // pred_fallthru
          _
      $region52: #{tpu_custom_call.1} parent=5 // pred_fallthru
        _
      %p1363 = scmp.le.s32.totalorder 2, %s16
      // Predicated region
      $region69: #{tpu_custom_call.1} parent=5 // pred_check
        %p1364 = pneg %p1363
      $region70: #{tpu_custom_call.1} parent=5 // pred_check_branch
        %1366 = sbr.rel (%p1364) target = $region72
      $region71: #{tpu_custom_call.1} parent=5 // pred_region
        %s1367 = ssub.s32 %s16, 2
        // Predicated region
        $region73: #{tpu_custom_call.1} parent=71 // pred_check
          %p1368 = pneg %p218
        $region74: #{tpu_custom_call.1} parent=71 // pred_check_branch
          %1370 = sbr.rel (%p1368) target = $region76
        $region75: #{tpu_custom_call.1} parent=71 // pred_region
          %p1371 = scmp.lt.s32.totalorder %s22, 1
          %s1372 = scalar_select %p1371, %s22, 1
          %s1373 = smul.addr %s1372, 2
          %s1374 = smul.addr %s1373, 8
          %s1375 = scalar_lea.vmem %s8, %s1374
        $region76: #{tpu_custom_call.1} parent=71 // pred_fallthru
          _
      $region72: #{tpu_custom_call.1} parent=5 // pred_fallthru
        _
    $region6: #{tpu_custom_call.1} parent=1 // loop_footer
      %s20 = sadd.s32 1, %s16
    $region7: #{tpu_custom_call.1} parent=1 // loop_footer_branch
      %15 = sbr.rel target = $region3
    $region8: #{tpu_custom_call.1} parent=1 // loop_exit
      _
    %1376 = vsyncpa [#allocation5], 1
    %s1377 = scalar_lea.sflag [#allocation5], 1
    %1378 = vsyncpa %s1377, 1
    %1379 = vsyncpa [#allocation7], 1

</llo_original>
